<compile_context>
chip_gen: v6e
topology: v6e:2x2x1
jax: 0.10.0
libtpu: 0.0.40
codegen_flags: <defaults>
</compile_context>

<pallas_src>
import functools
import math

import jax
import jax.numpy as jnp
from jax.experimental import pallas as pl
from jax.experimental.pallas import tpu as pltpu


def _mha_tall(q_bf, k_bf, v_bf, bias_tall, mask3, num_heads):
    """Multi-head attention over P positions, heads stacked on the row axis.

    q_bf:       (P, C)       bf16 queries (heads packed along lanes; softmax scale
                             already folded into the projection).
    k_bf, v_bf: (P, C)       bf16 keys / values.
    bias_tall:  (nh*P, P)    bf16; row n*P+i holds head n, query position i.  Entries
                             outside the axial pattern are -1e30 (mask), valid ones
                             carry the per-head relative positional bias.
    mask3:      (nh, P, C)   bf16 head-selection mask (1 where channel c belongs to
                             head n).
    Everything is a 2-D matmul / elementwise op / minor-dim reduction: no lane
    slicing, no concat of per-head results, no rank-3 transposes.
    """
    P, C = q_bf.shape

    # Replicate q once per head block (broadcast multiply, bf16) and zero the other
    # heads' channels so the full-C contraction below yields per-head dot products.
    q_tall = (q_bf[None, :, :] * mask3).reshape(num_heads * P, C)          # bf16

    # logits[n*P+i, j] = sum_d q[i, n*hd+d] * k[j, n*hd+d]   (scale pre-folded)
    logits = jax.lax.dot_general(
        q_tall, k_bf,
        dimension_numbers=(((1,), (1,)), ((), ())),
        preferred_element_type=jnp.float32) + bias_tall                    # (nh*P, P) f32

    m = jnp.max(logits, axis=-1, keepdims=True)
    p = jnp.exp(logits - m)                                                # masked -> 0
    denom = jnp.sum(p, axis=-1, keepdims=True)
    p = p * pl.reciprocal(denom, approx=True)                              # EUP

    # ctx_tall[n*P+i, c] = sum_j p[n,i,j] * v[j, c]
    ctx_tall = jnp.dot(p.astype(jnp.bfloat16), v_bf,
                       preferred_element_type=jnp.float32)                 # (nh*P, C)
    # Keep, per channel, only its own head's row block and fold heads back to (P, C).
    # Exactly one nonzero term per element -> bf16 select + sum is exact.
    ctx = jnp.sum(ctx_tall.astype(jnp.bfloat16).reshape(num_heads, P, C) * mask3,
                  axis=0)
    return ctx                                                             # (P, C) bf16


def _attention_block_kernel(tgt_ref, ref_ref,
                            wq_r, bq_r, wkv_r, bkv_r, bias_r,
                            w_rc, b_rc, wkv_c, bkv_c, wo_c, bo_c, bias_c,
                            mask_ref,
                            o_ref, *, num_heads, scales):
    P = tgt_ref.shape[1]
    C = tgt_ref.shape[2]

    mask3 = mask_ref[...].reshape(num_heads, P, C)             # bf16 {0,1}, hoisted

    x_tgt = tgt_ref[...].reshape(P, C).astype(jnp.float32)     # raw tgt (residual source)
    ref_bf = ref_ref[...].reshape(P, C).astype(jnp.bfloat16)   # raw ref

    # k/v are invariant across the shared-weight applications and hoisted:
    #   rows pass uses BN_ref(ref) -- BN folded into wkv_r/bkv_r host-side;
    #   cols pass uses the RAW ref (PyTorch wiring).
    kv_r = jnp.dot(ref_bf, wkv_r[...],
                   preferred_element_type=jnp.float32) + bkv_r[...]
    kv_c = jnp.dot(ref_bf, wkv_c[...],
                   preferred_element_type=jnp.float32) + bkv_c[...]
    k_r = kv_r[:, :C].astype(jnp.bfloat16)
    v_r = kv_r[:, C:].astype(jnp.bfloat16)
    k_c = kv_c[:, :C].astype(jnp.bfloat16)
    v_c = kv_c[:, C:].astype(jnp.bfloat16)

    x = x_tgt
    for _ in range(scales):   # nn.Sequential([module] * scales) => shared weights
        # rows: q = (BN_tgt(x) @ wq_r + bq_r) * 1/sqrt(hd)   (BN + scale pre-folded)
        q = (jnp.dot(x.astype(jnp.bfloat16), wq_r[...],
                     preferred_element_type=jnp.float32)
             + bq_r[...]).astype(jnp.bfloat16)
        ctx = _mha_tall(q, k_r, v_r, bias_r[...], mask3, num_heads)
        # cols: q = ((ctx @ wo_r + bo_r) @ wq_c + bq_c) * 1/sqrt(hd)
        #       -> single fused projection (w_rc, b_rc), computed host-side.
        q = (jnp.dot(ctx, w_rc[...],
                     preferred_element_type=jnp.float32)
             + b_rc[...]).astype(jnp.bfloat16)
        ctx = _mha_tall(q, k_c, v_c, bias_c[...], mask3, num_heads)
        out = jnp.dot(ctx, wo_c[...],
                      preferred_element_type=jnp.float32) + bo_c[...]
        # residual with the raw tgt of THIS application, then ReLU
        x = jnp.maximum(out + x, 0.0)

    o_ref[...] = x.reshape(1, P, C).astype(o_ref.dtype)


# --------------------------- host-side parameter glue ---------------------------

def _bn_fold(bn, eps=1e-5):
    # Eval-mode BatchNorm2d -> per-channel scale/shift (folded into projections below).
    scale = bn['gamma'] / jnp.sqrt(bn['var'] + eps)
    shift = bn['beta'] - bn['mean'] * scale
    return scale.astype(jnp.float32), shift.astype(jnp.float32)        # (C,)


def _axial_bias_tall(pos, H, W, along_h):
    """(nh, L, L) positional bias -> (nh*H*W, H*W) additive bias + axial mask (bf16).

    Encodes one axial pass as full attention over the H*W positions: pairs in
    different columns (rows pass) / rows (cols pass) get -1e30, valid pairs get
    the per-head relative positional bias.  Row n*P+i = (head n, query pos i).
    """
    nh = pos.shape[0]
    P = H * W
    hh = jnp.arange(P) // W
    ww = jnp.arange(P) % W
    if along_h:
        allowed = ww[:, None] == ww[None, :]
        bias = pos[:, hh[:, None], hh[None, :]]
    else:
        allowed = hh[:, None] == hh[None, :]
        bias = pos[:, ww[:, None], ww[None, :]]
    bias = jnp.where(allowed[None, :, :], bias, jnp.float32(-1e30))
    return bias.reshape(nh * P, P).astype(jnp.bfloat16)   # -1e30 representable in bf16


def _head_mask_tall(num_heads, P, C):
    # (nh*P, C) bf16 head-selection mask: 1 where channel c belongs to head n.
    hd = C // num_heads
    row_head = jnp.arange(num_heads * P) // P
    col_head = jnp.arange(C) // hd
    return (row_head[:, None] == col_head[None, :]).astype(jnp.bfloat16)


def init_params(key, dim, num_heads, kernel):
    keys = iter(jax.random.split(key, 32))

    def w():
        return jax.random.normal(next(keys), (dim, dim), jnp.float32) * 0.02

    def b():
        return jax.random.normal(next(keys), (1, dim), jnp.float32) * 0.01

    def attn():
        return dict(wq=w(), bq=b(), wk=w(), bk=b(), wv=w(), bv=b(),
                    wo=w(), bo=b(),
                    pos=jax.random.normal(next(keys),
                                          (num_heads, kernel, kernel),
                                          jnp.float32) * 0.02)

    def bn():
        return dict(
            gamma=1.0 + 0.1 * jax.random.normal(next(keys), (dim,), jnp.float32),
            beta=0.1 * jax.random.normal(next(keys), (dim,), jnp.float32),
            mean=0.1 * jax.random.normal(next(keys), (dim,), jnp.float32),
            var=jnp.abs(1.0 + 0.1 * jax.random.normal(next(keys), (dim,),
                                                      jnp.float32)))

    return dict(rows=attn(), cols=attn(), bn_tgt=bn(), bn_ref=bn())


# ------------------------------- module forward -------------------------------

def attention_block(tgt, ref, params, *, num_heads=8, scales=2):
    """AttentionBlock(axial=True) forward.  tgt/ref: (B, C, H, W) NCHW.
    Returns only the tgt-side output (as the PyTorch forward does)."""
    B, C, H, W = tgt.shape
    P = H * W
    pr, pc_ = params['rows'], params['cols']
    assert C % num_heads == 0
    assert pr['pos'].shape == (num_heads, H, H), 'rows pos bias must be (nh, H, H)'
    assert pc_['pos'].shape == (num_heads, W, W), 'cols pos bias must be (nh, W, W)'

    # Single NCHW -> (B, H*W, C) layout change per tensor (channels on lanes);
    # both axial passes and both scales reuse this layout inside the kernel.
    tgt_seq = jnp.transpose(tgt, (0, 2, 3, 1)).reshape(B, P, C)
    ref_seq = jnp.transpose(ref, (0, 2, 3, 1)).reshape(B, P, C)

    t_sc, t_sh = _bn_fold(params['bn_tgt'])
    r_sc, r_sh = _bn_fold(params['bn_ref'])
    s = 1.0 / math.sqrt(C // num_heads)

    # ---- host-side algebraic folds (free; done once) ----
    # rows q-projection absorbs BN_tgt and the softmax scale:
    wq_r = (t_sc[:, None] * pr['wq']) * s
    bq_r = (t_sh[None, :] @ pr['wq'] + pr['bq']) * s
    # rows k/v projection absorbs BN_ref; k & v fused into one (C, 2C) matmul:
    wkv_r_raw = jnp.concatenate([pr['wk'], pr['wv']], axis=1)
    bkv_r_raw = jnp.concatenate([pr['bk'], pr['bv']], axis=1)
    wkv_r = r_sc[:, None] * wkv_r_raw
    bkv_r = r_sh[None, :] @ wkv_r_raw + bkv_r_raw
    # rows out-projection folded into cols q-projection (+ softmax scale):
    #   q_cols = (ctx_rows @ wo_r + bo_r) @ wq_c + bq_c == ctx_rows @ w_rc + b_rc
    w_rc = (pr['wo'] @ pc_['wq']) * s
    b_rc = (pr['bo'] @ pc_['wq'] + pc_['bq']) * s
    # cols k/v act on the RAW ref -> no BN fold:
    wkv_c = jnp.concatenate([pc_['wk'], pc_['wv']], axis=1)
    bkv_c = jnp.concatenate([pc_['bk'], pc_['bv']], axis=1)

    bias_r = _axial_bias_tall(pr['pos'], H, W, along_h=True)    # (nh*P, P) bf16
    bias_c = _axial_bias_tall(pc_['pos'], H, W, along_h=False)  # (nh*P, P) bf16
    mask = _head_mask_tall(num_heads, P, C)                     # (nh*P, C) bf16

    bf = lambda a: a.astype(jnp.bfloat16)
    f32 = lambda a: a.astype(jnp.float32)

    seq_spec = pl.BlockSpec((1, P, C), lambda b: (b, 0, 0))

    def rep_spec(shape):
        return pl.BlockSpec(shape, lambda b, _n=len(shape): (0,) * _n)

    kernel = functools.partial(_attention_block_kernel,
                               num_heads=num_heads, scales=scales)

    out_seq = pl.pallas_call(
        kernel,
        out_shape=jax.ShapeDtypeStruct((B, P, C), tgt.dtype),
        grid=(B,),
        in_specs=[seq_spec, seq_spec,
                  # rows
                  rep_spec((C, C)), rep_spec((1, C)),
                  rep_spec((C, 2 * C)), rep_spec((1, 2 * C)),
                  rep_spec((num_heads * P, P)),
                  # cols (q-projection fused with rows out-projection)
                  rep_spec((C, C)), rep_spec((1, C)),
                  rep_spec((C, 2 * C)), rep_spec((1, 2 * C)),
                  rep_spec((C, C)), rep_spec((1, C)),
                  rep_spec((num_heads * P, P)),
                  # head-selection mask
                  rep_spec((num_heads * P, C))],
        out_specs=seq_spec,
        compiler_params=pltpu.CompilerParams(
            dimension_semantics=("parallel",)),      # B=2 -> both TCs busy on v7x
    )(tgt_seq, ref_seq,
      bf(wq_r), f32(bq_r), bf(wkv_r), f32(bkv_r), bias_r,
      bf(w_rc), f32(b_rc), bf(wkv_c), f32(bkv_c), bf(pc_['wo']), f32(pc_['bo']), bias_c,
      mask)

    return jnp.transpose(out_seq.reshape(B, H, W, C), (0, 3, 1, 2))


if __name__ == "__main__":
    B, C, H, W = 2, 256, 8, 8          # dim=256 is hardcoded in the module
    num_heads = 8
    kernel_size = H                    # axial kernel == spatial extent (H == W)

    key = jax.random.PRNGKey(0)
    k_tgt, k_ref, k_par = jax.random.split(key, 3)
    tgt = jax.random.normal(k_tgt, (B, C, H, W), jnp.float32)
    ref = jax.random.normal(k_ref, (B, C, H, W), jnp.float32)
    params = init_params(k_par, dim=C, num_heads=num_heads, kernel=kernel_size)

    fwd = jax.jit(functools.partial(attention_block,
                                    num_heads=num_heads, scales=2))
    out = fwd(tgt, ref, params)
    jax.block_until_ready(out)

    assert out.shape == (B, C, H, W)
    assert bool(jnp.all(out >= 0.0))    # final ReLU epilogue
    print("KERNEL_OK")
</pallas_src>

<mosaic_0001>
module attributes {stable_mosaic.version = 11 : i64} {
  func.func @_attention_block_kernel(%arg0: i32, %arg1: memref<1x64x256xf32, #tpu.memory_space<vmem>>, %arg2: memref<1x64x256xf32, #tpu.memory_space<vmem>>, %arg3: memref<256x256xbf16, #tpu.memory_space<vmem>>, %arg4: memref<1x256xf32, #tpu.memory_space<vmem>>, %arg5: memref<256x512xbf16, #tpu.memory_space<vmem>>, %arg6: memref<1x512xf32, #tpu.memory_space<vmem>>, %arg7: memref<512x64xbf16, #tpu.memory_space<vmem>>, %arg8: memref<256x256xbf16, #tpu.memory_space<vmem>>, %arg9: memref<1x256xf32, #tpu.memory_space<vmem>>, %arg10: memref<256x512xbf16, #tpu.memory_space<vmem>>, %arg11: memref<1x512xf32, #tpu.memory_space<vmem>>, %arg12: memref<256x256xbf16, #tpu.memory_space<vmem>>, %arg13: memref<1x256xf32, #tpu.memory_space<vmem>>, %arg14: memref<512x64xbf16, #tpu.memory_space<vmem>>, %arg15: memref<512x256xbf16, #tpu.memory_space<vmem>>, %arg16: memref<1x64x256xf32, #tpu.memory_space<vmem>>) attributes {dimension_semantics = [#tpu.dimension_semantics<parallel>], iteration_bounds = array<i64: 2>, scalar_prefetch = 0 : i64, scratch_operands = 0 : i64, tpu.core_type = #tpu.core_type<tc>, window_params = [{transform_indices = @transform_0, window_bounds = array<i64: 1, 64, 256>}, {transform_indices = @transform_1, window_bounds = array<i64: 1, 64, 256>}, {pipeline_mode = #tpu.pipeline_mode<synchronous>, transform_indices = @transform_2, window_bounds = array<i64: 256, 256>}, {pipeline_mode = #tpu.pipeline_mode<synchronous>, transform_indices = @transform_3, window_bounds = array<i64: 1, 256>}, {pipeline_mode = #tpu.pipeline_mode<synchronous>, transform_indices = @transform_4, window_bounds = array<i64: 256, 512>}, {pipeline_mode = #tpu.pipeline_mode<synchronous>, transform_indices = @transform_5, window_bounds = array<i64: 1, 512>}, {pipeline_mode = #tpu.pipeline_mode<synchronous>, transform_indices = @transform_6, window_bounds = array<i64: 512, 64>}, {pipeline_mode = #tpu.pipeline_mode<synchronous>, transform_indices = @transform_7, window_bounds = array<i64: 256, 256>}, {pipeline_mode = #tpu.pipeline_mode<synchronous>, transform_indices = @transform_8, window_bounds = array<i64: 1, 256>}, {pipeline_mode = #tpu.pipeline_mode<synchronous>, transform_indices = @transform_9, window_bounds = array<i64: 256, 512>}, {pipeline_mode = #tpu.pipeline_mode<synchronous>, transform_indices = @transform_10, window_bounds = array<i64: 1, 512>}, {pipeline_mode = #tpu.pipeline_mode<synchronous>, transform_indices = @transform_11, window_bounds = array<i64: 256, 256>}, {pipeline_mode = #tpu.pipeline_mode<synchronous>, transform_indices = @transform_12, window_bounds = array<i64: 1, 256>}, {pipeline_mode = #tpu.pipeline_mode<synchronous>, transform_indices = @transform_13, window_bounds = array<i64: 512, 64>}, {pipeline_mode = #tpu.pipeline_mode<synchronous>, transform_indices = @transform_14, window_bounds = array<i64: 512, 256>}, {transform_indices = @transform_15, window_bounds = array<i64: 1, 64, 256>}]} {
    %c0 = arith.constant 0 : index
    %c0_0 = arith.constant 0 : index
    %0 = vector.load %arg15[%c0, %c0_0] : memref<512x256xbf16, #tpu.memory_space<vmem>>, vector<512x256xbf16>
    %1 = vector.shape_cast %0 : vector<512x256xbf16> to vector<8x64x256xbf16>
    %c0_1 = arith.constant 0 : index
    %c0_2 = arith.constant 0 : index
    %c0_3 = arith.constant 0 : index
    %2 = vector.load %arg1[%c0_1, %c0_2, %c0_3] : memref<1x64x256xf32, #tpu.memory_space<vmem>>, vector<1x64x256xf32>
    %3 = vector.shape_cast %2 : vector<1x64x256xf32> to vector<64x256xf32>
    %c0_4 = arith.constant 0 : index
    %c0_5 = arith.constant 0 : index
    %c0_6 = arith.constant 0 : index
    %4 = vector.load %arg2[%c0_4, %c0_5, %c0_6] : memref<1x64x256xf32, #tpu.memory_space<vmem>>, vector<1x64x256xf32>
    %5 = vector.shape_cast %4 : vector<1x64x256xf32> to vector<64x256xf32>
    %6 = arith.truncf %5 : vector<64x256xf32> to vector<64x256xbf16>
    %c0_7 = arith.constant 0 : index
    %c0_8 = arith.constant 0 : index
    %7 = vector.load %arg5[%c0_7, %c0_8] : memref<256x512xbf16, #tpu.memory_space<vmem>>, vector<256x512xbf16>
    %cst = arith.constant dense<0.000000e+00> : vector<64x512xf32>
    %8 = tpu.matmul %6, %7, %cst {dimension_numbers = #tpu.dot_dimension_numbers<[1], [0], [0], [1], [0, 0, 1, 1], [], []>} : vector<64x256xbf16>, vector<256x512xbf16>, vector<64x512xf32> -> vector<64x512xf32>
    %c0_9 = arith.constant 0 : index
    %c0_10 = arith.constant 0 : index
    %9 = vector.load %arg6[%c0_9, %c0_10] : memref<1x512xf32, #tpu.memory_space<vmem>>, vector<1x512xf32>
    %10 = vector.broadcast %9 : vector<1x512xf32> to vector<64x512xf32>
    %11 = arith.addf %8, %10 : vector<64x512xf32>
    %c0_11 = arith.constant 0 : index
    %c0_12 = arith.constant 0 : index
    %12 = vector.load %arg10[%c0_11, %c0_12] : memref<256x512xbf16, #tpu.memory_space<vmem>>, vector<256x512xbf16>
    %cst_13 = arith.constant dense<0.000000e+00> : vector<64x512xf32>
    %13 = tpu.matmul %6, %12, %cst_13 {dimension_numbers = #tpu.dot_dimension_numbers<[1], [0], [0], [1], [0, 0, 1, 1], [], []>} : vector<64x256xbf16>, vector<256x512xbf16>, vector<64x512xf32> -> vector<64x512xf32>
    %c0_14 = arith.constant 0 : index
    %c0_15 = arith.constant 0 : index
    %14 = vector.load %arg11[%c0_14, %c0_15] : memref<1x512xf32, #tpu.memory_space<vmem>>, vector<1x512xf32>
    %15 = vector.broadcast %14 : vector<1x512xf32> to vector<64x512xf32>
    %16 = arith.addf %13, %15 : vector<64x512xf32>
    %17 = vector.extract_strided_slice %11 {offsets = [0, 0], sizes = [64, 256], strides = [1, 1]} : vector<64x512xf32> to vector<64x256xf32>
    %18 = arith.truncf %17 : vector<64x256xf32> to vector<64x256xbf16>
    %19 = vector.extract_strided_slice %11 {offsets = [0, 256], sizes = [64, 256], strides = [1, 1]} : vector<64x512xf32> to vector<64x256xf32>
    %20 = arith.truncf %19 : vector<64x256xf32> to vector<64x256xbf16>
    %21 = vector.extract_strided_slice %16 {offsets = [0, 0], sizes = [64, 256], strides = [1, 1]} : vector<64x512xf32> to vector<64x256xf32>
    %22 = arith.truncf %21 : vector<64x256xf32> to vector<64x256xbf16>
    %23 = vector.extract_strided_slice %16 {offsets = [0, 256], sizes = [64, 256], strides = [1, 1]} : vector<64x512xf32> to vector<64x256xf32>
    %24 = arith.truncf %23 : vector<64x256xf32> to vector<64x256xbf16>
    %25 = arith.truncf %3 : vector<64x256xf32> to vector<64x256xbf16>
    %c0_16 = arith.constant 0 : index
    %c0_17 = arith.constant 0 : index
    %26 = vector.load %arg3[%c0_16, %c0_17] : memref<256x256xbf16, #tpu.memory_space<vmem>>, vector<256x256xbf16>
    %cst_18 = arith.constant dense<0.000000e+00> : vector<64x256xf32>
    %27 = tpu.matmul %25, %26, %cst_18 {dimension_numbers = #tpu.dot_dimension_numbers<[1], [0], [0], [1], [0, 0, 1, 1], [], []>} : vector<64x256xbf16>, vector<256x256xbf16>, vector<64x256xf32> -> vector<64x256xf32>
    %c0_19 = arith.constant 0 : index
    %c0_20 = arith.constant 0 : index
    %28 = vector.load %arg4[%c0_19, %c0_20] : memref<1x256xf32, #tpu.memory_space<vmem>>, vector<1x256xf32>
    %29 = vector.broadcast %28 : vector<1x256xf32> to vector<64x256xf32>
    %30 = arith.addf %27, %29 : vector<64x256xf32>
    %31 = arith.truncf %30 : vector<64x256xf32> to vector<64x256xbf16>
    %c0_21 = arith.constant 0 : index
    %c0_22 = arith.constant 0 : index
    %32 = vector.load %arg7[%c0_21, %c0_22] : memref<512x64xbf16, #tpu.memory_space<vmem>>, vector<512x64xbf16>
    %33 = vector.shape_cast %31 : vector<64x256xbf16> to vector<1x64x256xbf16>
    %34 = vector.broadcast %33 : vector<1x64x256xbf16> to vector<8x64x256xbf16>
    %35 = arith.mulf %34, %1 : vector<8x64x256xbf16>
    %36 = vector.shape_cast %35 : vector<8x64x256xbf16> to vector<512x256xbf16>
    %cst_23 = arith.constant dense<0.000000e+00> : vector<512x64xf32>
    %37 = tpu.matmul %36, %18, %cst_23 {dimension_numbers = #tpu.dot_dimension_numbers<[1], [1], [0], [0], [0, 0, 1, 0], [], []>} : vector<512x256xbf16>, vector<64x256xbf16>, vector<512x64xf32> -> vector<512x64xf32>
    %38 = arith.extf %32 : vector<512x64xbf16> to vector<512x64xf32>
    %39 = arith.addf %37, %38 : vector<512x64xf32>
    %cst_24 = arith.constant dense<0xFF800000> : vector<512xf32>
    %40 = vector.multi_reduction <maximumf>, %39, %cst_24 [1] : vector<512x64xf32> to vector<512xf32>
    %41 = vector.shape_cast %40 : vector<512xf32> to vector<512x1xf32>
    %42 = vector.broadcast %41 : vector<512x1xf32> to vector<512x64xf32>
    %43 = arith.subf %39, %42 : vector<512x64xf32>
    %44 = math.exp %43 : vector<512x64xf32>
    %cst_25 = arith.constant dense<0.000000e+00> : vector<512xf32>
    %45 = vector.multi_reduction <add>, %44, %cst_25 [1] : vector<512x64xf32> to vector<512xf32>
    %46 = vector.shape_cast %45 : vector<512xf32> to vector<512x1xf32>
    %47 = tpu.reciprocal %46 {approx = true} : vector<512x1xf32> -> vector<512x1xf32>
    %48 = vector.broadcast %47 : vector<512x1xf32> to vector<512x64xf32>
    %49 = arith.mulf %44, %48 : vector<512x64xf32>
    %50 = arith.truncf %49 : vector<512x64xf32> to vector<512x64xbf16>
    %cst_26 = arith.constant dense<0.000000e+00> : vector<512x256xf32>
    %51 = tpu.matmul %50, %20, %cst_26 {dimension_numbers = #tpu.dot_dimension_numbers<[1], [0], [0], [1], [0, 0, 1, 1], [], []>} : vector<512x64xbf16>, vector<64x256xbf16>, vector<512x256xf32> -> vector<512x256xf32>
    %52 = arith.truncf %51 : vector<512x256xf32> to vector<512x256xbf16>
    %53 = vector.shape_cast %52 : vector<512x256xbf16> to vector<8x64x256xbf16>
    %54 = arith.mulf %53, %1 : vector<8x64x256xbf16>
    %55 = arith.extf %54 : vector<8x64x256xbf16> to vector<8x64x256xf32>
    %cst_27 = arith.constant dense<0.000000e+00> : vector<64x256xf32>
    %56 = vector.multi_reduction <add>, %55, %cst_27 [0] : vector<8x64x256xf32> to vector<64x256xf32>
    %57 = arith.truncf %56 : vector<64x256xf32> to vector<64x256xbf16>
    %c0_28 = arith.constant 0 : index
    %c0_29 = arith.constant 0 : index
    %58 = vector.load %arg8[%c0_28, %c0_29] : memref<256x256xbf16, #tpu.memory_space<vmem>>, vector<256x256xbf16>
    %cst_30 = arith.constant dense<0.000000e+00> : vector<64x256xf32>
    %59 = tpu.matmul %57, %58, %cst_30 {dimension_numbers = #tpu.dot_dimension_numbers<[1], [0], [0], [1], [0, 0, 1, 1], [], []>} : vector<64x256xbf16>, vector<256x256xbf16>, vector<64x256xf32> -> vector<64x256xf32>
    %c0_31 = arith.constant 0 : index
    %c0_32 = arith.constant 0 : index
    %60 = vector.load %arg9[%c0_31, %c0_32] : memref<1x256xf32, #tpu.memory_space<vmem>>, vector<1x256xf32>
    %61 = vector.broadcast %60 : vector<1x256xf32> to vector<64x256xf32>
    %62 = arith.addf %59, %61 : vector<64x256xf32>
    %63 = arith.truncf %62 : vector<64x256xf32> to vector<64x256xbf16>
    %c0_33 = arith.constant 0 : index
    %c0_34 = arith.constant 0 : index
    %64 = vector.load %arg14[%c0_33, %c0_34] : memref<512x64xbf16, #tpu.memory_space<vmem>>, vector<512x64xbf16>
    %65 = vector.shape_cast %63 : vector<64x256xbf16> to vector<1x64x256xbf16>
    %66 = vector.broadcast %65 : vector<1x64x256xbf16> to vector<8x64x256xbf16>
    %67 = arith.mulf %66, %1 : vector<8x64x256xbf16>
    %68 = vector.shape_cast %67 : vector<8x64x256xbf16> to vector<512x256xbf16>
    %cst_35 = arith.constant dense<0.000000e+00> : vector<512x64xf32>
    %69 = tpu.matmul %68, %22, %cst_35 {dimension_numbers = #tpu.dot_dimension_numbers<[1], [1], [0], [0], [0, 0, 1, 0], [], []>} : vector<512x256xbf16>, vector<64x256xbf16>, vector<512x64xf32> -> vector<512x64xf32>
    %70 = arith.extf %64 : vector<512x64xbf16> to vector<512x64xf32>
    %71 = arith.addf %69, %70 : vector<512x64xf32>
    %cst_36 = arith.constant dense<0xFF800000> : vector<512xf32>
    %72 = vector.multi_reduction <maximumf>, %71, %cst_36 [1] : vector<512x64xf32> to vector<512xf32>
    %73 = vector.shape_cast %72 : vector<512xf32> to vector<512x1xf32>
    %74 = vector.broadcast %73 : vector<512x1xf32> to vector<512x64xf32>
    %75 = arith.subf %71, %74 : vector<512x64xf32>
    %76 = math.exp %75 : vector<512x64xf32>
    %cst_37 = arith.constant dense<0.000000e+00> : vector<512xf32>
    %77 = vector.multi_reduction <add>, %76, %cst_37 [1] : vector<512x64xf32> to vector<512xf32>
    %78 = vector.shape_cast %77 : vector<512xf32> to vector<512x1xf32>
    %79 = tpu.reciprocal %78 {approx = true} : vector<512x1xf32> -> vector<512x1xf32>
    %80 = vector.broadcast %79 : vector<512x1xf32> to vector<512x64xf32>
    %81 = arith.mulf %76, %80 : vector<512x64xf32>
    %82 = arith.truncf %81 : vector<512x64xf32> to vector<512x64xbf16>
    %cst_38 = arith.constant dense<0.000000e+00> : vector<512x256xf32>
    %83 = tpu.matmul %82, %24, %cst_38 {dimension_numbers = #tpu.dot_dimension_numbers<[1], [0], [0], [1], [0, 0, 1, 1], [], []>} : vector<512x64xbf16>, vector<64x256xbf16>, vector<512x256xf32> -> vector<512x256xf32>
    %84 = arith.truncf %83 : vector<512x256xf32> to vector<512x256xbf16>
    %85 = vector.shape_cast %84 : vector<512x256xbf16> to vector<8x64x256xbf16>
    %86 = arith.mulf %85, %1 : vector<8x64x256xbf16>
    %87 = arith.extf %86 : vector<8x64x256xbf16> to vector<8x64x256xf32>
    %cst_39 = arith.constant dense<0.000000e+00> : vector<64x256xf32>
    %88 = vector.multi_reduction <add>, %87, %cst_39 [0] : vector<8x64x256xf32> to vector<64x256xf32>
    %89 = arith.truncf %88 : vector<64x256xf32> to vector<64x256xbf16>
    %c0_40 = arith.constant 0 : index
    %c0_41 = arith.constant 0 : index
    %90 = vector.load %arg12[%c0_40, %c0_41] : memref<256x256xbf16, #tpu.memory_space<vmem>>, vector<256x256xbf16>
    %cst_42 = arith.constant dense<0.000000e+00> : vector<64x256xf32>
    %91 = tpu.matmul %89, %90, %cst_42 {dimension_numbers = #tpu.dot_dimension_numbers<[1], [0], [0], [1], [0, 0, 1, 1], [], []>} : vector<64x256xbf16>, vector<256x256xbf16>, vector<64x256xf32> -> vector<64x256xf32>
    %c0_43 = arith.constant 0 : index
    %c0_44 = arith.constant 0 : index
    %92 = vector.load %arg13[%c0_43, %c0_44] : memref<1x256xf32, #tpu.memory_space<vmem>>, vector<1x256xf32>
    %93 = vector.broadcast %92 : vector<1x256xf32> to vector<64x256xf32>
    %94 = arith.addf %91, %93 : vector<64x256xf32>
    %95 = arith.addf %94, %3 : vector<64x256xf32>
    %cst_45 = arith.constant 0.000000e+00 : f32
    %96 = vector.broadcast %cst_45 : f32 to vector<64x256xf32>
    %97 = arith.maximumf %95, %96 : vector<64x256xf32>
    %98 = arith.truncf %97 : vector<64x256xf32> to vector<64x256xbf16>
    %c0_46 = arith.constant 0 : index
    %c0_47 = arith.constant 0 : index
    %99 = vector.load %arg3[%c0_46, %c0_47] : memref<256x256xbf16, #tpu.memory_space<vmem>>, vector<256x256xbf16>
    %cst_48 = arith.constant dense<0.000000e+00> : vector<64x256xf32>
    %100 = tpu.matmul %98, %99, %cst_48 {dimension_numbers = #tpu.dot_dimension_numbers<[1], [0], [0], [1], [0, 0, 1, 1], [], []>} : vector<64x256xbf16>, vector<256x256xbf16>, vector<64x256xf32> -> vector<64x256xf32>
    %c0_49 = arith.constant 0 : index
    %c0_50 = arith.constant 0 : index
    %101 = vector.load %arg4[%c0_49, %c0_50] : memref<1x256xf32, #tpu.memory_space<vmem>>, vector<1x256xf32>
    %102 = vector.broadcast %101 : vector<1x256xf32> to vector<64x256xf32>
    %103 = arith.addf %100, %102 : vector<64x256xf32>
    %104 = arith.truncf %103 : vector<64x256xf32> to vector<64x256xbf16>
    %c0_51 = arith.constant 0 : index
    %c0_52 = arith.constant 0 : index
    %105 = vector.load %arg7[%c0_51, %c0_52] : memref<512x64xbf16, #tpu.memory_space<vmem>>, vector<512x64xbf16>
    %106 = vector.shape_cast %104 : vector<64x256xbf16> to vector<1x64x256xbf16>
    %107 = vector.broadcast %106 : vector<1x64x256xbf16> to vector<8x64x256xbf16>
    %108 = arith.mulf %107, %1 : vector<8x64x256xbf16>
    %109 = vector.shape_cast %108 : vector<8x64x256xbf16> to vector<512x256xbf16>
    %cst_53 = arith.constant dense<0.000000e+00> : vector<512x64xf32>
    %110 = tpu.matmul %109, %18, %cst_53 {dimension_numbers = #tpu.dot_dimension_numbers<[1], [1], [0], [0], [0, 0, 1, 0], [], []>} : vector<512x256xbf16>, vector<64x256xbf16>, vector<512x64xf32> -> vector<512x64xf32>
    %111 = arith.extf %105 : vector<512x64xbf16> to vector<512x64xf32>
    %112 = arith.addf %110, %111 : vector<512x64xf32>
    %cst_54 = arith.constant dense<0xFF800000> : vector<512xf32>
    %113 = vector.multi_reduction <maximumf>, %112, %cst_54 [1] : vector<512x64xf32> to vector<512xf32>
    %114 = vector.shape_cast %113 : vector<512xf32> to vector<512x1xf32>
    %115 = vector.broadcast %114 : vector<512x1xf32> to vector<512x64xf32>
    %116 = arith.subf %112, %115 : vector<512x64xf32>
    %117 = math.exp %116 : vector<512x64xf32>
    %cst_55 = arith.constant dense<0.000000e+00> : vector<512xf32>
    %118 = vector.multi_reduction <add>, %117, %cst_55 [1] : vector<512x64xf32> to vector<512xf32>
    %119 = vector.shape_cast %118 : vector<512xf32> to vector<512x1xf32>
    %120 = tpu.reciprocal %119 {approx = true} : vector<512x1xf32> -> vector<512x1xf32>
    %121 = vector.broadcast %120 : vector<512x1xf32> to vector<512x64xf32>
    %122 = arith.mulf %117, %121 : vector<512x64xf32>
    %123 = arith.truncf %122 : vector<512x64xf32> to vector<512x64xbf16>
    %cst_56 = arith.constant dense<0.000000e+00> : vector<512x256xf32>
    %124 = tpu.matmul %123, %20, %cst_56 {dimension_numbers = #tpu.dot_dimension_numbers<[1], [0], [0], [1], [0, 0, 1, 1], [], []>} : vector<512x64xbf16>, vector<64x256xbf16>, vector<512x256xf32> -> vector<512x256xf32>
    %125 = arith.truncf %124 : vector<512x256xf32> to vector<512x256xbf16>
    %126 = vector.shape_cast %125 : vector<512x256xbf16> to vector<8x64x256xbf16>
    %127 = arith.mulf %126, %1 : vector<8x64x256xbf16>
    %128 = arith.extf %127 : vector<8x64x256xbf16> to vector<8x64x256xf32>
    %cst_57 = arith.constant dense<0.000000e+00> : vector<64x256xf32>
    %129 = vector.multi_reduction <add>, %128, %cst_57 [0] : vector<8x64x256xf32> to vector<64x256xf32>
    %130 = arith.truncf %129 : vector<64x256xf32> to vector<64x256xbf16>
    %c0_58 = arith.constant 0 : index
    %c0_59 = arith.constant 0 : index
    %131 = vector.load %arg8[%c0_58, %c0_59] : memref<256x256xbf16, #tpu.memory_space<vmem>>, vector<256x256xbf16>
    %cst_60 = arith.constant dense<0.000000e+00> : vector<64x256xf32>
    %132 = tpu.matmul %130, %131, %cst_60 {dimension_numbers = #tpu.dot_dimension_numbers<[1], [0], [0], [1], [0, 0, 1, 1], [], []>} : vector<64x256xbf16>, vector<256x256xbf16>, vector<64x256xf32> -> vector<64x256xf32>
    %c0_61 = arith.constant 0 : index
    %c0_62 = arith.constant 0 : index
    %133 = vector.load %arg9[%c0_61, %c0_62] : memref<1x256xf32, #tpu.memory_space<vmem>>, vector<1x256xf32>
    %134 = vector.broadcast %133 : vector<1x256xf32> to vector<64x256xf32>
    %135 = arith.addf %132, %134 : vector<64x256xf32>
    %136 = arith.truncf %135 : vector<64x256xf32> to vector<64x256xbf16>
    %c0_63 = arith.constant 0 : index
    %c0_64 = arith.constant 0 : index
    %137 = vector.load %arg14[%c0_63, %c0_64] : memref<512x64xbf16, #tpu.memory_space<vmem>>, vector<512x64xbf16>
    %138 = vector.shape_cast %136 : vector<64x256xbf16> to vector<1x64x256xbf16>
    %139 = vector.broadcast %138 : vector<1x64x256xbf16> to vector<8x64x256xbf16>
    %140 = arith.mulf %139, %1 : vector<8x64x256xbf16>
    %141 = vector.shape_cast %140 : vector<8x64x256xbf16> to vector<512x256xbf16>
    %cst_65 = arith.constant dense<0.000000e+00> : vector<512x64xf32>
    %142 = tpu.matmul %141, %22, %cst_65 {dimension_numbers = #tpu.dot_dimension_numbers<[1], [1], [0], [0], [0, 0, 1, 0], [], []>} : vector<512x256xbf16>, vector<64x256xbf16>, vector<512x64xf32> -> vector<512x64xf32>
    %143 = arith.extf %137 : vector<512x64xbf16> to vector<512x64xf32>
    %144 = arith.addf %142, %143 : vector<512x64xf32>
    %cst_66 = arith.constant dense<0xFF800000> : vector<512xf32>
    %145 = vector.multi_reduction <maximumf>, %144, %cst_66 [1] : vector<512x64xf32> to vector<512xf32>
    %146 = vector.shape_cast %145 : vector<512xf32> to vector<512x1xf32>
    %147 = vector.broadcast %146 : vector<512x1xf32> to vector<512x64xf32>
    %148 = arith.subf %144, %147 : vector<512x64xf32>
    %149 = math.exp %148 : vector<512x64xf32>
    %cst_67 = arith.constant dense<0.000000e+00> : vector<512xf32>
    %150 = vector.multi_reduction <add>, %149, %cst_67 [1] : vector<512x64xf32> to vector<512xf32>
    %151 = vector.shape_cast %150 : vector<512xf32> to vector<512x1xf32>
    %152 = tpu.reciprocal %151 {approx = true} : vector<512x1xf32> -> vector<512x1xf32>
    %153 = vector.broadcast %152 : vector<512x1xf32> to vector<512x64xf32>
    %154 = arith.mulf %149, %153 : vector<512x64xf32>
    %155 = arith.truncf %154 : vector<512x64xf32> to vector<512x64xbf16>
    %cst_68 = arith.constant dense<0.000000e+00> : vector<512x256xf32>
    %156 = tpu.matmul %155, %24, %cst_68 {dimension_numbers = #tpu.dot_dimension_numbers<[1], [0], [0], [1], [0, 0, 1, 1], [], []>} : vector<512x64xbf16>, vector<64x256xbf16>, vector<512x256xf32> -> vector<512x256xf32>
    %157 = arith.truncf %156 : vector<512x256xf32> to vector<512x256xbf16>
    %158 = vector.shape_cast %157 : vector<512x256xbf16> to vector<8x64x256xbf16>
    %159 = arith.mulf %158, %1 : vector<8x64x256xbf16>
    %160 = arith.extf %159 : vector<8x64x256xbf16> to vector<8x64x256xf32>
    %cst_69 = arith.constant dense<0.000000e+00> : vector<64x256xf32>
    %161 = vector.multi_reduction <add>, %160, %cst_69 [0] : vector<8x64x256xf32> to vector<64x256xf32>
    %162 = arith.truncf %161 : vector<64x256xf32> to vector<64x256xbf16>
    %c0_70 = arith.constant 0 : index
    %c0_71 = arith.constant 0 : index
    %163 = vector.load %arg12[%c0_70, %c0_71] : memref<256x256xbf16, #tpu.memory_space<vmem>>, vector<256x256xbf16>
    %cst_72 = arith.constant dense<0.000000e+00> : vector<64x256xf32>
    %164 = tpu.matmul %162, %163, %cst_72 {dimension_numbers = #tpu.dot_dimension_numbers<[1], [0], [0], [1], [0, 0, 1, 1], [], []>} : vector<64x256xbf16>, vector<256x256xbf16>, vector<64x256xf32> -> vector<64x256xf32>
    %c0_73 = arith.constant 0 : index
    %c0_74 = arith.constant 0 : index
    %165 = vector.load %arg13[%c0_73, %c0_74] : memref<1x256xf32, #tpu.memory_space<vmem>>, vector<1x256xf32>
    %166 = vector.broadcast %165 : vector<1x256xf32> to vector<64x256xf32>
    %167 = arith.addf %164, %166 : vector<64x256xf32>
    %168 = arith.addf %167, %97 : vector<64x256xf32>
    %cst_75 = arith.constant 0.000000e+00 : f32
    %169 = vector.broadcast %cst_75 : f32 to vector<64x256xf32>
    %170 = arith.maximumf %168, %169 : vector<64x256xf32>
    %171 = vector.shape_cast %170 : vector<64x256xf32> to vector<1x64x256xf32>
    %c0_76 = arith.constant 0 : index
    %c0_77 = arith.constant 0 : index
    %c0_78 = arith.constant 0 : index
    %172 = vector.load %arg16[%c0_76, %c0_77, %c0_78] : memref<1x64x256xf32, #tpu.memory_space<vmem>>, vector<1x64x256xf32>
    tpu.vector_store %arg16[%c0_76, %c0_77, %c0_78], %171 {strides = array<i32>} : memref<1x64x256xf32, #tpu.memory_space<vmem>>, vector<1x64x256xf32>,
    return
  }
  func.func @transform_0(%arg0: i32) -> (i32, i32, i32) {
    %c0_i32 = arith.constant 0 : i32
    %c0_i32_0 = arith.constant 0 : i32
    %c0_i32_1 = arith.constant 0 : i32
    return %arg0, %c0_i32, %c0_i32_0 : i32, i32, i32
  }
  func.func @transform_1(%arg0: i32) -> (i32, i32, i32) {
    %c0_i32 = arith.constant 0 : i32
    %c0_i32_0 = arith.constant 0 : i32
    %c0_i32_1 = arith.constant 0 : i32
    return %arg0, %c0_i32, %c0_i32_0 : i32, i32, i32
  }
  func.func @transform_2(%arg0: i32) -> (i32, i32) {
    %c0_i32 = arith.constant 0 : i32
    %c0_i32_0 = arith.constant 0 : i32
    %c0_i32_1 = arith.constant 0 : i32
    return %c0_i32, %c0_i32_0 : i32, i32
  }
  func.func @transform_3(%arg0: i32) -> (i32, i32) {
    %c0_i32 = arith.constant 0 : i32
    %c0_i32_0 = arith.constant 0 : i32
    %c0_i32_1 = arith.constant 0 : i32
    return %c0_i32, %c0_i32_0 : i32, i32
  }
  func.func @transform_4(%arg0: i32) -> (i32, i32) {
    %c0_i32 = arith.constant 0 : i32
    %c0_i32_0 = arith.constant 0 : i32
    %c0_i32_1 = arith.constant 0 : i32
    return %c0_i32, %c0_i32_0 : i32, i32
  }
  func.func @transform_5(%arg0: i32) -> (i32, i32) {
    %c0_i32 = arith.constant 0 : i32
    %c0_i32_0 = arith.constant 0 : i32
    %c0_i32_1 = arith.constant 0 : i32
    return %c0_i32, %c0_i32_0 : i32, i32
  }
  func.func @transform_6(%arg0: i32) -> (i32, i32) {
    %c0_i32 = arith.constant 0 : i32
    %c0_i32_0 = arith.constant 0 : i32
    %c0_i32_1 = arith.constant 0 : i32
    return %c0_i32, %c0_i32_0 : i32, i32
  }
  func.func @transform_7(%arg0: i32) -> (i32, i32) {
    %c0_i32 = arith.constant 0 : i32
    %c0_i32_0 = arith.constant 0 : i32
    %c0_i32_1 = arith.constant 0 : i32
    return %c0_i32, %c0_i32_0 : i32, i32
  }
  func.func @transform_8(%arg0: i32) -> (i32, i32) {
    %c0_i32 = arith.constant 0 : i32
    %c0_i32_0 = arith.constant 0 : i32
    %c0_i32_1 = arith.constant 0 : i32
    return %c0_i32, %c0_i32_0 : i32, i32
  }
  func.func @transform_9(%arg0: i32) -> (i32, i32) {
    %c0_i32 = arith.constant 0 : i32
    %c0_i32_0 = arith.constant 0 : i32
    %c0_i32_1 = arith.constant 0 : i32
    return %c0_i32, %c0_i32_0 : i32, i32
  }
  func.func @transform_10(%arg0: i32) -> (i32, i32) {
    %c0_i32 = arith.constant 0 : i32
    %c0_i32_0 = arith.constant 0 : i32
    %c0_i32_1 = arith.constant 0 : i32
    return %c0_i32, %c0_i32_0 : i32, i32
  }
  func.func @transform_11(%arg0: i32) -> (i32, i32) {
    %c0_i32 = arith.constant 0 : i32
    %c0_i32_0 = arith.constant 0 : i32
    %c0_i32_1 = arith.constant 0 : i32
    return %c0_i32, %c0_i32_0 : i32, i32
  }
  func.func @transform_12(%arg0: i32) -> (i32, i32) {
    %c0_i32 = arith.constant 0 : i32
    %c0_i32_0 = arith.constant 0 : i32
    %c0_i32_1 = arith.constant 0 : i32
    return %c0_i32, %c0_i32_0 : i32, i32
  }
  func.func @transform_13(%arg0: i32) -> (i32, i32) {
    %c0_i32 = arith.constant 0 : i32
    %c0_i32_0 = arith.constant 0 : i32
    %c0_i32_1 = arith.constant 0 : i32
    return %c0_i32, %c0_i32_0 : i32, i32
  }
  func.func @transform_14(%arg0: i32) -> (i32, i32) {
    %c0_i32 = arith.constant 0 : i32
    %c0_i32_0 = arith.constant 0 : i32
    %c0_i32_1 = arith.constant 0 : i32
    return %c0_i32, %c0_i32_0 : i32, i32
  }
  func.func @transform_15(%arg0: i32) -> (i32, i32, i32) {
    %c0_i32 = arith.constant 0 : i32
    %c0_i32_0 = arith.constant 0 : i32
    %c0_i32_1 = arith.constant 0 : i32
    return %arg0, %c0_i32, %c0_i32_0 : i32, i32, i32
  }
}

</mosaic_0001>

<llo_original>
// kernel: attention_block.1
$region0: #{attention_block.1}
  #allocation0 [shape = 'u32[]', space=smem, size = 0x4, offset = 0x4, fixed_abs, tag = 'smem constant byte address 0x4 - core index']
  #allocation1 [shape = 'u32[144,128]{1,0:T(1,128)}', space=vmem, size = 0x12000, scoped, tag = 'internal scratch']
  %s0 = inlined_call_operand.vmem [shape: f32[2,64,256], index: 0, kind: input, shape index: {}]
  %s1 = inlined_call_operand.vmem [shape: f32[2,64,256], index: 1, kind: input, shape index: {}]
  %s2 = inlined_call_operand.vmem [shape: bf16[256,256], index: 2, kind: input, shape index: {}]
  %s3 = inlined_call_operand.vmem [shape: f32[1,256], index: 3, kind: input, shape index: {}]
  %s4 = inlined_call_operand.vmem [shape: bf16[256,512], index: 4, kind: input, shape index: {}]
  %s5 = inlined_call_operand.vmem [shape: f32[1,512], index: 5, kind: input, shape index: {}]
  %s6 = inlined_call_operand.vmem [shape: bf16[512,64], index: 6, kind: input, shape index: {}]
  %s7 = inlined_call_operand.vmem [shape: bf16[256,256], index: 7, kind: input, shape index: {}]
  %s8 = inlined_call_operand.vmem [shape: f32[1,256], index: 8, kind: input, shape index: {}]
  %s9 = inlined_call_operand.vmem [shape: bf16[256,512], index: 9, kind: input, shape index: {}]
  %s10 = inlined_call_operand.vmem [shape: f32[1,512], index: 10, kind: input, shape index: {}]
  %s11 = inlined_call_operand.vmem [shape: bf16[256,256], index: 11, kind: input, shape index: {}]
  %s12 = inlined_call_operand.vmem [shape: f32[1,256], index: 12, kind: input, shape index: {}]
  %s13 = inlined_call_operand.vmem [shape: bf16[512,64], index: 13, kind: input, shape index: {}]
  %s14 = inlined_call_operand.vmem [shape: bf16[512,256], index: 14, kind: input, shape index: {}]
  %s15 = inlined_call_operand.hbm [shape: f32[2,64,256], index: 15, kind: output, shape index: {}]
  %s16 = sld [smem:[#allocation0]]
  $region93: #{attention_block.1} parent=0
    _
  %s18 = ssub.s32 1, %s16
  %s19 = scalar_select 0, %s18, %s16
  $region1: #{attention_block.1} parent=0
    #allocation2 [shape = 'u8[131072]{0}', space=vmem, size = 0x20000, scoped, tag = 'output window, operand 0']
    #allocation3 [shape = 's32[2]{0}', space=sflag, size = 0x8, scoped, tag = 'scoped memory for attention_block.1']
    %20 = vsyncpa [#allocation3], 0
    %s21 = scalar_lea.sflag [#allocation3], 1
    %22 = vsyncpa %s21, 0
    loop: start=0, step=1, limit=4
    $region2: #{attention_block.1} parent=1 // loop_pre_header
      _
    $region3: #{attention_block.1} parent=1 // loop_header
      %s24 = sphi 0, %s28
      %p25 = scmp.ge.s32.totalorder %s24, 4
      %s34 = sphi 0, %s36
      %s37 = sphi 0, %s34
      %s38 = sphi 0, %s37
      %s54 = sphi 0, %s38
      %s60 = sphi 0, %s62
      %s63 = sphi 0, %s60
      %s64 = sphi 0, %s63
      %s80 = sphi 0, %s64
      %s84 = sphi 0, %s84
      %s86 = sphi 0, %s84
      %s87 = sphi 0, %s86
      %s101 = sphi 0, %s87
      %s105 = sphi 0, %s105
      %s107 = sphi 0, %s105
      %s108 = sphi 0, %s107
      %s122 = sphi 0, %s108
      %s126 = sphi 0, %s126
      %s128 = sphi 0, %s126
      %s129 = sphi 0, %s128
      %s143 = sphi 0, %s129
      %s147 = sphi 0, %s147
      %s149 = sphi 0, %s147
      %s150 = sphi 0, %s149
      %s164 = sphi 0, %s150
      %s168 = sphi 0, %s168
      %s170 = sphi 0, %s168
      %s171 = sphi 0, %s170
      %s185 = sphi 0, %s171
      %s189 = sphi 0, %s189
      %s191 = sphi 0, %s189
      %s192 = sphi 0, %s191
      %s206 = sphi 0, %s192
      %s210 = sphi 0, %s210
      %s212 = sphi 0, %s210
      %s213 = sphi 0, %s212
      %s227 = sphi 0, %s213
      %s231 = sphi 0, %s231
      %s233 = sphi 0, %s231
      %s234 = sphi 0, %s233
      %s248 = sphi 0, %s234
      %s252 = sphi 0, %s252
      %s254 = sphi 0, %s252
      %s255 = sphi 0, %s254
      %s269 = sphi 0, %s255
      %s273 = sphi 0, %s273
      %s275 = sphi 0, %s273
      %s276 = sphi 0, %s275
      %s290 = sphi 0, %s276
      %s294 = sphi 0, %s294
      %s296 = sphi 0, %s294
      %s297 = sphi 0, %s296
      %s311 = sphi 0, %s297
      %s315 = sphi 0, %s315
      %s317 = sphi 0, %s315
      %s318 = sphi 0, %s317
      %s332 = sphi 0, %s318
      %s336 = sphi 0, %s336
      %s338 = sphi 0, %s336
      %s339 = sphi 0, %s338
      %s353 = sphi 0, %s339
      %s359 = sphi 0, %s361
      %s362 = sphi 0, %s359
      %s363 = sphi 0, %s362
      %s379 = sphi 0, %s363
    $region4: #{attention_block.1} parent=1 // loop_header_branch
      %27 = sbr.rel (%p25) target = $region8
    $region5: #{attention_block.1} parent=1 // loop_body
      %s29 = ssub.s32 %s24, 1
      %s30 = ssub.s32 %s24, 2
      %s31 = sadd.s32 %s24, 1
      %s32 = ssub.s32 %s24, %s31
      %p33 = scmp.eq.s32.totalorder %s32, 0
      %s35 = sadd.s32 %s34, 1
      %s36 = scalar_select %p33, %s34, %s35
      %p39 = pneg %p33
      %p40 = scmp.eq.s32.totalorder %s24, 1
      %p41 = por %p39, %p40
      %p42 = scmp.ne.s32.totalorder %s34, %s37
      %p43 = scmp.eq.s32.totalorder %s24, 0
      %p44 = por %p42, %p43
      %p45 = scmp.ne.s32.totalorder %s34, %s37
      %p46 = scmp.eq.s32.totalorder %s29, 1
      %p47 = por %p45, %p46
      %p48 = scmp.ne.s32.totalorder %s37, %s38
      %p49 = scmp.eq.s32.totalorder %s29, 0
      %p50 = por %p48, %p49
      %p51 = scmp.ne.s32.totalorder %s37, %s38
      %p52 = scmp.eq.s32.totalorder %s30, 1
      %p53 = por %p51, %p52
      %p55 = scmp.ne.s32.totalorder %s38, %s54
      %p56 = scmp.eq.s32.totalorder %s30, 0
      %p57 = por %p55, %p56
      %s58 = ssub.s32 %s24, %s31
      %p59 = scmp.eq.s32.totalorder %s58, 0
      %s61 = sadd.s32 %s60, 1
      %s62 = scalar_select %p59, %s60, %s61
      %p65 = pneg %p59
      %p66 = scmp.eq.s32.totalorder %s24, 1
      %p67 = por %p65, %p66
      %p68 = scmp.ne.s32.totalorder %s60, %s63
      %p69 = scmp.eq.s32.totalorder %s24, 0
      %p70 = por %p68, %p69
      %p71 = scmp.ne.s32.totalorder %s60, %s63
      %p72 = scmp.eq.s32.totalorder %s29, 1
      %p73 = por %p71, %p72
      %p74 = scmp.ne.s32.totalorder %s63, %s64
      %p75 = scmp.eq.s32.totalorder %s29, 0
      %p76 = por %p74, %p75
      %p77 = scmp.ne.s32.totalorder %s63, %s64
      %p78 = scmp.eq.s32.totalorder %s30, 1
      %p79 = por %p77, %p78
      %p81 = scmp.ne.s32.totalorder %s64, %s80
      %p82 = scmp.eq.s32.totalorder %s30, 0
      %p83 = por %p81, %p82
      %s85 = sadd.s32 %s84, 1
      %p88 = scmp.eq.s32.totalorder %s24, 1
      %p89 = scmp.ne.s32.totalorder %s84, %s86
      %p90 = scmp.eq.s32.totalorder %s24, 0
      %p91 = por %p89, %p90
      %p92 = scmp.ne.s32.totalorder %s84, %s86
      %p93 = scmp.eq.s32.totalorder %s29, 1
      %p94 = por %p92, %p93
      %p95 = scmp.ne.s32.totalorder %s86, %s87
      %p96 = scmp.eq.s32.totalorder %s29, 0
      %p97 = por %p95, %p96
      %p98 = scmp.ne.s32.totalorder %s86, %s87
      %p99 = scmp.eq.s32.totalorder %s30, 1
      %p100 = por %p98, %p99
      %p102 = scmp.ne.s32.totalorder %s87, %s101
      %p103 = scmp.eq.s32.totalorder %s30, 0
      %p104 = por %p102, %p103
      %s106 = sadd.s32 %s105, 1
      %p109 = scmp.eq.s32.totalorder %s24, 1
      %p110 = scmp.ne.s32.totalorder %s105, %s107
      %p111 = scmp.eq.s32.totalorder %s24, 0
      %p112 = por %p110, %p111
      %p113 = scmp.ne.s32.totalorder %s105, %s107
      %p114 = scmp.eq.s32.totalorder %s29, 1
      %p115 = por %p113, %p114
      %p116 = scmp.ne.s32.totalorder %s107, %s108
      %p117 = scmp.eq.s32.totalorder %s29, 0
      %p118 = por %p116, %p117
      %p119 = scmp.ne.s32.totalorder %s107, %s108
      %p120 = scmp.eq.s32.totalorder %s30, 1
      %p121 = por %p119, %p120
      %p123 = scmp.ne.s32.totalorder %s108, %s122
      %p124 = scmp.eq.s32.totalorder %s30, 0
      %p125 = por %p123, %p124
      %s127 = sadd.s32 %s126, 1
      %p130 = scmp.eq.s32.totalorder %s24, 1
      %p131 = scmp.ne.s32.totalorder %s126, %s128
      %p132 = scmp.eq.s32.totalorder %s24, 0
      %p133 = por %p131, %p132
      %p134 = scmp.ne.s32.totalorder %s126, %s128
      %p135 = scmp.eq.s32.totalorder %s29, 1
      %p136 = por %p134, %p135
      %p137 = scmp.ne.s32.totalorder %s128, %s129
      %p138 = scmp.eq.s32.totalorder %s29, 0
      %p139 = por %p137, %p138
      %p140 = scmp.ne.s32.totalorder %s128, %s129
      %p141 = scmp.eq.s32.totalorder %s30, 1
      %p142 = por %p140, %p141
      %p144 = scmp.ne.s32.totalorder %s129, %s143
      %p145 = scmp.eq.s32.totalorder %s30, 0
      %p146 = por %p144, %p145
      %s148 = sadd.s32 %s147, 1
      %p151 = scmp.eq.s32.totalorder %s24, 1
      %p152 = scmp.ne.s32.totalorder %s147, %s149
      %p153 = scmp.eq.s32.totalorder %s24, 0
      %p154 = por %p152, %p153
      %p155 = scmp.ne.s32.totalorder %s147, %s149
      %p156 = scmp.eq.s32.totalorder %s29, 1
      %p157 = por %p155, %p156
      %p158 = scmp.ne.s32.totalorder %s149, %s150
      %p159 = scmp.eq.s32.totalorder %s29, 0
      %p160 = por %p158, %p159
      %p161 = scmp.ne.s32.totalorder %s149, %s150
      %p162 = scmp.eq.s32.totalorder %s30, 1
      %p163 = por %p161, %p162
      %p165 = scmp.ne.s32.totalorder %s150, %s164
      %p166 = scmp.eq.s32.totalorder %s30, 0
      %p167 = por %p165, %p166
      %s169 = sadd.s32 %s168, 1
      %p172 = scmp.eq.s32.totalorder %s24, 1
      %p173 = scmp.ne.s32.totalorder %s168, %s170
      %p174 = scmp.eq.s32.totalorder %s24, 0
      %p175 = por %p173, %p174
      %p176 = scmp.ne.s32.totalorder %s168, %s170
      %p177 = scmp.eq.s32.totalorder %s29, 1
      %p178 = por %p176, %p177
      %p179 = scmp.ne.s32.totalorder %s170, %s171
      %p180 = scmp.eq.s32.totalorder %s29, 0
      %p181 = por %p179, %p180
      %p182 = scmp.ne.s32.totalorder %s170, %s171
      %p183 = scmp.eq.s32.totalorder %s30, 1
      %p184 = por %p182, %p183
      %p186 = scmp.ne.s32.totalorder %s171, %s185
      %p187 = scmp.eq.s32.totalorder %s30, 0
      %p188 = por %p186, %p187
      %s190 = sadd.s32 %s189, 1
      %p193 = scmp.eq.s32.totalorder %s24, 1
      %p194 = scmp.ne.s32.totalorder %s189, %s191
      %p195 = scmp.eq.s32.totalorder %s24, 0
      %p196 = por %p194, %p195
      %p197 = scmp.ne.s32.totalorder %s189, %s191
      %p198 = scmp.eq.s32.totalorder %s29, 1
      %p199 = por %p197, %p198
      %p200 = scmp.ne.s32.totalorder %s191, %s192
      %p201 = scmp.eq.s32.totalorder %s29, 0
      %p202 = por %p200, %p201
      %p203 = scmp.ne.s32.totalorder %s191, %s192
      %p204 = scmp.eq.s32.totalorder %s30, 1
      %p205 = por %p203, %p204
      %p207 = scmp.ne.s32.totalorder %s192, %s206
      %p208 = scmp.eq.s32.totalorder %s30, 0
      %p209 = por %p207, %p208
      %s211 = sadd.s32 %s210, 1
      %p214 = scmp.eq.s32.totalorder %s24, 1
      %p215 = scmp.ne.s32.totalorder %s210, %s212
      %p216 = scmp.eq.s32.totalorder %s24, 0
      %p217 = por %p215, %p216
      %p218 = scmp.ne.s32.totalorder %s210, %s212
      %p219 = scmp.eq.s32.totalorder %s29, 1
      %p220 = por %p218, %p219
      %p221 = scmp.ne.s32.totalorder %s212, %s213
      %p222 = scmp.eq.s32.totalorder %s29, 0
      %p223 = por %p221, %p222
      %p224 = scmp.ne.s32.totalorder %s212, %s213
      %p225 = scmp.eq.s32.totalorder %s30, 1
      %p226 = por %p224, %p225
      %p228 = scmp.ne.s32.totalorder %s213, %s227
      %p229 = scmp.eq.s32.totalorder %s30, 0
      %p230 = por %p228, %p229
      %s232 = sadd.s32 %s231, 1
      %p235 = scmp.eq.s32.totalorder %s24, 1
      %p236 = scmp.ne.s32.totalorder %s231, %s233
      %p237 = scmp.eq.s32.totalorder %s24, 0
      %p238 = por %p236, %p237
      %p239 = scmp.ne.s32.totalorder %s231, %s233
      %p240 = scmp.eq.s32.totalorder %s29, 1
      %p241 = por %p239, %p240
      %p242 = scmp.ne.s32.totalorder %s233, %s234
      %p243 = scmp.eq.s32.totalorder %s29, 0
      %p244 = por %p242, %p243
      %p245 = scmp.ne.s32.totalorder %s233, %s234
      %p246 = scmp.eq.s32.totalorder %s30, 1
      %p247 = por %p245, %p246
      %p249 = scmp.ne.s32.totalorder %s234, %s248
      %p250 = scmp.eq.s32.totalorder %s30, 0
      %p251 = por %p249, %p250
      %s253 = sadd.s32 %s252, 1
      %p256 = scmp.eq.s32.totalorder %s24, 1
      %p257 = scmp.ne.s32.totalorder %s252, %s254
      %p258 = scmp.eq.s32.totalorder %s24, 0
      %p259 = por %p257, %p258
      %p260 = scmp.ne.s32.totalorder %s252, %s254
      %p261 = scmp.eq.s32.totalorder %s29, 1
      %p262 = por %p260, %p261
      %p263 = scmp.ne.s32.totalorder %s254, %s255
      %p264 = scmp.eq.s32.totalorder %s29, 0
      %p265 = por %p263, %p264
      %p266 = scmp.ne.s32.totalorder %s254, %s255
      %p267 = scmp.eq.s32.totalorder %s30, 1
      %p268 = por %p266, %p267
      %p270 = scmp.ne.s32.totalorder %s255, %s269
      %p271 = scmp.eq.s32.totalorder %s30, 0
      %p272 = por %p270, %p271
      %s274 = sadd.s32 %s273, 1
      %p277 = scmp.eq.s32.totalorder %s24, 1
      %p278 = scmp.ne.s32.totalorder %s273, %s275
      %p279 = scmp.eq.s32.totalorder %s24, 0
      %p280 = por %p278, %p279
      %p281 = scmp.ne.s32.totalorder %s273, %s275
      %p282 = scmp.eq.s32.totalorder %s29, 1
      %p283 = por %p281, %p282
      %p284 = scmp.ne.s32.totalorder %s275, %s276
      %p285 = scmp.eq.s32.totalorder %s29, 0
      %p286 = por %p284, %p285
      %p287 = scmp.ne.s32.totalorder %s275, %s276
      %p288 = scmp.eq.s32.totalorder %s30, 1
      %p289 = por %p287, %p288
      %p291 = scmp.ne.s32.totalorder %s276, %s290
      %p292 = scmp.eq.s32.totalorder %s30, 0
      %p293 = por %p291, %p292
      %s295 = sadd.s32 %s294, 1
      %p298 = scmp.eq.s32.totalorder %s24, 1
      %p299 = scmp.ne.s32.totalorder %s294, %s296
      %p300 = scmp.eq.s32.totalorder %s24, 0
      %p301 = por %p299, %p300
      %p302 = scmp.ne.s32.totalorder %s294, %s296
      %p303 = scmp.eq.s32.totalorder %s29, 1
      %p304 = por %p302, %p303
      %p305 = scmp.ne.s32.totalorder %s296, %s297
      %p306 = scmp.eq.s32.totalorder %s29, 0
      %p307 = por %p305, %p306
      %p308 = scmp.ne.s32.totalorder %s296, %s297
      %p309 = scmp.eq.s32.totalorder %s30, 1
      %p310 = por %p308, %p309
      %p312 = scmp.ne.s32.totalorder %s297, %s311
      %p313 = scmp.eq.s32.totalorder %s30, 0
      %p314 = por %p312, %p313
      %s316 = sadd.s32 %s315, 1
      %p319 = scmp.eq.s32.totalorder %s24, 1
      %p320 = scmp.ne.s32.totalorder %s315, %s317
      %p321 = scmp.eq.s32.totalorder %s24, 0
      %p322 = por %p320, %p321
      %p323 = scmp.ne.s32.totalorder %s315, %s317
      %p324 = scmp.eq.s32.totalorder %s29, 1
      %p325 = por %p323, %p324
      %p326 = scmp.ne.s32.totalorder %s317, %s318
      %p327 = scmp.eq.s32.totalorder %s29, 0
      %p328 = por %p326, %p327
      %p329 = scmp.ne.s32.totalorder %s317, %s318
      %p330 = scmp.eq.s32.totalorder %s30, 1
      %p331 = por %p329, %p330
      %p333 = scmp.ne.s32.totalorder %s318, %s332
      %p334 = scmp.eq.s32.totalorder %s30, 0
      %p335 = por %p333, %p334
      %s337 = sadd.s32 %s336, 1
      %p340 = scmp.eq.s32.totalorder %s24, 1
      %p341 = scmp.ne.s32.totalorder %s336, %s338
      %p342 = scmp.eq.s32.totalorder %s24, 0
      %p343 = por %p341, %p342
      %p344 = scmp.ne.s32.totalorder %s336, %s338
      %p345 = scmp.eq.s32.totalorder %s29, 1
      %p346 = por %p344, %p345
      %p347 = scmp.ne.s32.totalorder %s338, %s339
      %p348 = scmp.eq.s32.totalorder %s29, 0
      %p349 = por %p347, %p348
      %p350 = scmp.ne.s32.totalorder %s338, %s339
      %p351 = scmp.eq.s32.totalorder %s30, 1
      %p352 = por %p350, %p351
      %p354 = scmp.ne.s32.totalorder %s339, %s353
      %p355 = scmp.eq.s32.totalorder %s30, 0
      %p356 = por %p354, %p355
      %s357 = ssub.s32 %s24, %s31
      %p358 = scmp.eq.s32.totalorder %s357, 0
      %s360 = sadd.s32 %s359, 1
      %s361 = scalar_select %p358, %s359, %s360
      %p364 = pneg %p358
      %p365 = scmp.eq.s32.totalorder %s24, 1
      %p366 = por %p364, %p365
      %p367 = scmp.ne.s32.totalorder %s359, %s362
      %p368 = scmp.eq.s32.totalorder %s24, 0
      %p369 = por %p367, %p368
      %p370 = scmp.ne.s32.totalorder %s359, %s362
      %p371 = scmp.eq.s32.totalorder %s29, 1
      %p372 = por %p370, %p371
      %p373 = scmp.ne.s32.totalorder %s362, %s363
      %p374 = scmp.eq.s32.totalorder %s29, 0
      %p375 = por %p373, %p374
      %p376 = scmp.ne.s32.totalorder %s362, %s363
      %p377 = scmp.eq.s32.totalorder %s30, 1
      %p378 = por %p376, %p377
      %p380 = scmp.ne.s32.totalorder %s363, %s379
      %p381 = scmp.eq.s32.totalorder %s30, 0
      %p382 = por %p380, %p381
      %p383 = scmp.le.s32.totalorder 1, %s24
      %p384 = scmp.lt.s32.totalorder %s24, 3
      %p385 = pnand %p383, %p384
      %p386 = pneg %p385
      // Predicated region
      $region9: #{attention_block.1} parent=5 // pred_check
        _
      $region10: #{attention_block.1} parent=5 // pred_check_branch
        %388 = sbr.rel (%p385) target = $region12
      $region11: #{attention_block.1} parent=5 // pred_region
        %s389 = ssub.s32 %s24, 1
        // Predicated region
        $region13: #{attention_block.1} parent=11 // pred_check
          %p390 = pneg %p97
        $region14: #{attention_block.1} parent=11 // pred_check_branch
          %392 = sbr.rel (%p390) target = $region16
        $region15: #{attention_block.1} parent=11 // pred_region
          _
        $region16: #{attention_block.1} parent=11 // pred_fallthru
          _
        // Predicated region
        $region17: #{attention_block.1} parent=11 // pred_check
          %p393 = pneg %p118
        $region18: #{attention_block.1} parent=11 // pred_check_branch
          %395 = sbr.rel (%p393) target = $region20
        $region19: #{attention_block.1} parent=11 // pred_region
          _
        $region20: #{attention_block.1} parent=11 // pred_fallthru
          _
        // Predicated region
        $region21: #{attention_block.1} parent=11 // pred_check
          %p396 = pneg %p139
        $region22: #{attention_block.1} parent=11 // pred_check_branch
          %398 = sbr.rel (%p396) target = $region24
        $region23: #{attention_block.1} parent=11 // pred_region
          _
        $region24: #{attention_block.1} parent=11 // pred_fallthru
          _
        // Predicated region
        $region25: #{attention_block.1} parent=11 // pred_check
          %p399 = pneg %p160
        $region26: #{attention_block.1} parent=11 // pred_check_branch
          %401 = sbr.rel (%p399) target = $region28
        $region27: #{attention_block.1} parent=11 // pred_region
          _
        $region28: #{attention_block.1} parent=11 // pred_fallthru
          _
        // Predicated region
        $region29: #{attention_block.1} parent=11 // pred_check
          %p402 = pneg %p181
        $region30: #{attention_block.1} parent=11 // pred_check_branch
          %404 = sbr.rel (%p402) target = $region32
        $region31: #{attention_block.1} parent=11 // pred_region
          _
        $region32: #{attention_block.1} parent=11 // pred_fallthru
          _
        // Predicated region
        $region33: #{attention_block.1} parent=11 // pred_check
          %p405 = pneg %p202
        $region34: #{attention_block.1} parent=11 // pred_check_branch
          %407 = sbr.rel (%p405) target = $region36
        $region35: #{attention_block.1} parent=11 // pred_region
          _
        $region36: #{attention_block.1} parent=11 // pred_fallthru
          _
        // Predicated region
        $region37: #{attention_block.1} parent=11 // pred_check
          %p408 = pneg %p223
        $region38: #{attention_block.1} parent=11 // pred_check_branch
          %410 = sbr.rel (%p408) target = $region40
        $region39: #{attention_block.1} parent=11 // pred_region
          _
        $region40: #{attention_block.1} parent=11 // pred_fallthru
          _
        // Predicated region
        $region41: #{attention_block.1} parent=11 // pred_check
          %p411 = pneg %p244
        $region42: #{attention_block.1} parent=11 // pred_check_branch
          %413 = sbr.rel (%p411) target = $region44
        $region43: #{attention_block.1} parent=11 // pred_region
          _
        $region44: #{attention_block.1} parent=11 // pred_fallthru
          _
        // Predicated region
        $region45: #{attention_block.1} parent=11 // pred_check
          %p414 = pneg %p265
        $region46: #{attention_block.1} parent=11 // pred_check_branch
          %416 = sbr.rel (%p414) target = $region48
        $region47: #{attention_block.1} parent=11 // pred_region
          _
        $region48: #{attention_block.1} parent=11 // pred_fallthru
          _
        // Predicated region
        $region49: #{attention_block.1} parent=11 // pred_check
          %p417 = pneg %p286
        $region50: #{attention_block.1} parent=11 // pred_check_branch
          %419 = sbr.rel (%p417) target = $region52
        $region51: #{attention_block.1} parent=11 // pred_region
          _
        $region52: #{attention_block.1} parent=11 // pred_fallthru
          _
        // Predicated region
        $region53: #{attention_block.1} parent=11 // pred_check
          %p420 = pneg %p307
        $region54: #{attention_block.1} parent=11 // pred_check_branch
          %422 = sbr.rel (%p420) target = $region56
        $region55: #{attention_block.1} parent=11 // pred_region
          _
        $region56: #{attention_block.1} parent=11 // pred_fallthru
          _
        // Predicated region
        $region57: #{attention_block.1} parent=11 // pred_check
          %p423 = pneg %p328
        $region58: #{attention_block.1} parent=11 // pred_check_branch
          %425 = sbr.rel (%p423) target = $region60
        $region59: #{attention_block.1} parent=11 // pred_region
          _
        $region60: #{attention_block.1} parent=11 // pred_fallthru
          _
        // Predicated region
        $region61: #{attention_block.1} parent=11 // pred_check
          %p426 = pneg %p349
        $region62: #{attention_block.1} parent=11 // pred_check_branch
          %428 = sbr.rel (%p426) target = $region64
        $region63: #{attention_block.1} parent=11 // pred_region
          _
        $region64: #{attention_block.1} parent=11 // pred_fallthru
          _
      $region12: #{attention_block.1} parent=5 // pred_fallthru
        _
      %p429 = scmp.lt.s32.totalorder %s24, 2
      // Predicated region
      $region65: #{attention_block.1} parent=5 // pred_check
        %p430 = pneg %p429
      $region66: #{attention_block.1} parent=5 // pred_check_branch
        %432 = sbr.rel (%p430) target = $region68
      $region67: #{attention_block.1} parent=5 // pred_region
        // Predicated region
        $region69: #{attention_block.1} parent=67 // pred_check
          %p433 = pneg %p44
        $region70: #{attention_block.1} parent=67 // pred_check_branch
          %435 = sbr.rel (%p433) target = $region72
        $region71: #{attention_block.1} parent=67 // pred_region
          %p436 = scmp.lt.s32.totalorder %s24, 1
          %s437 = scalar_select %p436, %s24, 1
          %s438 = smul.addr %s437, 16
          %s439 = smul.addr %s438, 8
          %s440 = scalar_lea.vmem %s0, %s439
        $region72: #{attention_block.1} parent=67 // pred_fallthru
          _
        // Predicated region
        $region73: #{attention_block.1} parent=67 // pred_check
          %p441 = pneg %p70
        $region74: #{attention_block.1} parent=67 // pred_check_branch
          %443 = sbr.rel (%p441) target = $region76
        $region75: #{attention_block.1} parent=67 // pred_region
          %p444 = scmp.lt.s32.totalorder %s24, 1
          %s445 = scalar_select %p444, %s24, 1
          %s446 = smul.addr %s445, 16
          %s447 = smul.addr %s446, 8
          %s448 = scalar_lea.vmem %s1, %s447
        $region76: #{attention_block.1} parent=67 // pred_fallthru
          _
      $region68: #{attention_block.1} parent=5 // pred_fallthru
        _
      %p449 = scmp.le.s32.totalorder 1, %s24
      %p450 = scmp.lt.s32.totalorder %s24, 3
      %p451 = pnand %p449, %p450
      %p452 = pneg %p451
      // Predicated region
      $region77: #{attention_block.1} parent=5 // pred_check
        _
      $region78: #{attention_block.1} parent=5 // pred_check_branch
        %454 = sbr.rel (%p451) target = $region80
      $region79: #{attention_block.1} parent=5 // pred_region
        %s455 = ssub.s32 %s24, 1
        %p456 = scmp.lt.s32.totalorder %s29, 1
        %s457 = scalar_select %p456, %s29, 1
        %s458 = smul.addr %s457, 16
        %s459 = smul.addr %s458, 8
        %s460 = scalar_lea.vmem %s0, %s459
        %p461 = pneg %p50
        %p462 = pneg %p47
        %p463 = scmp.lt.s32.totalorder %s29, 1
        %s464 = scalar_select %p463, %s29, 1
        %s465 = smul.addr %s464, 16
        %s466 = smul.addr %s465, 8
        %s467 = scalar_lea.vmem %s1, %s466
        %p468 = pneg %p76
        %p469 = pneg %p73
        %p470 = pneg %p97
        %p471 = pneg %p94
        %p472 = pneg %p118
        %p473 = pneg %p115
        %p474 = pneg %p139
        %p475 = pneg %p136
        %p476 = pneg %p160
        %p477 = pneg %p157
        %p478 = pneg %p181
        %p479 = pneg %p178
        %p480 = pneg %p202
        %p481 = pneg %p199
        %p482 = pneg %p223
        %p483 = pneg %p220
        %p484 = pneg %p244
        %p485 = pneg %p241
        %p486 = pneg %p265
        %p487 = pneg %p262
        %p488 = pneg %p286
        %p489 = pneg %p283
        %p490 = pneg %p307
        %p491 = pneg %p304
        %p492 = pneg %p328
        %p493 = pneg %p325
        %p494 = pneg %p349
        %p495 = pneg %p346
        %p496 = pneg %p375
        %p497 = pneg %p372
        %s498 = sand.u32 %s362, 1
        %s499 = scalar_lea.sflag [#allocation3], %s498
        %s500 = sand.u32 %s362, 1
        %s501 = smul.addr %s500, 128
        %s502 = scalar_lea.vmem [#allocation2], %s501
        %p503 = scmp.lt.s32.totalorder %s29, 1
        %s504 = scalar_select %p503, %s29, 1
        %s505 = smul.addr %s504, 16
        %s506 = smul.addr %s505, 8
        %s507 = scalar_lea.vmem %s0, %s506
        %p508 = scmp.lt.s32.totalorder %s29, 1
        %s509 = scalar_select %p508, %s29, 1
        %s510 = smul.addr %s509, 16
        %s511 = smul.addr %s510, 8
        %s512 = scalar_lea.vmem %s1, %s511
        %v514 = vld [vmem:[%s14] sm:$0xff]
        %v515 = vld [vmem:[%s14 + $0x8] sm:$0xff]
        %v516 = vld [vmem:[%s14 + $0x10] sm:$0xff]
        %v517 = vld [vmem:[%s14 + $0x18] sm:$0xff]
        %v518 = vld [vmem:[%s14 + $0x20] sm:$0xff]
        %v519 = vld [vmem:[%s14 + $0x28] sm:$0xff]
        %v520 = vld [vmem:[%s14 + $0x30] sm:$0xff]
        %v521 = vld [vmem:[%s14 + $0x38] sm:$0xff]
        %v522 = vld [vmem:[%s14 + $0x40] sm:$0xff]
        %v523 = vld [vmem:[%s14 + $0x48] sm:$0xff]
        %v524 = vld [vmem:[%s14 + $0x50] sm:$0xff]
        %v525 = vld [vmem:[%s14 + $0x58] sm:$0xff]
        %v526 = vld [vmem:[%s14 + $0x60] sm:$0xff]
        %v527 = vld [vmem:[%s14 + $0x68] sm:$0xff]
        %v528 = vld [vmem:[%s14 + $0x70] sm:$0xff]
        %v529 = vld [vmem:[%s14 + $0x78] sm:$0xff]
        %v530 = vld [vmem:[%s14 + $0x80] sm:$0xff]
        %v531 = vld [vmem:[%s14 + $0x88] sm:$0xff]
        %v532 = vld [vmem:[%s14 + $0x90] sm:$0xff]
        %v533 = vld [vmem:[%s14 + $0x98] sm:$0xff]
        %v534 = vld [vmem:[%s14 + $0xa0] sm:$0xff]
        %v535 = vld [vmem:[%s14 + $0xa8] sm:$0xff]
        %v536 = vld [vmem:[%s14 + $0xb0] sm:$0xff]
        %v537 = vld [vmem:[%s14 + $0xb8] sm:$0xff]
        %v538 = vld [vmem:[%s14 + $0xc0] sm:$0xff]
        %v539 = vld [vmem:[%s14 + $0xc8] sm:$0xff]
        %v540 = vld [vmem:[%s14 + $0xd0] sm:$0xff]
        %v541 = vld [vmem:[%s14 + $0xd8] sm:$0xff]
        %v542 = vld [vmem:[%s14 + $0xe0] sm:$0xff]
        %v543 = vld [vmem:[%s14 + $0xe8] sm:$0xff]
        %v544 = vld [vmem:[%s14 + $0xf0] sm:$0xff]
        %v545 = vld [vmem:[%s14 + $0xf8] sm:$0xff]
        %v546 = vld [vmem:[%s14 + $0x100] sm:$0xff]
        %v547 = vld [vmem:[%s14 + $0x108] sm:$0xff]
        %v548 = vld [vmem:[%s14 + $0x110] sm:$0xff]
        %v549 = vld [vmem:[%s14 + $0x118] sm:$0xff]
        %v550 = vld [vmem:[%s14 + $0x120] sm:$0xff]
        %v551 = vld [vmem:[%s14 + $0x128] sm:$0xff]
        %v552 = vld [vmem:[%s14 + $0x130] sm:$0xff]
        %v553 = vld [vmem:[%s14 + $0x138] sm:$0xff]
        %v554 = vld [vmem:[%s14 + $0x140] sm:$0xff]
        %v555 = vld [vmem:[%s14 + $0x148] sm:$0xff]
        %v556 = vld [vmem:[%s14 + $0x150] sm:$0xff]
        %v557 = vld [vmem:[%s14 + $0x158] sm:$0xff]
        %v558 = vld [vmem:[%s14 + $0x160] sm:$0xff]
        %v559 = vld [vmem:[%s14 + $0x168] sm:$0xff]
        %v560 = vld [vmem:[%s14 + $0x170] sm:$0xff]
        %v561 = vld [vmem:[%s14 + $0x178] sm:$0xff]
        %v562 = vld [vmem:[%s14 + $0x180] sm:$0xff]
        %v563 = vld [vmem:[%s14 + $0x188] sm:$0xff]
        %v564 = vld [vmem:[%s14 + $0x190] sm:$0xff]
        %v565 = vld [vmem:[%s14 + $0x198] sm:$0xff]
        %v566 = vld [vmem:[%s14 + $0x1a0] sm:$0xff]
        %v567 = vld [vmem:[%s14 + $0x1a8] sm:$0xff]
        %v568 = vld [vmem:[%s14 + $0x1b0] sm:$0xff]
        %v569 = vld [vmem:[%s14 + $0x1b8] sm:$0xff]
        %v570 = vld [vmem:[%s14 + $0x1c0] sm:$0xff]
        %v571 = vld [vmem:[%s14 + $0x1c8] sm:$0xff]
        %v572 = vld [vmem:[%s14 + $0x1d0] sm:$0xff]
        %v573 = vld [vmem:[%s14 + $0x1d8] sm:$0xff]
        %v574 = vld [vmem:[%s14 + $0x1e0] sm:$0xff]
        %v575 = vld [vmem:[%s14 + $0x1e8] sm:$0xff]
        %v576 = vld [vmem:[%s14 + $0x1f0] sm:$0xff]
        %v577 = vld [vmem:[%s14 + $0x1f8] sm:$0xff]
        %v578 = vld [vmem:[%s507] sm:$0xff]
        %v579 = vld [vmem:[%s507 + $0x8] sm:$0xff]
        %v580 = vld [vmem:[%s507 + $0x10] sm:$0xff]
        %v581 = vld [vmem:[%s507 + $0x18] sm:$0xff]
        %v582 = vld [vmem:[%s507 + $0x20] sm:$0xff]
        %v583 = vld [vmem:[%s507 + $0x28] sm:$0xff]
        %v584 = vld [vmem:[%s507 + $0x30] sm:$0xff]
        %v585 = vld [vmem:[%s507 + $0x38] sm:$0xff]
        %v586 = vld [vmem:[%s507 + $0x40] sm:$0xff]
        %v587 = vld [vmem:[%s507 + $0x48] sm:$0xff]
        %v588 = vld [vmem:[%s507 + $0x50] sm:$0xff]
        %v589 = vld [vmem:[%s507 + $0x58] sm:$0xff]
        %v590 = vld [vmem:[%s507 + $0x60] sm:$0xff]
        %v591 = vld [vmem:[%s507 + $0x68] sm:$0xff]
        %v592 = vld [vmem:[%s507 + $0x70] sm:$0xff]
        %v593 = vld [vmem:[%s507 + $0x78] sm:$0xff]
        %v594 = vld [vmem:[%s512] sm:$0xff]
        %v595 = vld [vmem:[%s512 + $0x8] sm:$0xff]
        %v596 = vld [vmem:[%s512 + $0x10] sm:$0xff]
        %v597 = vld [vmem:[%s512 + $0x18] sm:$0xff]
        %v598 = vld [vmem:[%s512 + $0x20] sm:$0xff]
        %v599 = vld [vmem:[%s512 + $0x28] sm:$0xff]
        %v600 = vld [vmem:[%s512 + $0x30] sm:$0xff]
        %v601 = vld [vmem:[%s512 + $0x38] sm:$0xff]
        %v602 = vld [vmem:[%s512 + $0x40] sm:$0xff]
        %v603 = vld [vmem:[%s512 + $0x48] sm:$0xff]
        %v604 = vld [vmem:[%s512 + $0x50] sm:$0xff]
        %v605 = vld [vmem:[%s512 + $0x58] sm:$0xff]
        %v606 = vld [vmem:[%s512 + $0x60] sm:$0xff]
        %v607 = vld [vmem:[%s512 + $0x68] sm:$0xff]
        %v608 = vld [vmem:[%s512 + $0x70] sm:$0xff]
        %v609 = vld [vmem:[%s512 + $0x78] sm:$0xff]
        %v610 = vpack.c.bf16 %v596, %v594
        %v611 = vpack.c.bf16 %v597, %v595
        %v612 = vpack.c.bf16 %v600, %v598
        %v613 = vpack.c.bf16 %v601, %v599
        %v614 = vpack.c.bf16 %v604, %v602
        %v615 = vpack.c.bf16 %v605, %v603
        %v616 = vpack.c.bf16 %v608, %v606
        %v617 = vpack.c.bf16 %v609, %v607
        %v618 = vld [vmem:[%s4] sm:$0xff]
        %v619 = vld [vmem:[%s4 + $0x8] sm:$0xff]
        %v620 = vld [vmem:[%s4 + $0x10] sm:$0xff]
        %v621 = vld [vmem:[%s4 + $0x18] sm:$0xff]
        %v622 = vld [vmem:[%s4 + $0x20] sm:$0xff]
        %v623 = vld [vmem:[%s4 + $0x28] sm:$0xff]
        %v624 = vld [vmem:[%s4 + $0x30] sm:$0xff]
        %v625 = vld [vmem:[%s4 + $0x38] sm:$0xff]
        %v626 = vld [vmem:[%s4 + $0x40] sm:$0xff]
        %v627 = vld [vmem:[%s4 + $0x48] sm:$0xff]
        %v628 = vld [vmem:[%s4 + $0x50] sm:$0xff]
        %v629 = vld [vmem:[%s4 + $0x58] sm:$0xff]
        %v630 = vld [vmem:[%s4 + $0x60] sm:$0xff]
        %v631 = vld [vmem:[%s4 + $0x68] sm:$0xff]
        %v632 = vld [vmem:[%s4 + $0x70] sm:$0xff]
        %v633 = vld [vmem:[%s4 + $0x78] sm:$0xff]
        %v634 = vld [vmem:[%s4 + $0x80] sm:$0xff]
        %v635 = vld [vmem:[%s4 + $0x88] sm:$0xff]
        %v636 = vld [vmem:[%s4 + $0x90] sm:$0xff]
        %v637 = vld [vmem:[%s4 + $0x98] sm:$0xff]
        %v638 = vld [vmem:[%s4 + $0xa0] sm:$0xff]
        %v639 = vld [vmem:[%s4 + $0xa8] sm:$0xff]
        %v640 = vld [vmem:[%s4 + $0xb0] sm:$0xff]
        %v641 = vld [vmem:[%s4 + $0xb8] sm:$0xff]
        %v642 = vld [vmem:[%s4 + $0xc0] sm:$0xff]
        %v643 = vld [vmem:[%s4 + $0xc8] sm:$0xff]
        %v644 = vld [vmem:[%s4 + $0xd0] sm:$0xff]
        %v645 = vld [vmem:[%s4 + $0xd8] sm:$0xff]
        %v646 = vld [vmem:[%s4 + $0xe0] sm:$0xff]
        %v647 = vld [vmem:[%s4 + $0xe8] sm:$0xff]
        %v648 = vld [vmem:[%s4 + $0xf0] sm:$0xff]
        %v649 = vld [vmem:[%s4 + $0xf8] sm:$0xff]
        %v650 = vld [vmem:[%s4 + $0x100] sm:$0xff]
        %v651 = vld [vmem:[%s4 + $0x108] sm:$0xff]
        %v652 = vld [vmem:[%s4 + $0x110] sm:$0xff]
        %v653 = vld [vmem:[%s4 + $0x118] sm:$0xff]
        %v654 = vld [vmem:[%s4 + $0x120] sm:$0xff]
        %v655 = vld [vmem:[%s4 + $0x128] sm:$0xff]
        %v656 = vld [vmem:[%s4 + $0x130] sm:$0xff]
        %v657 = vld [vmem:[%s4 + $0x138] sm:$0xff]
        %v658 = vld [vmem:[%s4 + $0x140] sm:$0xff]
        %v659 = vld [vmem:[%s4 + $0x148] sm:$0xff]
        %v660 = vld [vmem:[%s4 + $0x150] sm:$0xff]
        %v661 = vld [vmem:[%s4 + $0x158] sm:$0xff]
        %v662 = vld [vmem:[%s4 + $0x160] sm:$0xff]
        %v663 = vld [vmem:[%s4 + $0x168] sm:$0xff]
        %v664 = vld [vmem:[%s4 + $0x170] sm:$0xff]
        %v665 = vld [vmem:[%s4 + $0x178] sm:$0xff]
        %v666 = vld [vmem:[%s4 + $0x180] sm:$0xff]
        %v667 = vld [vmem:[%s4 + $0x188] sm:$0xff]
        %v668 = vld [vmem:[%s4 + $0x190] sm:$0xff]
        %v669 = vld [vmem:[%s4 + $0x198] sm:$0xff]
        %v670 = vld [vmem:[%s4 + $0x1a0] sm:$0xff]
        %v671 = vld [vmem:[%s4 + $0x1a8] sm:$0xff]
        %v672 = vld [vmem:[%s4 + $0x1b0] sm:$0xff]
        %v673 = vld [vmem:[%s4 + $0x1b8] sm:$0xff]
        %v674 = vld [vmem:[%s4 + $0x1c0] sm:$0xff]
        %v675 = vld [vmem:[%s4 + $0x1c8] sm:$0xff]
        %v676 = vld [vmem:[%s4 + $0x1d0] sm:$0xff]
        %v677 = vld [vmem:[%s4 + $0x1d8] sm:$0xff]
        %v678 = vld [vmem:[%s4 + $0x1e0] sm:$0xff]
        %v679 = vld [vmem:[%s4 + $0x1e8] sm:$0xff]
        %v680 = vld [vmem:[%s4 + $0x1f0] sm:$0xff]
        %v681 = vld [vmem:[%s4 + $0x1f8] sm:$0xff]
        %v682 = vld [vmem:[%s5] sm:$0xf]
        %v684 = vlaneseq
        %v685 = vshrl.u32 %v684, 7
        %v686 = vsub.s32 0, %v685
        %v687 = vrot.slane %v682, %v686
        %v688 = vlaneseq
        %v689 = vshrl.u32 %v688, 7
        %v690 = vsub.s32 1, %v689
        %v691 = vrot.slane %v682, %v690
        %v692 = vlaneseq
        %v693 = vshrl.u32 %v692, 7
        %v694 = vsub.s32 2, %v693
        %v695 = vrot.slane %v682, %v694
        %v696 = vlaneseq
        %v697 = vshrl.u32 %v696, 7
        %v698 = vsub.s32 3, %v697
        %v699 = vrot.slane %v682, %v698
        %v768 = vunpack.c.l.b16 %v618
        %v769 = vunpack.c.h.b16 %v618
        %v770 = vunpack.c.l.b16 %v619
        %v771 = vunpack.c.h.b16 %v619
        %v772 = vunpack.c.l.b16 %v620
        %v773 = vunpack.c.h.b16 %v620
        %v774 = vunpack.c.l.b16 %v621
        %v775 = vunpack.c.h.b16 %v621
        %v776 = vunpack.c.l.b16 %v622
        %v777 = vunpack.c.h.b16 %v622
        %v778 = vunpack.c.l.b16 %v623
        %v779 = vunpack.c.h.b16 %v623
        %v780 = vunpack.c.l.b16 %v624
        %v781 = vunpack.c.h.b16 %v624
        %v782 = vunpack.c.l.b16 %v625
        %v783 = vunpack.c.h.b16 %v625
        %v784 = vunpack.c.l.b16 %v626
        %v785 = vunpack.c.h.b16 %v626
        %v786 = vunpack.c.l.b16 %v627
        %v787 = vunpack.c.h.b16 %v627
        %v788 = vunpack.c.l.b16 %v628
        %v789 = vunpack.c.h.b16 %v628
        %v790 = vunpack.c.l.b16 %v629
        %v791 = vunpack.c.h.b16 %v629
        %v792 = vunpack.c.l.b16 %v630
        %v793 = vunpack.c.h.b16 %v630
        %v794 = vunpack.c.l.b16 %v631
        %v795 = vunpack.c.h.b16 %v631
        %v796 = vunpack.c.l.b16 %v632
        %v797 = vunpack.c.h.b16 %v632
        %v798 = vunpack.c.l.b16 %v633
        %v799 = vunpack.c.h.b16 %v633
        %v800 = vunpack.c.l.b16 %v634
        %v801 = vunpack.c.h.b16 %v634
        %v802 = vunpack.c.l.b16 %v635
        %v803 = vunpack.c.h.b16 %v635
        %v804 = vunpack.c.l.b16 %v636
        %v805 = vunpack.c.h.b16 %v636
        %v806 = vunpack.c.l.b16 %v637
        %v807 = vunpack.c.h.b16 %v637
        %v808 = vunpack.c.l.b16 %v638
        %v809 = vunpack.c.h.b16 %v638
        %v810 = vunpack.c.l.b16 %v639
        %v811 = vunpack.c.h.b16 %v639
        %v812 = vunpack.c.l.b16 %v640
        %v813 = vunpack.c.h.b16 %v640
        %v814 = vunpack.c.l.b16 %v641
        %v815 = vunpack.c.h.b16 %v641
        %v816 = vunpack.c.l.b16 %v642
        %v817 = vunpack.c.h.b16 %v642
        %v818 = vunpack.c.l.b16 %v643
        %v819 = vunpack.c.h.b16 %v643
        %v820 = vunpack.c.l.b16 %v644
        %v821 = vunpack.c.h.b16 %v644
        %v822 = vunpack.c.l.b16 %v645
        %v823 = vunpack.c.h.b16 %v645
        %v824 = vunpack.c.l.b16 %v646
        %v825 = vunpack.c.h.b16 %v646
        %v826 = vunpack.c.l.b16 %v647
        %v827 = vunpack.c.h.b16 %v647
        %v828 = vunpack.c.l.b16 %v648
        %v829 = vunpack.c.h.b16 %v648
        %v830 = vunpack.c.l.b16 %v649
        %v831 = vunpack.c.h.b16 %v649
        %v832 = vunpack.c.l.b16 %v650
        %v833 = vunpack.c.h.b16 %v650
        %v834 = vunpack.c.l.b16 %v651
        %v835 = vunpack.c.h.b16 %v651
        %v836 = vunpack.c.l.b16 %v652
        %v837 = vunpack.c.h.b16 %v652
        %v838 = vunpack.c.l.b16 %v653
        %v839 = vunpack.c.h.b16 %v653
        %v840 = vunpack.c.l.b16 %v654
        %v841 = vunpack.c.h.b16 %v654
        %v842 = vunpack.c.l.b16 %v655
        %v843 = vunpack.c.h.b16 %v655
        %v844 = vunpack.c.l.b16 %v656
        %v845 = vunpack.c.h.b16 %v656
        %v846 = vunpack.c.l.b16 %v657
        %v847 = vunpack.c.h.b16 %v657
        %v848 = vunpack.c.l.b16 %v658
        %v849 = vunpack.c.h.b16 %v658
        %v850 = vunpack.c.l.b16 %v659
        %v851 = vunpack.c.h.b16 %v659
        %v852 = vunpack.c.l.b16 %v660
        %v853 = vunpack.c.h.b16 %v660
        %v854 = vunpack.c.l.b16 %v661
        %v855 = vunpack.c.h.b16 %v661
        %v856 = vunpack.c.l.b16 %v662
        %v857 = vunpack.c.h.b16 %v662
        %v858 = vunpack.c.l.b16 %v663
        %v859 = vunpack.c.h.b16 %v663
        %v860 = vunpack.c.l.b16 %v664
        %v861 = vunpack.c.h.b16 %v664
        %v862 = vunpack.c.l.b16 %v665
        %v863 = vunpack.c.h.b16 %v665
        %v864 = vunpack.c.l.b16 %v666
        %v865 = vunpack.c.h.b16 %v666
        %v866 = vunpack.c.l.b16 %v667
        %v867 = vunpack.c.h.b16 %v667
        %v868 = vunpack.c.l.b16 %v668
        %v869 = vunpack.c.h.b16 %v668
        %v870 = vunpack.c.l.b16 %v669
        %v871 = vunpack.c.h.b16 %v669
        %v872 = vunpack.c.l.b16 %v670
        %v873 = vunpack.c.h.b16 %v670
        %v874 = vunpack.c.l.b16 %v671
        %v875 = vunpack.c.h.b16 %v671
        %v876 = vunpack.c.l.b16 %v672
        %v877 = vunpack.c.h.b16 %v672
        %v878 = vunpack.c.l.b16 %v673
        %v879 = vunpack.c.h.b16 %v673
        %v880 = vunpack.c.l.b16 %v674
        %v881 = vunpack.c.h.b16 %v674
        %v882 = vunpack.c.l.b16 %v675
        %v883 = vunpack.c.h.b16 %v675
        %v884 = vunpack.c.l.b16 %v676
        %v885 = vunpack.c.h.b16 %v676
        %v886 = vunpack.c.l.b16 %v677
        %v887 = vunpack.c.h.b16 %v677
        %v888 = vunpack.c.l.b16 %v678
        %v889 = vunpack.c.h.b16 %v678
        %v890 = vunpack.c.l.b16 %v679
        %v891 = vunpack.c.h.b16 %v679
        %v892 = vunpack.c.l.b16 %v680
        %v893 = vunpack.c.h.b16 %v680
        %v894 = vunpack.c.l.b16 %v681
        %v895 = vunpack.c.h.b16 %v681
        %v896 = vpack.c.b16 %v772, %v768
        %v897 = vpack.c.b16 %v773, %v769
        %v898 = vpack.c.b16 %v774, %v770
        %v899 = vpack.c.b16 %v775, %v771
        %v900 = vpack.c.b16 %v780, %v776
        %v901 = vpack.c.b16 %v781, %v777
        %v902 = vpack.c.b16 %v782, %v778
        %v903 = vpack.c.b16 %v783, %v779
        %v904 = vpack.c.b16 %v788, %v784
        %v905 = vpack.c.b16 %v789, %v785
        %v906 = vpack.c.b16 %v790, %v786
        %v907 = vpack.c.b16 %v791, %v787
        %v908 = vpack.c.b16 %v796, %v792
        %v909 = vpack.c.b16 %v797, %v793
        %v910 = vpack.c.b16 %v798, %v794
        %v911 = vpack.c.b16 %v799, %v795
        %v912 = vpack.c.b16 %v804, %v800
        %v913 = vpack.c.b16 %v805, %v801
        %v914 = vpack.c.b16 %v806, %v802
        %v915 = vpack.c.b16 %v807, %v803
        %v916 = vpack.c.b16 %v812, %v808
        %v917 = vpack.c.b16 %v813, %v809
        %v918 = vpack.c.b16 %v814, %v810
        %v919 = vpack.c.b16 %v815, %v811
        %v920 = vpack.c.b16 %v820, %v816
        %v921 = vpack.c.b16 %v821, %v817
        %v922 = vpack.c.b16 %v822, %v818
        %v923 = vpack.c.b16 %v823, %v819
        %v924 = vpack.c.b16 %v828, %v824
        %v925 = vpack.c.b16 %v829, %v825
        %v926 = vpack.c.b16 %v830, %v826
        %v927 = vpack.c.b16 %v831, %v827
        %v928 = vpack.c.b16 %v836, %v832
        %v929 = vpack.c.b16 %v837, %v833
        %v930 = vpack.c.b16 %v838, %v834
        %v931 = vpack.c.b16 %v839, %v835
        %v932 = vpack.c.b16 %v844, %v840
        %v933 = vpack.c.b16 %v845, %v841
        %v934 = vpack.c.b16 %v846, %v842
        %v935 = vpack.c.b16 %v847, %v843
        %v936 = vpack.c.b16 %v852, %v848
        %v937 = vpack.c.b16 %v853, %v849
        %v938 = vpack.c.b16 %v854, %v850
        %v939 = vpack.c.b16 %v855, %v851
        %v940 = vpack.c.b16 %v860, %v856
        %v941 = vpack.c.b16 %v861, %v857
        %v942 = vpack.c.b16 %v862, %v858
        %v943 = vpack.c.b16 %v863, %v859
        %v944 = vpack.c.b16 %v868, %v864
        %v945 = vpack.c.b16 %v869, %v865
        %v946 = vpack.c.b16 %v870, %v866
        %v947 = vpack.c.b16 %v871, %v867
        %v948 = vpack.c.b16 %v876, %v872
        %v949 = vpack.c.b16 %v877, %v873
        %v950 = vpack.c.b16 %v878, %v874
        %v951 = vpack.c.b16 %v879, %v875
        %v952 = vpack.c.b16 %v884, %v880
        %v953 = vpack.c.b16 %v885, %v881
        %v954 = vpack.c.b16 %v886, %v882
        %v955 = vpack.c.b16 %v887, %v883
        %v956 = vpack.c.b16 %v892, %v888
        %v957 = vpack.c.b16 %v893, %v889
        %v958 = vpack.c.b16 %v894, %v890
        %v959 = vpack.c.b16 %v895, %v891
        %1024 = vmatprep.subr.bf16.mxu0 %v925
        %1025 = vmatpush1.bf16.msra.mxu0 %v924
        %1026 = vmatprep.subr.bf16.mxu0 %v921
        %1027 = vmatpush1.bf16.msra.mxu0 %v920
        %1028 = vmatprep.subr.bf16.mxu0 %v917
        %1029 = vmatpush1.bf16.msra.mxu0 %v916
        %1030 = vmatprep.subr.bf16.mxu0 %v913
        %1031 = vmatpush1.bf16.msra.mxu0 %v912
        %1032 = vmatprep.subr.bf16.mxu0 %v909
        %1033 = vmatpush1.bf16.msra.mxu0 %v908
        %1034 = vmatprep.subr.bf16.mxu0 %v905
        %1035 = vmatpush1.bf16.msra.mxu0 %v904
        %1036 = vmatprep.subr.bf16.mxu0 %v901
        %1037 = vmatpush1.bf16.msra.mxu0 %v900
        %1038 = vmatprep.subr.bf16.mxu0 %v897
        %1039 = vmatpush1.bf16.msra.mxu0 %v896
        %1040 = vmatprep.subr.bf16.mxu0 %v957
        %1041 = vmatpush2.bf16.msra.mxu0 %v956
        %1042 = vmatprep.subr.bf16.mxu0 %v953
        %1043 = vmatpush2.bf16.msra.mxu0 %v952
        %1044 = vmatprep.subr.bf16.mxu0 %v949
        %1045 = vmatpush2.bf16.msra.mxu0 %v948
        %1046 = vmatprep.subr.bf16.mxu0 %v945
        %1047 = vmatpush2.bf16.msra.mxu0 %v944
        %1048 = vmatprep.subr.bf16.mxu0 %v941
        %1049 = vmatpush2.bf16.msra.mxu0 %v940
        %1050 = vmatprep.subr.bf16.mxu0 %v937
        %1051 = vmatpush2.bf16.msra.mxu0 %v936
        %1052 = vmatprep.subr.bf16.mxu0 %v933
        %1053 = vmatpush2.bf16.msra.mxu0 %v932
        %1054 = vmatprep.subr.bf16.mxu0 %v929
        %1055 = vmatpush2.bf16.msra.mxu0 %v928
        %1056 = vmatprep.mubr.bf16.mxu0 %v611
        %1057 = vmatmul.mubr.bf16.gmra.mxu0 %v610
        %v1058 = vpop.f32.mrf.mxu0
        %v1059 = vadd.f32 %v687, %v1058
        %v1060 = vpop.f32.mrf.mxu0
        %v1061 = vadd.f32 %v691, %v1060
        %v1062 = vpop.f32.mrf.mxu0
        %v1063 = vadd.f32 %v687, %v1062
        %v1064 = vpop.f32.mrf.mxu0
        %v1065 = vadd.f32 %v691, %v1064
        %1066 = vmatprep.mubr.bf16.mxu0 %v613
        %1067 = vmatmul.mubr.bf16.gmra.mxu0 %v612
        %v1068 = vpop.f32.mrf.mxu0
        %v1069 = vadd.f32 %v687, %v1068
        %v1070 = vpop.f32.mrf.mxu0
        %v1071 = vadd.f32 %v691, %v1070
        %v1072 = vpop.f32.mrf.mxu0
        %v1073 = vadd.f32 %v687, %v1072
        %v1074 = vpop.f32.mrf.mxu0
        %v1075 = vadd.f32 %v691, %v1074
        %1076 = vmatprep.mubr.bf16.mxu0 %v615
        %1077 = vmatmul.mubr.bf16.gmra.mxu0 %v614
        %v1078 = vpop.f32.mrf.mxu0
        %v1079 = vadd.f32 %v687, %v1078
        %v1080 = vpop.f32.mrf.mxu0
        %v1081 = vadd.f32 %v691, %v1080
        %v1082 = vpop.f32.mrf.mxu0
        %v1083 = vadd.f32 %v687, %v1082
        %v1084 = vpop.f32.mrf.mxu0
        %v1085 = vadd.f32 %v691, %v1084
        %1086 = vmatprep.mubr.bf16.mxu0 %v617
        %1087 = vmatmul.mubr.bf16.gmra.mxu0 %v616
        %v1088 = vpop.f32.mrf.mxu0
        %v1089 = vadd.f32 %v687, %v1088
        %v1090 = vpop.f32.mrf.mxu0
        %v1091 = vadd.f32 %v691, %v1090
        %v1092 = vpop.f32.mrf.mxu0
        %v1093 = vadd.f32 %v687, %v1092
        %v1094 = vpop.f32.mrf.mxu0
        %v1095 = vadd.f32 %v691, %v1094
        %1096 = vdwg.mxu0
        %1097 = vmatprep.subr.bf16.mxu0 %v927
        %1098 = vmatpush1.bf16.msra.mxu0 %v926
        %1099 = vmatprep.subr.bf16.mxu0 %v923
        %1100 = vmatpush1.bf16.msra.mxu0 %v922
        %1101 = vmatprep.subr.bf16.mxu0 %v919
        %1102 = vmatpush1.bf16.msra.mxu0 %v918
        %1103 = vmatprep.subr.bf16.mxu0 %v915
        %1104 = vmatpush1.bf16.msra.mxu0 %v914
        %1105 = vmatprep.subr.bf16.mxu0 %v911
        %1106 = vmatpush1.bf16.msra.mxu0 %v910
        %1107 = vmatprep.subr.bf16.mxu0 %v907
        %1108 = vmatpush1.bf16.msra.mxu0 %v906
        %1109 = vmatprep.subr.bf16.mxu0 %v903
        %1110 = vmatpush1.bf16.msra.mxu0 %v902
        %1111 = vmatprep.subr.bf16.mxu0 %v899
        %1112 = vmatpush1.bf16.msra.mxu0 %v898
        %1113 = vmatprep.subr.bf16.mxu0 %v959
        %1114 = vmatpush2.bf16.msra.mxu0 %v958
        %1115 = vmatprep.subr.bf16.mxu0 %v955
        %1116 = vmatpush2.bf16.msra.mxu0 %v954
        %1117 = vmatprep.subr.bf16.mxu0 %v951
        %1118 = vmatpush2.bf16.msra.mxu0 %v950
        %1119 = vmatprep.subr.bf16.mxu0 %v947
        %1120 = vmatpush2.bf16.msra.mxu0 %v946
        %1121 = vmatprep.subr.bf16.mxu0 %v943
        %1122 = vmatpush2.bf16.msra.mxu0 %v942
        %1123 = vmatprep.subr.bf16.mxu0 %v939
        %1124 = vmatpush2.bf16.msra.mxu0 %v938
        %1125 = vmatprep.subr.bf16.mxu0 %v935
        %1126 = vmatpush2.bf16.msra.mxu0 %v934
        %1127 = vmatprep.subr.bf16.mxu0 %v931
        %1128 = vmatpush2.bf16.msra.mxu0 %v930
        %1129 = vmatprep.mubr.bf16.mxu0 %v611
        %1130 = vmatmul.mubr.bf16.gmra.mxu0 %v610
        %v1131 = vpop.f32.mrf.mxu0
        %v1132 = vadd.f32 %v695, %v1131
        %v1133 = vpop.f32.mrf.mxu0
        %v1134 = vadd.f32 %v699, %v1133
        %v1135 = vpop.f32.mrf.mxu0
        %v1136 = vadd.f32 %v695, %v1135
        %v1137 = vpop.f32.mrf.mxu0
        %v1138 = vadd.f32 %v699, %v1137
        %1139 = vmatprep.mubr.bf16.mxu0 %v613
        %1140 = vmatmul.mubr.bf16.gmra.mxu0 %v612
        %v1141 = vpop.f32.mrf.mxu0
        %v1142 = vadd.f32 %v695, %v1141
        %v1143 = vpop.f32.mrf.mxu0
        %v1144 = vadd.f32 %v699, %v1143
        %v1145 = vpop.f32.mrf.mxu0
        %v1146 = vadd.f32 %v695, %v1145
        %v1147 = vpop.f32.mrf.mxu0
        %v1148 = vadd.f32 %v699, %v1147
        %1149 = vmatprep.mubr.bf16.mxu0 %v615
        %1150 = vmatmul.mubr.bf16.gmra.mxu0 %v614
        %v1151 = vpop.f32.mrf.mxu0
        %v1152 = vadd.f32 %v695, %v1151
        %v1153 = vpop.f32.mrf.mxu0
        %v1154 = vadd.f32 %v699, %v1153
        %v1155 = vpop.f32.mrf.mxu0
        %v1156 = vadd.f32 %v695, %v1155
        %v1157 = vpop.f32.mrf.mxu0
        %v1158 = vadd.f32 %v699, %v1157
        %1159 = vmatprep.mubr.bf16.mxu0 %v617
        %1160 = vmatmul.mubr.bf16.gmra.mxu0 %v616
        %v1161 = vpop.f32.mrf.mxu0
        %v1162 = vadd.f32 %v695, %v1161
        %v1163 = vpop.f32.mrf.mxu0
        %v1164 = vadd.f32 %v699, %v1163
        %v1165 = vpop.f32.mrf.mxu0
        %v1166 = vadd.f32 %v695, %v1165
        %v1167 = vpop.f32.mrf.mxu0
        %v1168 = vadd.f32 %v699, %v1167
        %1169 = vdwg.mxu0
        %v1170 = vld [vmem:[%s9] sm:$0xff]
        %v1171 = vld [vmem:[%s9 + $0x8] sm:$0xff]
        %v1172 = vld [vmem:[%s9 + $0x10] sm:$0xff]
        %v1173 = vld [vmem:[%s9 + $0x18] sm:$0xff]
        %v1174 = vld [vmem:[%s9 + $0x20] sm:$0xff]
        %v1175 = vld [vmem:[%s9 + $0x28] sm:$0xff]
        %v1176 = vld [vmem:[%s9 + $0x30] sm:$0xff]
        %v1177 = vld [vmem:[%s9 + $0x38] sm:$0xff]
        %v1178 = vld [vmem:[%s9 + $0x40] sm:$0xff]
        %v1179 = vld [vmem:[%s9 + $0x48] sm:$0xff]
        %v1180 = vld [vmem:[%s9 + $0x50] sm:$0xff]
        %v1181 = vld [vmem:[%s9 + $0x58] sm:$0xff]
        %v1182 = vld [vmem:[%s9 + $0x60] sm:$0xff]
        %v1183 = vld [vmem:[%s9 + $0x68] sm:$0xff]
        %v1184 = vld [vmem:[%s9 + $0x70] sm:$0xff]
        %v1185 = vld [vmem:[%s9 + $0x78] sm:$0xff]
        %v1186 = vld [vmem:[%s9 + $0x80] sm:$0xff]
        %v1187 = vld [vmem:[%s9 + $0x88] sm:$0xff]
        %v1188 = vld [vmem:[%s9 + $0x90] sm:$0xff]
        %v1189 = vld [vmem:[%s9 + $0x98] sm:$0xff]
        %v1190 = vld [vmem:[%s9 + $0xa0] sm:$0xff]
        %v1191 = vld [vmem:[%s9 + $0xa8] sm:$0xff]
        %v1192 = vld [vmem:[%s9 + $0xb0] sm:$0xff]
        %v1193 = vld [vmem:[%s9 + $0xb8] sm:$0xff]
        %v1194 = vld [vmem:[%s9 + $0xc0] sm:$0xff]
        %v1195 = vld [vmem:[%s9 + $0xc8] sm:$0xff]
        %v1196 = vld [vmem:[%s9 + $0xd0] sm:$0xff]
        %v1197 = vld [vmem:[%s9 + $0xd8] sm:$0xff]
        %v1198 = vld [vmem:[%s9 + $0xe0] sm:$0xff]
        %v1199 = vld [vmem:[%s9 + $0xe8] sm:$0xff]
        %v1200 = vld [vmem:[%s9 + $0xf0] sm:$0xff]
        %v1201 = vld [vmem:[%s9 + $0xf8] sm:$0xff]
        %v1202 = vld [vmem:[%s9 + $0x100] sm:$0xff]
        %v1203 = vld [vmem:[%s9 + $0x108] sm:$0xff]
        %v1204 = vld [vmem:[%s9 + $0x110] sm:$0xff]
        %v1205 = vld [vmem:[%s9 + $0x118] sm:$0xff]
        %v1206 = vld [vmem:[%s9 + $0x120] sm:$0xff]
        %v1207 = vld [vmem:[%s9 + $0x128] sm:$0xff]
        %v1208 = vld [vmem:[%s9 + $0x130] sm:$0xff]
        %v1209 = vld [vmem:[%s9 + $0x138] sm:$0xff]
        %v1210 = vld [vmem:[%s9 + $0x140] sm:$0xff]
        %v1211 = vld [vmem:[%s9 + $0x148] sm:$0xff]
        %v1212 = vld [vmem:[%s9 + $0x150] sm:$0xff]
        %v1213 = vld [vmem:[%s9 + $0x158] sm:$0xff]
        %v1214 = vld [vmem:[%s9 + $0x160] sm:$0xff]
        %v1215 = vld [vmem:[%s9 + $0x168] sm:$0xff]
        %v1216 = vld [vmem:[%s9 + $0x170] sm:$0xff]
        %v1217 = vld [vmem:[%s9 + $0x178] sm:$0xff]
        %v1218 = vld [vmem:[%s9 + $0x180] sm:$0xff]
        %v1219 = vld [vmem:[%s9 + $0x188] sm:$0xff]
        %v1220 = vld [vmem:[%s9 + $0x190] sm:$0xff]
        %v1221 = vld [vmem:[%s9 + $0x198] sm:$0xff]
        %v1222 = vld [vmem:[%s9 + $0x1a0] sm:$0xff]
        %v1223 = vld [vmem:[%s9 + $0x1a8] sm:$0xff]
        %v1224 = vld [vmem:[%s9 + $0x1b0] sm:$0xff]
        %v1225 = vld [vmem:[%s9 + $0x1b8] sm:$0xff]
        %v1226 = vld [vmem:[%s9 + $0x1c0] sm:$0xff]
        %v1227 = vld [vmem:[%s9 + $0x1c8] sm:$0xff]
        %v1228 = vld [vmem:[%s9 + $0x1d0] sm:$0xff]
        %v1229 = vld [vmem:[%s9 + $0x1d8] sm:$0xff]
        %v1230 = vld [vmem:[%s9 + $0x1e0] sm:$0xff]
        %v1231 = vld [vmem:[%s9 + $0x1e8] sm:$0xff]
        %v1232 = vld [vmem:[%s9 + $0x1f0] sm:$0xff]
        %v1233 = vld [vmem:[%s9 + $0x1f8] sm:$0xff]
        %v1234 = vld [vmem:[%s10] sm:$0xf]
        %v1236 = vlaneseq
        %v1237 = vshrl.u32 %v1236, 7
        %v1238 = vsub.s32 0, %v1237
        %v1239 = vrot.slane %v1234, %v1238
        %v1240 = vlaneseq
        %v1241 = vshrl.u32 %v1240, 7
        %v1242 = vsub.s32 1, %v1241
        %v1243 = vrot.slane %v1234, %v1242
        %v1244 = vlaneseq
        %v1245 = vshrl.u32 %v1244, 7
        %v1246 = vsub.s32 2, %v1245
        %v1247 = vrot.slane %v1234, %v1246
        %v1248 = vlaneseq
        %v1249 = vshrl.u32 %v1248, 7
        %v1250 = vsub.s32 3, %v1249
        %v1251 = vrot.slane %v1234, %v1250
        %v1320 = vunpack.c.l.b16 %v1170
        %v1321 = vunpack.c.h.b16 %v1170
        %v1322 = vunpack.c.l.b16 %v1171
        %v1323 = vunpack.c.h.b16 %v1171
        %v1324 = vunpack.c.l.b16 %v1172
        %v1325 = vunpack.c.h.b16 %v1172
        %v1326 = vunpack.c.l.b16 %v1173
        %v1327 = vunpack.c.h.b16 %v1173
        %v1328 = vunpack.c.l.b16 %v1174
        %v1329 = vunpack.c.h.b16 %v1174
        %v1330 = vunpack.c.l.b16 %v1175
        %v1331 = vunpack.c.h.b16 %v1175
        %v1332 = vunpack.c.l.b16 %v1176
        %v1333 = vunpack.c.h.b16 %v1176
        %v1334 = vunpack.c.l.b16 %v1177
        %v1335 = vunpack.c.h.b16 %v1177
        %v1336 = vunpack.c.l.b16 %v1178
        %v1337 = vunpack.c.h.b16 %v1178
        %v1338 = vunpack.c.l.b16 %v1179
        %v1339 = vunpack.c.h.b16 %v1179
        %v1340 = vunpack.c.l.b16 %v1180
        %v1341 = vunpack.c.h.b16 %v1180
        %v1342 = vunpack.c.l.b16 %v1181
        %v1343 = vunpack.c.h.b16 %v1181
        %v1344 = vunpack.c.l.b16 %v1182
        %v1345 = vunpack.c.h.b16 %v1182
        %v1346 = vunpack.c.l.b16 %v1183
        %v1347 = vunpack.c.h.b16 %v1183
        %v1348 = vunpack.c.l.b16 %v1184
        %v1349 = vunpack.c.h.b16 %v1184
        %v1350 = vunpack.c.l.b16 %v1185
        %v1351 = vunpack.c.h.b16 %v1185
        %v1352 = vunpack.c.l.b16 %v1186
        %v1353 = vunpack.c.h.b16 %v1186
        %v1354 = vunpack.c.l.b16 %v1187
        %v1355 = vunpack.c.h.b16 %v1187
        %v1356 = vunpack.c.l.b16 %v1188
        %v1357 = vunpack.c.h.b16 %v1188
        %v1358 = vunpack.c.l.b16 %v1189
        %v1359 = vunpack.c.h.b16 %v1189
        %v1360 = vunpack.c.l.b16 %v1190
        %v1361 = vunpack.c.h.b16 %v1190
        %v1362 = vunpack.c.l.b16 %v1191
        %v1363 = vunpack.c.h.b16 %v1191
        %v1364 = vunpack.c.l.b16 %v1192
        %v1365 = vunpack.c.h.b16 %v1192
        %v1366 = vunpack.c.l.b16 %v1193
        %v1367 = vunpack.c.h.b16 %v1193
        %v1368 = vunpack.c.l.b16 %v1194
        %v1369 = vunpack.c.h.b16 %v1194
        %v1370 = vunpack.c.l.b16 %v1195
        %v1371 = vunpack.c.h.b16 %v1195
        %v1372 = vunpack.c.l.b16 %v1196
        %v1373 = vunpack.c.h.b16 %v1196
        %v1374 = vunpack.c.l.b16 %v1197
        %v1375 = vunpack.c.h.b16 %v1197
        %v1376 = vunpack.c.l.b16 %v1198
        %v1377 = vunpack.c.h.b16 %v1198
        %v1378 = vunpack.c.l.b16 %v1199
        %v1379 = vunpack.c.h.b16 %v1199
        %v1380 = vunpack.c.l.b16 %v1200
        %v1381 = vunpack.c.h.b16 %v1200
        %v1382 = vunpack.c.l.b16 %v1201
        %v1383 = vunpack.c.h.b16 %v1201
        %v1384 = vunpack.c.l.b16 %v1202
        %v1385 = vunpack.c.h.b16 %v1202
        %v1386 = vunpack.c.l.b16 %v1203
        %v1387 = vunpack.c.h.b16 %v1203
        %v1388 = vunpack.c.l.b16 %v1204
        %v1389 = vunpack.c.h.b16 %v1204
        %v1390 = vunpack.c.l.b16 %v1205
        %v1391 = vunpack.c.h.b16 %v1205
        %v1392 = vunpack.c.l.b16 %v1206
        %v1393 = vunpack.c.h.b16 %v1206
        %v1394 = vunpack.c.l.b16 %v1207
        %v1395 = vunpack.c.h.b16 %v1207
        %v1396 = vunpack.c.l.b16 %v1208
        %v1397 = vunpack.c.h.b16 %v1208
        %v1398 = vunpack.c.l.b16 %v1209
        %v1399 = vunpack.c.h.b16 %v1209
        %v1400 = vunpack.c.l.b16 %v1210
        %v1401 = vunpack.c.h.b16 %v1210
        %v1402 = vunpack.c.l.b16 %v1211
        %v1403 = vunpack.c.h.b16 %v1211
        %v1404 = vunpack.c.l.b16 %v1212
        %v1405 = vunpack.c.h.b16 %v1212
        %v1406 = vunpack.c.l.b16 %v1213
        %v1407 = vunpack.c.h.b16 %v1213
        %v1408 = vunpack.c.l.b16 %v1214
        %v1409 = vunpack.c.h.b16 %v1214
        %v1410 = vunpack.c.l.b16 %v1215
        %v1411 = vunpack.c.h.b16 %v1215
        %v1412 = vunpack.c.l.b16 %v1216
        %v1413 = vunpack.c.h.b16 %v1216
        %v1414 = vunpack.c.l.b16 %v1217
        %v1415 = vunpack.c.h.b16 %v1217
        %v1416 = vunpack.c.l.b16 %v1218
        %v1417 = vunpack.c.h.b16 %v1218
        %v1418 = vunpack.c.l.b16 %v1219
        %v1419 = vunpack.c.h.b16 %v1219
        %v1420 = vunpack.c.l.b16 %v1220
        %v1421 = vunpack.c.h.b16 %v1220
        %v1422 = vunpack.c.l.b16 %v1221
        %v1423 = vunpack.c.h.b16 %v1221
        %v1424 = vunpack.c.l.b16 %v1222
        %v1425 = vunpack.c.h.b16 %v1222
        %v1426 = vunpack.c.l.b16 %v1223
        %v1427 = vunpack.c.h.b16 %v1223
        %v1428 = vunpack.c.l.b16 %v1224
        %v1429 = vunpack.c.h.b16 %v1224
        %v1430 = vunpack.c.l.b16 %v1225
        %v1431 = vunpack.c.h.b16 %v1225
        %v1432 = vunpack.c.l.b16 %v1226
        %v1433 = vunpack.c.h.b16 %v1226
        %v1434 = vunpack.c.l.b16 %v1227
        %v1435 = vunpack.c.h.b16 %v1227
        %v1436 = vunpack.c.l.b16 %v1228
        %v1437 = vunpack.c.h.b16 %v1228
        %v1438 = vunpack.c.l.b16 %v1229
        %v1439 = vunpack.c.h.b16 %v1229
        %v1440 = vunpack.c.l.b16 %v1230
        %v1441 = vunpack.c.h.b16 %v1230
        %v1442 = vunpack.c.l.b16 %v1231
        %v1443 = vunpack.c.h.b16 %v1231
        %v1444 = vunpack.c.l.b16 %v1232
        %v1445 = vunpack.c.h.b16 %v1232
        %v1446 = vunpack.c.l.b16 %v1233
        %v1447 = vunpack.c.h.b16 %v1233
        %v1448 = vpack.c.b16 %v1324, %v1320
        %v1449 = vpack.c.b16 %v1325, %v1321
        %v1450 = vpack.c.b16 %v1326, %v1322
        %v1451 = vpack.c.b16 %v1327, %v1323
        %v1452 = vpack.c.b16 %v1332, %v1328
        %v1453 = vpack.c.b16 %v1333, %v1329
        %v1454 = vpack.c.b16 %v1334, %v1330
        %v1455 = vpack.c.b16 %v1335, %v1331
        %v1456 = vpack.c.b16 %v1340, %v1336
        %v1457 = vpack.c.b16 %v1341, %v1337
        %v1458 = vpack.c.b16 %v1342, %v1338
        %v1459 = vpack.c.b16 %v1343, %v1339
        %v1460 = vpack.c.b16 %v1348, %v1344
        %v1461 = vpack.c.b16 %v1349, %v1345
        %v1462 = vpack.c.b16 %v1350, %v1346
        %v1463 = vpack.c.b16 %v1351, %v1347
        %v1464 = vpack.c.b16 %v1356, %v1352
        %v1465 = vpack.c.b16 %v1357, %v1353
        %v1466 = vpack.c.b16 %v1358, %v1354
        %v1467 = vpack.c.b16 %v1359, %v1355
        %v1468 = vpack.c.b16 %v1364, %v1360
        %v1469 = vpack.c.b16 %v1365, %v1361
        %v1470 = vpack.c.b16 %v1366, %v1362
        %v1471 = vpack.c.b16 %v1367, %v1363
        %v1472 = vpack.c.b16 %v1372, %v1368
        %v1473 = vpack.c.b16 %v1373, %v1369
        %v1474 = vpack.c.b16 %v1374, %v1370
        %v1475 = vpack.c.b16 %v1375, %v1371
        %v1476 = vpack.c.b16 %v1380, %v1376
        %v1477 = vpack.c.b16 %v1381, %v1377
        %v1478 = vpack.c.b16 %v1382, %v1378
        %v1479 = vpack.c.b16 %v1383, %v1379
        %v1480 = vpack.c.b16 %v1388, %v1384
        %v1481 = vpack.c.b16 %v1389, %v1385
        %v1482 = vpack.c.b16 %v1390, %v1386
        %v1483 = vpack.c.b16 %v1391, %v1387
        %v1484 = vpack.c.b16 %v1396, %v1392
        %v1485 = vpack.c.b16 %v1397, %v1393
        %v1486 = vpack.c.b16 %v1398, %v1394
        %v1487 = vpack.c.b16 %v1399, %v1395
        %v1488 = vpack.c.b16 %v1404, %v1400
        %v1489 = vpack.c.b16 %v1405, %v1401
        %v1490 = vpack.c.b16 %v1406, %v1402
        %v1491 = vpack.c.b16 %v1407, %v1403
        %v1492 = vpack.c.b16 %v1412, %v1408
        %v1493 = vpack.c.b16 %v1413, %v1409
        %v1494 = vpack.c.b16 %v1414, %v1410
        %v1495 = vpack.c.b16 %v1415, %v1411
        %v1496 = vpack.c.b16 %v1420, %v1416
        %v1497 = vpack.c.b16 %v1421, %v1417
        %v1498 = vpack.c.b16 %v1422, %v1418
        %v1499 = vpack.c.b16 %v1423, %v1419
        %v1500 = vpack.c.b16 %v1428, %v1424
        %v1501 = vpack.c.b16 %v1429, %v1425
        %v1502 = vpack.c.b16 %v1430, %v1426
        %v1503 = vpack.c.b16 %v1431, %v1427
        %v1504 = vpack.c.b16 %v1436, %v1432
        %v1505 = vpack.c.b16 %v1437, %v1433
        %v1506 = vpack.c.b16 %v1438, %v1434
        %v1507 = vpack.c.b16 %v1439, %v1435
        %v1508 = vpack.c.b16 %v1444, %v1440
        %v1509 = vpack.c.b16 %v1445, %v1441
        %v1510 = vpack.c.b16 %v1446, %v1442
        %v1511 = vpack.c.b16 %v1447, %v1443
        %1576 = vmatprep.subr.bf16.mxu0 %v1477
        %1577 = vmatpush1.bf16.msra.mxu0 %v1476
        %1578 = vmatprep.subr.bf16.mxu0 %v1473
        %1579 = vmatpush1.bf16.msra.mxu0 %v1472
        %1580 = vmatprep.subr.bf16.mxu0 %v1469
        %1581 = vmatpush1.bf16.msra.mxu0 %v1468
        %1582 = vmatprep.subr.bf16.mxu0 %v1465
        %1583 = vmatpush1.bf16.msra.mxu0 %v1464
        %1584 = vmatprep.subr.bf16.mxu0 %v1461
        %1585 = vmatpush1.bf16.msra.mxu0 %v1460
        %1586 = vmatprep.subr.bf16.mxu0 %v1457
        %1587 = vmatpush1.bf16.msra.mxu0 %v1456
        %1588 = vmatprep.subr.bf16.mxu0 %v1453
        %1589 = vmatpush1.bf16.msra.mxu0 %v1452
        %1590 = vmatprep.subr.bf16.mxu0 %v1449
        %1591 = vmatpush1.bf16.msra.mxu0 %v1448
        %1592 = vmatprep.subr.bf16.mxu0 %v1509
        %1593 = vmatpush2.bf16.msra.mxu0 %v1508
        %1594 = vmatprep.subr.bf16.mxu0 %v1505
        %1595 = vmatpush2.bf16.msra.mxu0 %v1504
        %1596 = vmatprep.subr.bf16.mxu0 %v1501
        %1597 = vmatpush2.bf16.msra.mxu0 %v1500
        %1598 = vmatprep.subr.bf16.mxu0 %v1497
        %1599 = vmatpush2.bf16.msra.mxu0 %v1496
        %1600 = vmatprep.subr.bf16.mxu0 %v1493
        %1601 = vmatpush2.bf16.msra.mxu0 %v1492
        %1602 = vmatprep.subr.bf16.mxu0 %v1489
        %1603 = vmatpush2.bf16.msra.mxu0 %v1488
        %1604 = vmatprep.subr.bf16.mxu0 %v1485
        %1605 = vmatpush2.bf16.msra.mxu0 %v1484
        %1606 = vmatprep.subr.bf16.mxu0 %v1481
        %1607 = vmatpush2.bf16.msra.mxu0 %v1480
        %1608 = vmatprep.mubr.bf16.mxu0 %v611
        %1609 = vmatmul.mubr.bf16.gmra.mxu0 %v610
        %v1610 = vpop.f32.mrf.mxu0
        %v1611 = vadd.f32 %v1239, %v1610
        %v1612 = vpop.f32.mrf.mxu0
        %v1613 = vadd.f32 %v1243, %v1612
        %v1614 = vpop.f32.mrf.mxu0
        %v1615 = vadd.f32 %v1239, %v1614
        %v1616 = vpop.f32.mrf.mxu0
        %v1617 = vadd.f32 %v1243, %v1616
        %1618 = vmatprep.mubr.bf16.mxu0 %v613
        %1619 = vmatmul.mubr.bf16.gmra.mxu0 %v612
        %v1620 = vpop.f32.mrf.mxu0
        %v1621 = vadd.f32 %v1239, %v1620
        %v1622 = vpop.f32.mrf.mxu0
        %v1623 = vadd.f32 %v1243, %v1622
        %v1624 = vpop.f32.mrf.mxu0
        %v1625 = vadd.f32 %v1239, %v1624
        %v1626 = vpop.f32.mrf.mxu0
        %v1627 = vadd.f32 %v1243, %v1626
        %1628 = vmatprep.mubr.bf16.mxu0 %v615
        %1629 = vmatmul.mubr.bf16.gmra.mxu0 %v614
        %v1630 = vpop.f32.mrf.mxu0
        %v1631 = vadd.f32 %v1239, %v1630
        %v1632 = vpop.f32.mrf.mxu0
        %v1633 = vadd.f32 %v1243, %v1632
        %v1634 = vpop.f32.mrf.mxu0
        %v1635 = vadd.f32 %v1239, %v1634
        %v1636 = vpop.f32.mrf.mxu0
        %v1637 = vadd.f32 %v1243, %v1636
        %1638 = vmatprep.mubr.bf16.mxu0 %v617
        %1639 = vmatmul.mubr.bf16.gmra.mxu0 %v616
        %v1640 = vpop.f32.mrf.mxu0
        %v1641 = vadd.f32 %v1239, %v1640
        %v1642 = vpop.f32.mrf.mxu0
        %v1643 = vadd.f32 %v1243, %v1642
        %v1644 = vpop.f32.mrf.mxu0
        %v1645 = vadd.f32 %v1239, %v1644
        %v1646 = vpop.f32.mrf.mxu0
        %v1647 = vadd.f32 %v1243, %v1646
        %1648 = vdwg.mxu0
        %1649 = vmatprep.subr.bf16.mxu0 %v1479
        %1650 = vmatpush1.bf16.msra.mxu0 %v1478
        %1651 = vmatprep.subr.bf16.mxu0 %v1475
        %1652 = vmatpush1.bf16.msra.mxu0 %v1474
        %1653 = vmatprep.subr.bf16.mxu0 %v1471
        %1654 = vmatpush1.bf16.msra.mxu0 %v1470
        %1655 = vmatprep.subr.bf16.mxu0 %v1467
        %1656 = vmatpush1.bf16.msra.mxu0 %v1466
        %1657 = vmatprep.subr.bf16.mxu0 %v1463
        %1658 = vmatpush1.bf16.msra.mxu0 %v1462
        %1659 = vmatprep.subr.bf16.mxu0 %v1459
        %1660 = vmatpush1.bf16.msra.mxu0 %v1458
        %1661 = vmatprep.subr.bf16.mxu0 %v1455
        %1662 = vmatpush1.bf16.msra.mxu0 %v1454
        %1663 = vmatprep.subr.bf16.mxu0 %v1451
        %1664 = vmatpush1.bf16.msra.mxu0 %v1450
        %1665 = vmatprep.subr.bf16.mxu0 %v1511
        %1666 = vmatpush2.bf16.msra.mxu0 %v1510
        %1667 = vmatprep.subr.bf16.mxu0 %v1507
        %1668 = vmatpush2.bf16.msra.mxu0 %v1506
        %1669 = vmatprep.subr.bf16.mxu0 %v1503
        %1670 = vmatpush2.bf16.msra.mxu0 %v1502
        %1671 = vmatprep.subr.bf16.mxu0 %v1499
        %1672 = vmatpush2.bf16.msra.mxu0 %v1498
        %1673 = vmatprep.subr.bf16.mxu0 %v1495
        %1674 = vmatpush2.bf16.msra.mxu0 %v1494
        %1675 = vmatprep.subr.bf16.mxu0 %v1491
        %1676 = vmatpush2.bf16.msra.mxu0 %v1490
        %1677 = vmatprep.subr.bf16.mxu0 %v1487
        %1678 = vmatpush2.bf16.msra.mxu0 %v1486
        %1679 = vmatprep.subr.bf16.mxu0 %v1483
        %1680 = vmatpush2.bf16.msra.mxu0 %v1482
        %1681 = vmatprep.mubr.bf16.mxu0 %v611
        %1682 = vmatmul.mubr.bf16.gmra.mxu0 %v610
        %v1683 = vpop.f32.mrf.mxu0
        %v1684 = vadd.f32 %v1247, %v1683
        %v1685 = vpop.f32.mrf.mxu0
        %v1686 = vadd.f32 %v1251, %v1685
        %v1687 = vpop.f32.mrf.mxu0
        %v1688 = vadd.f32 %v1247, %v1687
        %v1689 = vpop.f32.mrf.mxu0
        %v1690 = vadd.f32 %v1251, %v1689
        %1691 = vmatprep.mubr.bf16.mxu0 %v613
        %1692 = vmatmul.mubr.bf16.gmra.mxu0 %v612
        %v1693 = vpop.f32.mrf.mxu0
        %v1694 = vadd.f32 %v1247, %v1693
        %v1695 = vpop.f32.mrf.mxu0
        %v1696 = vadd.f32 %v1251, %v1695
        %v1697 = vpop.f32.mrf.mxu0
        %v1698 = vadd.f32 %v1247, %v1697
        %v1699 = vpop.f32.mrf.mxu0
        %v1700 = vadd.f32 %v1251, %v1699
        %1701 = vmatprep.mubr.bf16.mxu0 %v615
        %1702 = vmatmul.mubr.bf16.gmra.mxu0 %v614
        %v1703 = vpop.f32.mrf.mxu0
        %v1704 = vadd.f32 %v1247, %v1703
        %v1705 = vpop.f32.mrf.mxu0
        %v1706 = vadd.f32 %v1251, %v1705
        %v1707 = vpop.f32.mrf.mxu0
        %v1708 = vadd.f32 %v1247, %v1707
        %v1709 = vpop.f32.mrf.mxu0
        %v1710 = vadd.f32 %v1251, %v1709
        %1711 = vmatprep.mubr.bf16.mxu0 %v617
        %1712 = vmatmul.mubr.bf16.gmra.mxu0 %v616
        %v1713 = vpop.f32.mrf.mxu0
        %v1714 = vadd.f32 %v1247, %v1713
        %v1715 = vpop.f32.mrf.mxu0
        %v1716 = vadd.f32 %v1251, %v1715
        %v1717 = vpop.f32.mrf.mxu0
        %v1718 = vadd.f32 %v1247, %v1717
        %v1719 = vpop.f32.mrf.mxu0
        %v1720 = vadd.f32 %v1251, %v1719
        %1721 = vdwg.mxu0
        %v1722 = vpack.c.bf16 %v1063, %v1059
        %v1723 = vpack.c.bf16 %v1065, %v1061
        %v1724 = vpack.c.bf16 %v1073, %v1069
        %v1725 = vpack.c.bf16 %v1075, %v1071
        %v1726 = vpack.c.bf16 %v1083, %v1079
        %v1727 = vpack.c.bf16 %v1085, %v1081
        %v1728 = vpack.c.bf16 %v1093, %v1089
        %v1729 = vpack.c.bf16 %v1095, %v1091
        %v1730 = vpack.c.bf16 %v1136, %v1132
        %v1731 = vpack.c.bf16 %v1138, %v1134
        %v1732 = vpack.c.bf16 %v1146, %v1142
        %v1733 = vpack.c.bf16 %v1148, %v1144
        %v1734 = vpack.c.bf16 %v1156, %v1152
        %v1735 = vpack.c.bf16 %v1158, %v1154
        %v1736 = vpack.c.bf16 %v1166, %v1162
        %v1737 = vpack.c.bf16 %v1168, %v1164
        %v1738 = vpack.c.bf16 %v1615, %v1611
        %v1739 = vpack.c.bf16 %v1617, %v1613
        %v1740 = vpack.c.bf16 %v1625, %v1621
        %v1741 = vpack.c.bf16 %v1627, %v1623
        %v1742 = vpack.c.bf16 %v1635, %v1631
        %v1743 = vpack.c.bf16 %v1637, %v1633
        %v1744 = vpack.c.bf16 %v1645, %v1641
        %v1745 = vpack.c.bf16 %v1647, %v1643
        %v1746 = vpack.c.bf16 %v1688, %v1684
        %v1747 = vpack.c.bf16 %v1690, %v1686
        %v1748 = vpack.c.bf16 %v1698, %v1694
        %v1749 = vpack.c.bf16 %v1700, %v1696
        %v1750 = vpack.c.bf16 %v1708, %v1704
        %v1751 = vpack.c.bf16 %v1710, %v1706
        %v1752 = vpack.c.bf16 %v1718, %v1714
        %v1753 = vpack.c.bf16 %v1720, %v1716
        %v1754 = vpack.c.bf16 %v580, %v578
        %v1755 = vpack.c.bf16 %v581, %v579
        %v1756 = vpack.c.bf16 %v584, %v582
        %v1757 = vpack.c.bf16 %v585, %v583
        %v1758 = vpack.c.bf16 %v588, %v586
        %v1759 = vpack.c.bf16 %v589, %v587
        %v1760 = vpack.c.bf16 %v592, %v590
        %v1761 = vpack.c.bf16 %v593, %v591
        %v1762 = vld [vmem:[%s2] sm:$0xff]
        %v1763 = vld [vmem:[%s2 + $0x8] sm:$0xff]
        %v1764 = vld [vmem:[%s2 + $0x10] sm:$0xff]
        %v1765 = vld [vmem:[%s2 + $0x18] sm:$0xff]
        %v1766 = vld [vmem:[%s2 + $0x20] sm:$0xff]
        %v1767 = vld [vmem:[%s2 + $0x28] sm:$0xff]
        %v1768 = vld [vmem:[%s2 + $0x30] sm:$0xff]
        %v1769 = vld [vmem:[%s2 + $0x38] sm:$0xff]
        %v1770 = vld [vmem:[%s2 + $0x40] sm:$0xff]
        %v1771 = vld [vmem:[%s2 + $0x48] sm:$0xff]
        %v1772 = vld [vmem:[%s2 + $0x50] sm:$0xff]
        %v1773 = vld [vmem:[%s2 + $0x58] sm:$0xff]
        %v1774 = vld [vmem:[%s2 + $0x60] sm:$0xff]
        %v1775 = vld [vmem:[%s2 + $0x68] sm:$0xff]
        %v1776 = vld [vmem:[%s2 + $0x70] sm:$0xff]
        %v1777 = vld [vmem:[%s2 + $0x78] sm:$0xff]
        %v1778 = vld [vmem:[%s2 + $0x80] sm:$0xff]
        %v1779 = vld [vmem:[%s2 + $0x88] sm:$0xff]
        %v1780 = vld [vmem:[%s2 + $0x90] sm:$0xff]
        %v1781 = vld [vmem:[%s2 + $0x98] sm:$0xff]
        %v1782 = vld [vmem:[%s2 + $0xa0] sm:$0xff]
        %v1783 = vld [vmem:[%s2 + $0xa8] sm:$0xff]
        %v1784 = vld [vmem:[%s2 + $0xb0] sm:$0xff]
        %v1785 = vld [vmem:[%s2 + $0xb8] sm:$0xff]
        %v1786 = vld [vmem:[%s2 + $0xc0] sm:$0xff]
        %v1787 = vld [vmem:[%s2 + $0xc8] sm:$0xff]
        %v1788 = vld [vmem:[%s2 + $0xd0] sm:$0xff]
        %v1789 = vld [vmem:[%s2 + $0xd8] sm:$0xff]
        %v1790 = vld [vmem:[%s2 + $0xe0] sm:$0xff]
        %v1791 = vld [vmem:[%s2 + $0xe8] sm:$0xff]
        %v1792 = vld [vmem:[%s2 + $0xf0] sm:$0xff]
        %v1793 = vld [vmem:[%s2 + $0xf8] sm:$0xff]
        %v1794 = vld [vmem:[%s3] sm:$0x3]
        %v1796 = vlaneseq
        %v1797 = vshrl.u32 %v1796, 7
        %v1798 = vsub.s32 0, %v1797
        %v1799 = vrot.slane %v1794, %v1798
        %v1800 = vlaneseq
        %v1801 = vshrl.u32 %v1800, 7
        %v1802 = vsub.s32 1, %v1801
        %v1803 = vrot.slane %v1794, %v1802
        %v1838 = vunpack.c.l.b16 %v1762
        %v1839 = vunpack.c.h.b16 %v1762
        %v1840 = vunpack.c.l.b16 %v1763
        %v1841 = vunpack.c.h.b16 %v1763
        %v1842 = vunpack.c.l.b16 %v1764
        %v1843 = vunpack.c.h.b16 %v1764
        %v1844 = vunpack.c.l.b16 %v1765
        %v1845 = vunpack.c.h.b16 %v1765
        %v1846 = vunpack.c.l.b16 %v1766
        %v1847 = vunpack.c.h.b16 %v1766
        %v1848 = vunpack.c.l.b16 %v1767
        %v1849 = vunpack.c.h.b16 %v1767
        %v1850 = vunpack.c.l.b16 %v1768
        %v1851 = vunpack.c.h.b16 %v1768
        %v1852 = vunpack.c.l.b16 %v1769
        %v1853 = vunpack.c.h.b16 %v1769
        %v1854 = vunpack.c.l.b16 %v1770
        %v1855 = vunpack.c.h.b16 %v1770
        %v1856 = vunpack.c.l.b16 %v1771
        %v1857 = vunpack.c.h.b16 %v1771
        %v1858 = vunpack.c.l.b16 %v1772
        %v1859 = vunpack.c.h.b16 %v1772
        %v1860 = vunpack.c.l.b16 %v1773
        %v1861 = vunpack.c.h.b16 %v1773
        %v1862 = vunpack.c.l.b16 %v1774
        %v1863 = vunpack.c.h.b16 %v1774
        %v1864 = vunpack.c.l.b16 %v1775
        %v1865 = vunpack.c.h.b16 %v1775
        %v1866 = vunpack.c.l.b16 %v1776
        %v1867 = vunpack.c.h.b16 %v1776
        %v1868 = vunpack.c.l.b16 %v1777
        %v1869 = vunpack.c.h.b16 %v1777
        %v1870 = vunpack.c.l.b16 %v1778
        %v1871 = vunpack.c.h.b16 %v1778
        %v1872 = vunpack.c.l.b16 %v1779
        %v1873 = vunpack.c.h.b16 %v1779
        %v1874 = vunpack.c.l.b16 %v1780
        %v1875 = vunpack.c.h.b16 %v1780
        %v1876 = vunpack.c.l.b16 %v1781
        %v1877 = vunpack.c.h.b16 %v1781
        %v1878 = vunpack.c.l.b16 %v1782
        %v1879 = vunpack.c.h.b16 %v1782
        %v1880 = vunpack.c.l.b16 %v1783
        %v1881 = vunpack.c.h.b16 %v1783
        %v1882 = vunpack.c.l.b16 %v1784
        %v1883 = vunpack.c.h.b16 %v1784
        %v1884 = vunpack.c.l.b16 %v1785
        %v1885 = vunpack.c.h.b16 %v1785
        %v1886 = vunpack.c.l.b16 %v1786
        %v1887 = vunpack.c.h.b16 %v1786
        %v1888 = vunpack.c.l.b16 %v1787
        %v1889 = vunpack.c.h.b16 %v1787
        %v1890 = vunpack.c.l.b16 %v1788
        %v1891 = vunpack.c.h.b16 %v1788
        %v1892 = vunpack.c.l.b16 %v1789
        %v1893 = vunpack.c.h.b16 %v1789
        %v1894 = vunpack.c.l.b16 %v1790
        %v1895 = vunpack.c.h.b16 %v1790
        %v1896 = vunpack.c.l.b16 %v1791
        %v1897 = vunpack.c.h.b16 %v1791
        %v1898 = vunpack.c.l.b16 %v1792
        %v1899 = vunpack.c.h.b16 %v1792
        %v1900 = vunpack.c.l.b16 %v1793
        %v1901 = vunpack.c.h.b16 %v1793
        %v1902 = vpack.c.b16 %v1840, %v1838
        %v1903 = vpack.c.b16 %v1841, %v1839
        %v1904 = vpack.c.b16 %v1844, %v1842
        %v1905 = vpack.c.b16 %v1845, %v1843
        %v1906 = vpack.c.b16 %v1848, %v1846
        %v1907 = vpack.c.b16 %v1849, %v1847
        %v1908 = vpack.c.b16 %v1852, %v1850
        %v1909 = vpack.c.b16 %v1853, %v1851
        %v1910 = vpack.c.b16 %v1856, %v1854
        %v1911 = vpack.c.b16 %v1857, %v1855
        %v1912 = vpack.c.b16 %v1860, %v1858
        %v1913 = vpack.c.b16 %v1861, %v1859
        %v1914 = vpack.c.b16 %v1864, %v1862
        %v1915 = vpack.c.b16 %v1865, %v1863
        %v1916 = vpack.c.b16 %v1868, %v1866
        %v1917 = vpack.c.b16 %v1869, %v1867
        %v1918 = vpack.c.b16 %v1872, %v1870
        %v1919 = vpack.c.b16 %v1873, %v1871
        %v1920 = vpack.c.b16 %v1876, %v1874
        %v1921 = vpack.c.b16 %v1877, %v1875
        %v1922 = vpack.c.b16 %v1880, %v1878
        %v1923 = vpack.c.b16 %v1881, %v1879
        %v1924 = vpack.c.b16 %v1884, %v1882
        %v1925 = vpack.c.b16 %v1885, %v1883
        %v1926 = vpack.c.b16 %v1888, %v1886
        %v1927 = vpack.c.b16 %v1889, %v1887
        %v1928 = vpack.c.b16 %v1892, %v1890
        %v1929 = vpack.c.b16 %v1893, %v1891
        %v1930 = vpack.c.b16 %v1896, %v1894
        %v1931 = vpack.c.b16 %v1897, %v1895
        %v1932 = vpack.c.b16 %v1900, %v1898
        %v1933 = vpack.c.b16 %v1901, %v1899
        %1966 = vmatprep.subr.bf16.mxu0 %v1917
        %1967 = vmatpush1.bf16.msra.mxu0 %v1916
        %1968 = vmatprep.subr.bf16.mxu0 %v1915
        %1969 = vmatpush1.bf16.msra.mxu0 %v1914
        %1970 = vmatprep.subr.bf16.mxu0 %v1913
        %1971 = vmatpush1.bf16.msra.mxu0 %v1912
        %1972 = vmatprep.subr.bf16.mxu0 %v1911
        %1973 = vmatpush1.bf16.msra.mxu0 %v1910
        %1974 = vmatprep.subr.bf16.mxu0 %v1909
        %1975 = vmatpush1.bf16.msra.mxu0 %v1908
        %1976 = vmatprep.subr.bf16.mxu0 %v1907
        %1977 = vmatpush1.bf16.msra.mxu0 %v1906
        %1978 = vmatprep.subr.bf16.mxu0 %v1905
        %1979 = vmatpush1.bf16.msra.mxu0 %v1904
        %1980 = vmatprep.subr.bf16.mxu0 %v1903
        %1981 = vmatpush1.bf16.msra.mxu0 %v1902
        %1982 = vmatprep.subr.bf16.mxu0 %v1933
        %1983 = vmatpush2.bf16.msra.mxu0 %v1932
        %1984 = vmatprep.subr.bf16.mxu0 %v1931
        %1985 = vmatpush2.bf16.msra.mxu0 %v1930
        %1986 = vmatprep.subr.bf16.mxu0 %v1929
        %1987 = vmatpush2.bf16.msra.mxu0 %v1928
        %1988 = vmatprep.subr.bf16.mxu0 %v1927
        %1989 = vmatpush2.bf16.msra.mxu0 %v1926
        %1990 = vmatprep.subr.bf16.mxu0 %v1925
        %1991 = vmatpush2.bf16.msra.mxu0 %v1924
        %1992 = vmatprep.subr.bf16.mxu0 %v1923
        %1993 = vmatpush2.bf16.msra.mxu0 %v1922
        %1994 = vmatprep.subr.bf16.mxu0 %v1921
        %1995 = vmatpush2.bf16.msra.mxu0 %v1920
        %1996 = vmatprep.subr.bf16.mxu0 %v1919
        %1997 = vmatpush2.bf16.msra.mxu0 %v1918
        %1998 = vmatprep.mubr.bf16.mxu0 %v1755
        %1999 = vmatmul.mubr.bf16.gmra.mxu0 %v1754
        %v2000 = vpop.f32.mrf.mxu0
        %v2001 = vadd.f32 %v1799, %v2000
        %v2002 = vpop.f32.mrf.mxu0
        %v2003 = vadd.f32 %v1803, %v2002
        %v2004 = vpop.f32.mrf.mxu0
        %v2005 = vadd.f32 %v1799, %v2004
        %v2006 = vpop.f32.mrf.mxu0
        %v2007 = vadd.f32 %v1803, %v2006
        %2008 = vmatprep.mubr.bf16.mxu0 %v1757
        %2009 = vmatmul.mubr.bf16.gmra.mxu0 %v1756
        %v2010 = vpop.f32.mrf.mxu0
        %v2011 = vadd.f32 %v1799, %v2010
        %v2012 = vpop.f32.mrf.mxu0
        %v2013 = vadd.f32 %v1803, %v2012
        %v2014 = vpop.f32.mrf.mxu0
        %v2015 = vadd.f32 %v1799, %v2014
        %v2016 = vpop.f32.mrf.mxu0
        %v2017 = vadd.f32 %v1803, %v2016
        %2018 = vmatprep.mubr.bf16.mxu0 %v1759
        %2019 = vmatmul.mubr.bf16.gmra.mxu0 %v1758
        %v2020 = vpop.f32.mrf.mxu0
        %v2021 = vadd.f32 %v1799, %v2020
        %v2022 = vpop.f32.mrf.mxu0
        %v2023 = vadd.f32 %v1803, %v2022
        %v2024 = vpop.f32.mrf.mxu0
        %v2025 = vadd.f32 %v1799, %v2024
        %v2026 = vpop.f32.mrf.mxu0
        %v2027 = vadd.f32 %v1803, %v2026
        %2028 = vmatprep.mubr.bf16.mxu0 %v1761
        %2029 = vmatmul.mubr.bf16.gmra.mxu0 %v1760
        %v2030 = vpop.f32.mrf.mxu0
        %v2031 = vadd.f32 %v1799, %v2030
        %v2032 = vpop.f32.mrf.mxu0
        %v2033 = vadd.f32 %v1803, %v2032
        %v2034 = vpop.f32.mrf.mxu0
        %v2035 = vadd.f32 %v1799, %v2034
        %v2036 = vpop.f32.mrf.mxu0
        %v2037 = vadd.f32 %v1803, %v2036
        %2038 = vdwg.mxu0
        %v2039 = vpack.c.bf16 %v2005, %v2001
        %v2040 = vpack.c.bf16 %v2007, %v2003
        %v2041 = vpack.c.bf16 %v2015, %v2011
        %v2042 = vpack.c.bf16 %v2017, %v2013
        %v2043 = vpack.c.bf16 %v2025, %v2021
        %v2044 = vpack.c.bf16 %v2027, %v2023
        %v2045 = vpack.c.bf16 %v2035, %v2031
        %v2046 = vpack.c.bf16 %v2037, %v2033
        %v2047 = vld [vmem:[%s6] sm:$0xf]
        %v2048 = vld [vmem:[%s6 + $0x4] sm:$0xf]
        %v2049 = vld [vmem:[%s6 + $0x8] sm:$0xf]
        %v2050 = vld [vmem:[%s6 + $0xc] sm:$0xf]
        %v2051 = vld [vmem:[%s6 + $0x10] sm:$0xf]
        %v2052 = vld [vmem:[%s6 + $0x14] sm:$0xf]
        %v2053 = vld [vmem:[%s6 + $0x18] sm:$0xf]
        %v2054 = vld [vmem:[%s6 + $0x1c] sm:$0xf]
        %v2055 = vld [vmem:[%s6 + $0x20] sm:$0xf]
        %v2056 = vld [vmem:[%s6 + $0x24] sm:$0xf]
        %v2057 = vld [vmem:[%s6 + $0x28] sm:$0xf]
        %v2058 = vld [vmem:[%s6 + $0x2c] sm:$0xf]
        %v2059 = vld [vmem:[%s6 + $0x30] sm:$0xf]
        %v2060 = vld [vmem:[%s6 + $0x34] sm:$0xf]
        %v2061 = vld [vmem:[%s6 + $0x38] sm:$0xf]
        %v2062 = vld [vmem:[%s6 + $0x3c] sm:$0xf]
        %v2063 = vld [vmem:[%s6 + $0x40] sm:$0xf]
        %v2064 = vld [vmem:[%s6 + $0x44] sm:$0xf]
        %v2065 = vld [vmem:[%s6 + $0x48] sm:$0xf]
        %v2066 = vld [vmem:[%s6 + $0x4c] sm:$0xf]
        %v2067 = vld [vmem:[%s6 + $0x50] sm:$0xf]
        %v2068 = vld [vmem:[%s6 + $0x54] sm:$0xf]
        %v2069 = vld [vmem:[%s6 + $0x58] sm:$0xf]
        %v2070 = vld [vmem:[%s6 + $0x5c] sm:$0xf]
        %v2071 = vld [vmem:[%s6 + $0x60] sm:$0xf]
        %v2072 = vld [vmem:[%s6 + $0x64] sm:$0xf]
        %v2073 = vld [vmem:[%s6 + $0x68] sm:$0xf]
        %v2074 = vld [vmem:[%s6 + $0x6c] sm:$0xf]
        %v2075 = vld [vmem:[%s6 + $0x70] sm:$0xf]
        %v2076 = vld [vmem:[%s6 + $0x74] sm:$0xf]
        %v2077 = vld [vmem:[%s6 + $0x78] sm:$0xf]
        %v2078 = vld [vmem:[%s6 + $0x7c] sm:$0xf]
        %v2079 = vld [vmem:[%s6 + $0x80] sm:$0xf]
        %v2080 = vld [vmem:[%s6 + $0x84] sm:$0xf]
        %v2081 = vld [vmem:[%s6 + $0x88] sm:$0xf]
        %v2082 = vld [vmem:[%s6 + $0x8c] sm:$0xf]
        %v2083 = vld [vmem:[%s6 + $0x90] sm:$0xf]
        %v2084 = vld [vmem:[%s6 + $0x94] sm:$0xf]
        %v2085 = vld [vmem:[%s6 + $0x98] sm:$0xf]
        %v2086 = vld [vmem:[%s6 + $0x9c] sm:$0xf]
        %v2087 = vld [vmem:[%s6 + $0xa0] sm:$0xf]
        %v2088 = vld [vmem:[%s6 + $0xa4] sm:$0xf]
        %v2089 = vld [vmem:[%s6 + $0xa8] sm:$0xf]
        %v2090 = vld [vmem:[%s6 + $0xac] sm:$0xf]
        %v2091 = vld [vmem:[%s6 + $0xb0] sm:$0xf]
        %v2092 = vld [vmem:[%s6 + $0xb4] sm:$0xf]
        %v2093 = vld [vmem:[%s6 + $0xb8] sm:$0xf]
        %v2094 = vld [vmem:[%s6 + $0xbc] sm:$0xf]
        %v2095 = vld [vmem:[%s6 + $0xc0] sm:$0xf]
        %v2096 = vld [vmem:[%s6 + $0xc4] sm:$0xf]
        %v2097 = vld [vmem:[%s6 + $0xc8] sm:$0xf]
        %v2098 = vld [vmem:[%s6 + $0xcc] sm:$0xf]
        %v2099 = vld [vmem:[%s6 + $0xd0] sm:$0xf]
        %v2100 = vld [vmem:[%s6 + $0xd4] sm:$0xf]
        %v2101 = vld [vmem:[%s6 + $0xd8] sm:$0xf]
        %v2102 = vld [vmem:[%s6 + $0xdc] sm:$0xf]
        %v2103 = vld [vmem:[%s6 + $0xe0] sm:$0xf]
        %v2104 = vld [vmem:[%s6 + $0xe4] sm:$0xf]
        %v2105 = vld [vmem:[%s6 + $0xe8] sm:$0xf]
        %v2106 = vld [vmem:[%s6 + $0xec] sm:$0xf]
        %v2107 = vld [vmem:[%s6 + $0xf0] sm:$0xf]
        %v2108 = vld [vmem:[%s6 + $0xf4] sm:$0xf]
        %v2109 = vld [vmem:[%s6 + $0xf8] sm:$0xf]
        %v2110 = vld [vmem:[%s6 + $0xfc] sm:$0xf]
        %v2175 = vunpack.c.l.b16 %v514
        %v2176 = vunpack.c.h.b16 %v514
        %v2177 = vunpack.c.l.b16 %v515
        %v2178 = vunpack.c.h.b16 %v515
        %v2179 = vunpack.c.l.b16 %v516
        %v2180 = vunpack.c.h.b16 %v516
        %v2181 = vunpack.c.l.b16 %v517
        %v2182 = vunpack.c.h.b16 %v517
        %v2183 = vunpack.c.l.b16 %v518
        %v2184 = vunpack.c.h.b16 %v518
        %v2185 = vunpack.c.l.b16 %v519
        %v2186 = vunpack.c.h.b16 %v519
        %v2187 = vunpack.c.l.b16 %v520
        %v2188 = vunpack.c.h.b16 %v520
        %v2189 = vunpack.c.l.b16 %v521
        %v2190 = vunpack.c.h.b16 %v521
        %v2191 = vunpack.c.l.b16 %v522
        %v2192 = vunpack.c.h.b16 %v522
        %v2193 = vunpack.c.l.b16 %v523
        %v2194 = vunpack.c.h.b16 %v523
        %v2195 = vunpack.c.l.b16 %v524
        %v2196 = vunpack.c.h.b16 %v524
        %v2197 = vunpack.c.l.b16 %v525
        %v2198 = vunpack.c.h.b16 %v525
        %v2199 = vunpack.c.l.b16 %v526
        %v2200 = vunpack.c.h.b16 %v526
        %v2201 = vunpack.c.l.b16 %v527
        %v2202 = vunpack.c.h.b16 %v527
        %v2203 = vunpack.c.l.b16 %v528
        %v2204 = vunpack.c.h.b16 %v528
        %v2205 = vunpack.c.l.b16 %v529
        %v2206 = vunpack.c.h.b16 %v529
        %v2207 = vunpack.c.l.b16 %v530
        %v2208 = vunpack.c.h.b16 %v530
        %v2209 = vunpack.c.l.b16 %v531
        %v2210 = vunpack.c.h.b16 %v531
        %v2211 = vunpack.c.l.b16 %v532
        %v2212 = vunpack.c.h.b16 %v532
        %v2213 = vunpack.c.l.b16 %v533
        %v2214 = vunpack.c.h.b16 %v533
        %v2215 = vunpack.c.l.b16 %v534
        %v2216 = vunpack.c.h.b16 %v534
        %v2217 = vunpack.c.l.b16 %v535
        %v2218 = vunpack.c.h.b16 %v535
        %v2219 = vunpack.c.l.b16 %v536
        %v2220 = vunpack.c.h.b16 %v536
        %v2221 = vunpack.c.l.b16 %v537
        %v2222 = vunpack.c.h.b16 %v537
        %v2223 = vunpack.c.l.b16 %v538
        %v2224 = vunpack.c.h.b16 %v538
        %v2225 = vunpack.c.l.b16 %v539
        %v2226 = vunpack.c.h.b16 %v539
        %v2227 = vunpack.c.l.b16 %v540
        %v2228 = vunpack.c.h.b16 %v540
        %v2229 = vunpack.c.l.b16 %v541
        %v2230 = vunpack.c.h.b16 %v541
        %v2231 = vunpack.c.l.b16 %v542
        %v2232 = vunpack.c.h.b16 %v542
        %v2233 = vunpack.c.l.b16 %v543
        %v2234 = vunpack.c.h.b16 %v543
        %v2235 = vunpack.c.l.b16 %v544
        %v2236 = vunpack.c.h.b16 %v544
        %v2237 = vunpack.c.l.b16 %v545
        %v2238 = vunpack.c.h.b16 %v545
        %v2239 = vunpack.c.l.b16 %v546
        %v2240 = vunpack.c.h.b16 %v546
        %v2241 = vunpack.c.l.b16 %v547
        %v2242 = vunpack.c.h.b16 %v547
        %v2243 = vunpack.c.l.b16 %v548
        %v2244 = vunpack.c.h.b16 %v548
        %v2245 = vunpack.c.l.b16 %v549
        %v2246 = vunpack.c.h.b16 %v549
        %v2247 = vunpack.c.l.b16 %v550
        %v2248 = vunpack.c.h.b16 %v550
        %v2249 = vunpack.c.l.b16 %v551
        %v2250 = vunpack.c.h.b16 %v551
        %v2251 = vunpack.c.l.b16 %v552
        %v2252 = vunpack.c.h.b16 %v552
        %v2253 = vunpack.c.l.b16 %v553
        %v2254 = vunpack.c.h.b16 %v553
        %v2255 = vunpack.c.l.b16 %v554
        %v2256 = vunpack.c.h.b16 %v554
        %v2257 = vunpack.c.l.b16 %v555
        %v2258 = vunpack.c.h.b16 %v555
        %v2259 = vunpack.c.l.b16 %v556
        %v2260 = vunpack.c.h.b16 %v556
        %v2261 = vunpack.c.l.b16 %v557
        %v2262 = vunpack.c.h.b16 %v557
        %v2263 = vunpack.c.l.b16 %v558
        %v2264 = vunpack.c.h.b16 %v558
        %v2265 = vunpack.c.l.b16 %v559
        %v2266 = vunpack.c.h.b16 %v559
        %v2267 = vunpack.c.l.b16 %v560
        %v2268 = vunpack.c.h.b16 %v560
        %v2269 = vunpack.c.l.b16 %v561
        %v2270 = vunpack.c.h.b16 %v561
        %v2271 = vunpack.c.l.b16 %v562
        %v2272 = vunpack.c.h.b16 %v562
        %v2273 = vunpack.c.l.b16 %v563
        %v2274 = vunpack.c.h.b16 %v563
        %v2275 = vunpack.c.l.b16 %v564
        %v2276 = vunpack.c.h.b16 %v564
        %v2277 = vunpack.c.l.b16 %v565
        %v2278 = vunpack.c.h.b16 %v565
        %v2279 = vunpack.c.l.b16 %v566
        %v2280 = vunpack.c.h.b16 %v566
        %v2281 = vunpack.c.l.b16 %v567
        %v2282 = vunpack.c.h.b16 %v567
        %v2283 = vunpack.c.l.b16 %v568
        %v2284 = vunpack.c.h.b16 %v568
        %v2285 = vunpack.c.l.b16 %v569
        %v2286 = vunpack.c.h.b16 %v569
        %v2287 = vunpack.c.l.b16 %v570
        %v2288 = vunpack.c.h.b16 %v570
        %v2289 = vunpack.c.l.b16 %v571
        %v2290 = vunpack.c.h.b16 %v571
        %v2291 = vunpack.c.l.b16 %v572
        %v2292 = vunpack.c.h.b16 %v572
        %v2293 = vunpack.c.l.b16 %v573
        %v2294 = vunpack.c.h.b16 %v573
        %v2295 = vunpack.c.l.b16 %v574
        %v2296 = vunpack.c.h.b16 %v574
        %v2297 = vunpack.c.l.b16 %v575
        %v2298 = vunpack.c.h.b16 %v575
        %v2299 = vunpack.c.l.b16 %v576
        %v2300 = vunpack.c.h.b16 %v576
        %v2301 = vunpack.c.l.b16 %v577
        %v2302 = vunpack.c.h.b16 %v577
        %v2303 = vpack.c.b16 %v2177, %v2175
        %v2304 = vpack.c.b16 %v2178, %v2176
        %v2305 = vpack.c.b16 %v2181, %v2179
        %v2306 = vpack.c.b16 %v2182, %v2180
        %v2307 = vpack.c.b16 %v2185, %v2183
        %v2308 = vpack.c.b16 %v2186, %v2184
        %v2309 = vpack.c.b16 %v2189, %v2187
        %v2310 = vpack.c.b16 %v2190, %v2188
        %v2311 = vpack.c.b16 %v2193, %v2191
        %v2312 = vpack.c.b16 %v2194, %v2192
        %v2313 = vpack.c.b16 %v2197, %v2195
        %v2314 = vpack.c.b16 %v2198, %v2196
        %v2315 = vpack.c.b16 %v2201, %v2199
        %v2316 = vpack.c.b16 %v2202, %v2200
        %v2317 = vpack.c.b16 %v2205, %v2203
        %v2318 = vpack.c.b16 %v2206, %v2204
        %v2319 = vpack.c.b16 %v2209, %v2207
        %v2320 = vpack.c.b16 %v2210, %v2208
        %v2321 = vpack.c.b16 %v2213, %v2211
        %v2322 = vpack.c.b16 %v2214, %v2212
        %v2323 = vpack.c.b16 %v2217, %v2215
        %v2324 = vpack.c.b16 %v2218, %v2216
        %v2325 = vpack.c.b16 %v2221, %v2219
        %v2326 = vpack.c.b16 %v2222, %v2220
        %v2327 = vpack.c.b16 %v2225, %v2223
        %v2328 = vpack.c.b16 %v2226, %v2224
        %v2329 = vpack.c.b16 %v2229, %v2227
        %v2330 = vpack.c.b16 %v2230, %v2228
        %v2331 = vpack.c.b16 %v2233, %v2231
        %v2332 = vpack.c.b16 %v2234, %v2232
        %v2333 = vpack.c.b16 %v2237, %v2235
        %v2334 = vpack.c.b16 %v2238, %v2236
        %v2335 = vpack.c.b16 %v2241, %v2239
        %v2336 = vpack.c.b16 %v2242, %v2240
        %v2337 = vpack.c.b16 %v2245, %v2243
        %v2338 = vpack.c.b16 %v2246, %v2244
        %v2339 = vpack.c.b16 %v2249, %v2247
        %v2340 = vpack.c.b16 %v2250, %v2248
        %v2341 = vpack.c.b16 %v2253, %v2251
        %v2342 = vpack.c.b16 %v2254, %v2252
        %v2343 = vpack.c.b16 %v2257, %v2255
        %v2344 = vpack.c.b16 %v2258, %v2256
        %v2345 = vpack.c.b16 %v2261, %v2259
        %v2346 = vpack.c.b16 %v2262, %v2260
        %v2347 = vpack.c.b16 %v2265, %v2263
        %v2348 = vpack.c.b16 %v2266, %v2264
        %v2349 = vpack.c.b16 %v2269, %v2267
        %v2350 = vpack.c.b16 %v2270, %v2268
        %v2351 = vpack.c.b16 %v2273, %v2271
        %v2352 = vpack.c.b16 %v2274, %v2272
        %v2353 = vpack.c.b16 %v2277, %v2275
        %v2354 = vpack.c.b16 %v2278, %v2276
        %v2355 = vpack.c.b16 %v2281, %v2279
        %v2356 = vpack.c.b16 %v2282, %v2280
        %v2357 = vpack.c.b16 %v2285, %v2283
        %v2358 = vpack.c.b16 %v2286, %v2284
        %v2359 = vpack.c.b16 %v2289, %v2287
        %v2360 = vpack.c.b16 %v2290, %v2288
        %v2361 = vpack.c.b16 %v2293, %v2291
        %v2362 = vpack.c.b16 %v2294, %v2292
        %v2363 = vpack.c.b16 %v2297, %v2295
        %v2364 = vpack.c.b16 %v2298, %v2296
        %v2365 = vpack.c.b16 %v2301, %v2299
        %v2366 = vpack.c.b16 %v2302, %v2300
        %v2431 = vmul.bf16 %v2039, %v2303
        %v2432 = vmul.bf16 %v2040, %v2304
        %v2433 = vmul.bf16 %v2041, %v2305
        %v2434 = vmul.bf16 %v2042, %v2306
        %v2435 = vmul.bf16 %v2043, %v2307
        %v2436 = vmul.bf16 %v2044, %v2308
        %v2437 = vmul.bf16 %v2045, %v2309
        %v2438 = vmul.bf16 %v2046, %v2310
        %v2439 = vmul.bf16 %v2039, %v2311
        %v2440 = vmul.bf16 %v2040, %v2312
        %v2441 = vmul.bf16 %v2041, %v2313
        %v2442 = vmul.bf16 %v2042, %v2314
        %v2443 = vmul.bf16 %v2043, %v2315
        %v2444 = vmul.bf16 %v2044, %v2316
        %v2445 = vmul.bf16 %v2045, %v2317
        %v2446 = vmul.bf16 %v2046, %v2318
        %v2447 = vmul.bf16 %v2039, %v2319
        %v2448 = vmul.bf16 %v2040, %v2320
        %v2449 = vmul.bf16 %v2041, %v2321
        %v2450 = vmul.bf16 %v2042, %v2322
        %v2451 = vmul.bf16 %v2043, %v2323
        %v2452 = vmul.bf16 %v2044, %v2324
        %v2453 = vmul.bf16 %v2045, %v2325
        %v2454 = vmul.bf16 %v2046, %v2326
        %v2455 = vmul.bf16 %v2039, %v2327
        %v2456 = vmul.bf16 %v2040, %v2328
        %v2457 = vmul.bf16 %v2041, %v2329
        %v2458 = vmul.bf16 %v2042, %v2330
        %v2459 = vmul.bf16 %v2043, %v2331
        %v2460 = vmul.bf16 %v2044, %v2332
        %v2461 = vmul.bf16 %v2045, %v2333
        %v2462 = vmul.bf16 %v2046, %v2334
        %v2463 = vmul.bf16 %v2039, %v2335
        %v2464 = vmul.bf16 %v2040, %v2336
        %v2465 = vmul.bf16 %v2041, %v2337
        %v2466 = vmul.bf16 %v2042, %v2338
        %v2467 = vmul.bf16 %v2043, %v2339
        %v2468 = vmul.bf16 %v2044, %v2340
        %v2469 = vmul.bf16 %v2045, %v2341
        %v2470 = vmul.bf16 %v2046, %v2342
        %v2471 = vmul.bf16 %v2039, %v2343
        %v2472 = vmul.bf16 %v2040, %v2344
        %v2473 = vmul.bf16 %v2041, %v2345
        %v2474 = vmul.bf16 %v2042, %v2346
        %v2475 = vmul.bf16 %v2043, %v2347
        %v2476 = vmul.bf16 %v2044, %v2348
        %v2477 = vmul.bf16 %v2045, %v2349
        %v2478 = vmul.bf16 %v2046, %v2350
        %v2479 = vmul.bf16 %v2039, %v2351
        %v2480 = vmul.bf16 %v2040, %v2352
        %v2481 = vmul.bf16 %v2041, %v2353
        %v2482 = vmul.bf16 %v2042, %v2354
        %v2483 = vmul.bf16 %v2043, %v2355
        %v2484 = vmul.bf16 %v2044, %v2356
        %v2485 = vmul.bf16 %v2045, %v2357
        %v2486 = vmul.bf16 %v2046, %v2358
        %v2487 = vmul.bf16 %v2039, %v2359
        %v2488 = vmul.bf16 %v2040, %v2360
        %v2489 = vmul.bf16 %v2041, %v2361
        %v2490 = vmul.bf16 %v2042, %v2362
        %v2491 = vmul.bf16 %v2043, %v2363
        %v2492 = vmul.bf16 %v2044, %v2364
        %v2493 = vmul.bf16 %v2045, %v2365
        %v2494 = vmul.bf16 %v2046, %v2366
        %v2495 = vunpack.c.l.bf16 %v2047
        %v2496 = vunpack.c.l.bf16 %v2048
        %v2497 = vunpack.c.l.bf16 %v2049
        %v2498 = vunpack.c.l.bf16 %v2050
        %v2499 = vunpack.c.l.bf16 %v2051
        %v2500 = vunpack.c.l.bf16 %v2052
        %v2501 = vunpack.c.l.bf16 %v2053
        %v2502 = vunpack.c.l.bf16 %v2054
        %v2503 = vunpack.c.l.bf16 %v2055
        %v2504 = vunpack.c.l.bf16 %v2056
        %v2505 = vunpack.c.l.bf16 %v2057
        %v2506 = vunpack.c.l.bf16 %v2058
        %v2507 = vunpack.c.l.bf16 %v2059
        %v2508 = vunpack.c.l.bf16 %v2060
        %v2509 = vunpack.c.l.bf16 %v2061
        %v2510 = vunpack.c.l.bf16 %v2062
        %v2511 = vunpack.c.l.bf16 %v2063
        %v2512 = vunpack.c.l.bf16 %v2064
        %v2513 = vunpack.c.l.bf16 %v2065
        %v2514 = vunpack.c.l.bf16 %v2066
        %v2515 = vunpack.c.l.bf16 %v2067
        %v2516 = vunpack.c.l.bf16 %v2068
        %v2517 = vunpack.c.l.bf16 %v2069
        %v2518 = vunpack.c.l.bf16 %v2070
        %v2519 = vunpack.c.l.bf16 %v2071
        %v2520 = vunpack.c.l.bf16 %v2072
        %v2521 = vunpack.c.l.bf16 %v2073
        %v2522 = vunpack.c.l.bf16 %v2074
        %v2523 = vunpack.c.l.bf16 %v2075
        %v2524 = vunpack.c.l.bf16 %v2076
        %v2525 = vunpack.c.l.bf16 %v2077
        %v2526 = vunpack.c.l.bf16 %v2078
        %v2527 = vunpack.c.l.bf16 %v2079
        %v2528 = vunpack.c.l.bf16 %v2080
        %v2529 = vunpack.c.l.bf16 %v2081
        %v2530 = vunpack.c.l.bf16 %v2082
        %v2531 = vunpack.c.l.bf16 %v2083
        %v2532 = vunpack.c.l.bf16 %v2084
        %v2533 = vunpack.c.l.bf16 %v2085
        %v2534 = vunpack.c.l.bf16 %v2086
        %v2535 = vunpack.c.l.bf16 %v2087
        %v2536 = vunpack.c.l.bf16 %v2088
        %v2537 = vunpack.c.l.bf16 %v2089
        %v2538 = vunpack.c.l.bf16 %v2090
        %v2539 = vunpack.c.l.bf16 %v2091
        %v2540 = vunpack.c.l.bf16 %v2092
        %v2541 = vunpack.c.l.bf16 %v2093
        %v2542 = vunpack.c.l.bf16 %v2094
        %v2543 = vunpack.c.l.bf16 %v2095
        %v2544 = vunpack.c.l.bf16 %v2096
        %v2545 = vunpack.c.l.bf16 %v2097
        %v2546 = vunpack.c.l.bf16 %v2098
        %v2547 = vunpack.c.l.bf16 %v2099
        %v2548 = vunpack.c.l.bf16 %v2100
        %v2549 = vunpack.c.l.bf16 %v2101
        %v2550 = vunpack.c.l.bf16 %v2102
        %v2551 = vunpack.c.l.bf16 %v2103
        %v2552 = vunpack.c.l.bf16 %v2104
        %v2553 = vunpack.c.l.bf16 %v2105
        %v2554 = vunpack.c.l.bf16 %v2106
        %v2555 = vunpack.c.l.bf16 %v2107
        %v2556 = vunpack.c.l.bf16 %v2108
        %v2557 = vunpack.c.l.bf16 %v2109
        %v2558 = vunpack.c.l.bf16 %v2110
        %2559 = vmatprep.subr.bf16.mxu0 0
        %2560 = vmatpush1.bf16.xpose.msra.mxu0 0
        %2561 = vmatprep.subr.bf16.mxu0 0
        %2562 = vmatpush1.bf16.xpose.msra.mxu0 0
        %2563 = vmatprep.subr.bf16.mxu0 0
        %2564 = vmatpush1.bf16.xpose.msra.mxu0 0
        %2565 = vmatprep.subr.bf16.mxu0 0
        %2566 = vmatpush1.bf16.xpose.msra.mxu0 0
        %2567 = vmatprep.subr.bf16.mxu0 %v1729
        %2568 = vmatpush1.bf16.xpose.msra.mxu0 %v1728
        %2569 = vmatprep.subr.bf16.mxu0 %v1727
        %2570 = vmatpush1.bf16.xpose.msra.mxu0 %v1726
        %2571 = vmatprep.subr.bf16.mxu0 %v1725
        %2572 = vmatpush1.bf16.xpose.msra.mxu0 %v1724
        %2573 = vmatprep.subr.bf16.mxu0 %v1723
        %2574 = vmatpush1.bf16.xpose.msra.mxu0 %v1722
        %2575 = vmatprep.subr.bf16.mxu0 0
        %2576 = vmatpush2.bf16.xpose.msra.mxu0 0
        %2577 = vmatprep.subr.bf16.mxu0 0
        %2578 = vmatpush2.bf16.xpose.msra.mxu0 0
        %2579 = vmatprep.subr.bf16.mxu0 0
        %2580 = vmatpush2.bf16.xpose.msra.mxu0 0
        %2581 = vmatprep.subr.bf16.mxu0 0
        %2582 = vmatpush2.bf16.xpose.msra.mxu0 0
        %2583 = vmatprep.subr.bf16.mxu0 0
        %2584 = vmatpush2.bf16.xpose.msra.mxu0 0
        %2585 = vmatprep.subr.bf16.mxu0 0
        %2586 = vmatpush2.bf16.xpose.msra.mxu0 0
        %2587 = vmatprep.subr.bf16.mxu0 0
        %2588 = vmatpush2.bf16.xpose.msra.mxu0 0
        %2589 = vmatprep.subr.bf16.mxu0 0
        %2590 = vmatpush2.bf16.xpose.msra.mxu0 0
        %2591 = vmatprep.mubr.bf16.mxu0 %v2432
        %2592 = vmatmul.mubr.bf16.gmra.mxu0 %v2431
        %v2593 = vpop.f32.mrf.mxu0
        %v2594 = vadd.f32 %v2495, %v2593
        %v2595 = vpop.f32.mrf.mxu0
        %v2596 = vpop.f32.mrf.mxu0
        %v2597 = vadd.f32 %v2496, %v2596
        %v2598 = vpop.f32.mrf.mxu0
        %2599 = vmatprep.mubr.bf16.mxu0 %v2434
        %2600 = vmatmul.mubr.bf16.gmra.mxu0 %v2433
        %v2601 = vpop.f32.mrf.mxu0
        %v2602 = vadd.f32 %v2497, %v2601
        %v2603 = vpop.f32.mrf.mxu0
        %v2604 = vpop.f32.mrf.mxu0
        %v2605 = vadd.f32 %v2498, %v2604
        %v2606 = vpop.f32.mrf.mxu0
        %2607 = vmatprep.mubr.bf16.mxu0 %v2436
        %2608 = vmatmul.mubr.bf16.gmra.mxu0 %v2435
        %v2609 = vpop.f32.mrf.mxu0
        %v2610 = vadd.f32 %v2499, %v2609
        %v2611 = vpop.f32.mrf.mxu0
        %v2612 = vpop.f32.mrf.mxu0
        %v2613 = vadd.f32 %v2500, %v2612
        %v2614 = vpop.f32.mrf.mxu0
        %2615 = vmatprep.mubr.bf16.mxu0 %v2438
        %2616 = vmatmul.mubr.bf16.gmra.mxu0 %v2437
        %v2617 = vpop.f32.mrf.mxu0
        %v2618 = vadd.f32 %v2501, %v2617
        %v2619 = vpop.f32.mrf.mxu0
        %v2620 = vpop.f32.mrf.mxu0
        %v2621 = vadd.f32 %v2502, %v2620
        %v2622 = vpop.f32.mrf.mxu0
        %2623 = vmatprep.mubr.bf16.mxu0 %v2440
        %2624 = vmatmul.mubr.bf16.gmra.mxu0 %v2439
        %v2625 = vpop.f32.mrf.mxu0
        %v2626 = vadd.f32 %v2503, %v2625
        %v2627 = vpop.f32.mrf.mxu0
        %v2628 = vpop.f32.mrf.mxu0
        %v2629 = vadd.f32 %v2504, %v2628
        %v2630 = vpop.f32.mrf.mxu0
        %2631 = vmatprep.mubr.bf16.mxu0 %v2442
        %2632 = vmatmul.mubr.bf16.gmra.mxu0 %v2441
        %v2633 = vpop.f32.mrf.mxu0
        %v2634 = vadd.f32 %v2505, %v2633
        %v2635 = vpop.f32.mrf.mxu0
        %v2636 = vpop.f32.mrf.mxu0
        %v2637 = vadd.f32 %v2506, %v2636
        %v2638 = vpop.f32.mrf.mxu0
        %2639 = vmatprep.mubr.bf16.mxu0 %v2444
        %2640 = vmatmul.mubr.bf16.gmra.mxu0 %v2443
        %v2641 = vpop.f32.mrf.mxu0
        %v2642 = vadd.f32 %v2507, %v2641
        %v2643 = vpop.f32.mrf.mxu0
        %v2644 = vpop.f32.mrf.mxu0
        %v2645 = vadd.f32 %v2508, %v2644
        %v2646 = vpop.f32.mrf.mxu0
        %2647 = vmatprep.mubr.bf16.mxu0 %v2446
        %2648 = vmatmul.mubr.bf16.gmra.mxu0 %v2445
        %v2649 = vpop.f32.mrf.mxu0
        %v2650 = vadd.f32 %v2509, %v2649
        %v2651 = vpop.f32.mrf.mxu0
        %v2652 = vpop.f32.mrf.mxu0
        %v2653 = vadd.f32 %v2510, %v2652
        %v2654 = vpop.f32.mrf.mxu0
        %2655 = vmatprep.mubr.bf16.mxu0 %v2448
        %2656 = vmatmul.mubr.bf16.gmra.mxu0 %v2447
        %v2657 = vpop.f32.mrf.mxu0
        %v2658 = vadd.f32 %v2511, %v2657
        %v2659 = vpop.f32.mrf.mxu0
        %v2660 = vpop.f32.mrf.mxu0
        %v2661 = vadd.f32 %v2512, %v2660
        %v2662 = vpop.f32.mrf.mxu0
        %2663 = vmatprep.mubr.bf16.mxu0 %v2450
        %2664 = vmatmul.mubr.bf16.gmra.mxu0 %v2449
        %v2665 = vpop.f32.mrf.mxu0
        %v2666 = vadd.f32 %v2513, %v2665
        %v2667 = vpop.f32.mrf.mxu0
        %v2668 = vpop.f32.mrf.mxu0
        %v2669 = vadd.f32 %v2514, %v2668
        %v2670 = vpop.f32.mrf.mxu0
        %2671 = vmatprep.mubr.bf16.mxu0 %v2452
        %2672 = vmatmul.mubr.bf16.gmra.mxu0 %v2451
        %v2673 = vpop.f32.mrf.mxu0
        %v2674 = vadd.f32 %v2515, %v2673
        %v2675 = vpop.f32.mrf.mxu0
        %v2676 = vpop.f32.mrf.mxu0
        %v2677 = vadd.f32 %v2516, %v2676
        %v2678 = vpop.f32.mrf.mxu0
        %2679 = vmatprep.mubr.bf16.mxu0 %v2454
        %2680 = vmatmul.mubr.bf16.gmra.mxu0 %v2453
        %v2681 = vpop.f32.mrf.mxu0
        %v2682 = vadd.f32 %v2517, %v2681
        %v2683 = vpop.f32.mrf.mxu0
        %v2684 = vpop.f32.mrf.mxu0
        %v2685 = vadd.f32 %v2518, %v2684
        %v2686 = vpop.f32.mrf.mxu0
        %2687 = vmatprep.mubr.bf16.mxu0 %v2456
        %2688 = vmatmul.mubr.bf16.gmra.mxu0 %v2455
        %v2689 = vpop.f32.mrf.mxu0
        %v2690 = vadd.f32 %v2519, %v2689
        %v2691 = vpop.f32.mrf.mxu0
        %v2692 = vpop.f32.mrf.mxu0
        %v2693 = vadd.f32 %v2520, %v2692
        %v2694 = vpop.f32.mrf.mxu0
        %2695 = vmatprep.mubr.bf16.mxu0 %v2458
        %2696 = vmatmul.mubr.bf16.gmra.mxu0 %v2457
        %v2697 = vpop.f32.mrf.mxu0
        %v2698 = vadd.f32 %v2521, %v2697
        %v2699 = vpop.f32.mrf.mxu0
        %v2700 = vpop.f32.mrf.mxu0
        %v2701 = vadd.f32 %v2522, %v2700
        %v2702 = vpop.f32.mrf.mxu0
        %2703 = vmatprep.mubr.bf16.mxu0 %v2460
        %2704 = vmatmul.mubr.bf16.gmra.mxu0 %v2459
        %v2705 = vpop.f32.mrf.mxu0
        %v2706 = vadd.f32 %v2523, %v2705
        %v2707 = vpop.f32.mrf.mxu0
        %v2708 = vpop.f32.mrf.mxu0
        %v2709 = vadd.f32 %v2524, %v2708
        %v2710 = vpop.f32.mrf.mxu0
        %2711 = vmatprep.mubr.bf16.mxu0 %v2462
        %2712 = vmatmul.mubr.bf16.gmra.mxu0 %v2461
        %v2713 = vpop.f32.mrf.mxu0
        %v2714 = vadd.f32 %v2525, %v2713
        %v2715 = vpop.f32.mrf.mxu0
        %v2716 = vpop.f32.mrf.mxu0
        %v2717 = vadd.f32 %v2526, %v2716
        %v2718 = vpop.f32.mrf.mxu0
        %2719 = vmatprep.mubr.bf16.mxu0 %v2464
        %2720 = vmatmul.mubr.bf16.gmra.mxu0 %v2463
        %v2721 = vpop.f32.mrf.mxu0
        %v2722 = vadd.f32 %v2527, %v2721
        %v2723 = vpop.f32.mrf.mxu0
        %v2724 = vpop.f32.mrf.mxu0
        %v2725 = vadd.f32 %v2528, %v2724
        %v2726 = vpop.f32.mrf.mxu0
        %2727 = vmatprep.mubr.bf16.mxu0 %v2466
        %2728 = vmatmul.mubr.bf16.gmra.mxu0 %v2465
        %v2729 = vpop.f32.mrf.mxu0
        %v2730 = vadd.f32 %v2529, %v2729
        %v2731 = vpop.f32.mrf.mxu0
        %v2732 = vpop.f32.mrf.mxu0
        %v2733 = vadd.f32 %v2530, %v2732
        %v2734 = vpop.f32.mrf.mxu0
        %2735 = vmatprep.mubr.bf16.mxu0 %v2468
        %2736 = vmatmul.mubr.bf16.gmra.mxu0 %v2467
        %v2737 = vpop.f32.mrf.mxu0
        %v2738 = vadd.f32 %v2531, %v2737
        %v2739 = vpop.f32.mrf.mxu0
        %v2740 = vpop.f32.mrf.mxu0
        %v2741 = vadd.f32 %v2532, %v2740
        %v2742 = vpop.f32.mrf.mxu0
        %2743 = vmatprep.mubr.bf16.mxu0 %v2470
        %2744 = vmatmul.mubr.bf16.gmra.mxu0 %v2469
        %v2745 = vpop.f32.mrf.mxu0
        %v2746 = vadd.f32 %v2533, %v2745
        %v2747 = vpop.f32.mrf.mxu0
        %v2748 = vpop.f32.mrf.mxu0
        %v2749 = vadd.f32 %v2534, %v2748
        %v2750 = vpop.f32.mrf.mxu0
        %2751 = vmatprep.mubr.bf16.mxu0 %v2472
        %2752 = vmatmul.mubr.bf16.gmra.mxu0 %v2471
        %v2753 = vpop.f32.mrf.mxu0
        %v2754 = vadd.f32 %v2535, %v2753
        %v2755 = vpop.f32.mrf.mxu0
        %v2756 = vpop.f32.mrf.mxu0
        %v2757 = vadd.f32 %v2536, %v2756
        %v2758 = vpop.f32.mrf.mxu0
        %2759 = vmatprep.mubr.bf16.mxu0 %v2474
        %2760 = vmatmul.mubr.bf16.gmra.mxu0 %v2473
        %v2761 = vpop.f32.mrf.mxu0
        %v2762 = vadd.f32 %v2537, %v2761
        %v2763 = vpop.f32.mrf.mxu0
        %v2764 = vpop.f32.mrf.mxu0
        %v2765 = vadd.f32 %v2538, %v2764
        %v2766 = vpop.f32.mrf.mxu0
        %2767 = vmatprep.mubr.bf16.mxu0 %v2476
        %2768 = vmatmul.mubr.bf16.gmra.mxu0 %v2475
        %v2769 = vpop.f32.mrf.mxu0
        %v2770 = vadd.f32 %v2539, %v2769
        %v2771 = vpop.f32.mrf.mxu0
        %v2772 = vpop.f32.mrf.mxu0
        %v2773 = vadd.f32 %v2540, %v2772
        %v2774 = vpop.f32.mrf.mxu0
        %2775 = vmatprep.mubr.bf16.mxu0 %v2478
        %2776 = vmatmul.mubr.bf16.gmra.mxu0 %v2477
        %v2777 = vpop.f32.mrf.mxu0
        %v2778 = vadd.f32 %v2541, %v2777
        %v2779 = vpop.f32.mrf.mxu0
        %v2780 = vpop.f32.mrf.mxu0
        %v2781 = vadd.f32 %v2542, %v2780
        %v2782 = vpop.f32.mrf.mxu0
        %2783 = vmatprep.mubr.bf16.mxu0 %v2480
        %2784 = vmatmul.mubr.bf16.gmra.mxu0 %v2479
        %v2785 = vpop.f32.mrf.mxu0
        %v2786 = vadd.f32 %v2543, %v2785
        %v2787 = vpop.f32.mrf.mxu0
        %v2788 = vpop.f32.mrf.mxu0
        %v2789 = vadd.f32 %v2544, %v2788
        %v2790 = vpop.f32.mrf.mxu0
        %2791 = vmatprep.mubr.bf16.mxu0 %v2482
        %2792 = vmatmul.mubr.bf16.gmra.mxu0 %v2481
        %v2793 = vpop.f32.mrf.mxu0
        %v2794 = vadd.f32 %v2545, %v2793
        %v2795 = vpop.f32.mrf.mxu0
        %v2796 = vpop.f32.mrf.mxu0
        %v2797 = vadd.f32 %v2546, %v2796
        %v2798 = vpop.f32.mrf.mxu0
        %2799 = vmatprep.mubr.bf16.mxu0 %v2484
        %2800 = vmatmul.mubr.bf16.gmra.mxu0 %v2483
        %v2801 = vpop.f32.mrf.mxu0
        %v2802 = vadd.f32 %v2547, %v2801
        %v2803 = vpop.f32.mrf.mxu0
        %v2804 = vpop.f32.mrf.mxu0
        %v2805 = vadd.f32 %v2548, %v2804
        %v2806 = vpop.f32.mrf.mxu0
        %2807 = vmatprep.mubr.bf16.mxu0 %v2486
        %2808 = vmatmul.mubr.bf16.gmra.mxu0 %v2485
        %v2809 = vpop.f32.mrf.mxu0
        %v2810 = vadd.f32 %v2549, %v2809
        %v2811 = vpop.f32.mrf.mxu0
        %v2812 = vpop.f32.mrf.mxu0
        %v2813 = vadd.f32 %v2550, %v2812
        %v2814 = vpop.f32.mrf.mxu0
        %2815 = vmatprep.mubr.bf16.mxu0 %v2488
        %2816 = vmatmul.mubr.bf16.gmra.mxu0 %v2487
        %v2817 = vpop.f32.mrf.mxu0
        %v2818 = vadd.f32 %v2551, %v2817
        %v2819 = vpop.f32.mrf.mxu0
        %v2820 = vpop.f32.mrf.mxu0
        %v2821 = vadd.f32 %v2552, %v2820
        %v2822 = vpop.f32.mrf.mxu0
        %2823 = vmatprep.mubr.bf16.mxu0 %v2490
        %2824 = vmatmul.mubr.bf16.gmra.mxu0 %v2489
        %v2825 = vpop.f32.mrf.mxu0
        %v2826 = vadd.f32 %v2553, %v2825
        %v2827 = vpop.f32.mrf.mxu0
        %v2828 = vpop.f32.mrf.mxu0
        %v2829 = vadd.f32 %v2554, %v2828
        %v2830 = vpop.f32.mrf.mxu0
        %2831 = vmatprep.mubr.bf16.mxu0 %v2492
        %2832 = vmatmul.mubr.bf16.gmra.mxu0 %v2491
        %v2833 = vpop.f32.mrf.mxu0
        %v2834 = vadd.f32 %v2555, %v2833
        %v2835 = vpop.f32.mrf.mxu0
        %v2836 = vpop.f32.mrf.mxu0
        %v2837 = vadd.f32 %v2556, %v2836
        %v2838 = vpop.f32.mrf.mxu0
        %2839 = vmatprep.mubr.bf16.mxu0 %v2494
        %2840 = vmatmul.mubr.bf16.gmra.mxu0 %v2493
        %v2841 = vpop.f32.mrf.mxu0
        %v2842 = vadd.f32 %v2557, %v2841
        %v2843 = vpop.f32.mrf.mxu0
        %v2844 = vpop.f32.mrf.mxu0
        %v2845 = vadd.f32 %v2558, %v2844
        %v2846 = vpop.f32.mrf.mxu0
        %2847 = vdwg.mxu0
        %vm2848 = vcmask 523264
        %v2849 = vsel %vm2848, %v2594, -inf
        %2850 = vmax.xlane.f32.xlu0 %v2849
        %v2851 = vpop.xlane.xlu0 %2850
        %v2852 = vsel %vm2848, %v2597, -inf
        %2853 = vmax.xlane.f32.xlu0 %v2852
        %v2854 = vpop.xlane.xlu0 %2853
        %v2855 = vsel %vm2848, %v2602, -inf
        %2856 = vmax.xlane.f32.xlu0 %v2855
        %v2857 = vpop.xlane.xlu0 %2856
        %v2858 = vsel %vm2848, %v2605, -inf
        %2859 = vmax.xlane.f32.xlu0 %v2858
        %v2860 = vpop.xlane.xlu0 %2859
        %v2861 = vsel %vm2848, %v2610, -inf
        %2862 = vmax.xlane.f32.xlu0 %v2861
        %v2863 = vpop.xlane.xlu0 %2862
        %v2864 = vsel %vm2848, %v2613, -inf
        %2865 = vmax.xlane.f32.xlu0 %v2864
        %v2866 = vpop.xlane.xlu0 %2865
        %v2867 = vsel %vm2848, %v2618, -inf
        %2868 = vmax.xlane.f32.xlu0 %v2867
        %v2869 = vpop.xlane.xlu0 %2868
        %v2870 = vsel %vm2848, %v2621, -inf
        %2871 = vmax.xlane.f32.xlu0 %v2870
        %v2872 = vpop.xlane.xlu0 %2871
        %v2873 = vsel %vm2848, %v2626, -inf
        %2874 = vmax.xlane.f32.xlu0 %v2873
        %v2875 = vpop.xlane.xlu0 %2874
        %v2876 = vsel %vm2848, %v2629, -inf
        %2877 = vmax.xlane.f32.xlu0 %v2876
        %v2878 = vpop.xlane.xlu0 %2877
        %v2879 = vsel %vm2848, %v2634, -inf
        %2880 = vmax.xlane.f32.xlu0 %v2879
        %v2881 = vpop.xlane.xlu0 %2880
        %v2882 = vsel %vm2848, %v2637, -inf
        %2883 = vmax.xlane.f32.xlu0 %v2882
        %v2884 = vpop.xlane.xlu0 %2883
        %v2885 = vsel %vm2848, %v2642, -inf
        %2886 = vmax.xlane.f32.xlu0 %v2885
        %v2887 = vpop.xlane.xlu0 %2886
        %v2888 = vsel %vm2848, %v2645, -inf
        %2889 = vmax.xlane.f32.xlu0 %v2888
        %v2890 = vpop.xlane.xlu0 %2889
        %v2891 = vsel %vm2848, %v2650, -inf
        %2892 = vmax.xlane.f32.xlu0 %v2891
        %v2893 = vpop.xlane.xlu0 %2892
        %v2894 = vsel %vm2848, %v2653, -inf
        %2895 = vmax.xlane.f32.xlu0 %v2894
        %v2896 = vpop.xlane.xlu0 %2895
        %v2897 = vsel %vm2848, %v2658, -inf
        %2898 = vmax.xlane.f32.xlu0 %v2897
        %v2899 = vpop.xlane.xlu0 %2898
        %v2900 = vsel %vm2848, %v2661, -inf
        %2901 = vmax.xlane.f32.xlu0 %v2900
        %v2902 = vpop.xlane.xlu0 %2901
        %v2903 = vsel %vm2848, %v2666, -inf
        %2904 = vmax.xlane.f32.xlu0 %v2903
        %v2905 = vpop.xlane.xlu0 %2904
        %v2906 = vsel %vm2848, %v2669, -inf
        %2907 = vmax.xlane.f32.xlu0 %v2906
        %v2908 = vpop.xlane.xlu0 %2907
        %v2909 = vsel %vm2848, %v2674, -inf
        %2910 = vmax.xlane.f32.xlu0 %v2909
        %v2911 = vpop.xlane.xlu0 %2910
        %v2912 = vsel %vm2848, %v2677, -inf
        %2913 = vmax.xlane.f32.xlu0 %v2912
        %v2914 = vpop.xlane.xlu0 %2913
        %v2915 = vsel %vm2848, %v2682, -inf
        %2916 = vmax.xlane.f32.xlu0 %v2915
        %v2917 = vpop.xlane.xlu0 %2916
        %v2918 = vsel %vm2848, %v2685, -inf
        %2919 = vmax.xlane.f32.xlu0 %v2918
        %v2920 = vpop.xlane.xlu0 %2919
        %v2921 = vsel %vm2848, %v2690, -inf
        %2922 = vmax.xlane.f32.xlu0 %v2921
        %v2923 = vpop.xlane.xlu0 %2922
        %v2924 = vsel %vm2848, %v2693, -inf
        %2925 = vmax.xlane.f32.xlu0 %v2924
        %v2926 = vpop.xlane.xlu0 %2925
        %v2927 = vsel %vm2848, %v2698, -inf
        %2928 = vmax.xlane.f32.xlu0 %v2927
        %v2929 = vpop.xlane.xlu0 %2928
        %v2930 = vsel %vm2848, %v2701, -inf
        %2931 = vmax.xlane.f32.xlu0 %v2930
        %v2932 = vpop.xlane.xlu0 %2931
        %v2933 = vsel %vm2848, %v2706, -inf
        %2934 = vmax.xlane.f32.xlu0 %v2933
        %v2935 = vpop.xlane.xlu0 %2934
        %v2936 = vsel %vm2848, %v2709, -inf
        %2937 = vmax.xlane.f32.xlu0 %v2936
        %v2938 = vpop.xlane.xlu0 %2937
        %v2939 = vsel %vm2848, %v2714, -inf
        %2940 = vmax.xlane.f32.xlu0 %v2939
        %v2941 = vpop.xlane.xlu0 %2940
        %v2942 = vsel %vm2848, %v2717, -inf
        %2943 = vmax.xlane.f32.xlu0 %v2942
        %v2944 = vpop.xlane.xlu0 %2943
        %v2945 = vsel %vm2848, %v2722, -inf
        %2946 = vmax.xlane.f32.xlu0 %v2945
        %v2947 = vpop.xlane.xlu0 %2946
        %v2948 = vsel %vm2848, %v2725, -inf
        %2949 = vmax.xlane.f32.xlu0 %v2948
        %v2950 = vpop.xlane.xlu0 %2949
        %v2951 = vsel %vm2848, %v2730, -inf
        %2952 = vmax.xlane.f32.xlu0 %v2951
        %v2953 = vpop.xlane.xlu0 %2952
        %v2954 = vsel %vm2848, %v2733, -inf
        %2955 = vmax.xlane.f32.xlu0 %v2954
        %v2956 = vpop.xlane.xlu0 %2955
        %v2957 = vsel %vm2848, %v2738, -inf
        %2958 = vmax.xlane.f32.xlu0 %v2957
        %v2959 = vpop.xlane.xlu0 %2958
        %v2960 = vsel %vm2848, %v2741, -inf
        %2961 = vmax.xlane.f32.xlu0 %v2960
        %v2962 = vpop.xlane.xlu0 %2961
        %v2963 = vsel %vm2848, %v2746, -inf
        %2964 = vmax.xlane.f32.xlu0 %v2963
        %v2965 = vpop.xlane.xlu0 %2964
        %v2966 = vsel %vm2848, %v2749, -inf
        %2967 = vmax.xlane.f32.xlu0 %v2966
        %v2968 = vpop.xlane.xlu0 %2967
        %v2969 = vsel %vm2848, %v2754, -inf
        %2970 = vmax.xlane.f32.xlu0 %v2969
        %v2971 = vpop.xlane.xlu0 %2970
        %v2972 = vsel %vm2848, %v2757, -inf
        %2973 = vmax.xlane.f32.xlu0 %v2972
        %v2974 = vpop.xlane.xlu0 %2973
        %v2975 = vsel %vm2848, %v2762, -inf
        %2976 = vmax.xlane.f32.xlu0 %v2975
        %v2977 = vpop.xlane.xlu0 %2976
        %v2978 = vsel %vm2848, %v2765, -inf
        %2979 = vmax.xlane.f32.xlu0 %v2978
        %v2980 = vpop.xlane.xlu0 %2979
        %v2981 = vsel %vm2848, %v2770, -inf
        %2982 = vmax.xlane.f32.xlu0 %v2981
        %v2983 = vpop.xlane.xlu0 %2982
        %v2984 = vsel %vm2848, %v2773, -inf
        %2985 = vmax.xlane.f32.xlu0 %v2984
        %v2986 = vpop.xlane.xlu0 %2985
        %v2987 = vsel %vm2848, %v2778, -inf
        %2988 = vmax.xlane.f32.xlu0 %v2987
        %v2989 = vpop.xlane.xlu0 %2988
        %v2990 = vsel %vm2848, %v2781, -inf
        %2991 = vmax.xlane.f32.xlu0 %v2990
        %v2992 = vpop.xlane.xlu0 %2991
        %v2993 = vsel %vm2848, %v2786, -inf
        %2994 = vmax.xlane.f32.xlu0 %v2993
        %v2995 = vpop.xlane.xlu0 %2994
        %v2996 = vsel %vm2848, %v2789, -inf
        %2997 = vmax.xlane.f32.xlu0 %v2996
        %v2998 = vpop.xlane.xlu0 %2997
        %v2999 = vsel %vm2848, %v2794, -inf
        %3000 = vmax.xlane.f32.xlu0 %v2999
        %v3001 = vpop.xlane.xlu0 %3000
        %v3002 = vsel %vm2848, %v2797, -inf
        %3003 = vmax.xlane.f32.xlu0 %v3002
        %v3004 = vpop.xlane.xlu0 %3003
        %v3005 = vsel %vm2848, %v2802, -inf
        %3006 = vmax.xlane.f32.xlu0 %v3005
        %v3007 = vpop.xlane.xlu0 %3006
        %v3008 = vsel %vm2848, %v2805, -inf
        %3009 = vmax.xlane.f32.xlu0 %v3008
        %v3010 = vpop.xlane.xlu0 %3009
        %v3011 = vsel %vm2848, %v2810, -inf
        %3012 = vmax.xlane.f32.xlu0 %v3011
        %v3013 = vpop.xlane.xlu0 %3012
        %v3014 = vsel %vm2848, %v2813, -inf
        %3015 = vmax.xlane.f32.xlu0 %v3014
        %v3016 = vpop.xlane.xlu0 %3015
        %v3017 = vsel %vm2848, %v2818, -inf
        %3018 = vmax.xlane.f32.xlu0 %v3017
        %v3019 = vpop.xlane.xlu0 %3018
        %v3020 = vsel %vm2848, %v2821, -inf
        %3021 = vmax.xlane.f32.xlu0 %v3020
        %v3022 = vpop.xlane.xlu0 %3021
        %v3023 = vsel %vm2848, %v2826, -inf
        %3024 = vmax.xlane.f32.xlu0 %v3023
        %v3025 = vpop.xlane.xlu0 %3024
        %v3026 = vsel %vm2848, %v2829, -inf
        %3027 = vmax.xlane.f32.xlu0 %v3026
        %v3028 = vpop.xlane.xlu0 %3027
        %v3029 = vsel %vm2848, %v2834, -inf
        %3030 = vmax.xlane.f32.xlu0 %v3029
        %v3031 = vpop.xlane.xlu0 %3030
        %v3032 = vsel %vm2848, %v2837, -inf
        %3033 = vmax.xlane.f32.xlu0 %v3032
        %v3034 = vpop.xlane.xlu0 %3033
        %v3035 = vsel %vm2848, %v2842, -inf
        %3036 = vmax.xlane.f32.xlu0 %v3035
        %v3037 = vpop.xlane.xlu0 %3036
        %v3038 = vsel %vm2848, %v2845, -inf
        %3039 = vmax.xlane.f32.xlu0 %v3038
        %v3040 = vpop.xlane.xlu0 %3039
        %v3041 = vsub.f32 %v2594, %v2851
        %v3042 = vsub.f32 %v2597, %v2854
        %v3043 = vsub.f32 %v2602, %v2857
        %v3044 = vsub.f32 %v2605, %v2860
        %v3045 = vsub.f32 %v2610, %v2863
        %v3046 = vsub.f32 %v2613, %v2866
        %v3047 = vsub.f32 %v2618, %v2869
        %v3048 = vsub.f32 %v2621, %v2872
        %v3049 = vsub.f32 %v2626, %v2875
        %v3050 = vsub.f32 %v2629, %v2878
        %v3051 = vsub.f32 %v2634, %v2881
        %v3052 = vsub.f32 %v2637, %v2884
        %v3053 = vsub.f32 %v2642, %v2887
        %v3054 = vsub.f32 %v2645, %v2890
        %v3055 = vsub.f32 %v2650, %v2893
        %v3056 = vsub.f32 %v2653, %v2896
        %v3057 = vsub.f32 %v2658, %v2899
        %v3058 = vsub.f32 %v2661, %v2902
        %v3059 = vsub.f32 %v2666, %v2905
        %v3060 = vsub.f32 %v2669, %v2908
        %v3061 = vsub.f32 %v2674, %v2911
        %v3062 = vsub.f32 %v2677, %v2914
        %v3063 = vsub.f32 %v2682, %v2917
        %v3064 = vsub.f32 %v2685, %v2920
        %v3065 = vsub.f32 %v2690, %v2923
        %v3066 = vsub.f32 %v2693, %v2926
        %v3067 = vsub.f32 %v2698, %v2929
        %v3068 = vsub.f32 %v2701, %v2932
        %v3069 = vsub.f32 %v2706, %v2935
        %v3070 = vsub.f32 %v2709, %v2938
        %v3071 = vsub.f32 %v2714, %v2941
        %v3072 = vsub.f32 %v2717, %v2944
        %v3073 = vsub.f32 %v2722, %v2947
        %v3074 = vsub.f32 %v2725, %v2950
        %v3075 = vsub.f32 %v2730, %v2953
        %v3076 = vsub.f32 %v2733, %v2956
        %v3077 = vsub.f32 %v2738, %v2959
        %v3078 = vsub.f32 %v2741, %v2962
        %v3079 = vsub.f32 %v2746, %v2965
        %v3080 = vsub.f32 %v2749, %v2968
        %v3081 = vsub.f32 %v2754, %v2971
        %v3082 = vsub.f32 %v2757, %v2974
        %v3083 = vsub.f32 %v2762, %v2977
        %v3084 = vsub.f32 %v2765, %v2980
        %v3085 = vsub.f32 %v2770, %v2983
        %v3086 = vsub.f32 %v2773, %v2986
        %v3087 = vsub.f32 %v2778, %v2989
        %v3088 = vsub.f32 %v2781, %v2992
        %v3089 = vsub.f32 %v2786, %v2995
        %v3090 = vsub.f32 %v2789, %v2998
        %v3091 = vsub.f32 %v2794, %v3001
        %v3092 = vsub.f32 %v2797, %v3004
        %v3093 = vsub.f32 %v2802, %v3007
        %v3094 = vsub.f32 %v2805, %v3010
        %v3095 = vsub.f32 %v2810, %v3013
        %v3096 = vsub.f32 %v2813, %v3016
        %v3097 = vsub.f32 %v2818, %v3019
        %v3098 = vsub.f32 %v2821, %v3022
        %v3099 = vsub.f32 %v2826, %v3025
        %v3100 = vsub.f32 %v2829, %v3028
        %v3101 = vsub.f32 %v2834, %v3031
        %v3102 = vsub.f32 %v2837, %v3034
        %v3103 = vsub.f32 %v2842, %v3037
        %v3104 = vsub.f32 %v2845, %v3040
        %v3105 = vmul.f32 %v3041, 1.442695
        %v3106 = vpow.pop %v3105
        %v3107 = vmul.f32 %v3042, 1.442695
        %v3108 = vpow.pop %v3107
        %v3109 = vmul.f32 %v3043, 1.442695
        %v3110 = vpow.pop %v3109
        %v3111 = vmul.f32 %v3044, 1.442695
        %v3112 = vpow.pop %v3111
        %v3113 = vmul.f32 %v3045, 1.442695
        %v3114 = vpow.pop %v3113
        %v3115 = vmul.f32 %v3046, 1.442695
        %v3116 = vpow.pop %v3115
        %v3117 = vmul.f32 %v3047, 1.442695
        %v3118 = vpow.pop %v3117
        %v3119 = vmul.f32 %v3048, 1.442695
        %v3120 = vpow.pop %v3119
        %v3121 = vmul.f32 %v3049, 1.442695
        %v3122 = vpow.pop %v3121
        %v3123 = vmul.f32 %v3050, 1.442695
        %v3124 = vpow.pop %v3123
        %v3125 = vmul.f32 %v3051, 1.442695
        %v3126 = vpow.pop %v3125
        %v3127 = vmul.f32 %v3052, 1.442695
        %v3128 = vpow.pop %v3127
        %v3129 = vmul.f32 %v3053, 1.442695
        %v3130 = vpow.pop %v3129
        %v3131 = vmul.f32 %v3054, 1.442695
        %v3132 = vpow.pop %v3131
        %v3133 = vmul.f32 %v3055, 1.442695
        %v3134 = vpow.pop %v3133
        %v3135 = vmul.f32 %v3056, 1.442695
        %v3136 = vpow.pop %v3135
        %v3137 = vmul.f32 %v3057, 1.442695
        %v3138 = vpow.pop %v3137
        %v3139 = vmul.f32 %v3058, 1.442695
        %v3140 = vpow.pop %v3139
        %v3141 = vmul.f32 %v3059, 1.442695
        %v3142 = vpow.pop %v3141
        %v3143 = vmul.f32 %v3060, 1.442695
        %v3144 = vpow.pop %v3143
        %v3145 = vmul.f32 %v3061, 1.442695
        %v3146 = vpow.pop %v3145
        %v3147 = vmul.f32 %v3062, 1.442695
        %v3148 = vpow.pop %v3147
        %v3149 = vmul.f32 %v3063, 1.442695
        %v3150 = vpow.pop %v3149
        %v3151 = vmul.f32 %v3064, 1.442695
        %v3152 = vpow.pop %v3151
        %v3153 = vmul.f32 %v3065, 1.442695
        %v3154 = vpow.pop %v3153
        %v3155 = vmul.f32 %v3066, 1.442695
        %v3156 = vpow.pop %v3155
        %v3157 = vmul.f32 %v3067, 1.442695
        %v3158 = vpow.pop %v3157
        %v3159 = vmul.f32 %v3068, 1.442695
        %v3160 = vpow.pop %v3159
        %v3161 = vmul.f32 %v3069, 1.442695
        %v3162 = vpow.pop %v3161
        %v3163 = vmul.f32 %v3070, 1.442695
        %v3164 = vpow.pop %v3163
        %v3165 = vmul.f32 %v3071, 1.442695
        %v3166 = vpow.pop %v3165
        %v3167 = vmul.f32 %v3072, 1.442695
        %v3168 = vpow.pop %v3167
        %v3169 = vmul.f32 %v3073, 1.442695
        %v3170 = vpow.pop %v3169
        %v3171 = vmul.f32 %v3074, 1.442695
        %v3172 = vpow.pop %v3171
        %v3173 = vmul.f32 %v3075, 1.442695
        %v3174 = vpow.pop %v3173
        %v3175 = vmul.f32 %v3076, 1.442695
        %v3176 = vpow.pop %v3175
        %v3177 = vmul.f32 %v3077, 1.442695
        %v3178 = vpow.pop %v3177
        %v3179 = vmul.f32 %v3078, 1.442695
        %v3180 = vpow.pop %v3179
        %v3181 = vmul.f32 %v3079, 1.442695
        %v3182 = vpow.pop %v3181
        %v3183 = vmul.f32 %v3080, 1.442695
        %v3184 = vpow.pop %v3183
        %v3185 = vmul.f32 %v3081, 1.442695
        %v3186 = vpow.pop %v3185
        %v3187 = vmul.f32 %v3082, 1.442695
        %v3188 = vpow.pop %v3187
        %v3189 = vmul.f32 %v3083, 1.442695
        %v3190 = vpow.pop %v3189
        %v3191 = vmul.f32 %v3084, 1.442695
        %v3192 = vpow.pop %v3191
        %v3193 = vmul.f32 %v3085, 1.442695
        %v3194 = vpow.pop %v3193
        %v3195 = vmul.f32 %v3086, 1.442695
        %v3196 = vpow.pop %v3195
        %v3197 = vmul.f32 %v3087, 1.442695
        %v3198 = vpow.pop %v3197
        %v3199 = vmul.f32 %v3088, 1.442695
        %v3200 = vpow.pop %v3199
        %v3201 = vmul.f32 %v3089, 1.442695
        %v3202 = vpow.pop %v3201
        %v3203 = vmul.f32 %v3090, 1.442695
        %v3204 = vpow.pop %v3203
        %v3205 = vmul.f32 %v3091, 1.442695
        %v3206 = vpow.pop %v3205
        %v3207 = vmul.f32 %v3092, 1.442695
        %v3208 = vpow.pop %v3207
        %v3209 = vmul.f32 %v3093, 1.442695
        %v3210 = vpow.pop %v3209
        %v3211 = vmul.f32 %v3094, 1.442695
        %v3212 = vpow.pop %v3211
        %v3213 = vmul.f32 %v3095, 1.442695
        %v3214 = vpow.pop %v3213
        %v3215 = vmul.f32 %v3096, 1.442695
        %v3216 = vpow.pop %v3215
        %v3217 = vmul.f32 %v3097, 1.442695
        %v3218 = vpow.pop %v3217
        %v3219 = vmul.f32 %v3098, 1.442695
        %v3220 = vpow.pop %v3219
        %v3221 = vmul.f32 %v3099, 1.442695
        %v3222 = vpow.pop %v3221
        %v3223 = vmul.f32 %v3100, 1.442695
        %v3224 = vpow.pop %v3223
        %v3225 = vmul.f32 %v3101, 1.442695
        %v3226 = vpow.pop %v3225
        %v3227 = vmul.f32 %v3102, 1.442695
        %v3228 = vpow.pop %v3227
        %v3229 = vmul.f32 %v3103, 1.442695
        %v3230 = vpow.pop %v3229
        %v3231 = vmul.f32 %v3104, 1.442695
        %v3232 = vpow.pop %v3231
        %v3233 = vsel %vm2848, %v3106, 0.0
        %3234 = vadd.xlane.f32.xlu0 %v3233
        %v3235 = vpop.xlane.xlu0 %3234
        %v3236 = vsel %vm2848, %v3108, 0.0
        %3237 = vadd.xlane.f32.xlu0 %v3236
        %v3238 = vpop.xlane.xlu0 %3237
        %v3239 = vsel %vm2848, %v3110, 0.0
        %3240 = vadd.xlane.f32.xlu0 %v3239
        %v3241 = vpop.xlane.xlu0 %3240
        %v3242 = vsel %vm2848, %v3112, 0.0
        %3243 = vadd.xlane.f32.xlu0 %v3242
        %v3244 = vpop.xlane.xlu0 %3243
        %v3245 = vsel %vm2848, %v3114, 0.0
        %3246 = vadd.xlane.f32.xlu0 %v3245
        %v3247 = vpop.xlane.xlu0 %3246
        %v3248 = vsel %vm2848, %v3116, 0.0
        %3249 = vadd.xlane.f32.xlu0 %v3248
        %v3250 = vpop.xlane.xlu0 %3249
        %v3251 = vsel %vm2848, %v3118, 0.0
        %3252 = vadd.xlane.f32.xlu0 %v3251
        %v3253 = vpop.xlane.xlu0 %3252
        %v3254 = vsel %vm2848, %v3120, 0.0
        %3255 = vadd.xlane.f32.xlu0 %v3254
        %v3256 = vpop.xlane.xlu0 %3255
        %v3257 = vsel %vm2848, %v3122, 0.0
        %3258 = vadd.xlane.f32.xlu0 %v3257
        %v3259 = vpop.xlane.xlu0 %3258
        %v3260 = vsel %vm2848, %v3124, 0.0
        %3261 = vadd.xlane.f32.xlu0 %v3260
        %v3262 = vpop.xlane.xlu0 %3261
        %v3263 = vsel %vm2848, %v3126, 0.0
        %3264 = vadd.xlane.f32.xlu0 %v3263
        %v3265 = vpop.xlane.xlu0 %3264
        %v3266 = vsel %vm2848, %v3128, 0.0
        %3267 = vadd.xlane.f32.xlu0 %v3266
        %v3268 = vpop.xlane.xlu0 %3267
        %v3269 = vsel %vm2848, %v3130, 0.0
        %3270 = vadd.xlane.f32.xlu0 %v3269
        %v3271 = vpop.xlane.xlu0 %3270
        %v3272 = vsel %vm2848, %v3132, 0.0
        %3273 = vadd.xlane.f32.xlu0 %v3272
        %v3274 = vpop.xlane.xlu0 %3273
        %v3275 = vsel %vm2848, %v3134, 0.0
        %3276 = vadd.xlane.f32.xlu0 %v3275
        %v3277 = vpop.xlane.xlu0 %3276
        %v3278 = vsel %vm2848, %v3136, 0.0
        %3279 = vadd.xlane.f32.xlu0 %v3278
        %v3280 = vpop.xlane.xlu0 %3279
        %v3281 = vsel %vm2848, %v3138, 0.0
        %3282 = vadd.xlane.f32.xlu0 %v3281
        %v3283 = vpop.xlane.xlu0 %3282
        %v3284 = vsel %vm2848, %v3140, 0.0
        %3285 = vadd.xlane.f32.xlu0 %v3284
        %v3286 = vpop.xlane.xlu0 %3285
        %v3287 = vsel %vm2848, %v3142, 0.0
        %3288 = vadd.xlane.f32.xlu0 %v3287
        %v3289 = vpop.xlane.xlu0 %3288
        %v3290 = vsel %vm2848, %v3144, 0.0
        %3291 = vadd.xlane.f32.xlu0 %v3290
        %v3292 = vpop.xlane.xlu0 %3291
        %v3293 = vsel %vm2848, %v3146, 0.0
        %3294 = vadd.xlane.f32.xlu0 %v3293
        %v3295 = vpop.xlane.xlu0 %3294
        %v3296 = vsel %vm2848, %v3148, 0.0
        %3297 = vadd.xlane.f32.xlu0 %v3296
        %v3298 = vpop.xlane.xlu0 %3297
        %v3299 = vsel %vm2848, %v3150, 0.0
        %3300 = vadd.xlane.f32.xlu0 %v3299
        %v3301 = vpop.xlane.xlu0 %3300
        %v3302 = vsel %vm2848, %v3152, 0.0
        %3303 = vadd.xlane.f32.xlu0 %v3302
        %v3304 = vpop.xlane.xlu0 %3303
        %v3305 = vsel %vm2848, %v3154, 0.0
        %3306 = vadd.xlane.f32.xlu0 %v3305
        %v3307 = vpop.xlane.xlu0 %3306
        %v3308 = vsel %vm2848, %v3156, 0.0
        %3309 = vadd.xlane.f32.xlu0 %v3308
        %v3310 = vpop.xlane.xlu0 %3309
        %v3311 = vsel %vm2848, %v3158, 0.0
        %3312 = vadd.xlane.f32.xlu0 %v3311
        %v3313 = vpop.xlane.xlu0 %3312
        %v3314 = vsel %vm2848, %v3160, 0.0
        %3315 = vadd.xlane.f32.xlu0 %v3314
        %v3316 = vpop.xlane.xlu0 %3315
        %v3317 = vsel %vm2848, %v3162, 0.0
        %3318 = vadd.xlane.f32.xlu0 %v3317
        %v3319 = vpop.xlane.xlu0 %3318
        %v3320 = vsel %vm2848, %v3164, 0.0
        %3321 = vadd.xlane.f32.xlu0 %v3320
        %v3322 = vpop.xlane.xlu0 %3321
        %v3323 = vsel %vm2848, %v3166, 0.0
        %3324 = vadd.xlane.f32.xlu0 %v3323
        %v3325 = vpop.xlane.xlu0 %3324
        %v3326 = vsel %vm2848, %v3168, 0.0
        %3327 = vadd.xlane.f32.xlu0 %v3326
        %v3328 = vpop.xlane.xlu0 %3327
        %v3329 = vsel %vm2848, %v3170, 0.0
        %3330 = vadd.xlane.f32.xlu0 %v3329
        %v3331 = vpop.xlane.xlu0 %3330
        %v3332 = vsel %vm2848, %v3172, 0.0
        %3333 = vadd.xlane.f32.xlu0 %v3332
        %v3334 = vpop.xlane.xlu0 %3333
        %v3335 = vsel %vm2848, %v3174, 0.0
        %3336 = vadd.xlane.f32.xlu0 %v3335
        %v3337 = vpop.xlane.xlu0 %3336
        %v3338 = vsel %vm2848, %v3176, 0.0
        %3339 = vadd.xlane.f32.xlu0 %v3338
        %v3340 = vpop.xlane.xlu0 %3339
        %v3341 = vsel %vm2848, %v3178, 0.0
        %3342 = vadd.xlane.f32.xlu0 %v3341
        %v3343 = vpop.xlane.xlu0 %3342
        %v3344 = vsel %vm2848, %v3180, 0.0
        %3345 = vadd.xlane.f32.xlu0 %v3344
        %v3346 = vpop.xlane.xlu0 %3345
        %v3347 = vsel %vm2848, %v3182, 0.0
        %3348 = vadd.xlane.f32.xlu0 %v3347
        %v3349 = vpop.xlane.xlu0 %3348
        %v3350 = vsel %vm2848, %v3184, 0.0
        %3351 = vadd.xlane.f32.xlu0 %v3350
        %v3352 = vpop.xlane.xlu0 %3351
        %v3353 = vsel %vm2848, %v3186, 0.0
        %3354 = vadd.xlane.f32.xlu0 %v3353
        %v3355 = vpop.xlane.xlu0 %3354
        %v3356 = vsel %vm2848, %v3188, 0.0
        %3357 = vadd.xlane.f32.xlu0 %v3356
        %v3358 = vpop.xlane.xlu0 %3357
        %v3359 = vsel %vm2848, %v3190, 0.0
        %3360 = vadd.xlane.f32.xlu0 %v3359
        %v3361 = vpop.xlane.xlu0 %3360
        %v3362 = vsel %vm2848, %v3192, 0.0
        %3363 = vadd.xlane.f32.xlu0 %v3362
        %v3364 = vpop.xlane.xlu0 %3363
        %v3365 = vsel %vm2848, %v3194, 0.0
        %3366 = vadd.xlane.f32.xlu0 %v3365
        %v3367 = vpop.xlane.xlu0 %3366
        %v3368 = vsel %vm2848, %v3196, 0.0
        %3369 = vadd.xlane.f32.xlu0 %v3368
        %v3370 = vpop.xlane.xlu0 %3369
        %v3371 = vsel %vm2848, %v3198, 0.0
        %3372 = vadd.xlane.f32.xlu0 %v3371
        %v3373 = vpop.xlane.xlu0 %3372
        %v3374 = vsel %vm2848, %v3200, 0.0
        %3375 = vadd.xlane.f32.xlu0 %v3374
        %v3376 = vpop.xlane.xlu0 %3375
        %v3377 = vsel %vm2848, %v3202, 0.0
        %3378 = vadd.xlane.f32.xlu0 %v3377
        %v3379 = vpop.xlane.xlu0 %3378
        %v3380 = vsel %vm2848, %v3204, 0.0
        %3381 = vadd.xlane.f32.xlu0 %v3380
        %v3382 = vpop.xlane.xlu0 %3381
        %v3383 = vsel %vm2848, %v3206, 0.0
        %3384 = vadd.xlane.f32.xlu0 %v3383
        %v3385 = vpop.xlane.xlu0 %3384
        %v3386 = vsel %vm2848, %v3208, 0.0
        %3387 = vadd.xlane.f32.xlu0 %v3386
        %v3388 = vpop.xlane.xlu0 %3387
        %v3389 = vsel %vm2848, %v3210, 0.0
        %3390 = vadd.xlane.f32.xlu0 %v3389
        %v3391 = vpop.xlane.xlu0 %3390
        %v3392 = vsel %vm2848, %v3212, 0.0
        %3393 = vadd.xlane.f32.xlu0 %v3392
        %v3394 = vpop.xlane.xlu0 %3393
        %v3395 = vsel %vm2848, %v3214, 0.0
        %3396 = vadd.xlane.f32.xlu0 %v3395
        %v3397 = vpop.xlane.xlu0 %3396
        %v3398 = vsel %vm2848, %v3216, 0.0
        %3399 = vadd.xlane.f32.xlu0 %v3398
        %v3400 = vpop.xlane.xlu0 %3399
        %v3401 = vsel %vm2848, %v3218, 0.0
        %3402 = vadd.xlane.f32.xlu0 %v3401
        %v3403 = vpop.xlane.xlu0 %3402
        %v3404 = vsel %vm2848, %v3220, 0.0
        %3405 = vadd.xlane.f32.xlu0 %v3404
        %v3406 = vpop.xlane.xlu0 %3405
        %v3407 = vsel %vm2848, %v3222, 0.0
        %3408 = vadd.xlane.f32.xlu0 %v3407
        %v3409 = vpop.xlane.xlu0 %3408
        %v3410 = vsel %vm2848, %v3224, 0.0
        %3411 = vadd.xlane.f32.xlu0 %v3410
        %v3412 = vpop.xlane.xlu0 %3411
        %v3413 = vsel %vm2848, %v3226, 0.0
        %3414 = vadd.xlane.f32.xlu0 %v3413
        %v3415 = vpop.xlane.xlu0 %3414
        %v3416 = vsel %vm2848, %v3228, 0.0
        %3417 = vadd.xlane.f32.xlu0 %v3416
        %v3418 = vpop.xlane.xlu0 %3417
        %v3419 = vsel %vm2848, %v3230, 0.0
        %3420 = vadd.xlane.f32.xlu0 %v3419
        %v3421 = vpop.xlane.xlu0 %3420
        %v3422 = vsel %vm2848, %v3232, 0.0
        %3423 = vadd.xlane.f32.xlu0 %v3422
        %v3424 = vpop.xlane.xlu0 %3423
        %v3425 = vrcp.pop %v3235
        %v3426 = vrcp.pop %v3238
        %v3427 = vrcp.pop %v3241
        %v3428 = vrcp.pop %v3244
        %v3429 = vrcp.pop %v3247
        %v3430 = vrcp.pop %v3250
        %v3431 = vrcp.pop %v3253
        %v3432 = vrcp.pop %v3256
        %v3433 = vrcp.pop %v3259
        %v3434 = vrcp.pop %v3262
        %v3435 = vrcp.pop %v3265
        %v3436 = vrcp.pop %v3268
        %v3437 = vrcp.pop %v3271
        %v3438 = vrcp.pop %v3274
        %v3439 = vrcp.pop %v3277
        %v3440 = vrcp.pop %v3280
        %v3441 = vrcp.pop %v3283
        %v3442 = vrcp.pop %v3286
        %v3443 = vrcp.pop %v3289
        %v3444 = vrcp.pop %v3292
        %v3445 = vrcp.pop %v3295
        %v3446 = vrcp.pop %v3298
        %v3447 = vrcp.pop %v3301
        %v3448 = vrcp.pop %v3304
        %v3449 = vrcp.pop %v3307
        %v3450 = vrcp.pop %v3310
        %v3451 = vrcp.pop %v3313
        %v3452 = vrcp.pop %v3316
        %v3453 = vrcp.pop %v3319
        %v3454 = vrcp.pop %v3322
        %v3455 = vrcp.pop %v3325
        %v3456 = vrcp.pop %v3328
        %v3457 = vrcp.pop %v3331
        %v3458 = vrcp.pop %v3334
        %v3459 = vrcp.pop %v3337
        %v3460 = vrcp.pop %v3340
        %v3461 = vrcp.pop %v3343
        %v3462 = vrcp.pop %v3346
        %v3463 = vrcp.pop %v3349
        %v3464 = vrcp.pop %v3352
        %v3465 = vrcp.pop %v3355
        %v3466 = vrcp.pop %v3358
        %v3467 = vrcp.pop %v3361
        %v3468 = vrcp.pop %v3364
        %v3469 = vrcp.pop %v3367
        %v3470 = vrcp.pop %v3370
        %v3471 = vrcp.pop %v3373
        %v3472 = vrcp.pop %v3376
        %v3473 = vrcp.pop %v3379
        %v3474 = vrcp.pop %v3382
        %v3475 = vrcp.pop %v3385
        %v3476 = vrcp.pop %v3388
        %v3477 = vrcp.pop %v3391
        %v3478 = vrcp.pop %v3394
        %v3479 = vrcp.pop %v3397
        %v3480 = vrcp.pop %v3400
        %v3481 = vrcp.pop %v3403
        %v3482 = vrcp.pop %v3406
        %v3483 = vrcp.pop %v3409
        %v3484 = vrcp.pop %v3412
        %v3485 = vrcp.pop %v3415
        %v3486 = vrcp.pop %v3418
        %v3487 = vrcp.pop %v3421
        %v3488 = vrcp.pop %v3424
        %v3489 = vmul.f32 %v3106, %v3425
        %v3490 = vmul.f32 %v3108, %v3426
        %v3491 = vmul.f32 %v3110, %v3427
        %v3492 = vmul.f32 %v3112, %v3428
        %v3493 = vmul.f32 %v3114, %v3429
        %v3494 = vmul.f32 %v3116, %v3430
        %v3495 = vmul.f32 %v3118, %v3431
        %v3496 = vmul.f32 %v3120, %v3432
        %v3497 = vmul.f32 %v3122, %v3433
        %v3498 = vmul.f32 %v3124, %v3434
        %v3499 = vmul.f32 %v3126, %v3435
        %v3500 = vmul.f32 %v3128, %v3436
        %v3501 = vmul.f32 %v3130, %v3437
        %v3502 = vmul.f32 %v3132, %v3438
        %v3503 = vmul.f32 %v3134, %v3439
        %v3504 = vmul.f32 %v3136, %v3440
        %v3505 = vmul.f32 %v3138, %v3441
        %v3506 = vmul.f32 %v3140, %v3442
        %v3507 = vmul.f32 %v3142, %v3443
        %v3508 = vmul.f32 %v3144, %v3444
        %v3509 = vmul.f32 %v3146, %v3445
        %v3510 = vmul.f32 %v3148, %v3446
        %v3511 = vmul.f32 %v3150, %v3447
        %v3512 = vmul.f32 %v3152, %v3448
        %v3513 = vmul.f32 %v3154, %v3449
        %v3514 = vmul.f32 %v3156, %v3450
        %v3515 = vmul.f32 %v3158, %v3451
        %v3516 = vmul.f32 %v3160, %v3452
        %v3517 = vmul.f32 %v3162, %v3453
        %v3518 = vmul.f32 %v3164, %v3454
        %v3519 = vmul.f32 %v3166, %v3455
        %v3520 = vmul.f32 %v3168, %v3456
        %v3521 = vmul.f32 %v3170, %v3457
        %v3522 = vmul.f32 %v3172, %v3458
        %v3523 = vmul.f32 %v3174, %v3459
        %v3524 = vmul.f32 %v3176, %v3460
        %v3525 = vmul.f32 %v3178, %v3461
        %v3526 = vmul.f32 %v3180, %v3462
        %v3527 = vmul.f32 %v3182, %v3463
        %v3528 = vmul.f32 %v3184, %v3464
        %v3529 = vmul.f32 %v3186, %v3465
        %v3530 = vmul.f32 %v3188, %v3466
        %v3531 = vmul.f32 %v3190, %v3467
        %v3532 = vmul.f32 %v3192, %v3468
        %v3533 = vmul.f32 %v3194, %v3469
        %v3534 = vmul.f32 %v3196, %v3470
        %v3535 = vmul.f32 %v3198, %v3471
        %v3536 = vmul.f32 %v3200, %v3472
        %v3537 = vmul.f32 %v3202, %v3473
        %v3538 = vmul.f32 %v3204, %v3474
        %v3539 = vmul.f32 %v3206, %v3475
        %v3540 = vmul.f32 %v3208, %v3476
        %v3541 = vmul.f32 %v3210, %v3477
        %v3542 = vmul.f32 %v3212, %v3478
        %v3543 = vmul.f32 %v3214, %v3479
        %v3544 = vmul.f32 %v3216, %v3480
        %v3545 = vmul.f32 %v3218, %v3481
        %v3546 = vmul.f32 %v3220, %v3482
        %v3547 = vmul.f32 %v3222, %v3483
        %v3548 = vmul.f32 %v3224, %v3484
        %v3549 = vmul.f32 %v3226, %v3485
        %v3550 = vmul.f32 %v3228, %v3486
        %v3551 = vmul.f32 %v3230, %v3487
        %v3552 = vmul.f32 %v3232, %v3488
        %v3553 = vpack.c.bf16 %v3490, %v3489
        %v3554 = vpack.c.bf16 %v3492, %v3491
        %v3555 = vpack.c.bf16 %v3494, %v3493
        %v3556 = vpack.c.bf16 %v3496, %v3495
        %v3557 = vpack.c.bf16 %v3498, %v3497
        %v3558 = vpack.c.bf16 %v3500, %v3499
        %v3559 = vpack.c.bf16 %v3502, %v3501
        %v3560 = vpack.c.bf16 %v3504, %v3503
        %v3561 = vpack.c.bf16 %v3506, %v3505
        %v3562 = vpack.c.bf16 %v3508, %v3507
        %v3563 = vpack.c.bf16 %v3510, %v3509
        %v3564 = vpack.c.bf16 %v3512, %v3511
        %v3565 = vpack.c.bf16 %v3514, %v3513
        %v3566 = vpack.c.bf16 %v3516, %v3515
        %v3567 = vpack.c.bf16 %v3518, %v3517
        %v3568 = vpack.c.bf16 %v3520, %v3519
        %v3569 = vpack.c.bf16 %v3522, %v3521
        %v3570 = vpack.c.bf16 %v3524, %v3523
        %v3571 = vpack.c.bf16 %v3526, %v3525
        %v3572 = vpack.c.bf16 %v3528, %v3527
        %v3573 = vpack.c.bf16 %v3530, %v3529
        %v3574 = vpack.c.bf16 %v3532, %v3531
        %v3575 = vpack.c.bf16 %v3534, %v3533
        %v3576 = vpack.c.bf16 %v3536, %v3535
        %v3577 = vpack.c.bf16 %v3538, %v3537
        %v3578 = vpack.c.bf16 %v3540, %v3539
        %v3579 = vpack.c.bf16 %v3542, %v3541
        %v3580 = vpack.c.bf16 %v3544, %v3543
        %v3581 = vpack.c.bf16 %v3546, %v3545
        %v3582 = vpack.c.bf16 %v3548, %v3547
        %v3583 = vpack.c.bf16 %v3550, %v3549
        %v3584 = vpack.c.bf16 %v3552, %v3551
        %v3586 = vsel %vm2848, %v3553, 0
        %v3589 = vsel %vm2848, %v3554, 0
        %v3592 = vsel %vm2848, %v3555, 0
        %v3595 = vsel %vm2848, %v3556, 0
        %v3598 = vsel %vm2848, %v3557, 0
        %v3601 = vsel %vm2848, %v3558, 0
        %v3604 = vsel %vm2848, %v3559, 0
        %v3607 = vsel %vm2848, %v3560, 0
        %v3610 = vsel %vm2848, %v3561, 0
        %v3613 = vsel %vm2848, %v3562, 0
        %v3616 = vsel %vm2848, %v3563, 0
        %v3619 = vsel %vm2848, %v3564, 0
        %v3622 = vsel %vm2848, %v3565, 0
        %v3625 = vsel %vm2848, %v3566, 0
        %v3628 = vsel %vm2848, %v3567, 0
        %v3631 = vsel %vm2848, %v3568, 0
        %v3634 = vsel %vm2848, %v3569, 0
        %v3637 = vsel %vm2848, %v3570, 0
        %v3640 = vsel %vm2848, %v3571, 0
        %v3643 = vsel %vm2848, %v3572, 0
        %v3646 = vsel %vm2848, %v3573, 0
        %v3649 = vsel %vm2848, %v3574, 0
        %v3652 = vsel %vm2848, %v3575, 0
        %v3655 = vsel %vm2848, %v3576, 0
        %v3658 = vsel %vm2848, %v3577, 0
        %v3661 = vsel %vm2848, %v3578, 0
        %v3664 = vsel %vm2848, %v3579, 0
        %v3667 = vsel %vm2848, %v3580, 0
        %v3670 = vsel %vm2848, %v3581, 0
        %v3673 = vsel %vm2848, %v3582, 0
        %v3676 = vsel %vm2848, %v3583, 0
        %v3679 = vsel %vm2848, %v3584, 0
        %3681 = vmatprep.subr.bf16.mxu0 0
        %3682 = vmatpush1.bf16.msra.mxu0 0
        %3683 = vmatprep.subr.bf16.mxu0 0
        %3684 = vmatpush1.bf16.msra.mxu0 0
        %3685 = vmatprep.subr.bf16.mxu0 0
        %3686 = vmatpush1.bf16.msra.mxu0 0
        %3687 = vmatprep.subr.bf16.mxu0 0
        %3688 = vmatpush1.bf16.msra.mxu0 0
        %3689 = vmatprep.subr.bf16.mxu0 %v1737
        %3690 = vmatpush1.bf16.msra.mxu0 %v1736
        %3691 = vmatprep.subr.bf16.mxu0 %v1735
        %3692 = vmatpush1.bf16.msra.mxu0 %v1734
        %3693 = vmatprep.subr.bf16.mxu0 %v1733
        %3694 = vmatpush1.bf16.msra.mxu0 %v1732
        %3695 = vmatprep.subr.bf16.mxu0 %v1731
        %3696 = vmatpush1.bf16.msra.mxu0 %v1730
        %3697 = vmatprep.subr.bf16.mxu0 0
        %3698 = vmatpush2.bf16.msra.mxu0 0
        %3699 = vmatprep.subr.bf16.mxu0 0
        %3700 = vmatpush2.bf16.msra.mxu0 0
        %3701 = vmatprep.subr.bf16.mxu0 0
        %3702 = vmatpush2.bf16.msra.mxu0 0
        %3703 = vmatprep.subr.bf16.mxu0 0
        %3704 = vmatpush2.bf16.msra.mxu0 0
        %3705 = vmatprep.subr.bf16.mxu0 0
        %3706 = vmatpush2.bf16.msra.mxu0 0
        %3707 = vmatprep.subr.bf16.mxu0 0
        %3708 = vmatpush2.bf16.msra.mxu0 0
        %3709 = vmatprep.subr.bf16.mxu0 0
        %3710 = vmatpush2.bf16.msra.mxu0 0
        %3711 = vmatprep.subr.bf16.mxu0 0
        %3712 = vmatpush2.bf16.msra.mxu0 0
        %3713 = vmatprep.mubr.bf16.mxu0 0
        %3714 = vmatmul.mubr.bf16.gmra.mxu0 %v3586
        %v3715 = vpop.f32.mrf.mxu0
        %v3716 = vadd.f32 0.0, %v3715
        %v3717 = vpop.f32.mrf.mxu0
        %v3718 = vadd.f32 0.0, %v3717
        %v3719 = vpop.f32.mrf.mxu0
        %v3720 = vadd.f32 0.0, %v3719
        %v3721 = vpop.f32.mrf.mxu0
        %v3722 = vadd.f32 0.0, %v3721
        %3723 = vmatprep.mubr.bf16.mxu0 0
        %3724 = vmatmul.mubr.bf16.gmra.mxu0 %v3589
        %v3725 = vpop.f32.mrf.mxu0
        %v3726 = vadd.f32 0.0, %v3725
        %v3727 = vpop.f32.mrf.mxu0
        %v3728 = vadd.f32 0.0, %v3727
        %v3729 = vpop.f32.mrf.mxu0
        %v3730 = vadd.f32 0.0, %v3729
        %v3731 = vpop.f32.mrf.mxu0
        %v3732 = vadd.f32 0.0, %v3731
        %3733 = vmatprep.mubr.bf16.mxu0 0
        %3734 = vmatmul.mubr.bf16.gmra.mxu0 %v3592
        %v3735 = vpop.f32.mrf.mxu0
        %v3736 = vadd.f32 0.0, %v3735
        %v3737 = vpop.f32.mrf.mxu0
        %v3738 = vadd.f32 0.0, %v3737
        %v3739 = vpop.f32.mrf.mxu0
        %v3740 = vadd.f32 0.0, %v3739
        %v3741 = vpop.f32.mrf.mxu0
        %v3742 = vadd.f32 0.0, %v3741
        %3743 = vmatprep.mubr.bf16.mxu0 0
        %3744 = vmatmul.mubr.bf16.gmra.mxu0 %v3595
        %v3745 = vpop.f32.mrf.mxu0
        %v3746 = vadd.f32 0.0, %v3745
        %v3747 = vpop.f32.mrf.mxu0
        %v3748 = vadd.f32 0.0, %v3747
        %v3749 = vpop.f32.mrf.mxu0
        %v3750 = vadd.f32 0.0, %v3749
        %v3751 = vpop.f32.mrf.mxu0
        %v3752 = vadd.f32 0.0, %v3751
        %3753 = vmatprep.mubr.bf16.mxu0 0
        %3754 = vmatmul.mubr.bf16.gmra.mxu0 %v3598
        %v3755 = vpop.f32.mrf.mxu0
        %v3756 = vadd.f32 0.0, %v3755
        %v3757 = vpop.f32.mrf.mxu0
        %v3758 = vadd.f32 0.0, %v3757
        %v3759 = vpop.f32.mrf.mxu0
        %v3760 = vadd.f32 0.0, %v3759
        %v3761 = vpop.f32.mrf.mxu0
        %v3762 = vadd.f32 0.0, %v3761
        %3763 = vmatprep.mubr.bf16.mxu0 0
        %3764 = vmatmul.mubr.bf16.gmra.mxu0 %v3601
        %v3765 = vpop.f32.mrf.mxu0
        %v3766 = vadd.f32 0.0, %v3765
        %v3767 = vpop.f32.mrf.mxu0
        %v3768 = vadd.f32 0.0, %v3767
        %v3769 = vpop.f32.mrf.mxu0
        %v3770 = vadd.f32 0.0, %v3769
        %v3771 = vpop.f32.mrf.mxu0
        %v3772 = vadd.f32 0.0, %v3771
        %3773 = vmatprep.mubr.bf16.mxu0 0
        %3774 = vmatmul.mubr.bf16.gmra.mxu0 %v3604
        %v3775 = vpop.f32.mrf.mxu0
        %v3776 = vadd.f32 0.0, %v3775
        %v3777 = vpop.f32.mrf.mxu0
        %v3778 = vadd.f32 0.0, %v3777
        %v3779 = vpop.f32.mrf.mxu0
        %v3780 = vadd.f32 0.0, %v3779
        %v3781 = vpop.f32.mrf.mxu0
        %v3782 = vadd.f32 0.0, %v3781
        %3783 = vmatprep.mubr.bf16.mxu0 0
        %3784 = vmatmul.mubr.bf16.gmra.mxu0 %v3607
        %v3785 = vpop.f32.mrf.mxu0
        %v3786 = vadd.f32 0.0, %v3785
        %v3787 = vpop.f32.mrf.mxu0
        %v3788 = vadd.f32 0.0, %v3787
        %v3789 = vpop.f32.mrf.mxu0
        %v3790 = vadd.f32 0.0, %v3789
        %v3791 = vpop.f32.mrf.mxu0
        %v3792 = vadd.f32 0.0, %v3791
        %3793 = vmatprep.mubr.bf16.mxu0 0
        %3794 = vmatmul.mubr.bf16.gmra.mxu0 %v3610
        %v3795 = vpop.f32.mrf.mxu0
        %v3796 = vadd.f32 0.0, %v3795
        %v3797 = vpop.f32.mrf.mxu0
        %v3798 = vadd.f32 0.0, %v3797
        %v3799 = vpop.f32.mrf.mxu0
        %v3800 = vadd.f32 0.0, %v3799
        %v3801 = vpop.f32.mrf.mxu0
        %v3802 = vadd.f32 0.0, %v3801
        %3803 = vmatprep.mubr.bf16.mxu0 0
        %3804 = vmatmul.mubr.bf16.gmra.mxu0 %v3613
        %v3805 = vpop.f32.mrf.mxu0
        %v3806 = vadd.f32 0.0, %v3805
        %v3807 = vpop.f32.mrf.mxu0
        %v3808 = vadd.f32 0.0, %v3807
        %v3809 = vpop.f32.mrf.mxu0
        %v3810 = vadd.f32 0.0, %v3809
        %v3811 = vpop.f32.mrf.mxu0
        %v3812 = vadd.f32 0.0, %v3811
        %3813 = vmatprep.mubr.bf16.mxu0 0
        %3814 = vmatmul.mubr.bf16.gmra.mxu0 %v3616
        %v3815 = vpop.f32.mrf.mxu0
        %v3816 = vadd.f32 0.0, %v3815
        %v3817 = vpop.f32.mrf.mxu0
        %v3818 = vadd.f32 0.0, %v3817
        %v3819 = vpop.f32.mrf.mxu0
        %v3820 = vadd.f32 0.0, %v3819
        %v3821 = vpop.f32.mrf.mxu0
        %v3822 = vadd.f32 0.0, %v3821
        %3823 = vmatprep.mubr.bf16.mxu0 0
        %3824 = vmatmul.mubr.bf16.gmra.mxu0 %v3619
        %v3825 = vpop.f32.mrf.mxu0
        %v3826 = vadd.f32 0.0, %v3825
        %v3827 = vpop.f32.mrf.mxu0
        %v3828 = vadd.f32 0.0, %v3827
        %v3829 = vpop.f32.mrf.mxu0
        %v3830 = vadd.f32 0.0, %v3829
        %v3831 = vpop.f32.mrf.mxu0
        %v3832 = vadd.f32 0.0, %v3831
        %3833 = vmatprep.mubr.bf16.mxu0 0
        %3834 = vmatmul.mubr.bf16.gmra.mxu0 %v3622
        %v3835 = vpop.f32.mrf.mxu0
        %v3836 = vadd.f32 0.0, %v3835
        %v3837 = vpop.f32.mrf.mxu0
        %v3838 = vadd.f32 0.0, %v3837
        %v3839 = vpop.f32.mrf.mxu0
        %v3840 = vadd.f32 0.0, %v3839
        %v3841 = vpop.f32.mrf.mxu0
        %v3842 = vadd.f32 0.0, %v3841
        %3843 = vmatprep.mubr.bf16.mxu0 0
        %3844 = vmatmul.mubr.bf16.gmra.mxu0 %v3625
        %v3845 = vpop.f32.mrf.mxu0
        %v3846 = vadd.f32 0.0, %v3845
        %v3847 = vpop.f32.mrf.mxu0
        %v3848 = vadd.f32 0.0, %v3847
        %v3849 = vpop.f32.mrf.mxu0
        %v3850 = vadd.f32 0.0, %v3849
        %v3851 = vpop.f32.mrf.mxu0
        %v3852 = vadd.f32 0.0, %v3851
        %3853 = vmatprep.mubr.bf16.mxu0 0
        %3854 = vmatmul.mubr.bf16.gmra.mxu0 %v3628
        %v3855 = vpop.f32.mrf.mxu0
        %v3856 = vadd.f32 0.0, %v3855
        %v3857 = vpop.f32.mrf.mxu0
        %v3858 = vadd.f32 0.0, %v3857
        %v3859 = vpop.f32.mrf.mxu0
        %v3860 = vadd.f32 0.0, %v3859
        %v3861 = vpop.f32.mrf.mxu0
        %v3862 = vadd.f32 0.0, %v3861
        %3863 = vmatprep.mubr.bf16.mxu0 0
        %3864 = vmatmul.mubr.bf16.gmra.mxu0 %v3631
        %v3865 = vpop.f32.mrf.mxu0
        %v3866 = vadd.f32 0.0, %v3865
        %v3867 = vpop.f32.mrf.mxu0
        %v3868 = vadd.f32 0.0, %v3867
        %v3869 = vpop.f32.mrf.mxu0
        %v3870 = vadd.f32 0.0, %v3869
        %v3871 = vpop.f32.mrf.mxu0
        %v3872 = vadd.f32 0.0, %v3871
        %3873 = vmatprep.mubr.bf16.mxu0 0
        %3874 = vmatmul.mubr.bf16.gmra.mxu0 %v3634
        %v3875 = vpop.f32.mrf.mxu0
        %v3876 = vadd.f32 0.0, %v3875
        %v3877 = vpop.f32.mrf.mxu0
        %v3878 = vadd.f32 0.0, %v3877
        %v3879 = vpop.f32.mrf.mxu0
        %v3880 = vadd.f32 0.0, %v3879
        %v3881 = vpop.f32.mrf.mxu0
        %v3882 = vadd.f32 0.0, %v3881
        %3883 = vmatprep.mubr.bf16.mxu0 0
        %3884 = vmatmul.mubr.bf16.gmra.mxu0 %v3637
        %v3885 = vpop.f32.mrf.mxu0
        %v3886 = vadd.f32 0.0, %v3885
        %v3887 = vpop.f32.mrf.mxu0
        %v3888 = vadd.f32 0.0, %v3887
        %v3889 = vpop.f32.mrf.mxu0
        %v3890 = vadd.f32 0.0, %v3889
        %v3891 = vpop.f32.mrf.mxu0
        %v3892 = vadd.f32 0.0, %v3891
        %3893 = vmatprep.mubr.bf16.mxu0 0
        %3894 = vmatmul.mubr.bf16.gmra.mxu0 %v3640
        %v3895 = vpop.f32.mrf.mxu0
        %v3896 = vadd.f32 0.0, %v3895
        %v3897 = vpop.f32.mrf.mxu0
        %v3898 = vadd.f32 0.0, %v3897
        %v3899 = vpop.f32.mrf.mxu0
        %v3900 = vadd.f32 0.0, %v3899
        %v3901 = vpop.f32.mrf.mxu0
        %v3902 = vadd.f32 0.0, %v3901
        %3903 = vmatprep.mubr.bf16.mxu0 0
        %3904 = vmatmul.mubr.bf16.gmra.mxu0 %v3643
        %v3905 = vpop.f32.mrf.mxu0
        %v3906 = vadd.f32 0.0, %v3905
        %v3907 = vpop.f32.mrf.mxu0
        %v3908 = vadd.f32 0.0, %v3907
        %v3909 = vpop.f32.mrf.mxu0
        %v3910 = vadd.f32 0.0, %v3909
        %v3911 = vpop.f32.mrf.mxu0
        %v3912 = vadd.f32 0.0, %v3911
        %3913 = vmatprep.mubr.bf16.mxu0 0
        %3914 = vmatmul.mubr.bf16.gmra.mxu0 %v3646
        %v3915 = vpop.f32.mrf.mxu0
        %v3916 = vadd.f32 0.0, %v3915
        %v3917 = vpop.f32.mrf.mxu0
        %v3918 = vadd.f32 0.0, %v3917
        %v3919 = vpop.f32.mrf.mxu0
        %v3920 = vadd.f32 0.0, %v3919
        %v3921 = vpop.f32.mrf.mxu0
        %v3922 = vadd.f32 0.0, %v3921
        %3923 = vmatprep.mubr.bf16.mxu0 0
        %3924 = vmatmul.mubr.bf16.gmra.mxu0 %v3649
        %v3925 = vpop.f32.mrf.mxu0
        %v3926 = vadd.f32 0.0, %v3925
        %v3927 = vpop.f32.mrf.mxu0
        %v3928 = vadd.f32 0.0, %v3927
        %v3929 = vpop.f32.mrf.mxu0
        %v3930 = vadd.f32 0.0, %v3929
        %v3931 = vpop.f32.mrf.mxu0
        %v3932 = vadd.f32 0.0, %v3931
        %3933 = vmatprep.mubr.bf16.mxu0 0
        %3934 = vmatmul.mubr.bf16.gmra.mxu0 %v3652
        %v3935 = vpop.f32.mrf.mxu0
        %v3936 = vadd.f32 0.0, %v3935
        %v3937 = vpop.f32.mrf.mxu0
        %v3938 = vadd.f32 0.0, %v3937
        %v3939 = vpop.f32.mrf.mxu0
        %v3940 = vadd.f32 0.0, %v3939
        %v3941 = vpop.f32.mrf.mxu0
        %v3942 = vadd.f32 0.0, %v3941
        %3943 = vmatprep.mubr.bf16.mxu0 0
        %3944 = vmatmul.mubr.bf16.gmra.mxu0 %v3655
        %v3945 = vpop.f32.mrf.mxu0
        %v3946 = vadd.f32 0.0, %v3945
        %v3947 = vpop.f32.mrf.mxu0
        %v3948 = vadd.f32 0.0, %v3947
        %v3949 = vpop.f32.mrf.mxu0
        %v3950 = vadd.f32 0.0, %v3949
        %v3951 = vpop.f32.mrf.mxu0
        %v3952 = vadd.f32 0.0, %v3951
        %3953 = vmatprep.mubr.bf16.mxu0 0
        %3954 = vmatmul.mubr.bf16.gmra.mxu0 %v3658
        %v3955 = vpop.f32.mrf.mxu0
        %v3956 = vadd.f32 0.0, %v3955
        %v3957 = vpop.f32.mrf.mxu0
        %v3958 = vadd.f32 0.0, %v3957
        %v3959 = vpop.f32.mrf.mxu0
        %v3960 = vadd.f32 0.0, %v3959
        %v3961 = vpop.f32.mrf.mxu0
        %v3962 = vadd.f32 0.0, %v3961
        %3963 = vmatprep.mubr.bf16.mxu0 0
        %3964 = vmatmul.mubr.bf16.gmra.mxu0 %v3661
        %v3965 = vpop.f32.mrf.mxu0
        %v3966 = vadd.f32 0.0, %v3965
        %v3967 = vpop.f32.mrf.mxu0
        %v3968 = vadd.f32 0.0, %v3967
        %v3969 = vpop.f32.mrf.mxu0
        %v3970 = vadd.f32 0.0, %v3969
        %v3971 = vpop.f32.mrf.mxu0
        %v3972 = vadd.f32 0.0, %v3971
        %3973 = vmatprep.mubr.bf16.mxu0 0
        %3974 = vmatmul.mubr.bf16.gmra.mxu0 %v3664
        %v3975 = vpop.f32.mrf.mxu0
        %v3976 = vadd.f32 0.0, %v3975
        %v3977 = vpop.f32.mrf.mxu0
        %v3978 = vadd.f32 0.0, %v3977
        %v3979 = vpop.f32.mrf.mxu0
        %v3980 = vadd.f32 0.0, %v3979
        %v3981 = vpop.f32.mrf.mxu0
        %v3982 = vadd.f32 0.0, %v3981
        %3983 = vmatprep.mubr.bf16.mxu0 0
        %3984 = vmatmul.mubr.bf16.gmra.mxu0 %v3667
        %v3985 = vpop.f32.mrf.mxu0
        %v3986 = vadd.f32 0.0, %v3985
        %v3987 = vpop.f32.mrf.mxu0
        %v3988 = vadd.f32 0.0, %v3987
        %v3989 = vpop.f32.mrf.mxu0
        %v3990 = vadd.f32 0.0, %v3989
        %v3991 = vpop.f32.mrf.mxu0
        %v3992 = vadd.f32 0.0, %v3991
        %3993 = vmatprep.mubr.bf16.mxu0 0
        %3994 = vmatmul.mubr.bf16.gmra.mxu0 %v3670
        %v3995 = vpop.f32.mrf.mxu0
        %v3996 = vadd.f32 0.0, %v3995
        %v3997 = vpop.f32.mrf.mxu0
        %v3998 = vadd.f32 0.0, %v3997
        %v3999 = vpop.f32.mrf.mxu0
        %v4000 = vadd.f32 0.0, %v3999
        %v4001 = vpop.f32.mrf.mxu0
        %v4002 = vadd.f32 0.0, %v4001
        %4003 = vmatprep.mubr.bf16.mxu0 0
        %4004 = vmatmul.mubr.bf16.gmra.mxu0 %v3673
        %v4005 = vpop.f32.mrf.mxu0
        %v4006 = vadd.f32 0.0, %v4005
        %v4007 = vpop.f32.mrf.mxu0
        %v4008 = vadd.f32 0.0, %v4007
        %v4009 = vpop.f32.mrf.mxu0
        %v4010 = vadd.f32 0.0, %v4009
        %v4011 = vpop.f32.mrf.mxu0
        %v4012 = vadd.f32 0.0, %v4011
        %4013 = vmatprep.mubr.bf16.mxu0 0
        %4014 = vmatmul.mubr.bf16.gmra.mxu0 %v3676
        %v4015 = vpop.f32.mrf.mxu0
        %v4016 = vadd.f32 0.0, %v4015
        %v4017 = vpop.f32.mrf.mxu0
        %v4018 = vadd.f32 0.0, %v4017
        %v4019 = vpop.f32.mrf.mxu0
        %v4020 = vadd.f32 0.0, %v4019
        %v4021 = vpop.f32.mrf.mxu0
        %v4022 = vadd.f32 0.0, %v4021
        %4023 = vmatprep.mubr.bf16.mxu0 0
        %4024 = vmatmul.mubr.bf16.gmra.mxu0 %v3679
        %v4025 = vpop.f32.mrf.mxu0
        %v4026 = vadd.f32 0.0, %v4025
        %v4027 = vpop.f32.mrf.mxu0
        %v4028 = vadd.f32 0.0, %v4027
        %v4029 = vpop.f32.mrf.mxu0
        %v4030 = vadd.f32 0.0, %v4029
        %v4031 = vpop.f32.mrf.mxu0
        %v4032 = vadd.f32 0.0, %v4031
        %4033 = vdwg.mxu0
        %v4034 = vpack.c.bf16 %v3720, %v3716
        %v4035 = vpack.c.bf16 %v3722, %v3718
        %v4036 = vpack.c.bf16 %v3730, %v3726
        %v4037 = vpack.c.bf16 %v3732, %v3728
        %v4038 = vpack.c.bf16 %v3740, %v3736
        %v4039 = vpack.c.bf16 %v3742, %v3738
        %v4040 = vpack.c.bf16 %v3750, %v3746
        %v4041 = vpack.c.bf16 %v3752, %v3748
        %v4042 = vpack.c.bf16 %v3760, %v3756
        %v4043 = vpack.c.bf16 %v3762, %v3758
        %v4044 = vpack.c.bf16 %v3770, %v3766
        %v4045 = vpack.c.bf16 %v3772, %v3768
        %v4046 = vpack.c.bf16 %v3780, %v3776
        %v4047 = vpack.c.bf16 %v3782, %v3778
        %v4048 = vpack.c.bf16 %v3790, %v3786
        %v4049 = vpack.c.bf16 %v3792, %v3788
        %v4050 = vpack.c.bf16 %v3800, %v3796
        %v4051 = vpack.c.bf16 %v3802, %v3798
        %v4052 = vpack.c.bf16 %v3810, %v3806
        %v4053 = vpack.c.bf16 %v3812, %v3808
        %v4054 = vpack.c.bf16 %v3820, %v3816
        %v4055 = vpack.c.bf16 %v3822, %v3818
        %v4056 = vpack.c.bf16 %v3830, %v3826
        %v4057 = vpack.c.bf16 %v3832, %v3828
        %v4058 = vpack.c.bf16 %v3840, %v3836
        %v4059 = vpack.c.bf16 %v3842, %v3838
        %v4060 = vpack.c.bf16 %v3850, %v3846
        %v4061 = vpack.c.bf16 %v3852, %v3848
        %v4062 = vpack.c.bf16 %v3860, %v3856
        %v4063 = vpack.c.bf16 %v3862, %v3858
        %v4064 = vpack.c.bf16 %v3870, %v3866
        %v4065 = vpack.c.bf16 %v3872, %v3868
        %v4066 = vpack.c.bf16 %v3880, %v3876
        %v4067 = vpack.c.bf16 %v3882, %v3878
        %v4068 = vpack.c.bf16 %v3890, %v3886
        %v4069 = vpack.c.bf16 %v3892, %v3888
        %v4070 = vpack.c.bf16 %v3900, %v3896
        %v4071 = vpack.c.bf16 %v3902, %v3898
        %v4072 = vpack.c.bf16 %v3910, %v3906
        %v4073 = vpack.c.bf16 %v3912, %v3908
        %v4074 = vpack.c.bf16 %v3920, %v3916
        %v4075 = vpack.c.bf16 %v3922, %v3918
        %v4076 = vpack.c.bf16 %v3930, %v3926
        %v4077 = vpack.c.bf16 %v3932, %v3928
        %v4078 = vpack.c.bf16 %v3940, %v3936
        %v4079 = vpack.c.bf16 %v3942, %v3938
        %v4080 = vpack.c.bf16 %v3950, %v3946
        %v4081 = vpack.c.bf16 %v3952, %v3948
        %v4082 = vpack.c.bf16 %v3960, %v3956
        %v4083 = vpack.c.bf16 %v3962, %v3958
        %v4084 = vpack.c.bf16 %v3970, %v3966
        %v4085 = vpack.c.bf16 %v3972, %v3968
        %v4086 = vpack.c.bf16 %v3980, %v3976
        %v4087 = vpack.c.bf16 %v3982, %v3978
        %v4088 = vpack.c.bf16 %v3990, %v3986
        %v4089 = vpack.c.bf16 %v3992, %v3988
        %v4090 = vpack.c.bf16 %v4000, %v3996
        %v4091 = vpack.c.bf16 %v4002, %v3998
        %v4092 = vpack.c.bf16 %v4010, %v4006
        %v4093 = vpack.c.bf16 %v4012, %v4008
        %v4094 = vpack.c.bf16 %v4020, %v4016
        %v4095 = vpack.c.bf16 %v4022, %v4018
        %v4096 = vpack.c.bf16 %v4030, %v4026
        %v4097 = vpack.c.bf16 %v4032, %v4028
        %v4098 = vmul.bf16 %v4034, %v2303
        %v4099 = vmul.bf16 %v4035, %v2304
        %v4100 = vmul.bf16 %v4036, %v2305
        %v4101 = vmul.bf16 %v4037, %v2306
        %v4102 = vmul.bf16 %v4038, %v2307
        %v4103 = vmul.bf16 %v4039, %v2308
        %v4104 = vmul.bf16 %v4040, %v2309
        %v4105 = vmul.bf16 %v4041, %v2310
        %v4106 = vmul.bf16 %v4042, %v2311
        %v4107 = vmul.bf16 %v4043, %v2312
        %v4108 = vmul.bf16 %v4044, %v2313
        %v4109 = vmul.bf16 %v4045, %v2314
        %v4110 = vmul.bf16 %v4046, %v2315
        %v4111 = vmul.bf16 %v4047, %v2316
        %v4112 = vmul.bf16 %v4048, %v2317
        %v4113 = vmul.bf16 %v4049, %v2318
        %v4114 = vmul.bf16 %v4050, %v2319
        %v4115 = vmul.bf16 %v4051, %v2320
        %v4116 = vmul.bf16 %v4052, %v2321
        %v4117 = vmul.bf16 %v4053, %v2322
        %v4118 = vmul.bf16 %v4054, %v2323
        %v4119 = vmul.bf16 %v4055, %v2324
        %v4120 = vmul.bf16 %v4056, %v2325
        %v4121 = vmul.bf16 %v4057, %v2326
        %v4122 = vmul.bf16 %v4058, %v2327
        %v4123 = vmul.bf16 %v4059, %v2328
        %v4124 = vmul.bf16 %v4060, %v2329
        %v4125 = vmul.bf16 %v4061, %v2330
        %v4126 = vmul.bf16 %v4062, %v2331
        %v4127 = vmul.bf16 %v4063, %v2332
        %v4128 = vmul.bf16 %v4064, %v2333
        %v4129 = vmul.bf16 %v4065, %v2334
        %v4130 = vmul.bf16 %v4066, %v2335
        %v4131 = vmul.bf16 %v4067, %v2336
        %v4132 = vmul.bf16 %v4068, %v2337
        %v4133 = vmul.bf16 %v4069, %v2338
        %v4134 = vmul.bf16 %v4070, %v2339
        %v4135 = vmul.bf16 %v4071, %v2340
        %v4136 = vmul.bf16 %v4072, %v2341
        %v4137 = vmul.bf16 %v4073, %v2342
        %v4138 = vmul.bf16 %v4074, %v2343
        %v4139 = vmul.bf16 %v4075, %v2344
        %v4140 = vmul.bf16 %v4076, %v2345
        %v4141 = vmul.bf16 %v4077, %v2346
        %v4142 = vmul.bf16 %v4078, %v2347
        %v4143 = vmul.bf16 %v4079, %v2348
        %v4144 = vmul.bf16 %v4080, %v2349
        %v4145 = vmul.bf16 %v4081, %v2350
        %v4146 = vmul.bf16 %v4082, %v2351
        %v4147 = vmul.bf16 %v4083, %v2352
        %v4148 = vmul.bf16 %v4084, %v2353
        %v4149 = vmul.bf16 %v4085, %v2354
        %v4150 = vmul.bf16 %v4086, %v2355
        %v4151 = vmul.bf16 %v4087, %v2356
        %v4152 = vmul.bf16 %v4088, %v2357
        %v4153 = vmul.bf16 %v4089, %v2358
        %v4154 = vmul.bf16 %v4090, %v2359
        %v4155 = vmul.bf16 %v4091, %v2360
        %v4156 = vmul.bf16 %v4092, %v2361
        %v4157 = vmul.bf16 %v4093, %v2362
        %v4158 = vmul.bf16 %v4094, %v2363
        %v4159 = vmul.bf16 %v4095, %v2364
        %v4160 = vmul.bf16 %v4096, %v2365
        %v4161 = vmul.bf16 %v4097, %v2366
        %v4162 = vunpack.c.l.bf16 %v4098
        %v4163 = vunpack.c.l.bf16 %v4099
        %v4164 = vunpack.c.h.bf16 %v4098
        %v4165 = vunpack.c.h.bf16 %v4099
        %v4166 = vunpack.c.l.bf16 %v4100
        %v4167 = vunpack.c.l.bf16 %v4101
        %v4168 = vunpack.c.h.bf16 %v4100
        %v4169 = vunpack.c.h.bf16 %v4101
        %v4170 = vunpack.c.l.bf16 %v4102
        %v4171 = vunpack.c.l.bf16 %v4103
        %v4172 = vunpack.c.h.bf16 %v4102
        %v4173 = vunpack.c.h.bf16 %v4103
        %v4174 = vunpack.c.l.bf16 %v4104
        %v4175 = vunpack.c.l.bf16 %v4105
        %v4176 = vunpack.c.h.bf16 %v4104
        %v4177 = vunpack.c.h.bf16 %v4105
        %v4178 = vunpack.c.l.bf16 %v4106
        %v4179 = vunpack.c.l.bf16 %v4107
        %v4180 = vunpack.c.h.bf16 %v4106
        %v4181 = vunpack.c.h.bf16 %v4107
        %v4182 = vunpack.c.l.bf16 %v4108
        %v4183 = vunpack.c.l.bf16 %v4109
        %v4184 = vunpack.c.h.bf16 %v4108
        %v4185 = vunpack.c.h.bf16 %v4109
        %v4186 = vunpack.c.l.bf16 %v4110
        %v4187 = vunpack.c.l.bf16 %v4111
        %v4188 = vunpack.c.h.bf16 %v4110
        %v4189 = vunpack.c.h.bf16 %v4111
        %v4190 = vunpack.c.l.bf16 %v4112
        %v4191 = vunpack.c.l.bf16 %v4113
        %v4192 = vunpack.c.h.bf16 %v4112
        %v4193 = vunpack.c.h.bf16 %v4113
        %v4194 = vunpack.c.l.bf16 %v4114
        %v4195 = vunpack.c.l.bf16 %v4115
        %v4196 = vunpack.c.h.bf16 %v4114
        %v4197 = vunpack.c.h.bf16 %v4115
        %v4198 = vunpack.c.l.bf16 %v4116
        %v4199 = vunpack.c.l.bf16 %v4117
        %v4200 = vunpack.c.h.bf16 %v4116
        %v4201 = vunpack.c.h.bf16 %v4117
        %v4202 = vunpack.c.l.bf16 %v4118
        %v4203 = vunpack.c.l.bf16 %v4119
        %v4204 = vunpack.c.h.bf16 %v4118
        %v4205 = vunpack.c.h.bf16 %v4119
        %v4206 = vunpack.c.l.bf16 %v4120
        %v4207 = vunpack.c.l.bf16 %v4121
        %v4208 = vunpack.c.h.bf16 %v4120
        %v4209 = vunpack.c.h.bf16 %v4121
        %v4210 = vunpack.c.l.bf16 %v4122
        %v4211 = vunpack.c.l.bf16 %v4123
        %v4212 = vunpack.c.h.bf16 %v4122
        %v4213 = vunpack.c.h.bf16 %v4123
        %v4214 = vunpack.c.l.bf16 %v4124
        %v4215 = vunpack.c.l.bf16 %v4125
        %v4216 = vunpack.c.h.bf16 %v4124
        %v4217 = vunpack.c.h.bf16 %v4125
        %v4218 = vunpack.c.l.bf16 %v4126
        %v4219 = vunpack.c.l.bf16 %v4127
        %v4220 = vunpack.c.h.bf16 %v4126
        %v4221 = vunpack.c.h.bf16 %v4127
        %v4222 = vunpack.c.l.bf16 %v4128
        %v4223 = vunpack.c.l.bf16 %v4129
        %v4224 = vunpack.c.h.bf16 %v4128
        %v4225 = vunpack.c.h.bf16 %v4129
        %v4226 = vunpack.c.l.bf16 %v4130
        %v4227 = vunpack.c.l.bf16 %v4131
        %v4228 = vunpack.c.h.bf16 %v4130
        %v4229 = vunpack.c.h.bf16 %v4131
        %v4230 = vunpack.c.l.bf16 %v4132
        %v4231 = vunpack.c.l.bf16 %v4133
        %v4232 = vunpack.c.h.bf16 %v4132
        %v4233 = vunpack.c.h.bf16 %v4133
        %v4234 = vunpack.c.l.bf16 %v4134
        %v4235 = vunpack.c.l.bf16 %v4135
        %v4236 = vunpack.c.h.bf16 %v4134
        %v4237 = vunpack.c.h.bf16 %v4135
        %v4238 = vunpack.c.l.bf16 %v4136
        %v4239 = vunpack.c.l.bf16 %v4137
        %v4240 = vunpack.c.h.bf16 %v4136
        %v4241 = vunpack.c.h.bf16 %v4137
        %v4242 = vunpack.c.l.bf16 %v4138
        %v4243 = vunpack.c.l.bf16 %v4139
        %v4244 = vunpack.c.h.bf16 %v4138
        %v4245 = vunpack.c.h.bf16 %v4139
        %v4246 = vunpack.c.l.bf16 %v4140
        %v4247 = vunpack.c.l.bf16 %v4141
        %v4248 = vunpack.c.h.bf16 %v4140
        %v4249 = vunpack.c.h.bf16 %v4141
        %v4250 = vunpack.c.l.bf16 %v4142
        %v4251 = vunpack.c.l.bf16 %v4143
        %v4252 = vunpack.c.h.bf16 %v4142
        %v4253 = vunpack.c.h.bf16 %v4143
        %v4254 = vunpack.c.l.bf16 %v4144
        %v4255 = vunpack.c.l.bf16 %v4145
        %v4256 = vunpack.c.h.bf16 %v4144
        %v4257 = vunpack.c.h.bf16 %v4145
        %v4258 = vunpack.c.l.bf16 %v4146
        %v4259 = vunpack.c.l.bf16 %v4147
        %v4260 = vunpack.c.h.bf16 %v4146
        %v4261 = vunpack.c.h.bf16 %v4147
        %v4262 = vunpack.c.l.bf16 %v4148
        %v4263 = vunpack.c.l.bf16 %v4149
        %v4264 = vunpack.c.h.bf16 %v4148
        %v4265 = vunpack.c.h.bf16 %v4149
        %v4266 = vunpack.c.l.bf16 %v4150
        %v4267 = vunpack.c.l.bf16 %v4151
        %v4268 = vunpack.c.h.bf16 %v4150
        %v4269 = vunpack.c.h.bf16 %v4151
        %v4270 = vunpack.c.l.bf16 %v4152
        %v4271 = vunpack.c.l.bf16 %v4153
        %v4272 = vunpack.c.h.bf16 %v4152
        %v4273 = vunpack.c.h.bf16 %v4153
        %v4274 = vunpack.c.l.bf16 %v4154
        %v4275 = vunpack.c.l.bf16 %v4155
        %v4276 = vunpack.c.h.bf16 %v4154
        %v4277 = vunpack.c.h.bf16 %v4155
        %v4278 = vunpack.c.l.bf16 %v4156
        %v4279 = vunpack.c.l.bf16 %v4157
        %v4280 = vunpack.c.h.bf16 %v4156
        %v4281 = vunpack.c.h.bf16 %v4157
        %v4282 = vunpack.c.l.bf16 %v4158
        %v4283 = vunpack.c.l.bf16 %v4159
        %v4284 = vunpack.c.h.bf16 %v4158
        %v4285 = vunpack.c.h.bf16 %v4159
        %v4286 = vunpack.c.l.bf16 %v4160
        %v4287 = vunpack.c.l.bf16 %v4161
        %v4288 = vunpack.c.h.bf16 %v4160
        %v4289 = vunpack.c.h.bf16 %v4161
        %v4290 = vadd.f32 %v4162, %v4178
        %v4291 = vadd.f32 %v4290, %v4194
        %v4292 = vadd.f32 %v4291, %v4210
        %v4293 = vadd.f32 %v4292, %v4226
        %v4294 = vadd.f32 %v4293, %v4242
        %v4295 = vadd.f32 %v4294, %v4258
        %v4296 = vadd.f32 %v4295, %v4274
        %v4297 = vadd.f32 %v4163, %v4179
        %v4298 = vadd.f32 %v4297, %v4195
        %v4299 = vadd.f32 %v4298, %v4211
        %v4300 = vadd.f32 %v4299, %v4227
        %v4301 = vadd.f32 %v4300, %v4243
        %v4302 = vadd.f32 %v4301, %v4259
        %v4303 = vadd.f32 %v4302, %v4275
        %v4304 = vadd.f32 %v4164, %v4180
        %v4305 = vadd.f32 %v4304, %v4196
        %v4306 = vadd.f32 %v4305, %v4212
        %v4307 = vadd.f32 %v4306, %v4228
        %v4308 = vadd.f32 %v4307, %v4244
        %v4309 = vadd.f32 %v4308, %v4260
        %v4310 = vadd.f32 %v4309, %v4276
        %v4311 = vadd.f32 %v4165, %v4181
        %v4312 = vadd.f32 %v4311, %v4197
        %v4313 = vadd.f32 %v4312, %v4213
        %v4314 = vadd.f32 %v4313, %v4229
        %v4315 = vadd.f32 %v4314, %v4245
        %v4316 = vadd.f32 %v4315, %v4261
        %v4317 = vadd.f32 %v4316, %v4277
        %v4318 = vadd.f32 %v4166, %v4182
        %v4319 = vadd.f32 %v4318, %v4198
        %v4320 = vadd.f32 %v4319, %v4214
        %v4321 = vadd.f32 %v4320, %v4230
        %v4322 = vadd.f32 %v4321, %v4246
        %v4323 = vadd.f32 %v4322, %v4262
        %v4324 = vadd.f32 %v4323, %v4278
        %v4325 = vadd.f32 %v4167, %v4183
        %v4326 = vadd.f32 %v4325, %v4199
        %v4327 = vadd.f32 %v4326, %v4215
        %v4328 = vadd.f32 %v4327, %v4231
        %v4329 = vadd.f32 %v4328, %v4247
        %v4330 = vadd.f32 %v4329, %v4263
        %v4331 = vadd.f32 %v4330, %v4279
        %v4332 = vadd.f32 %v4168, %v4184
        %v4333 = vadd.f32 %v4332, %v4200
        %v4334 = vadd.f32 %v4333, %v4216
        %v4335 = vadd.f32 %v4334, %v4232
        %v4336 = vadd.f32 %v4335, %v4248
        %v4337 = vadd.f32 %v4336, %v4264
        %v4338 = vadd.f32 %v4337, %v4280
        %v4339 = vadd.f32 %v4169, %v4185
        %v4340 = vadd.f32 %v4339, %v4201
        %v4341 = vadd.f32 %v4340, %v4217
        %v4342 = vadd.f32 %v4341, %v4233
        %v4343 = vadd.f32 %v4342, %v4249
        %v4344 = vadd.f32 %v4343, %v4265
        %v4345 = vadd.f32 %v4344, %v4281
        %v4346 = vadd.f32 %v4170, %v4186
        %v4347 = vadd.f32 %v4346, %v4202
        %v4348 = vadd.f32 %v4347, %v4218
        %v4349 = vadd.f32 %v4348, %v4234
        %v4350 = vadd.f32 %v4349, %v4250
        %v4351 = vadd.f32 %v4350, %v4266
        %v4352 = vadd.f32 %v4351, %v4282
        %v4353 = vadd.f32 %v4171, %v4187
        %v4354 = vadd.f32 %v4353, %v4203
        %v4355 = vadd.f32 %v4354, %v4219
        %v4356 = vadd.f32 %v4355, %v4235
        %v4357 = vadd.f32 %v4356, %v4251
        %v4358 = vadd.f32 %v4357, %v4267
        %v4359 = vadd.f32 %v4358, %v4283
        %v4360 = vadd.f32 %v4172, %v4188
        %v4361 = vadd.f32 %v4360, %v4204
        %v4362 = vadd.f32 %v4361, %v4220
        %v4363 = vadd.f32 %v4362, %v4236
        %v4364 = vadd.f32 %v4363, %v4252
        %v4365 = vadd.f32 %v4364, %v4268
        %v4366 = vadd.f32 %v4365, %v4284
        %v4367 = vadd.f32 %v4173, %v4189
        %v4368 = vadd.f32 %v4367, %v4205
        %v4369 = vadd.f32 %v4368, %v4221
        %v4370 = vadd.f32 %v4369, %v4237
        %v4371 = vadd.f32 %v4370, %v4253
        %v4372 = vadd.f32 %v4371, %v4269
        %v4373 = vadd.f32 %v4372, %v4285
        %v4374 = vadd.f32 %v4174, %v4190
        %v4375 = vadd.f32 %v4374, %v4206
        %v4376 = vadd.f32 %v4375, %v4222
        %v4377 = vadd.f32 %v4376, %v4238
        %v4378 = vadd.f32 %v4377, %v4254
        %v4379 = vadd.f32 %v4378, %v4270
        %v4380 = vadd.f32 %v4379, %v4286
        %v4381 = vadd.f32 %v4175, %v4191
        %v4382 = vadd.f32 %v4381, %v4207
        %v4383 = vadd.f32 %v4382, %v4223
        %v4384 = vadd.f32 %v4383, %v4239
        %v4385 = vadd.f32 %v4384, %v4255
        %v4386 = vadd.f32 %v4385, %v4271
        %v4387 = vadd.f32 %v4386, %v4287
        %v4388 = vadd.f32 %v4176, %v4192
        %v4389 = vadd.f32 %v4388, %v4208
        %v4390 = vadd.f32 %v4389, %v4224
        %v4391 = vadd.f32 %v4390, %v4240
        %v4392 = vadd.f32 %v4391, %v4256
        %v4393 = vadd.f32 %v4392, %v4272
        %v4394 = vadd.f32 %v4393, %v4288
        %v4395 = vadd.f32 %v4177, %v4193
        %v4396 = vadd.f32 %v4395, %v4209
        %v4397 = vadd.f32 %v4396, %v4225
        %v4398 = vadd.f32 %v4397, %v4241
        %v4399 = vadd.f32 %v4398, %v4257
        %v4400 = vadd.f32 %v4399, %v4273
        %v4401 = vadd.f32 %v4400, %v4289
        %v4402 = vpack.c.bf16 %v4310, %v4296
        %v4403 = vpack.c.bf16 %v4317, %v4303
        %v4404 = vpack.c.bf16 %v4338, %v4324
        %v4405 = vpack.c.bf16 %v4345, %v4331
        %v4406 = vpack.c.bf16 %v4366, %v4352
        %v4407 = vpack.c.bf16 %v4373, %v4359
        %v4408 = vpack.c.bf16 %v4394, %v4380
        %v4409 = vpack.c.bf16 %v4401, %v4387
        %v4410 = vld [vmem:[%s7] sm:$0xff]
        %v4411 = vld [vmem:[%s7 + $0x8] sm:$0xff]
        %v4412 = vld [vmem:[%s7 + $0x10] sm:$0xff]
        %v4413 = vld [vmem:[%s7 + $0x18] sm:$0xff]
        %v4414 = vld [vmem:[%s7 + $0x20] sm:$0xff]
        %v4415 = vld [vmem:[%s7 + $0x28] sm:$0xff]
        %v4416 = vld [vmem:[%s7 + $0x30] sm:$0xff]
        %v4417 = vld [vmem:[%s7 + $0x38] sm:$0xff]
        %v4418 = vld [vmem:[%s7 + $0x40] sm:$0xff]
        %v4419 = vld [vmem:[%s7 + $0x48] sm:$0xff]
        %v4420 = vld [vmem:[%s7 + $0x50] sm:$0xff]
        %v4421 = vld [vmem:[%s7 + $0x58] sm:$0xff]
        %v4422 = vld [vmem:[%s7 + $0x60] sm:$0xff]
        %v4423 = vld [vmem:[%s7 + $0x68] sm:$0xff]
        %v4424 = vld [vmem:[%s7 + $0x70] sm:$0xff]
        %v4425 = vld [vmem:[%s7 + $0x78] sm:$0xff]
        %v4426 = vld [vmem:[%s7 + $0x80] sm:$0xff]
        %v4427 = vld [vmem:[%s7 + $0x88] sm:$0xff]
        %v4428 = vld [vmem:[%s7 + $0x90] sm:$0xff]
        %v4429 = vld [vmem:[%s7 + $0x98] sm:$0xff]
        %v4430 = vld [vmem:[%s7 + $0xa0] sm:$0xff]
        %v4431 = vld [vmem:[%s7 + $0xa8] sm:$0xff]
        %v4432 = vld [vmem:[%s7 + $0xb0] sm:$0xff]
        %v4433 = vld [vmem:[%s7 + $0xb8] sm:$0xff]
        %v4434 = vld [vmem:[%s7 + $0xc0] sm:$0xff]
        %v4435 = vld [vmem:[%s7 + $0xc8] sm:$0xff]
        %v4436 = vld [vmem:[%s7 + $0xd0] sm:$0xff]
        %v4437 = vld [vmem:[%s7 + $0xd8] sm:$0xff]
        %v4438 = vld [vmem:[%s7 + $0xe0] sm:$0xff]
        %v4439 = vld [vmem:[%s7 + $0xe8] sm:$0xff]
        %v4440 = vld [vmem:[%s7 + $0xf0] sm:$0xff]
        %v4441 = vld [vmem:[%s7 + $0xf8] sm:$0xff]
        %v4442 = vld [vmem:[%s8] sm:$0x3]
        %v4444 = vlaneseq
        %v4445 = vshrl.u32 %v4444, 7
        %v4446 = vsub.s32 0, %v4445
        %v4447 = vrot.slane %v4442, %v4446
        %v4448 = vlaneseq
        %v4449 = vshrl.u32 %v4448, 7
        %v4450 = vsub.s32 1, %v4449
        %v4451 = vrot.slane %v4442, %v4450
        %v4486 = vunpack.c.l.b16 %v4410
        %v4487 = vunpack.c.h.b16 %v4410
        %v4488 = vunpack.c.l.b16 %v4411
        %v4489 = vunpack.c.h.b16 %v4411
        %v4490 = vunpack.c.l.b16 %v4412
        %v4491 = vunpack.c.h.b16 %v4412
        %v4492 = vunpack.c.l.b16 %v4413
        %v4493 = vunpack.c.h.b16 %v4413
        %v4494 = vunpack.c.l.b16 %v4414
        %v4495 = vunpack.c.h.b16 %v4414
        %v4496 = vunpack.c.l.b16 %v4415
        %v4497 = vunpack.c.h.b16 %v4415
        %v4498 = vunpack.c.l.b16 %v4416
        %v4499 = vunpack.c.h.b16 %v4416
        %v4500 = vunpack.c.l.b16 %v4417
        %v4501 = vunpack.c.h.b16 %v4417
        %v4502 = vunpack.c.l.b16 %v4418
        %v4503 = vunpack.c.h.b16 %v4418
        %v4504 = vunpack.c.l.b16 %v4419
        %v4505 = vunpack.c.h.b16 %v4419
        %v4506 = vunpack.c.l.b16 %v4420
        %v4507 = vunpack.c.h.b16 %v4420
        %v4508 = vunpack.c.l.b16 %v4421
        %v4509 = vunpack.c.h.b16 %v4421
        %v4510 = vunpack.c.l.b16 %v4422
        %v4511 = vunpack.c.h.b16 %v4422
        %v4512 = vunpack.c.l.b16 %v4423
        %v4513 = vunpack.c.h.b16 %v4423
        %v4514 = vunpack.c.l.b16 %v4424
        %v4515 = vunpack.c.h.b16 %v4424
        %v4516 = vunpack.c.l.b16 %v4425
        %v4517 = vunpack.c.h.b16 %v4425
        %v4518 = vunpack.c.l.b16 %v4426
        %v4519 = vunpack.c.h.b16 %v4426
        %v4520 = vunpack.c.l.b16 %v4427
        %v4521 = vunpack.c.h.b16 %v4427
        %v4522 = vunpack.c.l.b16 %v4428
        %v4523 = vunpack.c.h.b16 %v4428
        %v4524 = vunpack.c.l.b16 %v4429
        %v4525 = vunpack.c.h.b16 %v4429
        %v4526 = vunpack.c.l.b16 %v4430
        %v4527 = vunpack.c.h.b16 %v4430
        %v4528 = vunpack.c.l.b16 %v4431
        %v4529 = vunpack.c.h.b16 %v4431
        %v4530 = vunpack.c.l.b16 %v4432
        %v4531 = vunpack.c.h.b16 %v4432
        %v4532 = vunpack.c.l.b16 %v4433
        %v4533 = vunpack.c.h.b16 %v4433
        %v4534 = vunpack.c.l.b16 %v4434
        %v4535 = vunpack.c.h.b16 %v4434
        %v4536 = vunpack.c.l.b16 %v4435
        %v4537 = vunpack.c.h.b16 %v4435
        %v4538 = vunpack.c.l.b16 %v4436
        %v4539 = vunpack.c.h.b16 %v4436
        %v4540 = vunpack.c.l.b16 %v4437
        %v4541 = vunpack.c.h.b16 %v4437
        %v4542 = vunpack.c.l.b16 %v4438
        %v4543 = vunpack.c.h.b16 %v4438
        %v4544 = vunpack.c.l.b16 %v4439
        %v4545 = vunpack.c.h.b16 %v4439
        %v4546 = vunpack.c.l.b16 %v4440
        %v4547 = vunpack.c.h.b16 %v4440
        %v4548 = vunpack.c.l.b16 %v4441
        %v4549 = vunpack.c.h.b16 %v4441
        %v4550 = vpack.c.b16 %v4488, %v4486
        %v4551 = vpack.c.b16 %v4489, %v4487
        %v4552 = vpack.c.b16 %v4492, %v4490
        %v4553 = vpack.c.b16 %v4493, %v4491
        %v4554 = vpack.c.b16 %v4496, %v4494
        %v4555 = vpack.c.b16 %v4497, %v4495
        %v4556 = vpack.c.b16 %v4500, %v4498
        %v4557 = vpack.c.b16 %v4501, %v4499
        %v4558 = vpack.c.b16 %v4504, %v4502
        %v4559 = vpack.c.b16 %v4505, %v4503
        %v4560 = vpack.c.b16 %v4508, %v4506
        %v4561 = vpack.c.b16 %v4509, %v4507
        %v4562 = vpack.c.b16 %v4512, %v4510
        %v4563 = vpack.c.b16 %v4513, %v4511
        %v4564 = vpack.c.b16 %v4516, %v4514
        %v4565 = vpack.c.b16 %v4517, %v4515
        %v4566 = vpack.c.b16 %v4520, %v4518
        %v4567 = vpack.c.b16 %v4521, %v4519
        %v4568 = vpack.c.b16 %v4524, %v4522
        %v4569 = vpack.c.b16 %v4525, %v4523
        %v4570 = vpack.c.b16 %v4528, %v4526
        %v4571 = vpack.c.b16 %v4529, %v4527
        %v4572 = vpack.c.b16 %v4532, %v4530
        %v4573 = vpack.c.b16 %v4533, %v4531
        %v4574 = vpack.c.b16 %v4536, %v4534
        %v4575 = vpack.c.b16 %v4537, %v4535
        %v4576 = vpack.c.b16 %v4540, %v4538
        %v4577 = vpack.c.b16 %v4541, %v4539
        %v4578 = vpack.c.b16 %v4544, %v4542
        %v4579 = vpack.c.b16 %v4545, %v4543
        %v4580 = vpack.c.b16 %v4548, %v4546
        %v4581 = vpack.c.b16 %v4549, %v4547
        %4614 = vmatprep.subr.bf16.mxu0 %v4565
        %4615 = vmatpush1.bf16.msra.mxu0 %v4564
        %4616 = vmatprep.subr.bf16.mxu0 %v4563
        %4617 = vmatpush1.bf16.msra.mxu0 %v4562
        %4618 = vmatprep.subr.bf16.mxu0 %v4561
        %4619 = vmatpush1.bf16.msra.mxu0 %v4560
        %4620 = vmatprep.subr.bf16.mxu0 %v4559
        %4621 = vmatpush1.bf16.msra.mxu0 %v4558
        %4622 = vmatprep.subr.bf16.mxu0 %v4557
        %4623 = vmatpush1.bf16.msra.mxu0 %v4556
        %4624 = vmatprep.subr.bf16.mxu0 %v4555
        %4625 = vmatpush1.bf16.msra.mxu0 %v4554
        %4626 = vmatprep.subr.bf16.mxu0 %v4553
        %4627 = vmatpush1.bf16.msra.mxu0 %v4552
        %4628 = vmatprep.subr.bf16.mxu0 %v4551
        %4629 = vmatpush1.bf16.msra.mxu0 %v4550
        %4630 = vmatprep.subr.bf16.mxu0 %v4581
        %4631 = vmatpush2.bf16.msra.mxu0 %v4580
        %4632 = vmatprep.subr.bf16.mxu0 %v4579
        %4633 = vmatpush2.bf16.msra.mxu0 %v4578
        %4634 = vmatprep.subr.bf16.mxu0 %v4577
        %4635 = vmatpush2.bf16.msra.mxu0 %v4576
        %4636 = vmatprep.subr.bf16.mxu0 %v4575
        %4637 = vmatpush2.bf16.msra.mxu0 %v4574
        %4638 = vmatprep.subr.bf16.mxu0 %v4573
        %4639 = vmatpush2.bf16.msra.mxu0 %v4572
        %4640 = vmatprep.subr.bf16.mxu0 %v4571
        %4641 = vmatpush2.bf16.msra.mxu0 %v4570
        %4642 = vmatprep.subr.bf16.mxu0 %v4569
        %4643 = vmatpush2.bf16.msra.mxu0 %v4568
        %4644 = vmatprep.subr.bf16.mxu0 %v4567
        %4645 = vmatpush2.bf16.msra.mxu0 %v4566
        %4646 = vmatprep.mubr.bf16.mxu0 %v4403
        %4647 = vmatmul.mubr.bf16.gmra.mxu0 %v4402
        %v4648 = vpop.f32.mrf.mxu0
        %v4649 = vadd.f32 %v4447, %v4648
        %v4650 = vpop.f32.mrf.mxu0
        %v4651 = vadd.f32 %v4451, %v4650
        %v4652 = vpop.f32.mrf.mxu0
        %v4653 = vadd.f32 %v4447, %v4652
        %v4654 = vpop.f32.mrf.mxu0
        %v4655 = vadd.f32 %v4451, %v4654
        %4656 = vmatprep.mubr.bf16.mxu0 %v4405
        %4657 = vmatmul.mubr.bf16.gmra.mxu0 %v4404
        %v4658 = vpop.f32.mrf.mxu0
        %v4659 = vadd.f32 %v4447, %v4658
        %v4660 = vpop.f32.mrf.mxu0
        %v4661 = vadd.f32 %v4451, %v4660
        %v4662 = vpop.f32.mrf.mxu0
        %v4663 = vadd.f32 %v4447, %v4662
        %v4664 = vpop.f32.mrf.mxu0
        %v4665 = vadd.f32 %v4451, %v4664
        %4666 = vmatprep.mubr.bf16.mxu0 %v4407
        %4667 = vmatmul.mubr.bf16.gmra.mxu0 %v4406
        %v4668 = vpop.f32.mrf.mxu0
        %v4669 = vadd.f32 %v4447, %v4668
        %v4670 = vpop.f32.mrf.mxu0
        %v4671 = vadd.f32 %v4451, %v4670
        %v4672 = vpop.f32.mrf.mxu0
        %v4673 = vadd.f32 %v4447, %v4672
        %v4674 = vpop.f32.mrf.mxu0
        %v4675 = vadd.f32 %v4451, %v4674
        %4676 = vmatprep.mubr.bf16.mxu0 %v4409
        %4677 = vmatmul.mubr.bf16.gmra.mxu0 %v4408
        %v4678 = vpop.f32.mrf.mxu0
        %v4679 = vadd.f32 %v4447, %v4678
        %v4680 = vpop.f32.mrf.mxu0
        %v4681 = vadd.f32 %v4451, %v4680
        %v4682 = vpop.f32.mrf.mxu0
        %v4683 = vadd.f32 %v4447, %v4682
        %v4684 = vpop.f32.mrf.mxu0
        %v4685 = vadd.f32 %v4451, %v4684
        %4686 = vdwg.mxu0
        %v4687 = vpack.c.bf16 %v4653, %v4649
        %v4688 = vpack.c.bf16 %v4655, %v4651
        %v4689 = vpack.c.bf16 %v4663, %v4659
        %v4690 = vpack.c.bf16 %v4665, %v4661
        %v4691 = vpack.c.bf16 %v4673, %v4669
        %v4692 = vpack.c.bf16 %v4675, %v4671
        %v4693 = vpack.c.bf16 %v4683, %v4679
        %v4694 = vpack.c.bf16 %v4685, %v4681
        %v4695 = vld [vmem:[%s13] sm:$0xf]
        %v4696 = vld [vmem:[%s13 + $0x4] sm:$0xf]
        %v4697 = vld [vmem:[%s13 + $0x8] sm:$0xf]
        %v4698 = vld [vmem:[%s13 + $0xc] sm:$0xf]
        %v4699 = vld [vmem:[%s13 + $0x10] sm:$0xf]
        %v4700 = vld [vmem:[%s13 + $0x14] sm:$0xf]
        %v4701 = vld [vmem:[%s13 + $0x18] sm:$0xf]
        %v4702 = vld [vmem:[%s13 + $0x1c] sm:$0xf]
        %v4703 = vld [vmem:[%s13 + $0x20] sm:$0xf]
        %v4704 = vld [vmem:[%s13 + $0x24] sm:$0xf]
        %v4705 = vld [vmem:[%s13 + $0x28] sm:$0xf]
        %v4706 = vld [vmem:[%s13 + $0x2c] sm:$0xf]
        %v4707 = vld [vmem:[%s13 + $0x30] sm:$0xf]
        %v4708 = vld [vmem:[%s13 + $0x34] sm:$0xf]
        %v4709 = vld [vmem:[%s13 + $0x38] sm:$0xf]
        %v4710 = vld [vmem:[%s13 + $0x3c] sm:$0xf]
        %v4711 = vld [vmem:[%s13 + $0x40] sm:$0xf]
        %v4712 = vld [vmem:[%s13 + $0x44] sm:$0xf]
        %v4713 = vld [vmem:[%s13 + $0x48] sm:$0xf]
        %v4714 = vld [vmem:[%s13 + $0x4c] sm:$0xf]
        %v4715 = vld [vmem:[%s13 + $0x50] sm:$0xf]
        %v4716 = vld [vmem:[%s13 + $0x54] sm:$0xf]
        %v4717 = vld [vmem:[%s13 + $0x58] sm:$0xf]
        %v4718 = vld [vmem:[%s13 + $0x5c] sm:$0xf]
        %v4719 = vld [vmem:[%s13 + $0x60] sm:$0xf]
        %v4720 = vld [vmem:[%s13 + $0x64] sm:$0xf]
        %v4721 = vld [vmem:[%s13 + $0x68] sm:$0xf]
        %v4722 = vld [vmem:[%s13 + $0x6c] sm:$0xf]
        %v4723 = vld [vmem:[%s13 + $0x70] sm:$0xf]
        %v4724 = vld [vmem:[%s13 + $0x74] sm:$0xf]
        %v4725 = vld [vmem:[%s13 + $0x78] sm:$0xf]
        %v4726 = vld [vmem:[%s13 + $0x7c] sm:$0xf]
        %v4727 = vld [vmem:[%s13 + $0x80] sm:$0xf]
        %v4728 = vld [vmem:[%s13 + $0x84] sm:$0xf]
        %v4729 = vld [vmem:[%s13 + $0x88] sm:$0xf]
        %v4730 = vld [vmem:[%s13 + $0x8c] sm:$0xf]
        %v4731 = vld [vmem:[%s13 + $0x90] sm:$0xf]
        %v4732 = vld [vmem:[%s13 + $0x94] sm:$0xf]
        %v4733 = vld [vmem:[%s13 + $0x98] sm:$0xf]
        %v4734 = vld [vmem:[%s13 + $0x9c] sm:$0xf]
        %v4735 = vld [vmem:[%s13 + $0xa0] sm:$0xf]
        %v4736 = vld [vmem:[%s13 + $0xa4] sm:$0xf]
        %v4737 = vld [vmem:[%s13 + $0xa8] sm:$0xf]
        %v4738 = vld [vmem:[%s13 + $0xac] sm:$0xf]
        %v4739 = vld [vmem:[%s13 + $0xb0] sm:$0xf]
        %v4740 = vld [vmem:[%s13 + $0xb4] sm:$0xf]
        %v4741 = vld [vmem:[%s13 + $0xb8] sm:$0xf]
        %v4742 = vld [vmem:[%s13 + $0xbc] sm:$0xf]
        %v4743 = vld [vmem:[%s13 + $0xc0] sm:$0xf]
        %v4744 = vld [vmem:[%s13 + $0xc4] sm:$0xf]
        %v4745 = vld [vmem:[%s13 + $0xc8] sm:$0xf]
        %v4746 = vld [vmem:[%s13 + $0xcc] sm:$0xf]
        %v4747 = vld [vmem:[%s13 + $0xd0] sm:$0xf]
        %v4748 = vld [vmem:[%s13 + $0xd4] sm:$0xf]
        %v4749 = vld [vmem:[%s13 + $0xd8] sm:$0xf]
        %v4750 = vld [vmem:[%s13 + $0xdc] sm:$0xf]
        %v4751 = vld [vmem:[%s13 + $0xe0] sm:$0xf]
        %v4752 = vld [vmem:[%s13 + $0xe4] sm:$0xf]
        %v4753 = vld [vmem:[%s13 + $0xe8] sm:$0xf]
        %v4754 = vld [vmem:[%s13 + $0xec] sm:$0xf]
        %v4755 = vld [vmem:[%s13 + $0xf0] sm:$0xf]
        %v4756 = vld [vmem:[%s13 + $0xf4] sm:$0xf]
        %v4757 = vld [vmem:[%s13 + $0xf8] sm:$0xf]
        %v4758 = vld [vmem:[%s13 + $0xfc] sm:$0xf]
        %v4759 = vmul.bf16 %v4687, %v2303
        %v4760 = vmul.bf16 %v4688, %v2304
        %v4761 = vmul.bf16 %v4689, %v2305
        %v4762 = vmul.bf16 %v4690, %v2306
        %v4763 = vmul.bf16 %v4691, %v2307
        %v4764 = vmul.bf16 %v4692, %v2308
        %v4765 = vmul.bf16 %v4693, %v2309
        %v4766 = vmul.bf16 %v4694, %v2310
        %v4767 = vmul.bf16 %v4687, %v2311
        %v4768 = vmul.bf16 %v4688, %v2312
        %v4769 = vmul.bf16 %v4689, %v2313
        %v4770 = vmul.bf16 %v4690, %v2314
        %v4771 = vmul.bf16 %v4691, %v2315
        %v4772 = vmul.bf16 %v4692, %v2316
        %v4773 = vmul.bf16 %v4693, %v2317
        %v4774 = vmul.bf16 %v4694, %v2318
        %v4775 = vmul.bf16 %v4687, %v2319
        %v4776 = vmul.bf16 %v4688, %v2320
        %v4777 = vmul.bf16 %v4689, %v2321
        %v4778 = vmul.bf16 %v4690, %v2322
        %v4779 = vmul.bf16 %v4691, %v2323
        %v4780 = vmul.bf16 %v4692, %v2324
        %v4781 = vmul.bf16 %v4693, %v2325
        %v4782 = vmul.bf16 %v4694, %v2326
        %v4783 = vmul.bf16 %v4687, %v2327
        %v4784 = vmul.bf16 %v4688, %v2328
        %v4785 = vmul.bf16 %v4689, %v2329
        %v4786 = vmul.bf16 %v4690, %v2330
        %v4787 = vmul.bf16 %v4691, %v2331
        %v4788 = vmul.bf16 %v4692, %v2332
        %v4789 = vmul.bf16 %v4693, %v2333
        %v4790 = vmul.bf16 %v4694, %v2334
        %v4791 = vmul.bf16 %v4687, %v2335
        %v4792 = vmul.bf16 %v4688, %v2336
        %v4793 = vmul.bf16 %v4689, %v2337
        %v4794 = vmul.bf16 %v4690, %v2338
        %v4795 = vmul.bf16 %v4691, %v2339
        %v4796 = vmul.bf16 %v4692, %v2340
        %v4797 = vmul.bf16 %v4693, %v2341
        %v4798 = vmul.bf16 %v4694, %v2342
        %v4799 = vmul.bf16 %v4687, %v2343
        %v4800 = vmul.bf16 %v4688, %v2344
        %v4801 = vmul.bf16 %v4689, %v2345
        %v4802 = vmul.bf16 %v4690, %v2346
        %v4803 = vmul.bf16 %v4691, %v2347
        %v4804 = vmul.bf16 %v4692, %v2348
        %v4805 = vmul.bf16 %v4693, %v2349
        %v4806 = vmul.bf16 %v4694, %v2350
        %v4807 = vmul.bf16 %v4687, %v2351
        %v4808 = vmul.bf16 %v4688, %v2352
        %v4809 = vmul.bf16 %v4689, %v2353
        %v4810 = vmul.bf16 %v4690, %v2354
        %v4811 = vmul.bf16 %v4691, %v2355
        %v4812 = vmul.bf16 %v4692, %v2356
        %v4813 = vmul.bf16 %v4693, %v2357
        %v4814 = vmul.bf16 %v4694, %v2358
        %v4815 = vmul.bf16 %v4687, %v2359
        %v4816 = vmul.bf16 %v4688, %v2360
        %v4817 = vmul.bf16 %v4689, %v2361
        %v4818 = vmul.bf16 %v4690, %v2362
        %v4819 = vmul.bf16 %v4691, %v2363
        %v4820 = vmul.bf16 %v4692, %v2364
        %v4821 = vmul.bf16 %v4693, %v2365
        %v4822 = vmul.bf16 %v4694, %v2366
        %v4823 = vunpack.c.l.bf16 %v4695
        %v4824 = vunpack.c.l.bf16 %v4696
        %v4825 = vunpack.c.l.bf16 %v4697
        %v4826 = vunpack.c.l.bf16 %v4698
        %v4827 = vunpack.c.l.bf16 %v4699
        %v4828 = vunpack.c.l.bf16 %v4700
        %v4829 = vunpack.c.l.bf16 %v4701
        %v4830 = vunpack.c.l.bf16 %v4702
        %v4831 = vunpack.c.l.bf16 %v4703
        %v4832 = vunpack.c.l.bf16 %v4704
        %v4833 = vunpack.c.l.bf16 %v4705
        %v4834 = vunpack.c.l.bf16 %v4706
        %v4835 = vunpack.c.l.bf16 %v4707
        %v4836 = vunpack.c.l.bf16 %v4708
        %v4837 = vunpack.c.l.bf16 %v4709
        %v4838 = vunpack.c.l.bf16 %v4710
        %v4839 = vunpack.c.l.bf16 %v4711
        %v4840 = vunpack.c.l.bf16 %v4712
        %v4841 = vunpack.c.l.bf16 %v4713
        %v4842 = vunpack.c.l.bf16 %v4714
        %v4843 = vunpack.c.l.bf16 %v4715
        %v4844 = vunpack.c.l.bf16 %v4716
        %v4845 = vunpack.c.l.bf16 %v4717
        %v4846 = vunpack.c.l.bf16 %v4718
        %v4847 = vunpack.c.l.bf16 %v4719
        %v4848 = vunpack.c.l.bf16 %v4720
        %v4849 = vunpack.c.l.bf16 %v4721
        %v4850 = vunpack.c.l.bf16 %v4722
        %v4851 = vunpack.c.l.bf16 %v4723
        %v4852 = vunpack.c.l.bf16 %v4724
        %v4853 = vunpack.c.l.bf16 %v4725
        %v4854 = vunpack.c.l.bf16 %v4726
        %v4855 = vunpack.c.l.bf16 %v4727
        %v4856 = vunpack.c.l.bf16 %v4728
        %v4857 = vunpack.c.l.bf16 %v4729
        %v4858 = vunpack.c.l.bf16 %v4730
        %v4859 = vunpack.c.l.bf16 %v4731
        %v4860 = vunpack.c.l.bf16 %v4732
        %v4861 = vunpack.c.l.bf16 %v4733
        %v4862 = vunpack.c.l.bf16 %v4734
        %v4863 = vunpack.c.l.bf16 %v4735
        %v4864 = vunpack.c.l.bf16 %v4736
        %v4865 = vunpack.c.l.bf16 %v4737
        %v4866 = vunpack.c.l.bf16 %v4738
        %v4867 = vunpack.c.l.bf16 %v4739
        %v4868 = vunpack.c.l.bf16 %v4740
        %v4869 = vunpack.c.l.bf16 %v4741
        %v4870 = vunpack.c.l.bf16 %v4742
        %v4871 = vunpack.c.l.bf16 %v4743
        %v4872 = vunpack.c.l.bf16 %v4744
        %v4873 = vunpack.c.l.bf16 %v4745
        %v4874 = vunpack.c.l.bf16 %v4746
        %v4875 = vunpack.c.l.bf16 %v4747
        %v4876 = vunpack.c.l.bf16 %v4748
        %v4877 = vunpack.c.l.bf16 %v4749
        %v4878 = vunpack.c.l.bf16 %v4750
        %v4879 = vunpack.c.l.bf16 %v4751
        %v4880 = vunpack.c.l.bf16 %v4752
        %v4881 = vunpack.c.l.bf16 %v4753
        %v4882 = vunpack.c.l.bf16 %v4754
        %v4883 = vunpack.c.l.bf16 %v4755
        %v4884 = vunpack.c.l.bf16 %v4756
        %v4885 = vunpack.c.l.bf16 %v4757
        %v4886 = vunpack.c.l.bf16 %v4758
        %4887 = vmatprep.subr.bf16.mxu0 0
        %4888 = vmatpush1.bf16.xpose.msra.mxu0 0
        %4889 = vmatprep.subr.bf16.mxu0 0
        %4890 = vmatpush1.bf16.xpose.msra.mxu0 0
        %4891 = vmatprep.subr.bf16.mxu0 0
        %4892 = vmatpush1.bf16.xpose.msra.mxu0 0
        %4893 = vmatprep.subr.bf16.mxu0 0
        %4894 = vmatpush1.bf16.xpose.msra.mxu0 0
        %4895 = vmatprep.subr.bf16.mxu0 %v1745
        %4896 = vmatpush1.bf16.xpose.msra.mxu0 %v1744
        %4897 = vmatprep.subr.bf16.mxu0 %v1743
        %4898 = vmatpush1.bf16.xpose.msra.mxu0 %v1742
        %4899 = vmatprep.subr.bf16.mxu0 %v1741
        %4900 = vmatpush1.bf16.xpose.msra.mxu0 %v1740
        %4901 = vmatprep.subr.bf16.mxu0 %v1739
        %4902 = vmatpush1.bf16.xpose.msra.mxu0 %v1738
        %4903 = vmatprep.subr.bf16.mxu0 0
        %4904 = vmatpush2.bf16.xpose.msra.mxu0 0
        %4905 = vmatprep.subr.bf16.mxu0 0
        %4906 = vmatpush2.bf16.xpose.msra.mxu0 0
        %4907 = vmatprep.subr.bf16.mxu0 0
        %4908 = vmatpush2.bf16.xpose.msra.mxu0 0
        %4909 = vmatprep.subr.bf16.mxu0 0
        %4910 = vmatpush2.bf16.xpose.msra.mxu0 0
        %4911 = vmatprep.subr.bf16.mxu0 0
        %4912 = vmatpush2.bf16.xpose.msra.mxu0 0
        %4913 = vmatprep.subr.bf16.mxu0 0
        %4914 = vmatpush2.bf16.xpose.msra.mxu0 0
        %4915 = vmatprep.subr.bf16.mxu0 0
        %4916 = vmatpush2.bf16.xpose.msra.mxu0 0
        %4917 = vmatprep.subr.bf16.mxu0 0
        %4918 = vmatpush2.bf16.xpose.msra.mxu0 0
        %4919 = vmatprep.mubr.bf16.mxu0 %v4760
        %4920 = vmatmul.mubr.bf16.gmra.mxu0 %v4759
        %v4921 = vpop.f32.mrf.mxu0
        %v4922 = vadd.f32 %v4823, %v4921
        %v4923 = vpop.f32.mrf.mxu0
        %v4924 = vpop.f32.mrf.mxu0
        %v4925 = vadd.f32 %v4824, %v4924
        %v4926 = vpop.f32.mrf.mxu0
        %4927 = vmatprep.mubr.bf16.mxu0 %v4762
        %4928 = vmatmul.mubr.bf16.gmra.mxu0 %v4761
        %v4929 = vpop.f32.mrf.mxu0
        %v4930 = vadd.f32 %v4825, %v4929
        %v4931 = vpop.f32.mrf.mxu0
        %v4932 = vpop.f32.mrf.mxu0
        %v4933 = vadd.f32 %v4826, %v4932
        %v4934 = vpop.f32.mrf.mxu0
        %4935 = vmatprep.mubr.bf16.mxu0 %v4764
        %4936 = vmatmul.mubr.bf16.gmra.mxu0 %v4763
        %v4937 = vpop.f32.mrf.mxu0
        %v4938 = vadd.f32 %v4827, %v4937
        %v4939 = vpop.f32.mrf.mxu0
        %v4940 = vpop.f32.mrf.mxu0
        %v4941 = vadd.f32 %v4828, %v4940
        %v4942 = vpop.f32.mrf.mxu0
        %4943 = vmatprep.mubr.bf16.mxu0 %v4766
        %4944 = vmatmul.mubr.bf16.gmra.mxu0 %v4765
        %v4945 = vpop.f32.mrf.mxu0
        %v4946 = vadd.f32 %v4829, %v4945
        %v4947 = vpop.f32.mrf.mxu0
        %v4948 = vpop.f32.mrf.mxu0
        %v4949 = vadd.f32 %v4830, %v4948
        %v4950 = vpop.f32.mrf.mxu0
        %4951 = vmatprep.mubr.bf16.mxu0 %v4768
        %4952 = vmatmul.mubr.bf16.gmra.mxu0 %v4767
        %v4953 = vpop.f32.mrf.mxu0
        %v4954 = vadd.f32 %v4831, %v4953
        %v4955 = vpop.f32.mrf.mxu0
        %v4956 = vpop.f32.mrf.mxu0
        %v4957 = vadd.f32 %v4832, %v4956
        %v4958 = vpop.f32.mrf.mxu0
        %4959 = vmatprep.mubr.bf16.mxu0 %v4770
        %4960 = vmatmul.mubr.bf16.gmra.mxu0 %v4769
        %v4961 = vpop.f32.mrf.mxu0
        %v4962 = vadd.f32 %v4833, %v4961
        %v4963 = vpop.f32.mrf.mxu0
        %v4964 = vpop.f32.mrf.mxu0
        %v4965 = vadd.f32 %v4834, %v4964
        %v4966 = vpop.f32.mrf.mxu0
        %4967 = vmatprep.mubr.bf16.mxu0 %v4772
        %4968 = vmatmul.mubr.bf16.gmra.mxu0 %v4771
        %v4969 = vpop.f32.mrf.mxu0
        %v4970 = vadd.f32 %v4835, %v4969
        %v4971 = vpop.f32.mrf.mxu0
        %v4972 = vpop.f32.mrf.mxu0
        %v4973 = vadd.f32 %v4836, %v4972
        %v4974 = vpop.f32.mrf.mxu0
        %4975 = vmatprep.mubr.bf16.mxu0 %v4774
        %4976 = vmatmul.mubr.bf16.gmra.mxu0 %v4773
        %v4977 = vpop.f32.mrf.mxu0
        %v4978 = vadd.f32 %v4837, %v4977
        %v4979 = vpop.f32.mrf.mxu0
        %v4980 = vpop.f32.mrf.mxu0
        %v4981 = vadd.f32 %v4838, %v4980
        %v4982 = vpop.f32.mrf.mxu0
        %4983 = vmatprep.mubr.bf16.mxu0 %v4776
        %4984 = vmatmul.mubr.bf16.gmra.mxu0 %v4775
        %v4985 = vpop.f32.mrf.mxu0
        %v4986 = vadd.f32 %v4839, %v4985
        %v4987 = vpop.f32.mrf.mxu0
        %v4988 = vpop.f32.mrf.mxu0
        %v4989 = vadd.f32 %v4840, %v4988
        %v4990 = vpop.f32.mrf.mxu0
        %4991 = vmatprep.mubr.bf16.mxu0 %v4778
        %4992 = vmatmul.mubr.bf16.gmra.mxu0 %v4777
        %v4993 = vpop.f32.mrf.mxu0
        %v4994 = vadd.f32 %v4841, %v4993
        %v4995 = vpop.f32.mrf.mxu0
        %v4996 = vpop.f32.mrf.mxu0
        %v4997 = vadd.f32 %v4842, %v4996
        %v4998 = vpop.f32.mrf.mxu0
        %4999 = vmatprep.mubr.bf16.mxu0 %v4780
        %5000 = vmatmul.mubr.bf16.gmra.mxu0 %v4779
        %v5001 = vpop.f32.mrf.mxu0
        %v5002 = vadd.f32 %v4843, %v5001
        %v5003 = vpop.f32.mrf.mxu0
        %v5004 = vpop.f32.mrf.mxu0
        %v5005 = vadd.f32 %v4844, %v5004
        %v5006 = vpop.f32.mrf.mxu0
        %5007 = vmatprep.mubr.bf16.mxu0 %v4782
        %5008 = vmatmul.mubr.bf16.gmra.mxu0 %v4781
        %v5009 = vpop.f32.mrf.mxu0
        %v5010 = vadd.f32 %v4845, %v5009
        %v5011 = vpop.f32.mrf.mxu0
        %v5012 = vpop.f32.mrf.mxu0
        %v5013 = vadd.f32 %v4846, %v5012
        %v5014 = vpop.f32.mrf.mxu0
        %5015 = vmatprep.mubr.bf16.mxu0 %v4784
        %5016 = vmatmul.mubr.bf16.gmra.mxu0 %v4783
        %v5017 = vpop.f32.mrf.mxu0
        %v5018 = vadd.f32 %v4847, %v5017
        %v5019 = vpop.f32.mrf.mxu0
        %v5020 = vpop.f32.mrf.mxu0
        %v5021 = vadd.f32 %v4848, %v5020
        %v5022 = vpop.f32.mrf.mxu0
        %5023 = vmatprep.mubr.bf16.mxu0 %v4786
        %5024 = vmatmul.mubr.bf16.gmra.mxu0 %v4785
        %v5025 = vpop.f32.mrf.mxu0
        %v5026 = vadd.f32 %v4849, %v5025
        %v5027 = vpop.f32.mrf.mxu0
        %v5028 = vpop.f32.mrf.mxu0
        %v5029 = vadd.f32 %v4850, %v5028
        %v5030 = vpop.f32.mrf.mxu0
        %5031 = vmatprep.mubr.bf16.mxu0 %v4788
        %5032 = vmatmul.mubr.bf16.gmra.mxu0 %v4787
        %v5033 = vpop.f32.mrf.mxu0
        %v5034 = vadd.f32 %v4851, %v5033
        %v5035 = vpop.f32.mrf.mxu0
        %v5036 = vpop.f32.mrf.mxu0
        %v5037 = vadd.f32 %v4852, %v5036
        %v5038 = vpop.f32.mrf.mxu0
        %5039 = vmatprep.mubr.bf16.mxu0 %v4790
        %5040 = vmatmul.mubr.bf16.gmra.mxu0 %v4789
        %v5041 = vpop.f32.mrf.mxu0
        %v5042 = vadd.f32 %v4853, %v5041
        %v5043 = vpop.f32.mrf.mxu0
        %v5044 = vpop.f32.mrf.mxu0
        %v5045 = vadd.f32 %v4854, %v5044
        %v5046 = vpop.f32.mrf.mxu0
        %5047 = vmatprep.mubr.bf16.mxu0 %v4792
        %5048 = vmatmul.mubr.bf16.gmra.mxu0 %v4791
        %v5049 = vpop.f32.mrf.mxu0
        %v5050 = vadd.f32 %v4855, %v5049
        %v5051 = vpop.f32.mrf.mxu0
        %v5052 = vpop.f32.mrf.mxu0
        %v5053 = vadd.f32 %v4856, %v5052
        %v5054 = vpop.f32.mrf.mxu0
        %5055 = vmatprep.mubr.bf16.mxu0 %v4794
        %5056 = vmatmul.mubr.bf16.gmra.mxu0 %v4793
        %v5057 = vpop.f32.mrf.mxu0
        %v5058 = vadd.f32 %v4857, %v5057
        %v5059 = vpop.f32.mrf.mxu0
        %v5060 = vpop.f32.mrf.mxu0
        %v5061 = vadd.f32 %v4858, %v5060
        %v5062 = vpop.f32.mrf.mxu0
        %5063 = vmatprep.mubr.bf16.mxu0 %v4796
        %5064 = vmatmul.mubr.bf16.gmra.mxu0 %v4795
        %v5065 = vpop.f32.mrf.mxu0
        %v5066 = vadd.f32 %v4859, %v5065
        %v5067 = vpop.f32.mrf.mxu0
        %v5068 = vpop.f32.mrf.mxu0
        %v5069 = vadd.f32 %v4860, %v5068
        %v5070 = vpop.f32.mrf.mxu0
        %5071 = vmatprep.mubr.bf16.mxu0 %v4798
        %5072 = vmatmul.mubr.bf16.gmra.mxu0 %v4797
        %v5073 = vpop.f32.mrf.mxu0
        %v5074 = vadd.f32 %v4861, %v5073
        %v5075 = vpop.f32.mrf.mxu0
        %v5076 = vpop.f32.mrf.mxu0
        %v5077 = vadd.f32 %v4862, %v5076
        %v5078 = vpop.f32.mrf.mxu0
        %5079 = vmatprep.mubr.bf16.mxu0 %v4800
        %5080 = vmatmul.mubr.bf16.gmra.mxu0 %v4799
        %v5081 = vpop.f32.mrf.mxu0
        %v5082 = vadd.f32 %v4863, %v5081
        %v5083 = vpop.f32.mrf.mxu0
        %v5084 = vpop.f32.mrf.mxu0
        %v5085 = vadd.f32 %v4864, %v5084
        %v5086 = vpop.f32.mrf.mxu0
        %5087 = vmatprep.mubr.bf16.mxu0 %v4802
        %5088 = vmatmul.mubr.bf16.gmra.mxu0 %v4801
        %v5089 = vpop.f32.mrf.mxu0
        %v5090 = vadd.f32 %v4865, %v5089
        %v5091 = vpop.f32.mrf.mxu0
        %v5092 = vpop.f32.mrf.mxu0
        %v5093 = vadd.f32 %v4866, %v5092
        %v5094 = vpop.f32.mrf.mxu0
        %5095 = vmatprep.mubr.bf16.mxu0 %v4804
        %5096 = vmatmul.mubr.bf16.gmra.mxu0 %v4803
        %v5097 = vpop.f32.mrf.mxu0
        %v5098 = vadd.f32 %v4867, %v5097
        %v5099 = vpop.f32.mrf.mxu0
        %v5100 = vpop.f32.mrf.mxu0
        %v5101 = vadd.f32 %v4868, %v5100
        %v5102 = vpop.f32.mrf.mxu0
        %5103 = vmatprep.mubr.bf16.mxu0 %v4806
        %5104 = vmatmul.mubr.bf16.gmra.mxu0 %v4805
        %v5105 = vpop.f32.mrf.mxu0
        %v5106 = vadd.f32 %v4869, %v5105
        %v5107 = vpop.f32.mrf.mxu0
        %v5108 = vpop.f32.mrf.mxu0
        %v5109 = vadd.f32 %v4870, %v5108
        %v5110 = vpop.f32.mrf.mxu0
        %5111 = vmatprep.mubr.bf16.mxu0 %v4808
        %5112 = vmatmul.mubr.bf16.gmra.mxu0 %v4807
        %v5113 = vpop.f32.mrf.mxu0
        %v5114 = vadd.f32 %v4871, %v5113
        %v5115 = vpop.f32.mrf.mxu0
        %v5116 = vpop.f32.mrf.mxu0
        %v5117 = vadd.f32 %v4872, %v5116
        %v5118 = vpop.f32.mrf.mxu0
        %5119 = vmatprep.mubr.bf16.mxu0 %v4810
        %5120 = vmatmul.mubr.bf16.gmra.mxu0 %v4809
        %v5121 = vpop.f32.mrf.mxu0
        %v5122 = vadd.f32 %v4873, %v5121
        %v5123 = vpop.f32.mrf.mxu0
        %v5124 = vpop.f32.mrf.mxu0
        %v5125 = vadd.f32 %v4874, %v5124
        %v5126 = vpop.f32.mrf.mxu0
        %5127 = vmatprep.mubr.bf16.mxu0 %v4812
        %5128 = vmatmul.mubr.bf16.gmra.mxu0 %v4811
        %v5129 = vpop.f32.mrf.mxu0
        %v5130 = vadd.f32 %v4875, %v5129
        %v5131 = vpop.f32.mrf.mxu0
        %v5132 = vpop.f32.mrf.mxu0
        %v5133 = vadd.f32 %v4876, %v5132
        %v5134 = vpop.f32.mrf.mxu0
        %5135 = vmatprep.mubr.bf16.mxu0 %v4814
        %5136 = vmatmul.mubr.bf16.gmra.mxu0 %v4813
        %v5137 = vpop.f32.mrf.mxu0
        %v5138 = vadd.f32 %v4877, %v5137
        %v5139 = vpop.f32.mrf.mxu0
        %v5140 = vpop.f32.mrf.mxu0
        %v5141 = vadd.f32 %v4878, %v5140
        %v5142 = vpop.f32.mrf.mxu0
        %5143 = vmatprep.mubr.bf16.mxu0 %v4816
        %5144 = vmatmul.mubr.bf16.gmra.mxu0 %v4815
        %v5145 = vpop.f32.mrf.mxu0
        %v5146 = vadd.f32 %v4879, %v5145
        %v5147 = vpop.f32.mrf.mxu0
        %v5148 = vpop.f32.mrf.mxu0
        %v5149 = vadd.f32 %v4880, %v5148
        %v5150 = vpop.f32.mrf.mxu0
        %5151 = vmatprep.mubr.bf16.mxu0 %v4818
        %5152 = vmatmul.mubr.bf16.gmra.mxu0 %v4817
        %v5153 = vpop.f32.mrf.mxu0
        %v5154 = vadd.f32 %v4881, %v5153
        %v5155 = vpop.f32.mrf.mxu0
        %v5156 = vpop.f32.mrf.mxu0
        %v5157 = vadd.f32 %v4882, %v5156
        %v5158 = vpop.f32.mrf.mxu0
        %5159 = vmatprep.mubr.bf16.mxu0 %v4820
        %5160 = vmatmul.mubr.bf16.gmra.mxu0 %v4819
        %v5161 = vpop.f32.mrf.mxu0
        %v5162 = vadd.f32 %v4883, %v5161
        %v5163 = vpop.f32.mrf.mxu0
        %v5164 = vpop.f32.mrf.mxu0
        %v5165 = vadd.f32 %v4884, %v5164
        %v5166 = vpop.f32.mrf.mxu0
        %5167 = vmatprep.mubr.bf16.mxu0 %v4822
        %5168 = vmatmul.mubr.bf16.gmra.mxu0 %v4821
        %v5169 = vpop.f32.mrf.mxu0
        %v5170 = vadd.f32 %v4885, %v5169
        %v5171 = vpop.f32.mrf.mxu0
        %v5172 = vpop.f32.mrf.mxu0
        %v5173 = vadd.f32 %v4886, %v5172
        %v5174 = vpop.f32.mrf.mxu0
        %5175 = vdwg.mxu0
        %v5176 = vsel %vm2848, %v4922, -inf
        %5177 = vmax.xlane.f32.xlu0 %v5176
        %v5178 = vpop.xlane.xlu0 %5177
        %v5179 = vsel %vm2848, %v4925, -inf
        %5180 = vmax.xlane.f32.xlu0 %v5179
        %v5181 = vpop.xlane.xlu0 %5180
        %v5182 = vsel %vm2848, %v4930, -inf
        %5183 = vmax.xlane.f32.xlu0 %v5182
        %v5184 = vpop.xlane.xlu0 %5183
        %v5185 = vsel %vm2848, %v4933, -inf
        %5186 = vmax.xlane.f32.xlu0 %v5185
        %v5187 = vpop.xlane.xlu0 %5186
        %v5188 = vsel %vm2848, %v4938, -inf
        %5189 = vmax.xlane.f32.xlu0 %v5188
        %v5190 = vpop.xlane.xlu0 %5189
        %v5191 = vsel %vm2848, %v4941, -inf
        %5192 = vmax.xlane.f32.xlu0 %v5191
        %v5193 = vpop.xlane.xlu0 %5192
        %v5194 = vsel %vm2848, %v4946, -inf
        %5195 = vmax.xlane.f32.xlu0 %v5194
        %v5196 = vpop.xlane.xlu0 %5195
        %v5197 = vsel %vm2848, %v4949, -inf
        %5198 = vmax.xlane.f32.xlu0 %v5197
        %v5199 = vpop.xlane.xlu0 %5198
        %v5200 = vsel %vm2848, %v4954, -inf
        %5201 = vmax.xlane.f32.xlu0 %v5200
        %v5202 = vpop.xlane.xlu0 %5201
        %v5203 = vsel %vm2848, %v4957, -inf
        %5204 = vmax.xlane.f32.xlu0 %v5203
        %v5205 = vpop.xlane.xlu0 %5204
        %v5206 = vsel %vm2848, %v4962, -inf
        %5207 = vmax.xlane.f32.xlu0 %v5206
        %v5208 = vpop.xlane.xlu0 %5207
        %v5209 = vsel %vm2848, %v4965, -inf
        %5210 = vmax.xlane.f32.xlu0 %v5209
        %v5211 = vpop.xlane.xlu0 %5210
        %v5212 = vsel %vm2848, %v4970, -inf
        %5213 = vmax.xlane.f32.xlu0 %v5212
        %v5214 = vpop.xlane.xlu0 %5213
        %v5215 = vsel %vm2848, %v4973, -inf
        %5216 = vmax.xlane.f32.xlu0 %v5215
        %v5217 = vpop.xlane.xlu0 %5216
        %v5218 = vsel %vm2848, %v4978, -inf
        %5219 = vmax.xlane.f32.xlu0 %v5218
        %v5220 = vpop.xlane.xlu0 %5219
        %v5221 = vsel %vm2848, %v4981, -inf
        %5222 = vmax.xlane.f32.xlu0 %v5221
        %v5223 = vpop.xlane.xlu0 %5222
        %v5224 = vsel %vm2848, %v4986, -inf
        %5225 = vmax.xlane.f32.xlu0 %v5224
        %v5226 = vpop.xlane.xlu0 %5225
        %v5227 = vsel %vm2848, %v4989, -inf
        %5228 = vmax.xlane.f32.xlu0 %v5227
        %v5229 = vpop.xlane.xlu0 %5228
        %v5230 = vsel %vm2848, %v4994, -inf
        %5231 = vmax.xlane.f32.xlu0 %v5230
        %v5232 = vpop.xlane.xlu0 %5231
        %v5233 = vsel %vm2848, %v4997, -inf
        %5234 = vmax.xlane.f32.xlu0 %v5233
        %v5235 = vpop.xlane.xlu0 %5234
        %v5236 = vsel %vm2848, %v5002, -inf
        %5237 = vmax.xlane.f32.xlu0 %v5236
        %v5238 = vpop.xlane.xlu0 %5237
        %v5239 = vsel %vm2848, %v5005, -inf
        %5240 = vmax.xlane.f32.xlu0 %v5239
        %v5241 = vpop.xlane.xlu0 %5240
        %v5242 = vsel %vm2848, %v5010, -inf
        %5243 = vmax.xlane.f32.xlu0 %v5242
        %v5244 = vpop.xlane.xlu0 %5243
        %v5245 = vsel %vm2848, %v5013, -inf
        %5246 = vmax.xlane.f32.xlu0 %v5245
        %v5247 = vpop.xlane.xlu0 %5246
        %v5248 = vsel %vm2848, %v5018, -inf
        %5249 = vmax.xlane.f32.xlu0 %v5248
        %v5250 = vpop.xlane.xlu0 %5249
        %v5251 = vsel %vm2848, %v5021, -inf
        %5252 = vmax.xlane.f32.xlu0 %v5251
        %v5253 = vpop.xlane.xlu0 %5252
        %v5254 = vsel %vm2848, %v5026, -inf
        %5255 = vmax.xlane.f32.xlu0 %v5254
        %v5256 = vpop.xlane.xlu0 %5255
        %v5257 = vsel %vm2848, %v5029, -inf
        %5258 = vmax.xlane.f32.xlu0 %v5257
        %v5259 = vpop.xlane.xlu0 %5258
        %v5260 = vsel %vm2848, %v5034, -inf
        %5261 = vmax.xlane.f32.xlu0 %v5260
        %v5262 = vpop.xlane.xlu0 %5261
        %v5263 = vsel %vm2848, %v5037, -inf
        %5264 = vmax.xlane.f32.xlu0 %v5263
        %v5265 = vpop.xlane.xlu0 %5264
        %v5266 = vsel %vm2848, %v5042, -inf
        %5267 = vmax.xlane.f32.xlu0 %v5266
        %v5268 = vpop.xlane.xlu0 %5267
        %v5269 = vsel %vm2848, %v5045, -inf
        %5270 = vmax.xlane.f32.xlu0 %v5269
        %v5271 = vpop.xlane.xlu0 %5270
        %v5272 = vsel %vm2848, %v5050, -inf
        %5273 = vmax.xlane.f32.xlu0 %v5272
        %v5274 = vpop.xlane.xlu0 %5273
        %v5275 = vsel %vm2848, %v5053, -inf
        %5276 = vmax.xlane.f32.xlu0 %v5275
        %v5277 = vpop.xlane.xlu0 %5276
        %v5278 = vsel %vm2848, %v5058, -inf
        %5279 = vmax.xlane.f32.xlu0 %v5278
        %v5280 = vpop.xlane.xlu0 %5279
        %v5281 = vsel %vm2848, %v5061, -inf
        %5282 = vmax.xlane.f32.xlu0 %v5281
        %v5283 = vpop.xlane.xlu0 %5282
        %v5284 = vsel %vm2848, %v5066, -inf
        %5285 = vmax.xlane.f32.xlu0 %v5284
        %v5286 = vpop.xlane.xlu0 %5285
        %v5287 = vsel %vm2848, %v5069, -inf
        %5288 = vmax.xlane.f32.xlu0 %v5287
        %v5289 = vpop.xlane.xlu0 %5288
        %v5290 = vsel %vm2848, %v5074, -inf
        %5291 = vmax.xlane.f32.xlu0 %v5290
        %v5292 = vpop.xlane.xlu0 %5291
        %v5293 = vsel %vm2848, %v5077, -inf
        %5294 = vmax.xlane.f32.xlu0 %v5293
        %v5295 = vpop.xlane.xlu0 %5294
        %v5296 = vsel %vm2848, %v5082, -inf
        %5297 = vmax.xlane.f32.xlu0 %v5296
        %v5298 = vpop.xlane.xlu0 %5297
        %v5299 = vsel %vm2848, %v5085, -inf
        %5300 = vmax.xlane.f32.xlu0 %v5299
        %v5301 = vpop.xlane.xlu0 %5300
        %v5302 = vsel %vm2848, %v5090, -inf
        %5303 = vmax.xlane.f32.xlu0 %v5302
        %v5304 = vpop.xlane.xlu0 %5303
        %v5305 = vsel %vm2848, %v5093, -inf
        %5306 = vmax.xlane.f32.xlu0 %v5305
        %v5307 = vpop.xlane.xlu0 %5306
        %v5308 = vsel %vm2848, %v5098, -inf
        %5309 = vmax.xlane.f32.xlu0 %v5308
        %v5310 = vpop.xlane.xlu0 %5309
        %v5311 = vsel %vm2848, %v5101, -inf
        %5312 = vmax.xlane.f32.xlu0 %v5311
        %v5313 = vpop.xlane.xlu0 %5312
        %v5314 = vsel %vm2848, %v5106, -inf
        %5315 = vmax.xlane.f32.xlu0 %v5314
        %v5316 = vpop.xlane.xlu0 %5315
        %v5317 = vsel %vm2848, %v5109, -inf
        %5318 = vmax.xlane.f32.xlu0 %v5317
        %v5319 = vpop.xlane.xlu0 %5318
        %v5320 = vsel %vm2848, %v5114, -inf
        %5321 = vmax.xlane.f32.xlu0 %v5320
        %v5322 = vpop.xlane.xlu0 %5321
        %v5323 = vsel %vm2848, %v5117, -inf
        %5324 = vmax.xlane.f32.xlu0 %v5323
        %v5325 = vpop.xlane.xlu0 %5324
        %v5326 = vsel %vm2848, %v5122, -inf
        %5327 = vmax.xlane.f32.xlu0 %v5326
        %v5328 = vpop.xlane.xlu0 %5327
        %v5329 = vsel %vm2848, %v5125, -inf
        %5330 = vmax.xlane.f32.xlu0 %v5329
        %v5331 = vpop.xlane.xlu0 %5330
        %v5332 = vsel %vm2848, %v5130, -inf
        %5333 = vmax.xlane.f32.xlu0 %v5332
        %v5334 = vpop.xlane.xlu0 %5333
        %v5335 = vsel %vm2848, %v5133, -inf
        %5336 = vmax.xlane.f32.xlu0 %v5335
        %v5337 = vpop.xlane.xlu0 %5336
        %v5338 = vsel %vm2848, %v5138, -inf
        %5339 = vmax.xlane.f32.xlu0 %v5338
        %v5340 = vpop.xlane.xlu0 %5339
        %v5341 = vsel %vm2848, %v5141, -inf
        %5342 = vmax.xlane.f32.xlu0 %v5341
        %v5343 = vpop.xlane.xlu0 %5342
        %v5344 = vsel %vm2848, %v5146, -inf
        %5345 = vmax.xlane.f32.xlu0 %v5344
        %v5346 = vpop.xlane.xlu0 %5345
        %v5347 = vsel %vm2848, %v5149, -inf
        %5348 = vmax.xlane.f32.xlu0 %v5347
        %v5349 = vpop.xlane.xlu0 %5348
        %v5350 = vsel %vm2848, %v5154, -inf
        %5351 = vmax.xlane.f32.xlu0 %v5350
        %v5352 = vpop.xlane.xlu0 %5351
        %v5353 = vsel %vm2848, %v5157, -inf
        %5354 = vmax.xlane.f32.xlu0 %v5353
        %v5355 = vpop.xlane.xlu0 %5354
        %v5356 = vsel %vm2848, %v5162, -inf
        %5357 = vmax.xlane.f32.xlu0 %v5356
        %v5358 = vpop.xlane.xlu0 %5357
        %v5359 = vsel %vm2848, %v5165, -inf
        %5360 = vmax.xlane.f32.xlu0 %v5359
        %v5361 = vpop.xlane.xlu0 %5360
        %v5362 = vsel %vm2848, %v5170, -inf
        %5363 = vmax.xlane.f32.xlu0 %v5362
        %v5364 = vpop.xlane.xlu0 %5363
        %v5365 = vsel %vm2848, %v5173, -inf
        %5366 = vmax.xlane.f32.xlu0 %v5365
        %v5367 = vpop.xlane.xlu0 %5366
        %v5368 = vsub.f32 %v4922, %v5178
        %v5369 = vsub.f32 %v4925, %v5181
        %v5370 = vsub.f32 %v4930, %v5184
        %v5371 = vsub.f32 %v4933, %v5187
        %v5372 = vsub.f32 %v4938, %v5190
        %v5373 = vsub.f32 %v4941, %v5193
        %v5374 = vsub.f32 %v4946, %v5196
        %v5375 = vsub.f32 %v4949, %v5199
        %v5376 = vsub.f32 %v4954, %v5202
        %v5377 = vsub.f32 %v4957, %v5205
        %v5378 = vsub.f32 %v4962, %v5208
        %v5379 = vsub.f32 %v4965, %v5211
        %v5380 = vsub.f32 %v4970, %v5214
        %v5381 = vsub.f32 %v4973, %v5217
        %v5382 = vsub.f32 %v4978, %v5220
        %v5383 = vsub.f32 %v4981, %v5223
        %v5384 = vsub.f32 %v4986, %v5226
        %v5385 = vsub.f32 %v4989, %v5229
        %v5386 = vsub.f32 %v4994, %v5232
        %v5387 = vsub.f32 %v4997, %v5235
        %v5388 = vsub.f32 %v5002, %v5238
        %v5389 = vsub.f32 %v5005, %v5241
        %v5390 = vsub.f32 %v5010, %v5244
        %v5391 = vsub.f32 %v5013, %v5247
        %v5392 = vsub.f32 %v5018, %v5250
        %v5393 = vsub.f32 %v5021, %v5253
        %v5394 = vsub.f32 %v5026, %v5256
        %v5395 = vsub.f32 %v5029, %v5259
        %v5396 = vsub.f32 %v5034, %v5262
        %v5397 = vsub.f32 %v5037, %v5265
        %v5398 = vsub.f32 %v5042, %v5268
        %v5399 = vsub.f32 %v5045, %v5271
        %v5400 = vsub.f32 %v5050, %v5274
        %v5401 = vsub.f32 %v5053, %v5277
        %v5402 = vsub.f32 %v5058, %v5280
        %v5403 = vsub.f32 %v5061, %v5283
        %v5404 = vsub.f32 %v5066, %v5286
        %v5405 = vsub.f32 %v5069, %v5289
        %v5406 = vsub.f32 %v5074, %v5292
        %v5407 = vsub.f32 %v5077, %v5295
        %v5408 = vsub.f32 %v5082, %v5298
        %v5409 = vsub.f32 %v5085, %v5301
        %v5410 = vsub.f32 %v5090, %v5304
        %v5411 = vsub.f32 %v5093, %v5307
        %v5412 = vsub.f32 %v5098, %v5310
        %v5413 = vsub.f32 %v5101, %v5313
        %v5414 = vsub.f32 %v5106, %v5316
        %v5415 = vsub.f32 %v5109, %v5319
        %v5416 = vsub.f32 %v5114, %v5322
        %v5417 = vsub.f32 %v5117, %v5325
        %v5418 = vsub.f32 %v5122, %v5328
        %v5419 = vsub.f32 %v5125, %v5331
        %v5420 = vsub.f32 %v5130, %v5334
        %v5421 = vsub.f32 %v5133, %v5337
        %v5422 = vsub.f32 %v5138, %v5340
        %v5423 = vsub.f32 %v5141, %v5343
        %v5424 = vsub.f32 %v5146, %v5346
        %v5425 = vsub.f32 %v5149, %v5349
        %v5426 = vsub.f32 %v5154, %v5352
        %v5427 = vsub.f32 %v5157, %v5355
        %v5428 = vsub.f32 %v5162, %v5358
        %v5429 = vsub.f32 %v5165, %v5361
        %v5430 = vsub.f32 %v5170, %v5364
        %v5431 = vsub.f32 %v5173, %v5367
        %v5432 = vmul.f32 %v5368, 1.442695
        %v5433 = vpow.pop %v5432
        %v5434 = vmul.f32 %v5369, 1.442695
        %v5435 = vpow.pop %v5434
        %v5436 = vmul.f32 %v5370, 1.442695
        %v5437 = vpow.pop %v5436
        %v5438 = vmul.f32 %v5371, 1.442695
        %v5439 = vpow.pop %v5438
        %v5440 = vmul.f32 %v5372, 1.442695
        %v5441 = vpow.pop %v5440
        %v5442 = vmul.f32 %v5373, 1.442695
        %v5443 = vpow.pop %v5442
        %v5444 = vmul.f32 %v5374, 1.442695
        %v5445 = vpow.pop %v5444
        %v5446 = vmul.f32 %v5375, 1.442695
        %v5447 = vpow.pop %v5446
        %v5448 = vmul.f32 %v5376, 1.442695
        %v5449 = vpow.pop %v5448
        %v5450 = vmul.f32 %v5377, 1.442695
        %v5451 = vpow.pop %v5450
        %v5452 = vmul.f32 %v5378, 1.442695
        %v5453 = vpow.pop %v5452
        %v5454 = vmul.f32 %v5379, 1.442695
        %v5455 = vpow.pop %v5454
        %v5456 = vmul.f32 %v5380, 1.442695
        %v5457 = vpow.pop %v5456
        %v5458 = vmul.f32 %v5381, 1.442695
        %v5459 = vpow.pop %v5458
        %v5460 = vmul.f32 %v5382, 1.442695
        %v5461 = vpow.pop %v5460
        %v5462 = vmul.f32 %v5383, 1.442695
        %v5463 = vpow.pop %v5462
        %v5464 = vmul.f32 %v5384, 1.442695
        %v5465 = vpow.pop %v5464
        %v5466 = vmul.f32 %v5385, 1.442695
        %v5467 = vpow.pop %v5466
        %v5468 = vmul.f32 %v5386, 1.442695
        %v5469 = vpow.pop %v5468
        %v5470 = vmul.f32 %v5387, 1.442695
        %v5471 = vpow.pop %v5470
        %v5472 = vmul.f32 %v5388, 1.442695
        %v5473 = vpow.pop %v5472
        %v5474 = vmul.f32 %v5389, 1.442695
        %v5475 = vpow.pop %v5474
        %v5476 = vmul.f32 %v5390, 1.442695
        %v5477 = vpow.pop %v5476
        %v5478 = vmul.f32 %v5391, 1.442695
        %v5479 = vpow.pop %v5478
        %v5480 = vmul.f32 %v5392, 1.442695
        %v5481 = vpow.pop %v5480
        %v5482 = vmul.f32 %v5393, 1.442695
        %v5483 = vpow.pop %v5482
        %v5484 = vmul.f32 %v5394, 1.442695
        %v5485 = vpow.pop %v5484
        %v5486 = vmul.f32 %v5395, 1.442695
        %v5487 = vpow.pop %v5486
        %v5488 = vmul.f32 %v5396, 1.442695
        %v5489 = vpow.pop %v5488
        %v5490 = vmul.f32 %v5397, 1.442695
        %v5491 = vpow.pop %v5490
        %v5492 = vmul.f32 %v5398, 1.442695
        %v5493 = vpow.pop %v5492
        %v5494 = vmul.f32 %v5399, 1.442695
        %v5495 = vpow.pop %v5494
        %v5496 = vmul.f32 %v5400, 1.442695
        %v5497 = vpow.pop %v5496
        %v5498 = vmul.f32 %v5401, 1.442695
        %v5499 = vpow.pop %v5498
        %v5500 = vmul.f32 %v5402, 1.442695
        %v5501 = vpow.pop %v5500
        %v5502 = vmul.f32 %v5403, 1.442695
        %v5503 = vpow.pop %v5502
        %v5504 = vmul.f32 %v5404, 1.442695
        %v5505 = vpow.pop %v5504
        %v5506 = vmul.f32 %v5405, 1.442695
        %v5507 = vpow.pop %v5506
        %v5508 = vmul.f32 %v5406, 1.442695
        %v5509 = vpow.pop %v5508
        %v5510 = vmul.f32 %v5407, 1.442695
        %v5511 = vpow.pop %v5510
        %v5512 = vmul.f32 %v5408, 1.442695
        %v5513 = vpow.pop %v5512
        %v5514 = vmul.f32 %v5409, 1.442695
        %v5515 = vpow.pop %v5514
        %v5516 = vmul.f32 %v5410, 1.442695
        %v5517 = vpow.pop %v5516
        %v5518 = vmul.f32 %v5411, 1.442695
        %v5519 = vpow.pop %v5518
        %v5520 = vmul.f32 %v5412, 1.442695
        %v5521 = vpow.pop %v5520
        %v5522 = vmul.f32 %v5413, 1.442695
        %v5523 = vpow.pop %v5522
        %v5524 = vmul.f32 %v5414, 1.442695
        %v5525 = vpow.pop %v5524
        %v5526 = vmul.f32 %v5415, 1.442695
        %v5527 = vpow.pop %v5526
        %v5528 = vmul.f32 %v5416, 1.442695
        %v5529 = vpow.pop %v5528
        %v5530 = vmul.f32 %v5417, 1.442695
        %v5531 = vpow.pop %v5530
        %v5532 = vmul.f32 %v5418, 1.442695
        %v5533 = vpow.pop %v5532
        %v5534 = vmul.f32 %v5419, 1.442695
        %v5535 = vpow.pop %v5534
        %v5536 = vmul.f32 %v5420, 1.442695
        %v5537 = vpow.pop %v5536
        %v5538 = vmul.f32 %v5421, 1.442695
        %v5539 = vpow.pop %v5538
        %v5540 = vmul.f32 %v5422, 1.442695
        %v5541 = vpow.pop %v5540
        %v5542 = vmul.f32 %v5423, 1.442695
        %v5543 = vpow.pop %v5542
        %v5544 = vmul.f32 %v5424, 1.442695
        %v5545 = vpow.pop %v5544
        %v5546 = vmul.f32 %v5425, 1.442695
        %v5547 = vpow.pop %v5546
        %v5548 = vmul.f32 %v5426, 1.442695
        %v5549 = vpow.pop %v5548
        %v5550 = vmul.f32 %v5427, 1.442695
        %v5551 = vpow.pop %v5550
        %v5552 = vmul.f32 %v5428, 1.442695
        %v5553 = vpow.pop %v5552
        %v5554 = vmul.f32 %v5429, 1.442695
        %v5555 = vpow.pop %v5554
        %v5556 = vmul.f32 %v5430, 1.442695
        %v5557 = vpow.pop %v5556
        %v5558 = vmul.f32 %v5431, 1.442695
        %v5559 = vpow.pop %v5558
        %v5560 = vsel %vm2848, %v5433, 0.0
        %5561 = vadd.xlane.f32.xlu0 %v5560
        %v5562 = vpop.xlane.xlu0 %5561
        %v5563 = vsel %vm2848, %v5435, 0.0
        %5564 = vadd.xlane.f32.xlu0 %v5563
        %v5565 = vpop.xlane.xlu0 %5564
        %v5566 = vsel %vm2848, %v5437, 0.0
        %5567 = vadd.xlane.f32.xlu0 %v5566
        %v5568 = vpop.xlane.xlu0 %5567
        %v5569 = vsel %vm2848, %v5439, 0.0
        %5570 = vadd.xlane.f32.xlu0 %v5569
        %v5571 = vpop.xlane.xlu0 %5570
        %v5572 = vsel %vm2848, %v5441, 0.0
        %5573 = vadd.xlane.f32.xlu0 %v5572
        %v5574 = vpop.xlane.xlu0 %5573
        %v5575 = vsel %vm2848, %v5443, 0.0
        %5576 = vadd.xlane.f32.xlu0 %v5575
        %v5577 = vpop.xlane.xlu0 %5576
        %v5578 = vsel %vm2848, %v5445, 0.0
        %5579 = vadd.xlane.f32.xlu0 %v5578
        %v5580 = vpop.xlane.xlu0 %5579
        %v5581 = vsel %vm2848, %v5447, 0.0
        %5582 = vadd.xlane.f32.xlu0 %v5581
        %v5583 = vpop.xlane.xlu0 %5582
        %v5584 = vsel %vm2848, %v5449, 0.0
        %5585 = vadd.xlane.f32.xlu0 %v5584
        %v5586 = vpop.xlane.xlu0 %5585
        %v5587 = vsel %vm2848, %v5451, 0.0
        %5588 = vadd.xlane.f32.xlu0 %v5587
        %v5589 = vpop.xlane.xlu0 %5588
        %v5590 = vsel %vm2848, %v5453, 0.0
        %5591 = vadd.xlane.f32.xlu0 %v5590
        %v5592 = vpop.xlane.xlu0 %5591
        %v5593 = vsel %vm2848, %v5455, 0.0
        %5594 = vadd.xlane.f32.xlu0 %v5593
        %v5595 = vpop.xlane.xlu0 %5594
        %v5596 = vsel %vm2848, %v5457, 0.0
        %5597 = vadd.xlane.f32.xlu0 %v5596
        %v5598 = vpop.xlane.xlu0 %5597
        %v5599 = vsel %vm2848, %v5459, 0.0
        %5600 = vadd.xlane.f32.xlu0 %v5599
        %v5601 = vpop.xlane.xlu0 %5600
        %v5602 = vsel %vm2848, %v5461, 0.0
        %5603 = vadd.xlane.f32.xlu0 %v5602
        %v5604 = vpop.xlane.xlu0 %5603
        %v5605 = vsel %vm2848, %v5463, 0.0
        %5606 = vadd.xlane.f32.xlu0 %v5605
        %v5607 = vpop.xlane.xlu0 %5606
        %v5608 = vsel %vm2848, %v5465, 0.0
        %5609 = vadd.xlane.f32.xlu0 %v5608
        %v5610 = vpop.xlane.xlu0 %5609
        %v5611 = vsel %vm2848, %v5467, 0.0
        %5612 = vadd.xlane.f32.xlu0 %v5611
        %v5613 = vpop.xlane.xlu0 %5612
        %v5614 = vsel %vm2848, %v5469, 0.0
        %5615 = vadd.xlane.f32.xlu0 %v5614
        %v5616 = vpop.xlane.xlu0 %5615
        %v5617 = vsel %vm2848, %v5471, 0.0
        %5618 = vadd.xlane.f32.xlu0 %v5617
        %v5619 = vpop.xlane.xlu0 %5618
        %v5620 = vsel %vm2848, %v5473, 0.0
        %5621 = vadd.xlane.f32.xlu0 %v5620
        %v5622 = vpop.xlane.xlu0 %5621
        %v5623 = vsel %vm2848, %v5475, 0.0
        %5624 = vadd.xlane.f32.xlu0 %v5623
        %v5625 = vpop.xlane.xlu0 %5624
        %v5626 = vsel %vm2848, %v5477, 0.0
        %5627 = vadd.xlane.f32.xlu0 %v5626
        %v5628 = vpop.xlane.xlu0 %5627
        %v5629 = vsel %vm2848, %v5479, 0.0
        %5630 = vadd.xlane.f32.xlu0 %v5629
        %v5631 = vpop.xlane.xlu0 %5630
        %v5632 = vsel %vm2848, %v5481, 0.0
        %5633 = vadd.xlane.f32.xlu0 %v5632
        %v5634 = vpop.xlane.xlu0 %5633
        %v5635 = vsel %vm2848, %v5483, 0.0
        %5636 = vadd.xlane.f32.xlu0 %v5635
        %v5637 = vpop.xlane.xlu0 %5636
        %v5638 = vsel %vm2848, %v5485, 0.0
        %5639 = vadd.xlane.f32.xlu0 %v5638
        %v5640 = vpop.xlane.xlu0 %5639
        %v5641 = vsel %vm2848, %v5487, 0.0
        %5642 = vadd.xlane.f32.xlu0 %v5641
        %v5643 = vpop.xlane.xlu0 %5642
        %v5644 = vsel %vm2848, %v5489, 0.0
        %5645 = vadd.xlane.f32.xlu0 %v5644
        %v5646 = vpop.xlane.xlu0 %5645
        %v5647 = vsel %vm2848, %v5491, 0.0
        %5648 = vadd.xlane.f32.xlu0 %v5647
        %v5649 = vpop.xlane.xlu0 %5648
        %v5650 = vsel %vm2848, %v5493, 0.0
        %5651 = vadd.xlane.f32.xlu0 %v5650
        %v5652 = vpop.xlane.xlu0 %5651
        %v5653 = vsel %vm2848, %v5495, 0.0
        %5654 = vadd.xlane.f32.xlu0 %v5653
        %v5655 = vpop.xlane.xlu0 %5654
        %v5656 = vsel %vm2848, %v5497, 0.0
        %5657 = vadd.xlane.f32.xlu0 %v5656
        %v5658 = vpop.xlane.xlu0 %5657
        %v5659 = vsel %vm2848, %v5499, 0.0
        %5660 = vadd.xlane.f32.xlu0 %v5659
        %v5661 = vpop.xlane.xlu0 %5660
        %v5662 = vsel %vm2848, %v5501, 0.0
        %5663 = vadd.xlane.f32.xlu0 %v5662
        %v5664 = vpop.xlane.xlu0 %5663
        %v5665 = vsel %vm2848, %v5503, 0.0
        %5666 = vadd.xlane.f32.xlu0 %v5665
        %v5667 = vpop.xlane.xlu0 %5666
        %v5668 = vsel %vm2848, %v5505, 0.0
        %5669 = vadd.xlane.f32.xlu0 %v5668
        %v5670 = vpop.xlane.xlu0 %5669
        %v5671 = vsel %vm2848, %v5507, 0.0
        %5672 = vadd.xlane.f32.xlu0 %v5671
        %v5673 = vpop.xlane.xlu0 %5672
        %v5674 = vsel %vm2848, %v5509, 0.0
        %5675 = vadd.xlane.f32.xlu0 %v5674
        %v5676 = vpop.xlane.xlu0 %5675
        %v5677 = vsel %vm2848, %v5511, 0.0
        %5678 = vadd.xlane.f32.xlu0 %v5677
        %v5679 = vpop.xlane.xlu0 %5678
        %v5680 = vsel %vm2848, %v5513, 0.0
        %5681 = vadd.xlane.f32.xlu0 %v5680
        %v5682 = vpop.xlane.xlu0 %5681
        %v5683 = vsel %vm2848, %v5515, 0.0
        %5684 = vadd.xlane.f32.xlu0 %v5683
        %v5685 = vpop.xlane.xlu0 %5684
        %v5686 = vsel %vm2848, %v5517, 0.0
        %5687 = vadd.xlane.f32.xlu0 %v5686
        %v5688 = vpop.xlane.xlu0 %5687
        %v5689 = vsel %vm2848, %v5519, 0.0
        %5690 = vadd.xlane.f32.xlu0 %v5689
        %v5691 = vpop.xlane.xlu0 %5690
        %v5692 = vsel %vm2848, %v5521, 0.0
        %5693 = vadd.xlane.f32.xlu0 %v5692
        %v5694 = vpop.xlane.xlu0 %5693
        %v5695 = vsel %vm2848, %v5523, 0.0
        %5696 = vadd.xlane.f32.xlu0 %v5695
        %v5697 = vpop.xlane.xlu0 %5696
        %v5698 = vsel %vm2848, %v5525, 0.0
        %5699 = vadd.xlane.f32.xlu0 %v5698
        %v5700 = vpop.xlane.xlu0 %5699
        %v5701 = vsel %vm2848, %v5527, 0.0
        %5702 = vadd.xlane.f32.xlu0 %v5701
        %v5703 = vpop.xlane.xlu0 %5702
        %v5704 = vsel %vm2848, %v5529, 0.0
        %5705 = vadd.xlane.f32.xlu0 %v5704
        %v5706 = vpop.xlane.xlu0 %5705
        %v5707 = vsel %vm2848, %v5531, 0.0
        %5708 = vadd.xlane.f32.xlu0 %v5707
        %v5709 = vpop.xlane.xlu0 %5708
        %v5710 = vsel %vm2848, %v5533, 0.0
        %5711 = vadd.xlane.f32.xlu0 %v5710
        %v5712 = vpop.xlane.xlu0 %5711
        %v5713 = vsel %vm2848, %v5535, 0.0
        %5714 = vadd.xlane.f32.xlu0 %v5713
        %v5715 = vpop.xlane.xlu0 %5714
        %v5716 = vsel %vm2848, %v5537, 0.0
        %5717 = vadd.xlane.f32.xlu0 %v5716
        %v5718 = vpop.xlane.xlu0 %5717
        %v5719 = vsel %vm2848, %v5539, 0.0
        %5720 = vadd.xlane.f32.xlu0 %v5719
        %v5721 = vpop.xlane.xlu0 %5720
        %v5722 = vsel %vm2848, %v5541, 0.0
        %5723 = vadd.xlane.f32.xlu0 %v5722
        %v5724 = vpop.xlane.xlu0 %5723
        %v5725 = vsel %vm2848, %v5543, 0.0
        %5726 = vadd.xlane.f32.xlu0 %v5725
        %v5727 = vpop.xlane.xlu0 %5726
        %v5728 = vsel %vm2848, %v5545, 0.0
        %5729 = vadd.xlane.f32.xlu0 %v5728
        %v5730 = vpop.xlane.xlu0 %5729
        %v5731 = vsel %vm2848, %v5547, 0.0
        %5732 = vadd.xlane.f32.xlu0 %v5731
        %v5733 = vpop.xlane.xlu0 %5732
        %v5734 = vsel %vm2848, %v5549, 0.0
        %5735 = vadd.xlane.f32.xlu0 %v5734
        %v5736 = vpop.xlane.xlu0 %5735
        %v5737 = vsel %vm2848, %v5551, 0.0
        %5738 = vadd.xlane.f32.xlu0 %v5737
        %v5739 = vpop.xlane.xlu0 %5738
        %v5740 = vsel %vm2848, %v5553, 0.0
        %5741 = vadd.xlane.f32.xlu0 %v5740
        %v5742 = vpop.xlane.xlu0 %5741
        %v5743 = vsel %vm2848, %v5555, 0.0
        %5744 = vadd.xlane.f32.xlu0 %v5743
        %v5745 = vpop.xlane.xlu0 %5744
        %v5746 = vsel %vm2848, %v5557, 0.0
        %5747 = vadd.xlane.f32.xlu0 %v5746
        %v5748 = vpop.xlane.xlu0 %5747
        %v5749 = vsel %vm2848, %v5559, 0.0
        %5750 = vadd.xlane.f32.xlu0 %v5749
        %v5751 = vpop.xlane.xlu0 %5750
        %v5752 = vrcp.pop %v5562
        %v5753 = vrcp.pop %v5565
        %v5754 = vrcp.pop %v5568
        %v5755 = vrcp.pop %v5571
        %v5756 = vrcp.pop %v5574
        %v5757 = vrcp.pop %v5577
        %v5758 = vrcp.pop %v5580
        %v5759 = vrcp.pop %v5583
        %v5760 = vrcp.pop %v5586
        %v5761 = vrcp.pop %v5589
        %v5762 = vrcp.pop %v5592
        %v5763 = vrcp.pop %v5595
        %v5764 = vrcp.pop %v5598
        %v5765 = vrcp.pop %v5601
        %v5766 = vrcp.pop %v5604
        %v5767 = vrcp.pop %v5607
        %v5768 = vrcp.pop %v5610
        %v5769 = vrcp.pop %v5613
        %v5770 = vrcp.pop %v5616
        %v5771 = vrcp.pop %v5619
        %v5772 = vrcp.pop %v5622
        %v5773 = vrcp.pop %v5625
        %v5774 = vrcp.pop %v5628
        %v5775 = vrcp.pop %v5631
        %v5776 = vrcp.pop %v5634
        %v5777 = vrcp.pop %v5637
        %v5778 = vrcp.pop %v5640
        %v5779 = vrcp.pop %v5643
        %v5780 = vrcp.pop %v5646
        %v5781 = vrcp.pop %v5649
        %v5782 = vrcp.pop %v5652
        %v5783 = vrcp.pop %v5655
        %v5784 = vrcp.pop %v5658
        %v5785 = vrcp.pop %v5661
        %v5786 = vrcp.pop %v5664
        %v5787 = vrcp.pop %v5667
        %v5788 = vrcp.pop %v5670
        %v5789 = vrcp.pop %v5673
        %v5790 = vrcp.pop %v5676
        %v5791 = vrcp.pop %v5679
        %v5792 = vrcp.pop %v5682
        %v5793 = vrcp.pop %v5685
        %v5794 = vrcp.pop %v5688
        %v5795 = vrcp.pop %v5691
        %v5796 = vrcp.pop %v5694
        %v5797 = vrcp.pop %v5697
        %v5798 = vrcp.pop %v5700
        %v5799 = vrcp.pop %v5703
        %v5800 = vrcp.pop %v5706
        %v5801 = vrcp.pop %v5709
        %v5802 = vrcp.pop %v5712
        %v5803 = vrcp.pop %v5715
        %v5804 = vrcp.pop %v5718
        %v5805 = vrcp.pop %v5721
        %v5806 = vrcp.pop %v5724
        %v5807 = vrcp.pop %v5727
        %v5808 = vrcp.pop %v5730
        %v5809 = vrcp.pop %v5733
        %v5810 = vrcp.pop %v5736
        %v5811 = vrcp.pop %v5739
        %v5812 = vrcp.pop %v5742
        %v5813 = vrcp.pop %v5745
        %v5814 = vrcp.pop %v5748
        %v5815 = vrcp.pop %v5751
        %v5816 = vmul.f32 %v5433, %v5752
        %v5817 = vmul.f32 %v5435, %v5753
        %v5818 = vmul.f32 %v5437, %v5754
        %v5819 = vmul.f32 %v5439, %v5755
        %v5820 = vmul.f32 %v5441, %v5756
        %v5821 = vmul.f32 %v5443, %v5757
        %v5822 = vmul.f32 %v5445, %v5758
        %v5823 = vmul.f32 %v5447, %v5759
        %v5824 = vmul.f32 %v5449, %v5760
        %v5825 = vmul.f32 %v5451, %v5761
        %v5826 = vmul.f32 %v5453, %v5762
        %v5827 = vmul.f32 %v5455, %v5763
        %v5828 = vmul.f32 %v5457, %v5764
        %v5829 = vmul.f32 %v5459, %v5765
        %v5830 = vmul.f32 %v5461, %v5766
        %v5831 = vmul.f32 %v5463, %v5767
        %v5832 = vmul.f32 %v5465, %v5768
        %v5833 = vmul.f32 %v5467, %v5769
        %v5834 = vmul.f32 %v5469, %v5770
        %v5835 = vmul.f32 %v5471, %v5771
        %v5836 = vmul.f32 %v5473, %v5772
        %v5837 = vmul.f32 %v5475, %v5773
        %v5838 = vmul.f32 %v5477, %v5774
        %v5839 = vmul.f32 %v5479, %v5775
        %v5840 = vmul.f32 %v5481, %v5776
        %v5841 = vmul.f32 %v5483, %v5777
        %v5842 = vmul.f32 %v5485, %v5778
        %v5843 = vmul.f32 %v5487, %v5779
        %v5844 = vmul.f32 %v5489, %v5780
        %v5845 = vmul.f32 %v5491, %v5781
        %v5846 = vmul.f32 %v5493, %v5782
        %v5847 = vmul.f32 %v5495, %v5783
        %v5848 = vmul.f32 %v5497, %v5784
        %v5849 = vmul.f32 %v5499, %v5785
        %v5850 = vmul.f32 %v5501, %v5786
        %v5851 = vmul.f32 %v5503, %v5787
        %v5852 = vmul.f32 %v5505, %v5788
        %v5853 = vmul.f32 %v5507, %v5789
        %v5854 = vmul.f32 %v5509, %v5790
        %v5855 = vmul.f32 %v5511, %v5791
        %v5856 = vmul.f32 %v5513, %v5792
        %v5857 = vmul.f32 %v5515, %v5793
        %v5858 = vmul.f32 %v5517, %v5794
        %v5859 = vmul.f32 %v5519, %v5795
        %v5860 = vmul.f32 %v5521, %v5796
        %v5861 = vmul.f32 %v5523, %v5797
        %v5862 = vmul.f32 %v5525, %v5798
        %v5863 = vmul.f32 %v5527, %v5799
        %v5864 = vmul.f32 %v5529, %v5800
        %v5865 = vmul.f32 %v5531, %v5801
        %v5866 = vmul.f32 %v5533, %v5802
        %v5867 = vmul.f32 %v5535, %v5803
        %v5868 = vmul.f32 %v5537, %v5804
        %v5869 = vmul.f32 %v5539, %v5805
        %v5870 = vmul.f32 %v5541, %v5806
        %v5871 = vmul.f32 %v5543, %v5807
        %v5872 = vmul.f32 %v5545, %v5808
        %v5873 = vmul.f32 %v5547, %v5809
        %v5874 = vmul.f32 %v5549, %v5810
        %v5875 = vmul.f32 %v5551, %v5811
        %v5876 = vmul.f32 %v5553, %v5812
        %v5877 = vmul.f32 %v5555, %v5813
        %v5878 = vmul.f32 %v5557, %v5814
        %v5879 = vmul.f32 %v5559, %v5815
        %v5880 = vpack.c.bf16 %v5817, %v5816
        %v5881 = vpack.c.bf16 %v5819, %v5818
        %v5882 = vpack.c.bf16 %v5821, %v5820
        %v5883 = vpack.c.bf16 %v5823, %v5822
        %v5884 = vpack.c.bf16 %v5825, %v5824
        %v5885 = vpack.c.bf16 %v5827, %v5826
        %v5886 = vpack.c.bf16 %v5829, %v5828
        %v5887 = vpack.c.bf16 %v5831, %v5830
        %v5888 = vpack.c.bf16 %v5833, %v5832
        %v5889 = vpack.c.bf16 %v5835, %v5834
        %v5890 = vpack.c.bf16 %v5837, %v5836
        %v5891 = vpack.c.bf16 %v5839, %v5838
        %v5892 = vpack.c.bf16 %v5841, %v5840
        %v5893 = vpack.c.bf16 %v5843, %v5842
        %v5894 = vpack.c.bf16 %v5845, %v5844
        %v5895 = vpack.c.bf16 %v5847, %v5846
        %v5896 = vpack.c.bf16 %v5849, %v5848
        %v5897 = vpack.c.bf16 %v5851, %v5850
        %v5898 = vpack.c.bf16 %v5853, %v5852
        %v5899 = vpack.c.bf16 %v5855, %v5854
        %v5900 = vpack.c.bf16 %v5857, %v5856
        %v5901 = vpack.c.bf16 %v5859, %v5858
        %v5902 = vpack.c.bf16 %v5861, %v5860
        %v5903 = vpack.c.bf16 %v5863, %v5862
        %v5904 = vpack.c.bf16 %v5865, %v5864
        %v5905 = vpack.c.bf16 %v5867, %v5866
        %v5906 = vpack.c.bf16 %v5869, %v5868
        %v5907 = vpack.c.bf16 %v5871, %v5870
        %v5908 = vpack.c.bf16 %v5873, %v5872
        %v5909 = vpack.c.bf16 %v5875, %v5874
        %v5910 = vpack.c.bf16 %v5877, %v5876
        %v5911 = vpack.c.bf16 %v5879, %v5878
        %v5913 = vsel %vm2848, %v5880, 0
        %v5916 = vsel %vm2848, %v5881, 0
        %v5919 = vsel %vm2848, %v5882, 0
        %v5922 = vsel %vm2848, %v5883, 0
        %v5925 = vsel %vm2848, %v5884, 0
        %v5928 = vsel %vm2848, %v5885, 0
        %v5931 = vsel %vm2848, %v5886, 0
        %v5934 = vsel %vm2848, %v5887, 0
        %v5937 = vsel %vm2848, %v5888, 0
        %v5940 = vsel %vm2848, %v5889, 0
        %v5943 = vsel %vm2848, %v5890, 0
        %v5946 = vsel %vm2848, %v5891, 0
        %v5949 = vsel %vm2848, %v5892, 0
        %v5952 = vsel %vm2848, %v5893, 0
        %v5955 = vsel %vm2848, %v5894, 0
        %v5958 = vsel %vm2848, %v5895, 0
        %v5961 = vsel %vm2848, %v5896, 0
        %v5964 = vsel %vm2848, %v5897, 0
        %v5967 = vsel %vm2848, %v5898, 0
        %v5970 = vsel %vm2848, %v5899, 0
        %v5973 = vsel %vm2848, %v5900, 0
        %v5976 = vsel %vm2848, %v5901, 0
        %v5979 = vsel %vm2848, %v5902, 0
        %v5982 = vsel %vm2848, %v5903, 0
        %v5985 = vsel %vm2848, %v5904, 0
        %v5988 = vsel %vm2848, %v5905, 0
        %v5991 = vsel %vm2848, %v5906, 0
        %v5994 = vsel %vm2848, %v5907, 0
        %v5997 = vsel %vm2848, %v5908, 0
        %v6000 = vsel %vm2848, %v5909, 0
        %v6003 = vsel %vm2848, %v5910, 0
        %v6006 = vsel %vm2848, %v5911, 0
        %6008 = vmatprep.subr.bf16.mxu0 0
        %6009 = vmatpush1.bf16.msra.mxu0 0
        %6010 = vmatprep.subr.bf16.mxu0 0
        %6011 = vmatpush1.bf16.msra.mxu0 0
        %6012 = vmatprep.subr.bf16.mxu0 0
        %6013 = vmatpush1.bf16.msra.mxu0 0
        %6014 = vmatprep.subr.bf16.mxu0 0
        %6015 = vmatpush1.bf16.msra.mxu0 0
        %6016 = vmatprep.subr.bf16.mxu0 %v1753
        %6017 = vmatpush1.bf16.msra.mxu0 %v1752
        %6018 = vmatprep.subr.bf16.mxu0 %v1751
        %6019 = vmatpush1.bf16.msra.mxu0 %v1750
        %6020 = vmatprep.subr.bf16.mxu0 %v1749
        %6021 = vmatpush1.bf16.msra.mxu0 %v1748
        %6022 = vmatprep.subr.bf16.mxu0 %v1747
        %6023 = vmatpush1.bf16.msra.mxu0 %v1746
        %6024 = vmatprep.subr.bf16.mxu0 0
        %6025 = vmatpush2.bf16.msra.mxu0 0
        %6026 = vmatprep.subr.bf16.mxu0 0
        %6027 = vmatpush2.bf16.msra.mxu0 0
        %6028 = vmatprep.subr.bf16.mxu0 0
        %6029 = vmatpush2.bf16.msra.mxu0 0
        %6030 = vmatprep.subr.bf16.mxu0 0
        %6031 = vmatpush2.bf16.msra.mxu0 0
        %6032 = vmatprep.subr.bf16.mxu0 0
        %6033 = vmatpush2.bf16.msra.mxu0 0
        %6034 = vmatprep.subr.bf16.mxu0 0
        %6035 = vmatpush2.bf16.msra.mxu0 0
        %6036 = vmatprep.subr.bf16.mxu0 0
        %6037 = vmatpush2.bf16.msra.mxu0 0
        %6038 = vmatprep.subr.bf16.mxu0 0
        %6039 = vmatpush2.bf16.msra.mxu0 0
        %6040 = vmatprep.mubr.bf16.mxu0 0
        %6041 = vmatmul.mubr.bf16.gmra.mxu0 %v5913
        %v6042 = vpop.f32.mrf.mxu0
        %v6043 = vadd.f32 0.0, %v6042
        %v6044 = vpop.f32.mrf.mxu0
        %v6045 = vadd.f32 0.0, %v6044
        %v6046 = vpop.f32.mrf.mxu0
        %v6047 = vadd.f32 0.0, %v6046
        %v6048 = vpop.f32.mrf.mxu0
        %v6049 = vadd.f32 0.0, %v6048
        %6050 = vmatprep.mubr.bf16.mxu0 0
        %6051 = vmatmul.mubr.bf16.gmra.mxu0 %v5916
        %v6052 = vpop.f32.mrf.mxu0
        %v6053 = vadd.f32 0.0, %v6052
        %v6054 = vpop.f32.mrf.mxu0
        %v6055 = vadd.f32 0.0, %v6054
        %v6056 = vpop.f32.mrf.mxu0
        %v6057 = vadd.f32 0.0, %v6056
        %v6058 = vpop.f32.mrf.mxu0
        %v6059 = vadd.f32 0.0, %v6058
        %6060 = vmatprep.mubr.bf16.mxu0 0
        %6061 = vmatmul.mubr.bf16.gmra.mxu0 %v5919
        %v6062 = vpop.f32.mrf.mxu0
        %v6063 = vadd.f32 0.0, %v6062
        %v6064 = vpop.f32.mrf.mxu0
        %v6065 = vadd.f32 0.0, %v6064
        %v6066 = vpop.f32.mrf.mxu0
        %v6067 = vadd.f32 0.0, %v6066
        %v6068 = vpop.f32.mrf.mxu0
        %v6069 = vadd.f32 0.0, %v6068
        %6070 = vmatprep.mubr.bf16.mxu0 0
        %6071 = vmatmul.mubr.bf16.gmra.mxu0 %v5922
        %v6072 = vpop.f32.mrf.mxu0
        %v6073 = vadd.f32 0.0, %v6072
        %v6074 = vpop.f32.mrf.mxu0
        %v6075 = vadd.f32 0.0, %v6074
        %v6076 = vpop.f32.mrf.mxu0
        %v6077 = vadd.f32 0.0, %v6076
        %v6078 = vpop.f32.mrf.mxu0
        %v6079 = vadd.f32 0.0, %v6078
        %6080 = vmatprep.mubr.bf16.mxu0 0
        %6081 = vmatmul.mubr.bf16.gmra.mxu0 %v5925
        %v6082 = vpop.f32.mrf.mxu0
        %v6083 = vadd.f32 0.0, %v6082
        %v6084 = vpop.f32.mrf.mxu0
        %v6085 = vadd.f32 0.0, %v6084
        %v6086 = vpop.f32.mrf.mxu0
        %v6087 = vadd.f32 0.0, %v6086
        %v6088 = vpop.f32.mrf.mxu0
        %v6089 = vadd.f32 0.0, %v6088
        %6090 = vmatprep.mubr.bf16.mxu0 0
        %6091 = vmatmul.mubr.bf16.gmra.mxu0 %v5928
        %v6092 = vpop.f32.mrf.mxu0
        %v6093 = vadd.f32 0.0, %v6092
        %v6094 = vpop.f32.mrf.mxu0
        %v6095 = vadd.f32 0.0, %v6094
        %v6096 = vpop.f32.mrf.mxu0
        %v6097 = vadd.f32 0.0, %v6096
        %v6098 = vpop.f32.mrf.mxu0
        %v6099 = vadd.f32 0.0, %v6098
        %6100 = vmatprep.mubr.bf16.mxu0 0
        %6101 = vmatmul.mubr.bf16.gmra.mxu0 %v5931
        %v6102 = vpop.f32.mrf.mxu0
        %v6103 = vadd.f32 0.0, %v6102
        %v6104 = vpop.f32.mrf.mxu0
        %v6105 = vadd.f32 0.0, %v6104
        %v6106 = vpop.f32.mrf.mxu0
        %v6107 = vadd.f32 0.0, %v6106
        %v6108 = vpop.f32.mrf.mxu0
        %v6109 = vadd.f32 0.0, %v6108
        %6110 = vmatprep.mubr.bf16.mxu0 0
        %6111 = vmatmul.mubr.bf16.gmra.mxu0 %v5934
        %v6112 = vpop.f32.mrf.mxu0
        %v6113 = vadd.f32 0.0, %v6112
        %v6114 = vpop.f32.mrf.mxu0
        %v6115 = vadd.f32 0.0, %v6114
        %v6116 = vpop.f32.mrf.mxu0
        %v6117 = vadd.f32 0.0, %v6116
        %v6118 = vpop.f32.mrf.mxu0
        %v6119 = vadd.f32 0.0, %v6118
        %6120 = vmatprep.mubr.bf16.mxu0 0
        %6121 = vmatmul.mubr.bf16.gmra.mxu0 %v5937
        %v6122 = vpop.f32.mrf.mxu0
        %v6123 = vadd.f32 0.0, %v6122
        %v6124 = vpop.f32.mrf.mxu0
        %v6125 = vadd.f32 0.0, %v6124
        %v6126 = vpop.f32.mrf.mxu0
        %v6127 = vadd.f32 0.0, %v6126
        %v6128 = vpop.f32.mrf.mxu0
        %v6129 = vadd.f32 0.0, %v6128
        %6130 = vmatprep.mubr.bf16.mxu0 0
        %6131 = vmatmul.mubr.bf16.gmra.mxu0 %v5940
        %v6132 = vpop.f32.mrf.mxu0
        %v6133 = vadd.f32 0.0, %v6132
        %v6134 = vpop.f32.mrf.mxu0
        %v6135 = vadd.f32 0.0, %v6134
        %v6136 = vpop.f32.mrf.mxu0
        %v6137 = vadd.f32 0.0, %v6136
        %v6138 = vpop.f32.mrf.mxu0
        %v6139 = vadd.f32 0.0, %v6138
        %6140 = vmatprep.mubr.bf16.mxu0 0
        %6141 = vmatmul.mubr.bf16.gmra.mxu0 %v5943
        %v6142 = vpop.f32.mrf.mxu0
        %v6143 = vadd.f32 0.0, %v6142
        %v6144 = vpop.f32.mrf.mxu0
        %v6145 = vadd.f32 0.0, %v6144
        %v6146 = vpop.f32.mrf.mxu0
        %v6147 = vadd.f32 0.0, %v6146
        %v6148 = vpop.f32.mrf.mxu0
        %v6149 = vadd.f32 0.0, %v6148
        %6150 = vmatprep.mubr.bf16.mxu0 0
        %6151 = vmatmul.mubr.bf16.gmra.mxu0 %v5946
        %v6152 = vpop.f32.mrf.mxu0
        %v6153 = vadd.f32 0.0, %v6152
        %v6154 = vpop.f32.mrf.mxu0
        %v6155 = vadd.f32 0.0, %v6154
        %v6156 = vpop.f32.mrf.mxu0
        %v6157 = vadd.f32 0.0, %v6156
        %v6158 = vpop.f32.mrf.mxu0
        %v6159 = vadd.f32 0.0, %v6158
        %6160 = vmatprep.mubr.bf16.mxu0 0
        %6161 = vmatmul.mubr.bf16.gmra.mxu0 %v5949
        %v6162 = vpop.f32.mrf.mxu0
        %v6163 = vadd.f32 0.0, %v6162
        %v6164 = vpop.f32.mrf.mxu0
        %v6165 = vadd.f32 0.0, %v6164
        %v6166 = vpop.f32.mrf.mxu0
        %v6167 = vadd.f32 0.0, %v6166
        %v6168 = vpop.f32.mrf.mxu0
        %v6169 = vadd.f32 0.0, %v6168
        %6170 = vmatprep.mubr.bf16.mxu0 0
        %6171 = vmatmul.mubr.bf16.gmra.mxu0 %v5952
        %v6172 = vpop.f32.mrf.mxu0
        %v6173 = vadd.f32 0.0, %v6172
        %v6174 = vpop.f32.mrf.mxu0
        %v6175 = vadd.f32 0.0, %v6174
        %v6176 = vpop.f32.mrf.mxu0
        %v6177 = vadd.f32 0.0, %v6176
        %v6178 = vpop.f32.mrf.mxu0
        %v6179 = vadd.f32 0.0, %v6178
        %6180 = vmatprep.mubr.bf16.mxu0 0
        %6181 = vmatmul.mubr.bf16.gmra.mxu0 %v5955
        %v6182 = vpop.f32.mrf.mxu0
        %v6183 = vadd.f32 0.0, %v6182
        %v6184 = vpop.f32.mrf.mxu0
        %v6185 = vadd.f32 0.0, %v6184
        %v6186 = vpop.f32.mrf.mxu0
        %v6187 = vadd.f32 0.0, %v6186
        %v6188 = vpop.f32.mrf.mxu0
        %v6189 = vadd.f32 0.0, %v6188
        %6190 = vmatprep.mubr.bf16.mxu0 0
        %6191 = vmatmul.mubr.bf16.gmra.mxu0 %v5958
        %v6192 = vpop.f32.mrf.mxu0
        %v6193 = vadd.f32 0.0, %v6192
        %v6194 = vpop.f32.mrf.mxu0
        %v6195 = vadd.f32 0.0, %v6194
        %v6196 = vpop.f32.mrf.mxu0
        %v6197 = vadd.f32 0.0, %v6196
        %v6198 = vpop.f32.mrf.mxu0
        %v6199 = vadd.f32 0.0, %v6198
        %6200 = vmatprep.mubr.bf16.mxu0 0
        %6201 = vmatmul.mubr.bf16.gmra.mxu0 %v5961
        %v6202 = vpop.f32.mrf.mxu0
        %v6203 = vadd.f32 0.0, %v6202
        %v6204 = vpop.f32.mrf.mxu0
        %v6205 = vadd.f32 0.0, %v6204
        %v6206 = vpop.f32.mrf.mxu0
        %v6207 = vadd.f32 0.0, %v6206
        %v6208 = vpop.f32.mrf.mxu0
        %v6209 = vadd.f32 0.0, %v6208
        %6210 = vmatprep.mubr.bf16.mxu0 0
        %6211 = vmatmul.mubr.bf16.gmra.mxu0 %v5964
        %v6212 = vpop.f32.mrf.mxu0
        %v6213 = vadd.f32 0.0, %v6212
        %v6214 = vpop.f32.mrf.mxu0
        %v6215 = vadd.f32 0.0, %v6214
        %v6216 = vpop.f32.mrf.mxu0
        %v6217 = vadd.f32 0.0, %v6216
        %v6218 = vpop.f32.mrf.mxu0
        %v6219 = vadd.f32 0.0, %v6218
        %6220 = vmatprep.mubr.bf16.mxu0 0
        %6221 = vmatmul.mubr.bf16.gmra.mxu0 %v5967
        %v6222 = vpop.f32.mrf.mxu0
        %v6223 = vadd.f32 0.0, %v6222
        %v6224 = vpop.f32.mrf.mxu0
        %v6225 = vadd.f32 0.0, %v6224
        %v6226 = vpop.f32.mrf.mxu0
        %v6227 = vadd.f32 0.0, %v6226
        %v6228 = vpop.f32.mrf.mxu0
        %v6229 = vadd.f32 0.0, %v6228
        %6230 = vmatprep.mubr.bf16.mxu0 0
        %6231 = vmatmul.mubr.bf16.gmra.mxu0 %v5970
        %v6232 = vpop.f32.mrf.mxu0
        %v6233 = vadd.f32 0.0, %v6232
        %v6234 = vpop.f32.mrf.mxu0
        %v6235 = vadd.f32 0.0, %v6234
        %v6236 = vpop.f32.mrf.mxu0
        %v6237 = vadd.f32 0.0, %v6236
        %v6238 = vpop.f32.mrf.mxu0
        %v6239 = vadd.f32 0.0, %v6238
        %6240 = vmatprep.mubr.bf16.mxu0 0
        %6241 = vmatmul.mubr.bf16.gmra.mxu0 %v5973
        %v6242 = vpop.f32.mrf.mxu0
        %v6243 = vadd.f32 0.0, %v6242
        %v6244 = vpop.f32.mrf.mxu0
        %v6245 = vadd.f32 0.0, %v6244
        %v6246 = vpop.f32.mrf.mxu0
        %v6247 = vadd.f32 0.0, %v6246
        %v6248 = vpop.f32.mrf.mxu0
        %v6249 = vadd.f32 0.0, %v6248
        %6250 = vmatprep.mubr.bf16.mxu0 0
        %6251 = vmatmul.mubr.bf16.gmra.mxu0 %v5976
        %v6252 = vpop.f32.mrf.mxu0
        %v6253 = vadd.f32 0.0, %v6252
        %v6254 = vpop.f32.mrf.mxu0
        %v6255 = vadd.f32 0.0, %v6254
        %v6256 = vpop.f32.mrf.mxu0
        %v6257 = vadd.f32 0.0, %v6256
        %v6258 = vpop.f32.mrf.mxu0
        %v6259 = vadd.f32 0.0, %v6258
        %6260 = vmatprep.mubr.bf16.mxu0 0
        %6261 = vmatmul.mubr.bf16.gmra.mxu0 %v5979
        %v6262 = vpop.f32.mrf.mxu0
        %v6263 = vadd.f32 0.0, %v6262
        %v6264 = vpop.f32.mrf.mxu0
        %v6265 = vadd.f32 0.0, %v6264
        %v6266 = vpop.f32.mrf.mxu0
        %v6267 = vadd.f32 0.0, %v6266
        %v6268 = vpop.f32.mrf.mxu0
        %v6269 = vadd.f32 0.0, %v6268
        %6270 = vmatprep.mubr.bf16.mxu0 0
        %6271 = vmatmul.mubr.bf16.gmra.mxu0 %v5982
        %v6272 = vpop.f32.mrf.mxu0
        %v6273 = vadd.f32 0.0, %v6272
        %v6274 = vpop.f32.mrf.mxu0
        %v6275 = vadd.f32 0.0, %v6274
        %v6276 = vpop.f32.mrf.mxu0
        %v6277 = vadd.f32 0.0, %v6276
        %v6278 = vpop.f32.mrf.mxu0
        %v6279 = vadd.f32 0.0, %v6278
        %6280 = vmatprep.mubr.bf16.mxu0 0
        %6281 = vmatmul.mubr.bf16.gmra.mxu0 %v5985
        %v6282 = vpop.f32.mrf.mxu0
        %v6283 = vadd.f32 0.0, %v6282
        %v6284 = vpop.f32.mrf.mxu0
        %v6285 = vadd.f32 0.0, %v6284
        %v6286 = vpop.f32.mrf.mxu0
        %v6287 = vadd.f32 0.0, %v6286
        %v6288 = vpop.f32.mrf.mxu0
        %v6289 = vadd.f32 0.0, %v6288
        %6290 = vmatprep.mubr.bf16.mxu0 0
        %6291 = vmatmul.mubr.bf16.gmra.mxu0 %v5988
        %v6292 = vpop.f32.mrf.mxu0
        %v6293 = vadd.f32 0.0, %v6292
        %v6294 = vpop.f32.mrf.mxu0
        %v6295 = vadd.f32 0.0, %v6294
        %v6296 = vpop.f32.mrf.mxu0
        %v6297 = vadd.f32 0.0, %v6296
        %v6298 = vpop.f32.mrf.mxu0
        %v6299 = vadd.f32 0.0, %v6298
        %6300 = vmatprep.mubr.bf16.mxu0 0
        %6301 = vmatmul.mubr.bf16.gmra.mxu0 %v5991
        %v6302 = vpop.f32.mrf.mxu0
        %v6303 = vadd.f32 0.0, %v6302
        %v6304 = vpop.f32.mrf.mxu0
        %v6305 = vadd.f32 0.0, %v6304
        %v6306 = vpop.f32.mrf.mxu0
        %v6307 = vadd.f32 0.0, %v6306
        %v6308 = vpop.f32.mrf.mxu0
        %v6309 = vadd.f32 0.0, %v6308
        %6310 = vmatprep.mubr.bf16.mxu0 0
        %6311 = vmatmul.mubr.bf16.gmra.mxu0 %v5994
        %v6312 = vpop.f32.mrf.mxu0
        %v6313 = vadd.f32 0.0, %v6312
        %v6314 = vpop.f32.mrf.mxu0
        %v6315 = vadd.f32 0.0, %v6314
        %v6316 = vpop.f32.mrf.mxu0
        %v6317 = vadd.f32 0.0, %v6316
        %v6318 = vpop.f32.mrf.mxu0
        %v6319 = vadd.f32 0.0, %v6318
        %6320 = vmatprep.mubr.bf16.mxu0 0
        %6321 = vmatmul.mubr.bf16.gmra.mxu0 %v5997
        %v6322 = vpop.f32.mrf.mxu0
        %v6323 = vadd.f32 0.0, %v6322
        %v6324 = vpop.f32.mrf.mxu0
        %v6325 = vadd.f32 0.0, %v6324
        %v6326 = vpop.f32.mrf.mxu0
        %v6327 = vadd.f32 0.0, %v6326
        %v6328 = vpop.f32.mrf.mxu0
        %v6329 = vadd.f32 0.0, %v6328
        %6330 = vmatprep.mubr.bf16.mxu0 0
        %6331 = vmatmul.mubr.bf16.gmra.mxu0 %v6000
        %v6332 = vpop.f32.mrf.mxu0
        %v6333 = vadd.f32 0.0, %v6332
        %v6334 = vpop.f32.mrf.mxu0
        %v6335 = vadd.f32 0.0, %v6334
        %v6336 = vpop.f32.mrf.mxu0
        %v6337 = vadd.f32 0.0, %v6336
        %v6338 = vpop.f32.mrf.mxu0
        %v6339 = vadd.f32 0.0, %v6338
        %6340 = vmatprep.mubr.bf16.mxu0 0
        %6341 = vmatmul.mubr.bf16.gmra.mxu0 %v6003
        %v6342 = vpop.f32.mrf.mxu0
        %v6343 = vadd.f32 0.0, %v6342
        %v6344 = vpop.f32.mrf.mxu0
        %v6345 = vadd.f32 0.0, %v6344
        %v6346 = vpop.f32.mrf.mxu0
        %v6347 = vadd.f32 0.0, %v6346
        %v6348 = vpop.f32.mrf.mxu0
        %v6349 = vadd.f32 0.0, %v6348
        %6350 = vmatprep.mubr.bf16.mxu0 0
        %6351 = vmatmul.mubr.bf16.gmra.mxu0 %v6006
        %v6352 = vpop.f32.mrf.mxu0
        %v6353 = vadd.f32 0.0, %v6352
        %v6354 = vpop.f32.mrf.mxu0
        %v6355 = vadd.f32 0.0, %v6354
        %v6356 = vpop.f32.mrf.mxu0
        %v6357 = vadd.f32 0.0, %v6356
        %v6358 = vpop.f32.mrf.mxu0
        %v6359 = vadd.f32 0.0, %v6358
        %6360 = vdwg.mxu0
        %v6361 = vpack.c.bf16 %v6047, %v6043
        %v6362 = vpack.c.bf16 %v6049, %v6045
        %v6363 = vpack.c.bf16 %v6057, %v6053
        %v6364 = vpack.c.bf16 %v6059, %v6055
        %v6365 = vpack.c.bf16 %v6067, %v6063
        %v6366 = vpack.c.bf16 %v6069, %v6065
        %v6367 = vpack.c.bf16 %v6077, %v6073
        %v6368 = vpack.c.bf16 %v6079, %v6075
        %v6369 = vpack.c.bf16 %v6087, %v6083
        %v6370 = vpack.c.bf16 %v6089, %v6085
        %v6371 = vpack.c.bf16 %v6097, %v6093
        %v6372 = vpack.c.bf16 %v6099, %v6095
        %v6373 = vpack.c.bf16 %v6107, %v6103
        %v6374 = vpack.c.bf16 %v6109, %v6105
        %v6375 = vpack.c.bf16 %v6117, %v6113
        %v6376 = vpack.c.bf16 %v6119, %v6115
        %v6377 = vpack.c.bf16 %v6127, %v6123
        %v6378 = vpack.c.bf16 %v6129, %v6125
        %v6379 = vpack.c.bf16 %v6137, %v6133
        %v6380 = vpack.c.bf16 %v6139, %v6135
        %v6381 = vpack.c.bf16 %v6147, %v6143
        %v6382 = vpack.c.bf16 %v6149, %v6145
        %v6383 = vpack.c.bf16 %v6157, %v6153
        %v6384 = vpack.c.bf16 %v6159, %v6155
        %v6385 = vpack.c.bf16 %v6167, %v6163
        %v6386 = vpack.c.bf16 %v6169, %v6165
        %v6387 = vpack.c.bf16 %v6177, %v6173
        %v6388 = vpack.c.bf16 %v6179, %v6175
        %v6389 = vpack.c.bf16 %v6187, %v6183
        %v6390 = vpack.c.bf16 %v6189, %v6185
        %v6391 = vpack.c.bf16 %v6197, %v6193
        %v6392 = vpack.c.bf16 %v6199, %v6195
        %v6393 = vpack.c.bf16 %v6207, %v6203
        %v6394 = vpack.c.bf16 %v6209, %v6205
        %v6395 = vpack.c.bf16 %v6217, %v6213
        %v6396 = vpack.c.bf16 %v6219, %v6215
        %v6397 = vpack.c.bf16 %v6227, %v6223
        %v6398 = vpack.c.bf16 %v6229, %v6225
        %v6399 = vpack.c.bf16 %v6237, %v6233
        %v6400 = vpack.c.bf16 %v6239, %v6235
        %v6401 = vpack.c.bf16 %v6247, %v6243
        %v6402 = vpack.c.bf16 %v6249, %v6245
        %v6403 = vpack.c.bf16 %v6257, %v6253
        %v6404 = vpack.c.bf16 %v6259, %v6255
        %v6405 = vpack.c.bf16 %v6267, %v6263
        %v6406 = vpack.c.bf16 %v6269, %v6265
        %v6407 = vpack.c.bf16 %v6277, %v6273
        %v6408 = vpack.c.bf16 %v6279, %v6275
        %v6409 = vpack.c.bf16 %v6287, %v6283
        %v6410 = vpack.c.bf16 %v6289, %v6285
        %v6411 = vpack.c.bf16 %v6297, %v6293
        %v6412 = vpack.c.bf16 %v6299, %v6295
        %v6413 = vpack.c.bf16 %v6307, %v6303
        %v6414 = vpack.c.bf16 %v6309, %v6305
        %v6415 = vpack.c.bf16 %v6317, %v6313
        %v6416 = vpack.c.bf16 %v6319, %v6315
        %v6417 = vpack.c.bf16 %v6327, %v6323
        %v6418 = vpack.c.bf16 %v6329, %v6325
        %v6419 = vpack.c.bf16 %v6337, %v6333
        %v6420 = vpack.c.bf16 %v6339, %v6335
        %v6421 = vpack.c.bf16 %v6347, %v6343
        %v6422 = vpack.c.bf16 %v6349, %v6345
        %v6423 = vpack.c.bf16 %v6357, %v6353
        %v6424 = vpack.c.bf16 %v6359, %v6355
        %v6425 = vmul.bf16 %v6361, %v2303
        %v6426 = vmul.bf16 %v6362, %v2304
        %v6427 = vmul.bf16 %v6363, %v2305
        %v6428 = vmul.bf16 %v6364, %v2306
        %v6429 = vmul.bf16 %v6365, %v2307
        %v6430 = vmul.bf16 %v6366, %v2308
        %v6431 = vmul.bf16 %v6367, %v2309
        %v6432 = vmul.bf16 %v6368, %v2310
        %v6433 = vmul.bf16 %v6369, %v2311
        %v6434 = vmul.bf16 %v6370, %v2312
        %v6435 = vmul.bf16 %v6371, %v2313
        %v6436 = vmul.bf16 %v6372, %v2314
        %v6437 = vmul.bf16 %v6373, %v2315
        %v6438 = vmul.bf16 %v6374, %v2316
        %v6439 = vmul.bf16 %v6375, %v2317
        %v6440 = vmul.bf16 %v6376, %v2318
        %v6441 = vmul.bf16 %v6377, %v2319
        %v6442 = vmul.bf16 %v6378, %v2320
        %v6443 = vmul.bf16 %v6379, %v2321
        %v6444 = vmul.bf16 %v6380, %v2322
        %v6445 = vmul.bf16 %v6381, %v2323
        %v6446 = vmul.bf16 %v6382, %v2324
        %v6447 = vmul.bf16 %v6383, %v2325
        %v6448 = vmul.bf16 %v6384, %v2326
        %v6449 = vmul.bf16 %v6385, %v2327
        %v6450 = vmul.bf16 %v6386, %v2328
        %v6451 = vmul.bf16 %v6387, %v2329
        %v6452 = vmul.bf16 %v6388, %v2330
        %v6453 = vmul.bf16 %v6389, %v2331
        %v6454 = vmul.bf16 %v6390, %v2332
        %v6455 = vmul.bf16 %v6391, %v2333
        %v6456 = vmul.bf16 %v6392, %v2334
        %v6457 = vmul.bf16 %v6393, %v2335
        %v6458 = vmul.bf16 %v6394, %v2336
        %v6459 = vmul.bf16 %v6395, %v2337
        %v6460 = vmul.bf16 %v6396, %v2338
        %v6461 = vmul.bf16 %v6397, %v2339
        %v6462 = vmul.bf16 %v6398, %v2340
        %v6463 = vmul.bf16 %v6399, %v2341
        %v6464 = vmul.bf16 %v6400, %v2342
        %v6465 = vmul.bf16 %v6401, %v2343
        %v6466 = vmul.bf16 %v6402, %v2344
        %v6467 = vmul.bf16 %v6403, %v2345
        %v6468 = vmul.bf16 %v6404, %v2346
        %v6469 = vmul.bf16 %v6405, %v2347
        %v6470 = vmul.bf16 %v6406, %v2348
        %v6471 = vmul.bf16 %v6407, %v2349
        %v6472 = vmul.bf16 %v6408, %v2350
        %v6473 = vmul.bf16 %v6409, %v2351
        %v6474 = vmul.bf16 %v6410, %v2352
        %v6475 = vmul.bf16 %v6411, %v2353
        %v6476 = vmul.bf16 %v6412, %v2354
        %v6477 = vmul.bf16 %v6413, %v2355
        %v6478 = vmul.bf16 %v6414, %v2356
        %v6479 = vmul.bf16 %v6415, %v2357
        %v6480 = vmul.bf16 %v6416, %v2358
        %v6481 = vmul.bf16 %v6417, %v2359
        %v6482 = vmul.bf16 %v6418, %v2360
        %v6483 = vmul.bf16 %v6419, %v2361
        %v6484 = vmul.bf16 %v6420, %v2362
        %v6485 = vmul.bf16 %v6421, %v2363
        %v6486 = vmul.bf16 %v6422, %v2364
        %v6487 = vmul.bf16 %v6423, %v2365
        %v6488 = vmul.bf16 %v6424, %v2366
        %v6489 = vunpack.c.l.bf16 %v6425
        %v6490 = vunpack.c.l.bf16 %v6426
        %v6491 = vunpack.c.h.bf16 %v6425
        %v6492 = vunpack.c.h.bf16 %v6426
        %v6493 = vunpack.c.l.bf16 %v6427
        %v6494 = vunpack.c.l.bf16 %v6428
        %v6495 = vunpack.c.h.bf16 %v6427
        %v6496 = vunpack.c.h.bf16 %v6428
        %v6497 = vunpack.c.l.bf16 %v6429
        %v6498 = vunpack.c.l.bf16 %v6430
        %v6499 = vunpack.c.h.bf16 %v6429
        %v6500 = vunpack.c.h.bf16 %v6430
        %v6501 = vunpack.c.l.bf16 %v6431
        %v6502 = vunpack.c.l.bf16 %v6432
        %v6503 = vunpack.c.h.bf16 %v6431
        %v6504 = vunpack.c.h.bf16 %v6432
        %v6505 = vunpack.c.l.bf16 %v6433
        %v6506 = vunpack.c.l.bf16 %v6434
        %v6507 = vunpack.c.h.bf16 %v6433
        %v6508 = vunpack.c.h.bf16 %v6434
        %v6509 = vunpack.c.l.bf16 %v6435
        %v6510 = vunpack.c.l.bf16 %v6436
        %v6511 = vunpack.c.h.bf16 %v6435
        %v6512 = vunpack.c.h.bf16 %v6436
        %v6513 = vunpack.c.l.bf16 %v6437
        %v6514 = vunpack.c.l.bf16 %v6438
        %v6515 = vunpack.c.h.bf16 %v6437
        %v6516 = vunpack.c.h.bf16 %v6438
        %v6517 = vunpack.c.l.bf16 %v6439
        %v6518 = vunpack.c.l.bf16 %v6440
        %v6519 = vunpack.c.h.bf16 %v6439
        %v6520 = vunpack.c.h.bf16 %v6440
        %v6521 = vunpack.c.l.bf16 %v6441
        %v6522 = vunpack.c.l.bf16 %v6442
        %v6523 = vunpack.c.h.bf16 %v6441
        %v6524 = vunpack.c.h.bf16 %v6442
        %v6525 = vunpack.c.l.bf16 %v6443
        %v6526 = vunpack.c.l.bf16 %v6444
        %v6527 = vunpack.c.h.bf16 %v6443
        %v6528 = vunpack.c.h.bf16 %v6444
        %v6529 = vunpack.c.l.bf16 %v6445
        %v6530 = vunpack.c.l.bf16 %v6446
        %v6531 = vunpack.c.h.bf16 %v6445
        %v6532 = vunpack.c.h.bf16 %v6446
        %v6533 = vunpack.c.l.bf16 %v6447
        %v6534 = vunpack.c.l.bf16 %v6448
        %v6535 = vunpack.c.h.bf16 %v6447
        %v6536 = vunpack.c.h.bf16 %v6448
        %v6537 = vunpack.c.l.bf16 %v6449
        %v6538 = vunpack.c.l.bf16 %v6450
        %v6539 = vunpack.c.h.bf16 %v6449
        %v6540 = vunpack.c.h.bf16 %v6450
        %v6541 = vunpack.c.l.bf16 %v6451
        %v6542 = vunpack.c.l.bf16 %v6452
        %v6543 = vunpack.c.h.bf16 %v6451
        %v6544 = vunpack.c.h.bf16 %v6452
        %v6545 = vunpack.c.l.bf16 %v6453
        %v6546 = vunpack.c.l.bf16 %v6454
        %v6547 = vunpack.c.h.bf16 %v6453
        %v6548 = vunpack.c.h.bf16 %v6454
        %v6549 = vunpack.c.l.bf16 %v6455
        %v6550 = vunpack.c.l.bf16 %v6456
        %v6551 = vunpack.c.h.bf16 %v6455
        %v6552 = vunpack.c.h.bf16 %v6456
        %v6553 = vunpack.c.l.bf16 %v6457
        %v6554 = vunpack.c.l.bf16 %v6458
        %v6555 = vunpack.c.h.bf16 %v6457
        %v6556 = vunpack.c.h.bf16 %v6458
        %v6557 = vunpack.c.l.bf16 %v6459
        %v6558 = vunpack.c.l.bf16 %v6460
        %v6559 = vunpack.c.h.bf16 %v6459
        %v6560 = vunpack.c.h.bf16 %v6460
        %v6561 = vunpack.c.l.bf16 %v6461
        %v6562 = vunpack.c.l.bf16 %v6462
        %v6563 = vunpack.c.h.bf16 %v6461
        %v6564 = vunpack.c.h.bf16 %v6462
        %v6565 = vunpack.c.l.bf16 %v6463
        %v6566 = vunpack.c.l.bf16 %v6464
        %v6567 = vunpack.c.h.bf16 %v6463
        %v6568 = vunpack.c.h.bf16 %v6464
        %v6569 = vunpack.c.l.bf16 %v6465
        %v6570 = vunpack.c.l.bf16 %v6466
        %v6571 = vunpack.c.h.bf16 %v6465
        %v6572 = vunpack.c.h.bf16 %v6466
        %v6573 = vunpack.c.l.bf16 %v6467
        %v6574 = vunpack.c.l.bf16 %v6468
        %v6575 = vunpack.c.h.bf16 %v6467
        %v6576 = vunpack.c.h.bf16 %v6468
        %v6577 = vunpack.c.l.bf16 %v6469
        %v6578 = vunpack.c.l.bf16 %v6470
        %v6579 = vunpack.c.h.bf16 %v6469
        %v6580 = vunpack.c.h.bf16 %v6470
        %v6581 = vunpack.c.l.bf16 %v6471
        %v6582 = vunpack.c.l.bf16 %v6472
        %v6583 = vunpack.c.h.bf16 %v6471
        %v6584 = vunpack.c.h.bf16 %v6472
        %v6585 = vunpack.c.l.bf16 %v6473
        %v6586 = vunpack.c.l.bf16 %v6474
        %v6587 = vunpack.c.h.bf16 %v6473
        %v6588 = vunpack.c.h.bf16 %v6474
        %v6589 = vunpack.c.l.bf16 %v6475
        %v6590 = vunpack.c.l.bf16 %v6476
        %v6591 = vunpack.c.h.bf16 %v6475
        %v6592 = vunpack.c.h.bf16 %v6476
        %v6593 = vunpack.c.l.bf16 %v6477
        %v6594 = vunpack.c.l.bf16 %v6478
        %v6595 = vunpack.c.h.bf16 %v6477
        %v6596 = vunpack.c.h.bf16 %v6478
        %v6597 = vunpack.c.l.bf16 %v6479
        %v6598 = vunpack.c.l.bf16 %v6480
        %v6599 = vunpack.c.h.bf16 %v6479
        %v6600 = vunpack.c.h.bf16 %v6480
        %v6601 = vunpack.c.l.bf16 %v6481
        %v6602 = vunpack.c.l.bf16 %v6482
        %v6603 = vunpack.c.h.bf16 %v6481
        %v6604 = vunpack.c.h.bf16 %v6482
        %v6605 = vunpack.c.l.bf16 %v6483
        %v6606 = vunpack.c.l.bf16 %v6484
        %v6607 = vunpack.c.h.bf16 %v6483
        %v6608 = vunpack.c.h.bf16 %v6484
        %v6609 = vunpack.c.l.bf16 %v6485
        %v6610 = vunpack.c.l.bf16 %v6486
        %v6611 = vunpack.c.h.bf16 %v6485
        %v6612 = vunpack.c.h.bf16 %v6486
        %v6613 = vunpack.c.l.bf16 %v6487
        %v6614 = vunpack.c.l.bf16 %v6488
        %v6615 = vunpack.c.h.bf16 %v6487
        %v6616 = vunpack.c.h.bf16 %v6488
        %v6617 = vadd.f32 %v6489, %v6505
        %v6618 = vadd.f32 %v6617, %v6521
        %v6619 = vadd.f32 %v6618, %v6537
        %v6620 = vadd.f32 %v6619, %v6553
        %v6621 = vadd.f32 %v6620, %v6569
        %v6622 = vadd.f32 %v6621, %v6585
        %v6623 = vadd.f32 %v6622, %v6601
        %v6624 = vadd.f32 %v6490, %v6506
        %v6625 = vadd.f32 %v6624, %v6522
        %v6626 = vadd.f32 %v6625, %v6538
        %v6627 = vadd.f32 %v6626, %v6554
        %v6628 = vadd.f32 %v6627, %v6570
        %v6629 = vadd.f32 %v6628, %v6586
        %v6630 = vadd.f32 %v6629, %v6602
        %v6631 = vadd.f32 %v6491, %v6507
        %v6632 = vadd.f32 %v6631, %v6523
        %v6633 = vadd.f32 %v6632, %v6539
        %v6634 = vadd.f32 %v6633, %v6555
        %v6635 = vadd.f32 %v6634, %v6571
        %v6636 = vadd.f32 %v6635, %v6587
        %v6637 = vadd.f32 %v6636, %v6603
        %v6638 = vadd.f32 %v6492, %v6508
        %v6639 = vadd.f32 %v6638, %v6524
        %v6640 = vadd.f32 %v6639, %v6540
        %v6641 = vadd.f32 %v6640, %v6556
        %v6642 = vadd.f32 %v6641, %v6572
        %v6643 = vadd.f32 %v6642, %v6588
        %v6644 = vadd.f32 %v6643, %v6604
        %v6645 = vadd.f32 %v6493, %v6509
        %v6646 = vadd.f32 %v6645, %v6525
        %v6647 = vadd.f32 %v6646, %v6541
        %v6648 = vadd.f32 %v6647, %v6557
        %v6649 = vadd.f32 %v6648, %v6573
        %v6650 = vadd.f32 %v6649, %v6589
        %v6651 = vadd.f32 %v6650, %v6605
        %v6652 = vadd.f32 %v6494, %v6510
        %v6653 = vadd.f32 %v6652, %v6526
        %v6654 = vadd.f32 %v6653, %v6542
        %v6655 = vadd.f32 %v6654, %v6558
        %v6656 = vadd.f32 %v6655, %v6574
        %v6657 = vadd.f32 %v6656, %v6590
        %v6658 = vadd.f32 %v6657, %v6606
        %v6659 = vadd.f32 %v6495, %v6511
        %v6660 = vadd.f32 %v6659, %v6527
        %v6661 = vadd.f32 %v6660, %v6543
        %v6662 = vadd.f32 %v6661, %v6559
        %v6663 = vadd.f32 %v6662, %v6575
        %v6664 = vadd.f32 %v6663, %v6591
        %v6665 = vadd.f32 %v6664, %v6607
        %v6666 = vadd.f32 %v6496, %v6512
        %v6667 = vadd.f32 %v6666, %v6528
        %v6668 = vadd.f32 %v6667, %v6544
        %v6669 = vadd.f32 %v6668, %v6560
        %v6670 = vadd.f32 %v6669, %v6576
        %v6671 = vadd.f32 %v6670, %v6592
        %v6672 = vadd.f32 %v6671, %v6608
        %v6673 = vadd.f32 %v6497, %v6513
        %v6674 = vadd.f32 %v6673, %v6529
        %v6675 = vadd.f32 %v6674, %v6545
        %v6676 = vadd.f32 %v6675, %v6561
        %v6677 = vadd.f32 %v6676, %v6577
        %v6678 = vadd.f32 %v6677, %v6593
        %v6679 = vadd.f32 %v6678, %v6609
        %v6680 = vadd.f32 %v6498, %v6514
        %v6681 = vadd.f32 %v6680, %v6530
        %v6682 = vadd.f32 %v6681, %v6546
        %v6683 = vadd.f32 %v6682, %v6562
        %v6684 = vadd.f32 %v6683, %v6578
        %v6685 = vadd.f32 %v6684, %v6594
        %v6686 = vadd.f32 %v6685, %v6610
        %v6687 = vadd.f32 %v6499, %v6515
        %v6688 = vadd.f32 %v6687, %v6531
        %v6689 = vadd.f32 %v6688, %v6547
        %v6690 = vadd.f32 %v6689, %v6563
        %v6691 = vadd.f32 %v6690, %v6579
        %v6692 = vadd.f32 %v6691, %v6595
        %v6693 = vadd.f32 %v6692, %v6611
        %v6694 = vadd.f32 %v6500, %v6516
        %v6695 = vadd.f32 %v6694, %v6532
        %v6696 = vadd.f32 %v6695, %v6548
        %v6697 = vadd.f32 %v6696, %v6564
        %v6698 = vadd.f32 %v6697, %v6580
        %v6699 = vadd.f32 %v6698, %v6596
        %v6700 = vadd.f32 %v6699, %v6612
        %v6701 = vadd.f32 %v6501, %v6517
        %v6702 = vadd.f32 %v6701, %v6533
        %v6703 = vadd.f32 %v6702, %v6549
        %v6704 = vadd.f32 %v6703, %v6565
        %v6705 = vadd.f32 %v6704, %v6581
        %v6706 = vadd.f32 %v6705, %v6597
        %v6707 = vadd.f32 %v6706, %v6613
        %v6708 = vadd.f32 %v6502, %v6518
        %v6709 = vadd.f32 %v6708, %v6534
        %v6710 = vadd.f32 %v6709, %v6550
        %v6711 = vadd.f32 %v6710, %v6566
        %v6712 = vadd.f32 %v6711, %v6582
        %v6713 = vadd.f32 %v6712, %v6598
        %v6714 = vadd.f32 %v6713, %v6614
        %v6715 = vadd.f32 %v6503, %v6519
        %v6716 = vadd.f32 %v6715, %v6535
        %v6717 = vadd.f32 %v6716, %v6551
        %v6718 = vadd.f32 %v6717, %v6567
        %v6719 = vadd.f32 %v6718, %v6583
        %v6720 = vadd.f32 %v6719, %v6599
        %v6721 = vadd.f32 %v6720, %v6615
        %v6722 = vadd.f32 %v6504, %v6520
        %v6723 = vadd.f32 %v6722, %v6536
        %v6724 = vadd.f32 %v6723, %v6552
        %v6725 = vadd.f32 %v6724, %v6568
        %v6726 = vadd.f32 %v6725, %v6584
        %v6727 = vadd.f32 %v6726, %v6600
        %v6728 = vadd.f32 %v6727, %v6616
        %v6729 = vpack.c.bf16 %v6637, %v6623
        %v6730 = vpack.c.bf16 %v6644, %v6630
        %v6731 = vpack.c.bf16 %v6665, %v6651
        %v6732 = vpack.c.bf16 %v6672, %v6658
        %v6733 = vpack.c.bf16 %v6693, %v6679
        %v6734 = vpack.c.bf16 %v6700, %v6686
        %v6735 = vpack.c.bf16 %v6721, %v6707
        %v6736 = vpack.c.bf16 %v6728, %v6714
        %v6737 = vld [vmem:[%s11] sm:$0xff]
        %v6738 = vld [vmem:[%s11 + $0x8] sm:$0xff]
        %v6739 = vld [vmem:[%s11 + $0x10] sm:$0xff]
        %v6740 = vld [vmem:[%s11 + $0x18] sm:$0xff]
        %v6741 = vld [vmem:[%s11 + $0x20] sm:$0xff]
        %v6742 = vld [vmem:[%s11 + $0x28] sm:$0xff]
        %v6743 = vld [vmem:[%s11 + $0x30] sm:$0xff]
        %v6744 = vld [vmem:[%s11 + $0x38] sm:$0xff]
        %v6745 = vld [vmem:[%s11 + $0x40] sm:$0xff]
        %v6746 = vld [vmem:[%s11 + $0x48] sm:$0xff]
        %v6747 = vld [vmem:[%s11 + $0x50] sm:$0xff]
        %v6748 = vld [vmem:[%s11 + $0x58] sm:$0xff]
        %v6749 = vld [vmem:[%s11 + $0x60] sm:$0xff]
        %v6750 = vld [vmem:[%s11 + $0x68] sm:$0xff]
        %v6751 = vld [vmem:[%s11 + $0x70] sm:$0xff]
        %v6752 = vld [vmem:[%s11 + $0x78] sm:$0xff]
        %v6753 = vld [vmem:[%s11 + $0x80] sm:$0xff]
        %v6754 = vld [vmem:[%s11 + $0x88] sm:$0xff]
        %v6755 = vld [vmem:[%s11 + $0x90] sm:$0xff]
        %v6756 = vld [vmem:[%s11 + $0x98] sm:$0xff]
        %v6757 = vld [vmem:[%s11 + $0xa0] sm:$0xff]
        %v6758 = vld [vmem:[%s11 + $0xa8] sm:$0xff]
        %v6759 = vld [vmem:[%s11 + $0xb0] sm:$0xff]
        %v6760 = vld [vmem:[%s11 + $0xb8] sm:$0xff]
        %v6761 = vld [vmem:[%s11 + $0xc0] sm:$0xff]
        %v6762 = vld [vmem:[%s11 + $0xc8] sm:$0xff]
        %v6763 = vld [vmem:[%s11 + $0xd0] sm:$0xff]
        %v6764 = vld [vmem:[%s11 + $0xd8] sm:$0xff]
        %v6765 = vld [vmem:[%s11 + $0xe0] sm:$0xff]
        %v6766 = vld [vmem:[%s11 + $0xe8] sm:$0xff]
        %v6767 = vld [vmem:[%s11 + $0xf0] sm:$0xff]
        %v6768 = vld [vmem:[%s11 + $0xf8] sm:$0xff]
        %v6769 = vld [vmem:[%s12] sm:$0x3]
        %v6771 = vlaneseq
        %v6772 = vshrl.u32 %v6771, 7
        %v6773 = vsub.s32 0, %v6772
        %v6774 = vrot.slane %v6769, %v6773
        %v6775 = vlaneseq
        %v6776 = vshrl.u32 %v6775, 7
        %v6777 = vsub.s32 1, %v6776
        %v6778 = vrot.slane %v6769, %v6777
        %v6813 = vunpack.c.l.b16 %v6737
        %v6814 = vunpack.c.h.b16 %v6737
        %v6815 = vunpack.c.l.b16 %v6738
        %v6816 = vunpack.c.h.b16 %v6738
        %v6817 = vunpack.c.l.b16 %v6739
        %v6818 = vunpack.c.h.b16 %v6739
        %v6819 = vunpack.c.l.b16 %v6740
        %v6820 = vunpack.c.h.b16 %v6740
        %v6821 = vunpack.c.l.b16 %v6741
        %v6822 = vunpack.c.h.b16 %v6741
        %v6823 = vunpack.c.l.b16 %v6742
        %v6824 = vunpack.c.h.b16 %v6742
        %v6825 = vunpack.c.l.b16 %v6743
        %v6826 = vunpack.c.h.b16 %v6743
        %v6827 = vunpack.c.l.b16 %v6744
        %v6828 = vunpack.c.h.b16 %v6744
        %v6829 = vunpack.c.l.b16 %v6745
        %v6830 = vunpack.c.h.b16 %v6745
        %v6831 = vunpack.c.l.b16 %v6746
        %v6832 = vunpack.c.h.b16 %v6746
        %v6833 = vunpack.c.l.b16 %v6747
        %v6834 = vunpack.c.h.b16 %v6747
        %v6835 = vunpack.c.l.b16 %v6748
        %v6836 = vunpack.c.h.b16 %v6748
        %v6837 = vunpack.c.l.b16 %v6749
        %v6838 = vunpack.c.h.b16 %v6749
        %v6839 = vunpack.c.l.b16 %v6750
        %v6840 = vunpack.c.h.b16 %v6750
        %v6841 = vunpack.c.l.b16 %v6751
        %v6842 = vunpack.c.h.b16 %v6751
        %v6843 = vunpack.c.l.b16 %v6752
        %v6844 = vunpack.c.h.b16 %v6752
        %v6845 = vunpack.c.l.b16 %v6753
        %v6846 = vunpack.c.h.b16 %v6753
        %v6847 = vunpack.c.l.b16 %v6754
        %v6848 = vunpack.c.h.b16 %v6754
        %v6849 = vunpack.c.l.b16 %v6755
        %v6850 = vunpack.c.h.b16 %v6755
        %v6851 = vunpack.c.l.b16 %v6756
        %v6852 = vunpack.c.h.b16 %v6756
        %v6853 = vunpack.c.l.b16 %v6757
        %v6854 = vunpack.c.h.b16 %v6757
        %v6855 = vunpack.c.l.b16 %v6758
        %v6856 = vunpack.c.h.b16 %v6758
        %v6857 = vunpack.c.l.b16 %v6759
        %v6858 = vunpack.c.h.b16 %v6759
        %v6859 = vunpack.c.l.b16 %v6760
        %v6860 = vunpack.c.h.b16 %v6760
        %v6861 = vunpack.c.l.b16 %v6761
        %v6862 = vunpack.c.h.b16 %v6761
        %v6863 = vunpack.c.l.b16 %v6762
        %v6864 = vunpack.c.h.b16 %v6762
        %v6865 = vunpack.c.l.b16 %v6763
        %v6866 = vunpack.c.h.b16 %v6763
        %v6867 = vunpack.c.l.b16 %v6764
        %v6868 = vunpack.c.h.b16 %v6764
        %v6869 = vunpack.c.l.b16 %v6765
        %v6870 = vunpack.c.h.b16 %v6765
        %v6871 = vunpack.c.l.b16 %v6766
        %v6872 = vunpack.c.h.b16 %v6766
        %v6873 = vunpack.c.l.b16 %v6767
        %v6874 = vunpack.c.h.b16 %v6767
        %v6875 = vunpack.c.l.b16 %v6768
        %v6876 = vunpack.c.h.b16 %v6768
        %v6877 = vpack.c.b16 %v6815, %v6813
        %v6878 = vpack.c.b16 %v6816, %v6814
        %v6879 = vpack.c.b16 %v6819, %v6817
        %v6880 = vpack.c.b16 %v6820, %v6818
        %v6881 = vpack.c.b16 %v6823, %v6821
        %v6882 = vpack.c.b16 %v6824, %v6822
        %v6883 = vpack.c.b16 %v6827, %v6825
        %v6884 = vpack.c.b16 %v6828, %v6826
        %v6885 = vpack.c.b16 %v6831, %v6829
        %v6886 = vpack.c.b16 %v6832, %v6830
        %v6887 = vpack.c.b16 %v6835, %v6833
        %v6888 = vpack.c.b16 %v6836, %v6834
        %v6889 = vpack.c.b16 %v6839, %v6837
        %v6890 = vpack.c.b16 %v6840, %v6838
        %v6891 = vpack.c.b16 %v6843, %v6841
        %v6892 = vpack.c.b16 %v6844, %v6842
        %v6893 = vpack.c.b16 %v6847, %v6845
        %v6894 = vpack.c.b16 %v6848, %v6846
        %v6895 = vpack.c.b16 %v6851, %v6849
        %v6896 = vpack.c.b16 %v6852, %v6850
        %v6897 = vpack.c.b16 %v6855, %v6853
        %v6898 = vpack.c.b16 %v6856, %v6854
        %v6899 = vpack.c.b16 %v6859, %v6857
        %v6900 = vpack.c.b16 %v6860, %v6858
        %v6901 = vpack.c.b16 %v6863, %v6861
        %v6902 = vpack.c.b16 %v6864, %v6862
        %v6903 = vpack.c.b16 %v6867, %v6865
        %v6904 = vpack.c.b16 %v6868, %v6866
        %v6905 = vpack.c.b16 %v6871, %v6869
        %v6906 = vpack.c.b16 %v6872, %v6870
        %v6907 = vpack.c.b16 %v6875, %v6873
        %v6908 = vpack.c.b16 %v6876, %v6874
        %6941 = vmatprep.subr.bf16.mxu0 %v6892
        %6942 = vmatpush1.bf16.msra.mxu0 %v6891
        %6943 = vmatprep.subr.bf16.mxu0 %v6890
        %6944 = vmatpush1.bf16.msra.mxu0 %v6889
        %6945 = vmatprep.subr.bf16.mxu0 %v6888
        %6946 = vmatpush1.bf16.msra.mxu0 %v6887
        %6947 = vmatprep.subr.bf16.mxu0 %v6886
        %6948 = vmatpush1.bf16.msra.mxu0 %v6885
        %6949 = vmatprep.subr.bf16.mxu0 %v6884
        %6950 = vmatpush1.bf16.msra.mxu0 %v6883
        %6951 = vmatprep.subr.bf16.mxu0 %v6882
        %6952 = vmatpush1.bf16.msra.mxu0 %v6881
        %6953 = vmatprep.subr.bf16.mxu0 %v6880
        %6954 = vmatpush1.bf16.msra.mxu0 %v6879
        %6955 = vmatprep.subr.bf16.mxu0 %v6878
        %6956 = vmatpush1.bf16.msra.mxu0 %v6877
        %6957 = vmatprep.subr.bf16.mxu0 %v6908
        %6958 = vmatpush2.bf16.msra.mxu0 %v6907
        %6959 = vmatprep.subr.bf16.mxu0 %v6906
        %6960 = vmatpush2.bf16.msra.mxu0 %v6905
        %6961 = vmatprep.subr.bf16.mxu0 %v6904
        %6962 = vmatpush2.bf16.msra.mxu0 %v6903
        %6963 = vmatprep.subr.bf16.mxu0 %v6902
        %6964 = vmatpush2.bf16.msra.mxu0 %v6901
        %6965 = vmatprep.subr.bf16.mxu0 %v6900
        %6966 = vmatpush2.bf16.msra.mxu0 %v6899
        %6967 = vmatprep.subr.bf16.mxu0 %v6898
        %6968 = vmatpush2.bf16.msra.mxu0 %v6897
        %6969 = vmatprep.subr.bf16.mxu0 %v6896
        %6970 = vmatpush2.bf16.msra.mxu0 %v6895
        %6971 = vmatprep.subr.bf16.mxu0 %v6894
        %6972 = vmatpush2.bf16.msra.mxu0 %v6893
        %6973 = vmatprep.mubr.bf16.mxu0 %v6730
        %6974 = vmatmul.mubr.bf16.gmra.mxu0 %v6729
        %v6975 = vpop.f32.mrf.mxu0
        %v6976 = vadd.f32 %v6774, %v6975
        %v6977 = vpop.f32.mrf.mxu0
        %v6978 = vadd.f32 %v6778, %v6977
        %v6979 = vpop.f32.mrf.mxu0
        %v6980 = vadd.f32 %v6774, %v6979
        %v6981 = vpop.f32.mrf.mxu0
        %v6982 = vadd.f32 %v6778, %v6981
        %6983 = vmatprep.mubr.bf16.mxu0 %v6732
        %6984 = vmatmul.mubr.bf16.gmra.mxu0 %v6731
        %v6985 = vpop.f32.mrf.mxu0
        %v6986 = vadd.f32 %v6774, %v6985
        %v6987 = vpop.f32.mrf.mxu0
        %v6988 = vadd.f32 %v6778, %v6987
        %v6989 = vpop.f32.mrf.mxu0
        %v6990 = vadd.f32 %v6774, %v6989
        %v6991 = vpop.f32.mrf.mxu0
        %v6992 = vadd.f32 %v6778, %v6991
        %6993 = vmatprep.mubr.bf16.mxu0 %v6734
        %6994 = vmatmul.mubr.bf16.gmra.mxu0 %v6733
        %v6995 = vpop.f32.mrf.mxu0
        %v6996 = vadd.f32 %v6774, %v6995
        %v6997 = vpop.f32.mrf.mxu0
        %v6998 = vadd.f32 %v6778, %v6997
        %v6999 = vpop.f32.mrf.mxu0
        %v7000 = vadd.f32 %v6774, %v6999
        %v7001 = vpop.f32.mrf.mxu0
        %v7002 = vadd.f32 %v6778, %v7001
        %7003 = vmatprep.mubr.bf16.mxu0 %v6736
        %7004 = vmatmul.mubr.bf16.gmra.mxu0 %v6735
        %v7005 = vpop.f32.mrf.mxu0
        %v7006 = vadd.f32 %v6774, %v7005
        %v7007 = vpop.f32.mrf.mxu0
        %v7008 = vadd.f32 %v6778, %v7007
        %v7009 = vpop.f32.mrf.mxu0
        %v7010 = vadd.f32 %v6774, %v7009
        %v7011 = vpop.f32.mrf.mxu0
        %v7012 = vadd.f32 %v6778, %v7011
        %7013 = vdwg.mxu0
        %v7014 = vadd.f32 %v6976, %v578
        %v7015 = vadd.f32 %v6978, %v579
        %v7016 = vadd.f32 %v6980, %v580
        %v7017 = vadd.f32 %v6982, %v581
        %v7018 = vadd.f32 %v6986, %v582
        %v7019 = vadd.f32 %v6988, %v583
        %v7020 = vadd.f32 %v6990, %v584
        %v7021 = vadd.f32 %v6992, %v585
        %v7022 = vadd.f32 %v6996, %v586
        %v7023 = vadd.f32 %v6998, %v587
        %v7024 = vadd.f32 %v7000, %v588
        %v7025 = vadd.f32 %v7002, %v589
        %v7026 = vadd.f32 %v7006, %v590
        %v7027 = vadd.f32 %v7008, %v591
        %v7028 = vadd.f32 %v7010, %v592
        %v7029 = vadd.f32 %v7012, %v593
        %v7030 = vmax.f32 %v7014, 0.0
        %v7031 = vmax.f32 %v7015, 0.0
        %v7032 = vmax.f32 %v7016, 0.0
        %v7033 = vmax.f32 %v7017, 0.0
        %v7034 = vmax.f32 %v7018, 0.0
        %v7035 = vmax.f32 %v7019, 0.0
        %v7036 = vmax.f32 %v7020, 0.0
        %v7037 = vmax.f32 %v7021, 0.0
        %v7038 = vmax.f32 %v7022, 0.0
        %v7039 = vmax.f32 %v7023, 0.0
        %v7040 = vmax.f32 %v7024, 0.0
        %v7041 = vmax.f32 %v7025, 0.0
        %v7042 = vmax.f32 %v7026, 0.0
        %v7043 = vmax.f32 %v7027, 0.0
        %v7044 = vmax.f32 %v7028, 0.0
        %v7045 = vmax.f32 %v7029, 0.0
        %v7046 = vpack.c.bf16 %v7032, %v7030
        %v7047 = vpack.c.bf16 %v7033, %v7031
        %v7048 = vpack.c.bf16 %v7036, %v7034
        %v7049 = vpack.c.bf16 %v7037, %v7035
        %v7050 = vpack.c.bf16 %v7040, %v7038
        %v7051 = vpack.c.bf16 %v7041, %v7039
        %v7052 = vpack.c.bf16 %v7044, %v7042
        %v7053 = vpack.c.bf16 %v7045, %v7043
        %7054 = vmatprep.subr.bf16.mxu0 %v1917
        %7055 = vmatpush1.bf16.msra.mxu0 %v1916
        %7056 = vmatprep.subr.bf16.mxu0 %v1915
        %7057 = vmatpush1.bf16.msra.mxu0 %v1914
        %7058 = vmatprep.subr.bf16.mxu0 %v1913
        %7059 = vmatpush1.bf16.msra.mxu0 %v1912
        %7060 = vmatprep.subr.bf16.mxu0 %v1911
        %7061 = vmatpush1.bf16.msra.mxu0 %v1910
        %7062 = vmatprep.subr.bf16.mxu0 %v1909
        %7063 = vmatpush1.bf16.msra.mxu0 %v1908
        %7064 = vmatprep.subr.bf16.mxu0 %v1907
        %7065 = vmatpush1.bf16.msra.mxu0 %v1906
        %7066 = vmatprep.subr.bf16.mxu0 %v1905
        %7067 = vmatpush1.bf16.msra.mxu0 %v1904
        %7068 = vmatprep.subr.bf16.mxu0 %v1903
        %7069 = vmatpush1.bf16.msra.mxu0 %v1902
        %7070 = vmatprep.subr.bf16.mxu0 %v1933
        %7071 = vmatpush2.bf16.msra.mxu0 %v1932
        %7072 = vmatprep.subr.bf16.mxu0 %v1931
        %7073 = vmatpush2.bf16.msra.mxu0 %v1930
        %7074 = vmatprep.subr.bf16.mxu0 %v1929
        %7075 = vmatpush2.bf16.msra.mxu0 %v1928
        %7076 = vmatprep.subr.bf16.mxu0 %v1927
        %7077 = vmatpush2.bf16.msra.mxu0 %v1926
        %7078 = vmatprep.subr.bf16.mxu0 %v1925
        %7079 = vmatpush2.bf16.msra.mxu0 %v1924
        %7080 = vmatprep.subr.bf16.mxu0 %v1923
        %7081 = vmatpush2.bf16.msra.mxu0 %v1922
        %7082 = vmatprep.subr.bf16.mxu0 %v1921
        %7083 = vmatpush2.bf16.msra.mxu0 %v1920
        %7084 = vmatprep.subr.bf16.mxu0 %v1919
        %7085 = vmatpush2.bf16.msra.mxu0 %v1918
        %7086 = vmatprep.mubr.bf16.mxu0 %v7047
        %7087 = vmatmul.mubr.bf16.gmra.mxu0 %v7046
        %v7088 = vpop.f32.mrf.mxu0
        %v7089 = vadd.f32 %v1799, %v7088
        %v7090 = vpop.f32.mrf.mxu0
        %v7091 = vadd.f32 %v1803, %v7090
        %v7092 = vpop.f32.mrf.mxu0
        %v7093 = vadd.f32 %v1799, %v7092
        %v7094 = vpop.f32.mrf.mxu0
        %v7095 = vadd.f32 %v1803, %v7094
        %7096 = vmatprep.mubr.bf16.mxu0 %v7049
        %7097 = vmatmul.mubr.bf16.gmra.mxu0 %v7048
        %v7098 = vpop.f32.mrf.mxu0
        %v7099 = vadd.f32 %v1799, %v7098
        %v7100 = vpop.f32.mrf.mxu0
        %v7101 = vadd.f32 %v1803, %v7100
        %v7102 = vpop.f32.mrf.mxu0
        %v7103 = vadd.f32 %v1799, %v7102
        %v7104 = vpop.f32.mrf.mxu0
        %v7105 = vadd.f32 %v1803, %v7104
        %7106 = vmatprep.mubr.bf16.mxu0 %v7051
        %7107 = vmatmul.mubr.bf16.gmra.mxu0 %v7050
        %v7108 = vpop.f32.mrf.mxu0
        %v7109 = vadd.f32 %v1799, %v7108
        %v7110 = vpop.f32.mrf.mxu0
        %v7111 = vadd.f32 %v1803, %v7110
        %v7112 = vpop.f32.mrf.mxu0
        %v7113 = vadd.f32 %v1799, %v7112
        %v7114 = vpop.f32.mrf.mxu0
        %v7115 = vadd.f32 %v1803, %v7114
        %7116 = vmatprep.mubr.bf16.mxu0 %v7053
        %7117 = vmatmul.mubr.bf16.gmra.mxu0 %v7052
        %v7118 = vpop.f32.mrf.mxu0
        %v7119 = vadd.f32 %v1799, %v7118
        %v7120 = vpop.f32.mrf.mxu0
        %v7121 = vadd.f32 %v1803, %v7120
        %v7122 = vpop.f32.mrf.mxu0
        %v7123 = vadd.f32 %v1799, %v7122
        %v7124 = vpop.f32.mrf.mxu0
        %v7125 = vadd.f32 %v1803, %v7124
        %7126 = vdwg.mxu0
        %v7127 = vpack.c.bf16 %v7093, %v7089
        %v7128 = vpack.c.bf16 %v7095, %v7091
        %v7129 = vpack.c.bf16 %v7103, %v7099
        %v7130 = vpack.c.bf16 %v7105, %v7101
        %v7131 = vpack.c.bf16 %v7113, %v7109
        %v7132 = vpack.c.bf16 %v7115, %v7111
        %v7133 = vpack.c.bf16 %v7123, %v7119
        %v7134 = vpack.c.bf16 %v7125, %v7121
        %v7135 = vmul.bf16 %v7127, %v2303
        %v7136 = vmul.bf16 %v7128, %v2304
        %v7137 = vmul.bf16 %v7129, %v2305
        %v7138 = vmul.bf16 %v7130, %v2306
        %v7139 = vmul.bf16 %v7131, %v2307
        %v7140 = vmul.bf16 %v7132, %v2308
        %v7141 = vmul.bf16 %v7133, %v2309
        %v7142 = vmul.bf16 %v7134, %v2310
        %v7143 = vmul.bf16 %v7127, %v2311
        %v7144 = vmul.bf16 %v7128, %v2312
        %v7145 = vmul.bf16 %v7129, %v2313
        %v7146 = vmul.bf16 %v7130, %v2314
        %v7147 = vmul.bf16 %v7131, %v2315
        %v7148 = vmul.bf16 %v7132, %v2316
        %v7149 = vmul.bf16 %v7133, %v2317
        %v7150 = vmul.bf16 %v7134, %v2318
        %v7151 = vmul.bf16 %v7127, %v2319
        %v7152 = vmul.bf16 %v7128, %v2320
        %v7153 = vmul.bf16 %v7129, %v2321
        %v7154 = vmul.bf16 %v7130, %v2322
        %v7155 = vmul.bf16 %v7131, %v2323
        %v7156 = vmul.bf16 %v7132, %v2324
        %v7157 = vmul.bf16 %v7133, %v2325
        %v7158 = vmul.bf16 %v7134, %v2326
        %v7159 = vmul.bf16 %v7127, %v2327
        %v7160 = vmul.bf16 %v7128, %v2328
        %v7161 = vmul.bf16 %v7129, %v2329
        %v7162 = vmul.bf16 %v7130, %v2330
        %v7163 = vmul.bf16 %v7131, %v2331
        %v7164 = vmul.bf16 %v7132, %v2332
        %v7165 = vmul.bf16 %v7133, %v2333
        %v7166 = vmul.bf16 %v7134, %v2334
        %v7167 = vmul.bf16 %v7127, %v2335
        %v7168 = vmul.bf16 %v7128, %v2336
        %v7169 = vmul.bf16 %v7129, %v2337
        %v7170 = vmul.bf16 %v7130, %v2338
        %v7171 = vmul.bf16 %v7131, %v2339
        %v7172 = vmul.bf16 %v7132, %v2340
        %v7173 = vmul.bf16 %v7133, %v2341
        %v7174 = vmul.bf16 %v7134, %v2342
        %v7175 = vmul.bf16 %v7127, %v2343
        %v7176 = vmul.bf16 %v7128, %v2344
        %v7177 = vmul.bf16 %v7129, %v2345
        %v7178 = vmul.bf16 %v7130, %v2346
        %v7179 = vmul.bf16 %v7131, %v2347
        %v7180 = vmul.bf16 %v7132, %v2348
        %v7181 = vmul.bf16 %v7133, %v2349
        %v7182 = vmul.bf16 %v7134, %v2350
        %v7183 = vmul.bf16 %v7127, %v2351
        %v7184 = vmul.bf16 %v7128, %v2352
        %v7185 = vmul.bf16 %v7129, %v2353
        %v7186 = vmul.bf16 %v7130, %v2354
        %v7187 = vmul.bf16 %v7131, %v2355
        %v7188 = vmul.bf16 %v7132, %v2356
        %v7189 = vmul.bf16 %v7133, %v2357
        %v7190 = vmul.bf16 %v7134, %v2358
        %v7191 = vmul.bf16 %v7127, %v2359
        %v7192 = vmul.bf16 %v7128, %v2360
        %v7193 = vmul.bf16 %v7129, %v2361
        %v7194 = vmul.bf16 %v7130, %v2362
        %v7195 = vmul.bf16 %v7131, %v2363
        %v7196 = vmul.bf16 %v7132, %v2364
        %v7197 = vmul.bf16 %v7133, %v2365
        %v7198 = vmul.bf16 %v7134, %v2366
        %7199 = vmatprep.subr.bf16.mxu0 0
        %7200 = vmatpush1.bf16.xpose.msra.mxu0 0
        %7201 = vmatprep.subr.bf16.mxu0 0
        %7202 = vmatpush1.bf16.xpose.msra.mxu0 0
        %7203 = vmatprep.subr.bf16.mxu0 0
        %7204 = vmatpush1.bf16.xpose.msra.mxu0 0
        %7205 = vmatprep.subr.bf16.mxu0 0
        %7206 = vmatpush1.bf16.xpose.msra.mxu0 0
        %7207 = vmatprep.subr.bf16.mxu0 %v1729
        %7208 = vmatpush1.bf16.xpose.msra.mxu0 %v1728
        %7209 = vmatprep.subr.bf16.mxu0 %v1727
        %7210 = vmatpush1.bf16.xpose.msra.mxu0 %v1726
        %7211 = vmatprep.subr.bf16.mxu0 %v1725
        %7212 = vmatpush1.bf16.xpose.msra.mxu0 %v1724
        %7213 = vmatprep.subr.bf16.mxu0 %v1723
        %7214 = vmatpush1.bf16.xpose.msra.mxu0 %v1722
        %7215 = vmatprep.subr.bf16.mxu0 0
        %7216 = vmatpush2.bf16.xpose.msra.mxu0 0
        %7217 = vmatprep.subr.bf16.mxu0 0
        %7218 = vmatpush2.bf16.xpose.msra.mxu0 0
        %7219 = vmatprep.subr.bf16.mxu0 0
        %7220 = vmatpush2.bf16.xpose.msra.mxu0 0
        %7221 = vmatprep.subr.bf16.mxu0 0
        %7222 = vmatpush2.bf16.xpose.msra.mxu0 0
        %7223 = vmatprep.subr.bf16.mxu0 0
        %7224 = vmatpush2.bf16.xpose.msra.mxu0 0
        %7225 = vmatprep.subr.bf16.mxu0 0
        %7226 = vmatpush2.bf16.xpose.msra.mxu0 0
        %7227 = vmatprep.subr.bf16.mxu0 0
        %7228 = vmatpush2.bf16.xpose.msra.mxu0 0
        %7229 = vmatprep.subr.bf16.mxu0 0
        %7230 = vmatpush2.bf16.xpose.msra.mxu0 0
        %7231 = vmatprep.mubr.bf16.mxu0 %v7136
        %7232 = vmatmul.mubr.bf16.gmra.mxu0 %v7135
        %v7233 = vpop.f32.mrf.mxu0
        %v7234 = vadd.f32 %v2495, %v7233
        %v7235 = vpop.f32.mrf.mxu0
        %v7236 = vpop.f32.mrf.mxu0
        %v7237 = vadd.f32 %v2496, %v7236
        %v7238 = vpop.f32.mrf.mxu0
        %7239 = vmatprep.mubr.bf16.mxu0 %v7138
        %7240 = vmatmul.mubr.bf16.gmra.mxu0 %v7137
        %v7241 = vpop.f32.mrf.mxu0
        %v7242 = vadd.f32 %v2497, %v7241
        %v7243 = vpop.f32.mrf.mxu0
        %v7244 = vpop.f32.mrf.mxu0
        %v7245 = vadd.f32 %v2498, %v7244
        %v7246 = vpop.f32.mrf.mxu0
        %7247 = vmatprep.mubr.bf16.mxu0 %v7140
        %7248 = vmatmul.mubr.bf16.gmra.mxu0 %v7139
        %v7249 = vpop.f32.mrf.mxu0
        %v7250 = vadd.f32 %v2499, %v7249
        %v7251 = vpop.f32.mrf.mxu0
        %v7252 = vpop.f32.mrf.mxu0
        %v7253 = vadd.f32 %v2500, %v7252
        %v7254 = vpop.f32.mrf.mxu0
        %7255 = vmatprep.mubr.bf16.mxu0 %v7142
        %7256 = vmatmul.mubr.bf16.gmra.mxu0 %v7141
        %v7257 = vpop.f32.mrf.mxu0
        %v7258 = vadd.f32 %v2501, %v7257
        %v7259 = vpop.f32.mrf.mxu0
        %v7260 = vpop.f32.mrf.mxu0
        %v7261 = vadd.f32 %v2502, %v7260
        %v7262 = vpop.f32.mrf.mxu0
        %7263 = vmatprep.mubr.bf16.mxu0 %v7144
        %7264 = vmatmul.mubr.bf16.gmra.mxu0 %v7143
        %v7265 = vpop.f32.mrf.mxu0
        %v7266 = vadd.f32 %v2503, %v7265
        %v7267 = vpop.f32.mrf.mxu0
        %v7268 = vpop.f32.mrf.mxu0
        %v7269 = vadd.f32 %v2504, %v7268
        %v7270 = vpop.f32.mrf.mxu0
        %7271 = vmatprep.mubr.bf16.mxu0 %v7146
        %7272 = vmatmul.mubr.bf16.gmra.mxu0 %v7145
        %v7273 = vpop.f32.mrf.mxu0
        %v7274 = vadd.f32 %v2505, %v7273
        %v7275 = vpop.f32.mrf.mxu0
        %v7276 = vpop.f32.mrf.mxu0
        %v7277 = vadd.f32 %v2506, %v7276
        %v7278 = vpop.f32.mrf.mxu0
        %7279 = vmatprep.mubr.bf16.mxu0 %v7148
        %7280 = vmatmul.mubr.bf16.gmra.mxu0 %v7147
        %v7281 = vpop.f32.mrf.mxu0
        %v7282 = vadd.f32 %v2507, %v7281
        %v7283 = vpop.f32.mrf.mxu0
        %v7284 = vpop.f32.mrf.mxu0
        %v7285 = vadd.f32 %v2508, %v7284
        %v7286 = vpop.f32.mrf.mxu0
        %7287 = vmatprep.mubr.bf16.mxu0 %v7150
        %7288 = vmatmul.mubr.bf16.gmra.mxu0 %v7149
        %v7289 = vpop.f32.mrf.mxu0
        %v7290 = vadd.f32 %v2509, %v7289
        %v7291 = vpop.f32.mrf.mxu0
        %v7292 = vpop.f32.mrf.mxu0
        %v7293 = vadd.f32 %v2510, %v7292
        %v7294 = vpop.f32.mrf.mxu0
        %7295 = vmatprep.mubr.bf16.mxu0 %v7152
        %7296 = vmatmul.mubr.bf16.gmra.mxu0 %v7151
        %v7297 = vpop.f32.mrf.mxu0
        %v7298 = vadd.f32 %v2511, %v7297
        %v7299 = vpop.f32.mrf.mxu0
        %v7300 = vpop.f32.mrf.mxu0
        %v7301 = vadd.f32 %v2512, %v7300
        %v7302 = vpop.f32.mrf.mxu0
        %7303 = vmatprep.mubr.bf16.mxu0 %v7154
        %7304 = vmatmul.mubr.bf16.gmra.mxu0 %v7153
        %v7305 = vpop.f32.mrf.mxu0
        %v7306 = vadd.f32 %v2513, %v7305
        %v7307 = vpop.f32.mrf.mxu0
        %v7308 = vpop.f32.mrf.mxu0
        %v7309 = vadd.f32 %v2514, %v7308
        %v7310 = vpop.f32.mrf.mxu0
        %7311 = vmatprep.mubr.bf16.mxu0 %v7156
        %7312 = vmatmul.mubr.bf16.gmra.mxu0 %v7155
        %v7313 = vpop.f32.mrf.mxu0
        %v7314 = vadd.f32 %v2515, %v7313
        %v7315 = vpop.f32.mrf.mxu0
        %v7316 = vpop.f32.mrf.mxu0
        %v7317 = vadd.f32 %v2516, %v7316
        %v7318 = vpop.f32.mrf.mxu0
        %7319 = vmatprep.mubr.bf16.mxu0 %v7158
        %7320 = vmatmul.mubr.bf16.gmra.mxu0 %v7157
        %v7321 = vpop.f32.mrf.mxu0
        %v7322 = vadd.f32 %v2517, %v7321
        %v7323 = vpop.f32.mrf.mxu0
        %v7324 = vpop.f32.mrf.mxu0
        %v7325 = vadd.f32 %v2518, %v7324
        %v7326 = vpop.f32.mrf.mxu0
        %7327 = vmatprep.mubr.bf16.mxu0 %v7160
        %7328 = vmatmul.mubr.bf16.gmra.mxu0 %v7159
        %v7329 = vpop.f32.mrf.mxu0
        %v7330 = vadd.f32 %v2519, %v7329
        %v7331 = vpop.f32.mrf.mxu0
        %v7332 = vpop.f32.mrf.mxu0
        %v7333 = vadd.f32 %v2520, %v7332
        %v7334 = vpop.f32.mrf.mxu0
        %7335 = vmatprep.mubr.bf16.mxu0 %v7162
        %7336 = vmatmul.mubr.bf16.gmra.mxu0 %v7161
        %v7337 = vpop.f32.mrf.mxu0
        %v7338 = vadd.f32 %v2521, %v7337
        %v7339 = vpop.f32.mrf.mxu0
        %v7340 = vpop.f32.mrf.mxu0
        %v7341 = vadd.f32 %v2522, %v7340
        %v7342 = vpop.f32.mrf.mxu0
        %7343 = vmatprep.mubr.bf16.mxu0 %v7164
        %7344 = vmatmul.mubr.bf16.gmra.mxu0 %v7163
        %v7345 = vpop.f32.mrf.mxu0
        %v7346 = vadd.f32 %v2523, %v7345
        %v7347 = vpop.f32.mrf.mxu0
        %v7348 = vpop.f32.mrf.mxu0
        %v7349 = vadd.f32 %v2524, %v7348
        %v7350 = vpop.f32.mrf.mxu0
        %7351 = vmatprep.mubr.bf16.mxu0 %v7166
        %7352 = vmatmul.mubr.bf16.gmra.mxu0 %v7165
        %v7353 = vpop.f32.mrf.mxu0
        %v7354 = vadd.f32 %v2525, %v7353
        %v7355 = vpop.f32.mrf.mxu0
        %v7356 = vpop.f32.mrf.mxu0
        %v7357 = vadd.f32 %v2526, %v7356
        %v7358 = vpop.f32.mrf.mxu0
        %7359 = vmatprep.mubr.bf16.mxu0 %v7168
        %7360 = vmatmul.mubr.bf16.gmra.mxu0 %v7167
        %v7361 = vpop.f32.mrf.mxu0
        %v7362 = vadd.f32 %v2527, %v7361
        %v7363 = vpop.f32.mrf.mxu0
        %v7364 = vpop.f32.mrf.mxu0
        %v7365 = vadd.f32 %v2528, %v7364
        %v7366 = vpop.f32.mrf.mxu0
        %7367 = vmatprep.mubr.bf16.mxu0 %v7170
        %7368 = vmatmul.mubr.bf16.gmra.mxu0 %v7169
        %v7369 = vpop.f32.mrf.mxu0
        %v7370 = vadd.f32 %v2529, %v7369
        %v7371 = vpop.f32.mrf.mxu0
        %v7372 = vpop.f32.mrf.mxu0
        %v7373 = vadd.f32 %v2530, %v7372
        %v7374 = vpop.f32.mrf.mxu0
        %7375 = vmatprep.mubr.bf16.mxu0 %v7172
        %7376 = vmatmul.mubr.bf16.gmra.mxu0 %v7171
        %v7377 = vpop.f32.mrf.mxu0
        %v7378 = vadd.f32 %v2531, %v7377
        %v7379 = vpop.f32.mrf.mxu0
        %v7380 = vpop.f32.mrf.mxu0
        %v7381 = vadd.f32 %v2532, %v7380
        %v7382 = vpop.f32.mrf.mxu0
        %7383 = vmatprep.mubr.bf16.mxu0 %v7174
        %7384 = vmatmul.mubr.bf16.gmra.mxu0 %v7173
        %v7385 = vpop.f32.mrf.mxu0
        %v7386 = vadd.f32 %v2533, %v7385
        %v7387 = vpop.f32.mrf.mxu0
        %v7388 = vpop.f32.mrf.mxu0
        %v7389 = vadd.f32 %v2534, %v7388
        %v7390 = vpop.f32.mrf.mxu0
        %7391 = vmatprep.mubr.bf16.mxu0 %v7176
        %7392 = vmatmul.mubr.bf16.gmra.mxu0 %v7175
        %v7393 = vpop.f32.mrf.mxu0
        %v7394 = vadd.f32 %v2535, %v7393
        %v7395 = vpop.f32.mrf.mxu0
        %v7396 = vpop.f32.mrf.mxu0
        %v7397 = vadd.f32 %v2536, %v7396
        %v7398 = vpop.f32.mrf.mxu0
        %7399 = vmatprep.mubr.bf16.mxu0 %v7178
        %7400 = vmatmul.mubr.bf16.gmra.mxu0 %v7177
        %v7401 = vpop.f32.mrf.mxu0
        %v7402 = vadd.f32 %v2537, %v7401
        %v7403 = vpop.f32.mrf.mxu0
        %v7404 = vpop.f32.mrf.mxu0
        %v7405 = vadd.f32 %v2538, %v7404
        %v7406 = vpop.f32.mrf.mxu0
        %7407 = vmatprep.mubr.bf16.mxu0 %v7180
        %7408 = vmatmul.mubr.bf16.gmra.mxu0 %v7179
        %v7409 = vpop.f32.mrf.mxu0
        %v7410 = vadd.f32 %v2539, %v7409
        %v7411 = vpop.f32.mrf.mxu0
        %v7412 = vpop.f32.mrf.mxu0
        %v7413 = vadd.f32 %v2540, %v7412
        %v7414 = vpop.f32.mrf.mxu0
        %7415 = vmatprep.mubr.bf16.mxu0 %v7182
        %7416 = vmatmul.mubr.bf16.gmra.mxu0 %v7181
        %v7417 = vpop.f32.mrf.mxu0
        %v7418 = vadd.f32 %v2541, %v7417
        %v7419 = vpop.f32.mrf.mxu0
        %v7420 = vpop.f32.mrf.mxu0
        %v7421 = vadd.f32 %v2542, %v7420
        %v7422 = vpop.f32.mrf.mxu0
        %7423 = vmatprep.mubr.bf16.mxu0 %v7184
        %7424 = vmatmul.mubr.bf16.gmra.mxu0 %v7183
        %v7425 = vpop.f32.mrf.mxu0
        %v7426 = vadd.f32 %v2543, %v7425
        %v7427 = vpop.f32.mrf.mxu0
        %v7428 = vpop.f32.mrf.mxu0
        %v7429 = vadd.f32 %v2544, %v7428
        %v7430 = vpop.f32.mrf.mxu0
        %7431 = vmatprep.mubr.bf16.mxu0 %v7186
        %7432 = vmatmul.mubr.bf16.gmra.mxu0 %v7185
        %v7433 = vpop.f32.mrf.mxu0
        %v7434 = vadd.f32 %v2545, %v7433
        %v7435 = vpop.f32.mrf.mxu0
        %v7436 = vpop.f32.mrf.mxu0
        %v7437 = vadd.f32 %v2546, %v7436
        %v7438 = vpop.f32.mrf.mxu0
        %7439 = vmatprep.mubr.bf16.mxu0 %v7188
        %7440 = vmatmul.mubr.bf16.gmra.mxu0 %v7187
        %v7441 = vpop.f32.mrf.mxu0
        %v7442 = vadd.f32 %v2547, %v7441
        %v7443 = vpop.f32.mrf.mxu0
        %v7444 = vpop.f32.mrf.mxu0
        %v7445 = vadd.f32 %v2548, %v7444
        %v7446 = vpop.f32.mrf.mxu0
        %7447 = vmatprep.mubr.bf16.mxu0 %v7190
        %7448 = vmatmul.mubr.bf16.gmra.mxu0 %v7189
        %v7449 = vpop.f32.mrf.mxu0
        %v7450 = vadd.f32 %v2549, %v7449
        %v7451 = vpop.f32.mrf.mxu0
        %v7452 = vpop.f32.mrf.mxu0
        %v7453 = vadd.f32 %v2550, %v7452
        %v7454 = vpop.f32.mrf.mxu0
        %7455 = vmatprep.mubr.bf16.mxu0 %v7192
        %7456 = vmatmul.mubr.bf16.gmra.mxu0 %v7191
        %v7457 = vpop.f32.mrf.mxu0
        %v7458 = vadd.f32 %v2551, %v7457
        %v7459 = vpop.f32.mrf.mxu0
        %v7460 = vpop.f32.mrf.mxu0
        %v7461 = vadd.f32 %v2552, %v7460
        %v7462 = vpop.f32.mrf.mxu0
        %7463 = vmatprep.mubr.bf16.mxu0 %v7194
        %7464 = vmatmul.mubr.bf16.gmra.mxu0 %v7193
        %v7465 = vpop.f32.mrf.mxu0
        %v7466 = vadd.f32 %v2553, %v7465
        %v7467 = vpop.f32.mrf.mxu0
        %v7468 = vpop.f32.mrf.mxu0
        %v7469 = vadd.f32 %v2554, %v7468
        %v7470 = vpop.f32.mrf.mxu0
        %7471 = vmatprep.mubr.bf16.mxu0 %v7196
        %7472 = vmatmul.mubr.bf16.gmra.mxu0 %v7195
        %v7473 = vpop.f32.mrf.mxu0
        %v7474 = vadd.f32 %v2555, %v7473
        %v7475 = vpop.f32.mrf.mxu0
        %v7476 = vpop.f32.mrf.mxu0
        %v7477 = vadd.f32 %v2556, %v7476
        %v7478 = vpop.f32.mrf.mxu0
        %7479 = vmatprep.mubr.bf16.mxu0 %v7198
        %7480 = vmatmul.mubr.bf16.gmra.mxu0 %v7197
        %v7481 = vpop.f32.mrf.mxu0
        %v7482 = vadd.f32 %v2557, %v7481
        %v7483 = vpop.f32.mrf.mxu0
        %v7484 = vpop.f32.mrf.mxu0
        %v7485 = vadd.f32 %v2558, %v7484
        %v7486 = vpop.f32.mrf.mxu0
        %7487 = vdwg.mxu0
        %v7488 = vsel %vm2848, %v7234, -inf
        %7489 = vmax.xlane.f32.xlu0 %v7488
        %v7490 = vpop.xlane.xlu0 %7489
        %v7491 = vsel %vm2848, %v7237, -inf
        %7492 = vmax.xlane.f32.xlu0 %v7491
        %v7493 = vpop.xlane.xlu0 %7492
        %v7494 = vsel %vm2848, %v7242, -inf
        %7495 = vmax.xlane.f32.xlu0 %v7494
        %v7496 = vpop.xlane.xlu0 %7495
        %v7497 = vsel %vm2848, %v7245, -inf
        %7498 = vmax.xlane.f32.xlu0 %v7497
        %v7499 = vpop.xlane.xlu0 %7498
        %v7500 = vsel %vm2848, %v7250, -inf
        %7501 = vmax.xlane.f32.xlu0 %v7500
        %v7502 = vpop.xlane.xlu0 %7501
        %v7503 = vsel %vm2848, %v7253, -inf
        %7504 = vmax.xlane.f32.xlu0 %v7503
        %v7505 = vpop.xlane.xlu0 %7504
        %v7506 = vsel %vm2848, %v7258, -inf
        %7507 = vmax.xlane.f32.xlu0 %v7506
        %v7508 = vpop.xlane.xlu0 %7507
        %v7509 = vsel %vm2848, %v7261, -inf
        %7510 = vmax.xlane.f32.xlu0 %v7509
        %v7511 = vpop.xlane.xlu0 %7510
        %v7512 = vsel %vm2848, %v7266, -inf
        %7513 = vmax.xlane.f32.xlu0 %v7512
        %v7514 = vpop.xlane.xlu0 %7513
        %v7515 = vsel %vm2848, %v7269, -inf
        %7516 = vmax.xlane.f32.xlu0 %v7515
        %v7517 = vpop.xlane.xlu0 %7516
        %v7518 = vsel %vm2848, %v7274, -inf
        %7519 = vmax.xlane.f32.xlu0 %v7518
        %v7520 = vpop.xlane.xlu0 %7519
        %v7521 = vsel %vm2848, %v7277, -inf
        %7522 = vmax.xlane.f32.xlu0 %v7521
        %v7523 = vpop.xlane.xlu0 %7522
        %v7524 = vsel %vm2848, %v7282, -inf
        %7525 = vmax.xlane.f32.xlu0 %v7524
        %v7526 = vpop.xlane.xlu0 %7525
        %v7527 = vsel %vm2848, %v7285, -inf
        %7528 = vmax.xlane.f32.xlu0 %v7527
        %v7529 = vpop.xlane.xlu0 %7528
        %v7530 = vsel %vm2848, %v7290, -inf
        %7531 = vmax.xlane.f32.xlu0 %v7530
        %v7532 = vpop.xlane.xlu0 %7531
        %v7533 = vsel %vm2848, %v7293, -inf
        %7534 = vmax.xlane.f32.xlu0 %v7533
        %v7535 = vpop.xlane.xlu0 %7534
        %v7536 = vsel %vm2848, %v7298, -inf
        %7537 = vmax.xlane.f32.xlu0 %v7536
        %v7538 = vpop.xlane.xlu0 %7537
        %v7539 = vsel %vm2848, %v7301, -inf
        %7540 = vmax.xlane.f32.xlu0 %v7539
        %v7541 = vpop.xlane.xlu0 %7540
        %v7542 = vsel %vm2848, %v7306, -inf
        %7543 = vmax.xlane.f32.xlu0 %v7542
        %v7544 = vpop.xlane.xlu0 %7543
        %v7545 = vsel %vm2848, %v7309, -inf
        %7546 = vmax.xlane.f32.xlu0 %v7545
        %v7547 = vpop.xlane.xlu0 %7546
        %v7548 = vsel %vm2848, %v7314, -inf
        %7549 = vmax.xlane.f32.xlu0 %v7548
        %v7550 = vpop.xlane.xlu0 %7549
        %v7551 = vsel %vm2848, %v7317, -inf
        %7552 = vmax.xlane.f32.xlu0 %v7551
        %v7553 = vpop.xlane.xlu0 %7552
        %v7554 = vsel %vm2848, %v7322, -inf
        %7555 = vmax.xlane.f32.xlu0 %v7554
        %v7556 = vpop.xlane.xlu0 %7555
        %v7557 = vsel %vm2848, %v7325, -inf
        %7558 = vmax.xlane.f32.xlu0 %v7557
        %v7559 = vpop.xlane.xlu0 %7558
        %v7560 = vsel %vm2848, %v7330, -inf
        %7561 = vmax.xlane.f32.xlu0 %v7560
        %v7562 = vpop.xlane.xlu0 %7561
        %v7563 = vsel %vm2848, %v7333, -inf
        %7564 = vmax.xlane.f32.xlu0 %v7563
        %v7565 = vpop.xlane.xlu0 %7564
        %v7566 = vsel %vm2848, %v7338, -inf
        %7567 = vmax.xlane.f32.xlu0 %v7566
        %v7568 = vpop.xlane.xlu0 %7567
        %v7569 = vsel %vm2848, %v7341, -inf
        %7570 = vmax.xlane.f32.xlu0 %v7569
        %v7571 = vpop.xlane.xlu0 %7570
        %v7572 = vsel %vm2848, %v7346, -inf
        %7573 = vmax.xlane.f32.xlu0 %v7572
        %v7574 = vpop.xlane.xlu0 %7573
        %v7575 = vsel %vm2848, %v7349, -inf
        %7576 = vmax.xlane.f32.xlu0 %v7575
        %v7577 = vpop.xlane.xlu0 %7576
        %v7578 = vsel %vm2848, %v7354, -inf
        %7579 = vmax.xlane.f32.xlu0 %v7578
        %v7580 = vpop.xlane.xlu0 %7579
        %v7581 = vsel %vm2848, %v7357, -inf
        %7582 = vmax.xlane.f32.xlu0 %v7581
        %v7583 = vpop.xlane.xlu0 %7582
        %v7584 = vsel %vm2848, %v7362, -inf
        %7585 = vmax.xlane.f32.xlu0 %v7584
        %v7586 = vpop.xlane.xlu0 %7585
        %v7587 = vsel %vm2848, %v7365, -inf
        %7588 = vmax.xlane.f32.xlu0 %v7587
        %v7589 = vpop.xlane.xlu0 %7588
        %v7590 = vsel %vm2848, %v7370, -inf
        %7591 = vmax.xlane.f32.xlu0 %v7590
        %v7592 = vpop.xlane.xlu0 %7591
        %v7593 = vsel %vm2848, %v7373, -inf
        %7594 = vmax.xlane.f32.xlu0 %v7593
        %v7595 = vpop.xlane.xlu0 %7594
        %v7596 = vsel %vm2848, %v7378, -inf
        %7597 = vmax.xlane.f32.xlu0 %v7596
        %v7598 = vpop.xlane.xlu0 %7597
        %v7599 = vsel %vm2848, %v7381, -inf
        %7600 = vmax.xlane.f32.xlu0 %v7599
        %v7601 = vpop.xlane.xlu0 %7600
        %v7602 = vsel %vm2848, %v7386, -inf
        %7603 = vmax.xlane.f32.xlu0 %v7602
        %v7604 = vpop.xlane.xlu0 %7603
        %v7605 = vsel %vm2848, %v7389, -inf
        %7606 = vmax.xlane.f32.xlu0 %v7605
        %v7607 = vpop.xlane.xlu0 %7606
        %v7608 = vsel %vm2848, %v7394, -inf
        %7609 = vmax.xlane.f32.xlu0 %v7608
        %v7610 = vpop.xlane.xlu0 %7609
        %v7611 = vsel %vm2848, %v7397, -inf
        %7612 = vmax.xlane.f32.xlu0 %v7611
        %v7613 = vpop.xlane.xlu0 %7612
        %v7614 = vsel %vm2848, %v7402, -inf
        %7615 = vmax.xlane.f32.xlu0 %v7614
        %v7616 = vpop.xlane.xlu0 %7615
        %v7617 = vsel %vm2848, %v7405, -inf
        %7618 = vmax.xlane.f32.xlu0 %v7617
        %v7619 = vpop.xlane.xlu0 %7618
        %v7620 = vsel %vm2848, %v7410, -inf
        %7621 = vmax.xlane.f32.xlu0 %v7620
        %v7622 = vpop.xlane.xlu0 %7621
        %v7623 = vsel %vm2848, %v7413, -inf
        %7624 = vmax.xlane.f32.xlu0 %v7623
        %v7625 = vpop.xlane.xlu0 %7624
        %v7626 = vsel %vm2848, %v7418, -inf
        %7627 = vmax.xlane.f32.xlu0 %v7626
        %v7628 = vpop.xlane.xlu0 %7627
        %v7629 = vsel %vm2848, %v7421, -inf
        %7630 = vmax.xlane.f32.xlu0 %v7629
        %v7631 = vpop.xlane.xlu0 %7630
        %v7632 = vsel %vm2848, %v7426, -inf
        %7633 = vmax.xlane.f32.xlu0 %v7632
        %v7634 = vpop.xlane.xlu0 %7633
        %v7635 = vsel %vm2848, %v7429, -inf
        %7636 = vmax.xlane.f32.xlu0 %v7635
        %v7637 = vpop.xlane.xlu0 %7636
        %v7638 = vsel %vm2848, %v7434, -inf
        %7639 = vmax.xlane.f32.xlu0 %v7638
        %v7640 = vpop.xlane.xlu0 %7639
        %v7641 = vsel %vm2848, %v7437, -inf
        %7642 = vmax.xlane.f32.xlu0 %v7641
        %v7643 = vpop.xlane.xlu0 %7642
        %v7644 = vsel %vm2848, %v7442, -inf
        %7645 = vmax.xlane.f32.xlu0 %v7644
        %v7646 = vpop.xlane.xlu0 %7645
        %v7647 = vsel %vm2848, %v7445, -inf
        %7648 = vmax.xlane.f32.xlu0 %v7647
        %v7649 = vpop.xlane.xlu0 %7648
        %v7650 = vsel %vm2848, %v7450, -inf
        %7651 = vmax.xlane.f32.xlu0 %v7650
        %v7652 = vpop.xlane.xlu0 %7651
        %v7653 = vsel %vm2848, %v7453, -inf
        %7654 = vmax.xlane.f32.xlu0 %v7653
        %v7655 = vpop.xlane.xlu0 %7654
        %v7656 = vsel %vm2848, %v7458, -inf
        %7657 = vmax.xlane.f32.xlu0 %v7656
        %v7658 = vpop.xlane.xlu0 %7657
        %v7659 = vsel %vm2848, %v7461, -inf
        %7660 = vmax.xlane.f32.xlu0 %v7659
        %v7661 = vpop.xlane.xlu0 %7660
        %v7662 = vsel %vm2848, %v7466, -inf
        %7663 = vmax.xlane.f32.xlu0 %v7662
        %v7664 = vpop.xlane.xlu0 %7663
        %v7665 = vsel %vm2848, %v7469, -inf
        %7666 = vmax.xlane.f32.xlu0 %v7665
        %v7667 = vpop.xlane.xlu0 %7666
        %v7668 = vsel %vm2848, %v7474, -inf
        %7669 = vmax.xlane.f32.xlu0 %v7668
        %v7670 = vpop.xlane.xlu0 %7669
        %v7671 = vsel %vm2848, %v7477, -inf
        %7672 = vmax.xlane.f32.xlu0 %v7671
        %v7673 = vpop.xlane.xlu0 %7672
        %v7674 = vsel %vm2848, %v7482, -inf
        %7675 = vmax.xlane.f32.xlu0 %v7674
        %v7676 = vpop.xlane.xlu0 %7675
        %v7677 = vsel %vm2848, %v7485, -inf
        %7678 = vmax.xlane.f32.xlu0 %v7677
        %v7679 = vpop.xlane.xlu0 %7678
        %v7680 = vsub.f32 %v7234, %v7490
        %v7681 = vsub.f32 %v7237, %v7493
        %v7682 = vsub.f32 %v7242, %v7496
        %v7683 = vsub.f32 %v7245, %v7499
        %v7684 = vsub.f32 %v7250, %v7502
        %v7685 = vsub.f32 %v7253, %v7505
        %v7686 = vsub.f32 %v7258, %v7508
        %v7687 = vsub.f32 %v7261, %v7511
        %v7688 = vsub.f32 %v7266, %v7514
        %v7689 = vsub.f32 %v7269, %v7517
        %v7690 = vsub.f32 %v7274, %v7520
        %v7691 = vsub.f32 %v7277, %v7523
        %v7692 = vsub.f32 %v7282, %v7526
        %v7693 = vsub.f32 %v7285, %v7529
        %v7694 = vsub.f32 %v7290, %v7532
        %v7695 = vsub.f32 %v7293, %v7535
        %v7696 = vsub.f32 %v7298, %v7538
        %v7697 = vsub.f32 %v7301, %v7541
        %v7698 = vsub.f32 %v7306, %v7544
        %v7699 = vsub.f32 %v7309, %v7547
        %v7700 = vsub.f32 %v7314, %v7550
        %v7701 = vsub.f32 %v7317, %v7553
        %v7702 = vsub.f32 %v7322, %v7556
        %v7703 = vsub.f32 %v7325, %v7559
        %v7704 = vsub.f32 %v7330, %v7562
        %v7705 = vsub.f32 %v7333, %v7565
        %v7706 = vsub.f32 %v7338, %v7568
        %v7707 = vsub.f32 %v7341, %v7571
        %v7708 = vsub.f32 %v7346, %v7574
        %v7709 = vsub.f32 %v7349, %v7577
        %v7710 = vsub.f32 %v7354, %v7580
        %v7711 = vsub.f32 %v7357, %v7583
        %v7712 = vsub.f32 %v7362, %v7586
        %v7713 = vsub.f32 %v7365, %v7589
        %v7714 = vsub.f32 %v7370, %v7592
        %v7715 = vsub.f32 %v7373, %v7595
        %v7716 = vsub.f32 %v7378, %v7598
        %v7717 = vsub.f32 %v7381, %v7601
        %v7718 = vsub.f32 %v7386, %v7604
        %v7719 = vsub.f32 %v7389, %v7607
        %v7720 = vsub.f32 %v7394, %v7610
        %v7721 = vsub.f32 %v7397, %v7613
        %v7722 = vsub.f32 %v7402, %v7616
        %v7723 = vsub.f32 %v7405, %v7619
        %v7724 = vsub.f32 %v7410, %v7622
        %v7725 = vsub.f32 %v7413, %v7625
        %v7726 = vsub.f32 %v7418, %v7628
        %v7727 = vsub.f32 %v7421, %v7631
        %v7728 = vsub.f32 %v7426, %v7634
        %v7729 = vsub.f32 %v7429, %v7637
        %v7730 = vsub.f32 %v7434, %v7640
        %v7731 = vsub.f32 %v7437, %v7643
        %v7732 = vsub.f32 %v7442, %v7646
        %v7733 = vsub.f32 %v7445, %v7649
        %v7734 = vsub.f32 %v7450, %v7652
        %v7735 = vsub.f32 %v7453, %v7655
        %v7736 = vsub.f32 %v7458, %v7658
        %v7737 = vsub.f32 %v7461, %v7661
        %v7738 = vsub.f32 %v7466, %v7664
        %v7739 = vsub.f32 %v7469, %v7667
        %v7740 = vsub.f32 %v7474, %v7670
        %v7741 = vsub.f32 %v7477, %v7673
        %v7742 = vsub.f32 %v7482, %v7676
        %v7743 = vsub.f32 %v7485, %v7679
        %v7744 = vmul.f32 %v7680, 1.442695
        %v7745 = vpow.pop %v7744
        %v7746 = vmul.f32 %v7681, 1.442695
        %v7747 = vpow.pop %v7746
        %v7748 = vmul.f32 %v7682, 1.442695
        %v7749 = vpow.pop %v7748
        %v7750 = vmul.f32 %v7683, 1.442695
        %v7751 = vpow.pop %v7750
        %v7752 = vmul.f32 %v7684, 1.442695
        %v7753 = vpow.pop %v7752
        %v7754 = vmul.f32 %v7685, 1.442695
        %v7755 = vpow.pop %v7754
        %v7756 = vmul.f32 %v7686, 1.442695
        %v7757 = vpow.pop %v7756
        %v7758 = vmul.f32 %v7687, 1.442695
        %v7759 = vpow.pop %v7758
        %v7760 = vmul.f32 %v7688, 1.442695
        %v7761 = vpow.pop %v7760
        %v7762 = vmul.f32 %v7689, 1.442695
        %v7763 = vpow.pop %v7762
        %v7764 = vmul.f32 %v7690, 1.442695
        %v7765 = vpow.pop %v7764
        %v7766 = vmul.f32 %v7691, 1.442695
        %v7767 = vpow.pop %v7766
        %v7768 = vmul.f32 %v7692, 1.442695
        %v7769 = vpow.pop %v7768
        %v7770 = vmul.f32 %v7693, 1.442695
        %v7771 = vpow.pop %v7770
        %v7772 = vmul.f32 %v7694, 1.442695
        %v7773 = vpow.pop %v7772
        %v7774 = vmul.f32 %v7695, 1.442695
        %v7775 = vpow.pop %v7774
        %v7776 = vmul.f32 %v7696, 1.442695
        %v7777 = vpow.pop %v7776
        %v7778 = vmul.f32 %v7697, 1.442695
        %v7779 = vpow.pop %v7778
        %v7780 = vmul.f32 %v7698, 1.442695
        %v7781 = vpow.pop %v7780
        %v7782 = vmul.f32 %v7699, 1.442695
        %v7783 = vpow.pop %v7782
        %v7784 = vmul.f32 %v7700, 1.442695
        %v7785 = vpow.pop %v7784
        %v7786 = vmul.f32 %v7701, 1.442695
        %v7787 = vpow.pop %v7786
        %v7788 = vmul.f32 %v7702, 1.442695
        %v7789 = vpow.pop %v7788
        %v7790 = vmul.f32 %v7703, 1.442695
        %v7791 = vpow.pop %v7790
        %v7792 = vmul.f32 %v7704, 1.442695
        %v7793 = vpow.pop %v7792
        %v7794 = vmul.f32 %v7705, 1.442695
        %v7795 = vpow.pop %v7794
        %v7796 = vmul.f32 %v7706, 1.442695
        %v7797 = vpow.pop %v7796
        %v7798 = vmul.f32 %v7707, 1.442695
        %v7799 = vpow.pop %v7798
        %v7800 = vmul.f32 %v7708, 1.442695
        %v7801 = vpow.pop %v7800
        %v7802 = vmul.f32 %v7709, 1.442695
        %v7803 = vpow.pop %v7802
        %v7804 = vmul.f32 %v7710, 1.442695
        %v7805 = vpow.pop %v7804
        %v7806 = vmul.f32 %v7711, 1.442695
        %v7807 = vpow.pop %v7806
        %v7808 = vmul.f32 %v7712, 1.442695
        %v7809 = vpow.pop %v7808
        %v7810 = vmul.f32 %v7713, 1.442695
        %v7811 = vpow.pop %v7810
        %v7812 = vmul.f32 %v7714, 1.442695
        %v7813 = vpow.pop %v7812
        %v7814 = vmul.f32 %v7715, 1.442695
        %v7815 = vpow.pop %v7814
        %v7816 = vmul.f32 %v7716, 1.442695
        %v7817 = vpow.pop %v7816
        %v7818 = vmul.f32 %v7717, 1.442695
        %v7819 = vpow.pop %v7818
        %v7820 = vmul.f32 %v7718, 1.442695
        %v7821 = vpow.pop %v7820
        %v7822 = vmul.f32 %v7719, 1.442695
        %v7823 = vpow.pop %v7822
        %v7824 = vmul.f32 %v7720, 1.442695
        %v7825 = vpow.pop %v7824
        %v7826 = vmul.f32 %v7721, 1.442695
        %v7827 = vpow.pop %v7826
        %v7828 = vmul.f32 %v7722, 1.442695
        %v7829 = vpow.pop %v7828
        %v7830 = vmul.f32 %v7723, 1.442695
        %v7831 = vpow.pop %v7830
        %v7832 = vmul.f32 %v7724, 1.442695
        %v7833 = vpow.pop %v7832
        %v7834 = vmul.f32 %v7725, 1.442695
        %v7835 = vpow.pop %v7834
        %v7836 = vmul.f32 %v7726, 1.442695
        %v7837 = vpow.pop %v7836
        %v7838 = vmul.f32 %v7727, 1.442695
        %v7839 = vpow.pop %v7838
        %v7840 = vmul.f32 %v7728, 1.442695
        %v7841 = vpow.pop %v7840
        %v7842 = vmul.f32 %v7729, 1.442695
        %v7843 = vpow.pop %v7842
        %v7844 = vmul.f32 %v7730, 1.442695
        %v7845 = vpow.pop %v7844
        %v7846 = vmul.f32 %v7731, 1.442695
        %v7847 = vpow.pop %v7846
        %v7848 = vmul.f32 %v7732, 1.442695
        %v7849 = vpow.pop %v7848
        %v7850 = vmul.f32 %v7733, 1.442695
        %v7851 = vpow.pop %v7850
        %v7852 = vmul.f32 %v7734, 1.442695
        %v7853 = vpow.pop %v7852
        %v7854 = vmul.f32 %v7735, 1.442695
        %v7855 = vpow.pop %v7854
        %v7856 = vmul.f32 %v7736, 1.442695
        %v7857 = vpow.pop %v7856
        %v7858 = vmul.f32 %v7737, 1.442695
        %v7859 = vpow.pop %v7858
        %v7860 = vmul.f32 %v7738, 1.442695
        %v7861 = vpow.pop %v7860
        %v7862 = vmul.f32 %v7739, 1.442695
        %v7863 = vpow.pop %v7862
        %v7864 = vmul.f32 %v7740, 1.442695
        %v7865 = vpow.pop %v7864
        %v7866 = vmul.f32 %v7741, 1.442695
        %v7867 = vpow.pop %v7866
        %v7868 = vmul.f32 %v7742, 1.442695
        %v7869 = vpow.pop %v7868
        %v7870 = vmul.f32 %v7743, 1.442695
        %v7871 = vpow.pop %v7870
        %v7872 = vsel %vm2848, %v7745, 0.0
        %7873 = vadd.xlane.f32.xlu0 %v7872
        %v7874 = vpop.xlane.xlu0 %7873
        %v7875 = vsel %vm2848, %v7747, 0.0
        %7876 = vadd.xlane.f32.xlu0 %v7875
        %v7877 = vpop.xlane.xlu0 %7876
        %v7878 = vsel %vm2848, %v7749, 0.0
        %7879 = vadd.xlane.f32.xlu0 %v7878
        %v7880 = vpop.xlane.xlu0 %7879
        %v7881 = vsel %vm2848, %v7751, 0.0
        %7882 = vadd.xlane.f32.xlu0 %v7881
        %v7883 = vpop.xlane.xlu0 %7882
        %v7884 = vsel %vm2848, %v7753, 0.0
        %7885 = vadd.xlane.f32.xlu0 %v7884
        %v7886 = vpop.xlane.xlu0 %7885
        %v7887 = vsel %vm2848, %v7755, 0.0
        %7888 = vadd.xlane.f32.xlu0 %v7887
        %v7889 = vpop.xlane.xlu0 %7888
        %v7890 = vsel %vm2848, %v7757, 0.0
        %7891 = vadd.xlane.f32.xlu0 %v7890
        %v7892 = vpop.xlane.xlu0 %7891
        %v7893 = vsel %vm2848, %v7759, 0.0
        %7894 = vadd.xlane.f32.xlu0 %v7893
        %v7895 = vpop.xlane.xlu0 %7894
        %v7896 = vsel %vm2848, %v7761, 0.0
        %7897 = vadd.xlane.f32.xlu0 %v7896
        %v7898 = vpop.xlane.xlu0 %7897
        %v7899 = vsel %vm2848, %v7763, 0.0
        %7900 = vadd.xlane.f32.xlu0 %v7899
        %v7901 = vpop.xlane.xlu0 %7900
        %v7902 = vsel %vm2848, %v7765, 0.0
        %7903 = vadd.xlane.f32.xlu0 %v7902
        %v7904 = vpop.xlane.xlu0 %7903
        %v7905 = vsel %vm2848, %v7767, 0.0
        %7906 = vadd.xlane.f32.xlu0 %v7905
        %v7907 = vpop.xlane.xlu0 %7906
        %v7908 = vsel %vm2848, %v7769, 0.0
        %7909 = vadd.xlane.f32.xlu0 %v7908
        %v7910 = vpop.xlane.xlu0 %7909
        %v7911 = vsel %vm2848, %v7771, 0.0
        %7912 = vadd.xlane.f32.xlu0 %v7911
        %v7913 = vpop.xlane.xlu0 %7912
        %v7914 = vsel %vm2848, %v7773, 0.0
        %7915 = vadd.xlane.f32.xlu0 %v7914
        %v7916 = vpop.xlane.xlu0 %7915
        %v7917 = vsel %vm2848, %v7775, 0.0
        %7918 = vadd.xlane.f32.xlu0 %v7917
        %v7919 = vpop.xlane.xlu0 %7918
        %v7920 = vsel %vm2848, %v7777, 0.0
        %7921 = vadd.xlane.f32.xlu0 %v7920
        %v7922 = vpop.xlane.xlu0 %7921
        %v7923 = vsel %vm2848, %v7779, 0.0
        %7924 = vadd.xlane.f32.xlu0 %v7923
        %v7925 = vpop.xlane.xlu0 %7924
        %v7926 = vsel %vm2848, %v7781, 0.0
        %7927 = vadd.xlane.f32.xlu0 %v7926
        %v7928 = vpop.xlane.xlu0 %7927
        %v7929 = vsel %vm2848, %v7783, 0.0
        %7930 = vadd.xlane.f32.xlu0 %v7929
        %v7931 = vpop.xlane.xlu0 %7930
        %v7932 = vsel %vm2848, %v7785, 0.0
        %7933 = vadd.xlane.f32.xlu0 %v7932
        %v7934 = vpop.xlane.xlu0 %7933
        %v7935 = vsel %vm2848, %v7787, 0.0
        %7936 = vadd.xlane.f32.xlu0 %v7935
        %v7937 = vpop.xlane.xlu0 %7936
        %v7938 = vsel %vm2848, %v7789, 0.0
        %7939 = vadd.xlane.f32.xlu0 %v7938
        %v7940 = vpop.xlane.xlu0 %7939
        %v7941 = vsel %vm2848, %v7791, 0.0
        %7942 = vadd.xlane.f32.xlu0 %v7941
        %v7943 = vpop.xlane.xlu0 %7942
        %v7944 = vsel %vm2848, %v7793, 0.0
        %7945 = vadd.xlane.f32.xlu0 %v7944
        %v7946 = vpop.xlane.xlu0 %7945
        %v7947 = vsel %vm2848, %v7795, 0.0
        %7948 = vadd.xlane.f32.xlu0 %v7947
        %v7949 = vpop.xlane.xlu0 %7948
        %v7950 = vsel %vm2848, %v7797, 0.0
        %7951 = vadd.xlane.f32.xlu0 %v7950
        %v7952 = vpop.xlane.xlu0 %7951
        %v7953 = vsel %vm2848, %v7799, 0.0
        %7954 = vadd.xlane.f32.xlu0 %v7953
        %v7955 = vpop.xlane.xlu0 %7954
        %v7956 = vsel %vm2848, %v7801, 0.0
        %7957 = vadd.xlane.f32.xlu0 %v7956
        %v7958 = vpop.xlane.xlu0 %7957
        %v7959 = vsel %vm2848, %v7803, 0.0
        %7960 = vadd.xlane.f32.xlu0 %v7959
        %v7961 = vpop.xlane.xlu0 %7960
        %v7962 = vsel %vm2848, %v7805, 0.0
        %7963 = vadd.xlane.f32.xlu0 %v7962
        %v7964 = vpop.xlane.xlu0 %7963
        %v7965 = vsel %vm2848, %v7807, 0.0
        %7966 = vadd.xlane.f32.xlu0 %v7965
        %v7967 = vpop.xlane.xlu0 %7966
        %v7968 = vsel %vm2848, %v7809, 0.0
        %7969 = vadd.xlane.f32.xlu0 %v7968
        %v7970 = vpop.xlane.xlu0 %7969
        %v7971 = vsel %vm2848, %v7811, 0.0
        %7972 = vadd.xlane.f32.xlu0 %v7971
        %v7973 = vpop.xlane.xlu0 %7972
        %v7974 = vsel %vm2848, %v7813, 0.0
        %7975 = vadd.xlane.f32.xlu0 %v7974
        %v7976 = vpop.xlane.xlu0 %7975
        %v7977 = vsel %vm2848, %v7815, 0.0
        %7978 = vadd.xlane.f32.xlu0 %v7977
        %v7979 = vpop.xlane.xlu0 %7978
        %v7980 = vsel %vm2848, %v7817, 0.0
        %7981 = vadd.xlane.f32.xlu0 %v7980
        %v7982 = vpop.xlane.xlu0 %7981
        %v7983 = vsel %vm2848, %v7819, 0.0
        %7984 = vadd.xlane.f32.xlu0 %v7983
        %v7985 = vpop.xlane.xlu0 %7984
        %v7986 = vsel %vm2848, %v7821, 0.0
        %7987 = vadd.xlane.f32.xlu0 %v7986
        %v7988 = vpop.xlane.xlu0 %7987
        %v7989 = vsel %vm2848, %v7823, 0.0
        %7990 = vadd.xlane.f32.xlu0 %v7989
        %v7991 = vpop.xlane.xlu0 %7990
        %v7992 = vsel %vm2848, %v7825, 0.0
        %7993 = vadd.xlane.f32.xlu0 %v7992
        %v7994 = vpop.xlane.xlu0 %7993
        %v7995 = vsel %vm2848, %v7827, 0.0
        %7996 = vadd.xlane.f32.xlu0 %v7995
        %v7997 = vpop.xlane.xlu0 %7996
        %v7998 = vsel %vm2848, %v7829, 0.0
        %7999 = vadd.xlane.f32.xlu0 %v7998
        %v8000 = vpop.xlane.xlu0 %7999
        %v8001 = vsel %vm2848, %v7831, 0.0
        %8002 = vadd.xlane.f32.xlu0 %v8001
        %v8003 = vpop.xlane.xlu0 %8002
        %v8004 = vsel %vm2848, %v7833, 0.0
        %8005 = vadd.xlane.f32.xlu0 %v8004
        %v8006 = vpop.xlane.xlu0 %8005
        %v8007 = vsel %vm2848, %v7835, 0.0
        %8008 = vadd.xlane.f32.xlu0 %v8007
        %v8009 = vpop.xlane.xlu0 %8008
        %v8010 = vsel %vm2848, %v7837, 0.0
        %8011 = vadd.xlane.f32.xlu0 %v8010
        %v8012 = vpop.xlane.xlu0 %8011
        %v8013 = vsel %vm2848, %v7839, 0.0
        %8014 = vadd.xlane.f32.xlu0 %v8013
        %v8015 = vpop.xlane.xlu0 %8014
        %v8016 = vsel %vm2848, %v7841, 0.0
        %8017 = vadd.xlane.f32.xlu0 %v8016
        %v8018 = vpop.xlane.xlu0 %8017
        %v8019 = vsel %vm2848, %v7843, 0.0
        %8020 = vadd.xlane.f32.xlu0 %v8019
        %v8021 = vpop.xlane.xlu0 %8020
        %v8022 = vsel %vm2848, %v7845, 0.0
        %8023 = vadd.xlane.f32.xlu0 %v8022
        %v8024 = vpop.xlane.xlu0 %8023
        %v8025 = vsel %vm2848, %v7847, 0.0
        %8026 = vadd.xlane.f32.xlu0 %v8025
        %v8027 = vpop.xlane.xlu0 %8026
        %v8028 = vsel %vm2848, %v7849, 0.0
        %8029 = vadd.xlane.f32.xlu0 %v8028
        %v8030 = vpop.xlane.xlu0 %8029
        %v8031 = vsel %vm2848, %v7851, 0.0
        %8032 = vadd.xlane.f32.xlu0 %v8031
        %v8033 = vpop.xlane.xlu0 %8032
        %v8034 = vsel %vm2848, %v7853, 0.0
        %8035 = vadd.xlane.f32.xlu0 %v8034
        %v8036 = vpop.xlane.xlu0 %8035
        %v8037 = vsel %vm2848, %v7855, 0.0
        %8038 = vadd.xlane.f32.xlu0 %v8037
        %v8039 = vpop.xlane.xlu0 %8038
        %v8040 = vsel %vm2848, %v7857, 0.0
        %8041 = vadd.xlane.f32.xlu0 %v8040
        %v8042 = vpop.xlane.xlu0 %8041
        %v8043 = vsel %vm2848, %v7859, 0.0
        %8044 = vadd.xlane.f32.xlu0 %v8043
        %v8045 = vpop.xlane.xlu0 %8044
        %v8046 = vsel %vm2848, %v7861, 0.0
        %8047 = vadd.xlane.f32.xlu0 %v8046
        %v8048 = vpop.xlane.xlu0 %8047
        %v8049 = vsel %vm2848, %v7863, 0.0
        %8050 = vadd.xlane.f32.xlu0 %v8049
        %v8051 = vpop.xlane.xlu0 %8050
        %v8052 = vsel %vm2848, %v7865, 0.0
        %8053 = vadd.xlane.f32.xlu0 %v8052
        %v8054 = vpop.xlane.xlu0 %8053
        %v8055 = vsel %vm2848, %v7867, 0.0
        %8056 = vadd.xlane.f32.xlu0 %v8055
        %v8057 = vpop.xlane.xlu0 %8056
        %v8058 = vsel %vm2848, %v7869, 0.0
        %8059 = vadd.xlane.f32.xlu0 %v8058
        %v8060 = vpop.xlane.xlu0 %8059
        %v8061 = vsel %vm2848, %v7871, 0.0
        %8062 = vadd.xlane.f32.xlu0 %v8061
        %v8063 = vpop.xlane.xlu0 %8062
        %v8064 = vrcp.pop %v7874
        %v8065 = vrcp.pop %v7877
        %v8066 = vrcp.pop %v7880
        %v8067 = vrcp.pop %v7883
        %v8068 = vrcp.pop %v7886
        %v8069 = vrcp.pop %v7889
        %v8070 = vrcp.pop %v7892
        %v8071 = vrcp.pop %v7895
        %v8072 = vrcp.pop %v7898
        %v8073 = vrcp.pop %v7901
        %v8074 = vrcp.pop %v7904
        %v8075 = vrcp.pop %v7907
        %v8076 = vrcp.pop %v7910
        %v8077 = vrcp.pop %v7913
        %v8078 = vrcp.pop %v7916
        %v8079 = vrcp.pop %v7919
        %v8080 = vrcp.pop %v7922
        %v8081 = vrcp.pop %v7925
        %v8082 = vrcp.pop %v7928
        %v8083 = vrcp.pop %v7931
        %v8084 = vrcp.pop %v7934
        %v8085 = vrcp.pop %v7937
        %v8086 = vrcp.pop %v7940
        %v8087 = vrcp.pop %v7943
        %v8088 = vrcp.pop %v7946
        %v8089 = vrcp.pop %v7949
        %v8090 = vrcp.pop %v7952
        %v8091 = vrcp.pop %v7955
        %v8092 = vrcp.pop %v7958
        %v8093 = vrcp.pop %v7961
        %v8094 = vrcp.pop %v7964
        %v8095 = vrcp.pop %v7967
        %v8096 = vrcp.pop %v7970
        %v8097 = vrcp.pop %v7973
        %v8098 = vrcp.pop %v7976
        %v8099 = vrcp.pop %v7979
        %v8100 = vrcp.pop %v7982
        %v8101 = vrcp.pop %v7985
        %v8102 = vrcp.pop %v7988
        %v8103 = vrcp.pop %v7991
        %v8104 = vrcp.pop %v7994
        %v8105 = vrcp.pop %v7997
        %v8106 = vrcp.pop %v8000
        %v8107 = vrcp.pop %v8003
        %v8108 = vrcp.pop %v8006
        %v8109 = vrcp.pop %v8009
        %v8110 = vrcp.pop %v8012
        %v8111 = vrcp.pop %v8015
        %v8112 = vrcp.pop %v8018
        %v8113 = vrcp.pop %v8021
        %v8114 = vrcp.pop %v8024
        %v8115 = vrcp.pop %v8027
        %v8116 = vrcp.pop %v8030
        %v8117 = vrcp.pop %v8033
        %v8118 = vrcp.pop %v8036
        %v8119 = vrcp.pop %v8039
        %v8120 = vrcp.pop %v8042
        %v8121 = vrcp.pop %v8045
        %v8122 = vrcp.pop %v8048
        %v8123 = vrcp.pop %v8051
        %v8124 = vrcp.pop %v8054
        %v8125 = vrcp.pop %v8057
        %v8126 = vrcp.pop %v8060
        %v8127 = vrcp.pop %v8063
        %v8128 = vmul.f32 %v7745, %v8064
        %v8129 = vmul.f32 %v7747, %v8065
        %v8130 = vmul.f32 %v7749, %v8066
        %v8131 = vmul.f32 %v7751, %v8067
        %v8132 = vmul.f32 %v7753, %v8068
        %v8133 = vmul.f32 %v7755, %v8069
        %v8134 = vmul.f32 %v7757, %v8070
        %v8135 = vmul.f32 %v7759, %v8071
        %v8136 = vmul.f32 %v7761, %v8072
        %v8137 = vmul.f32 %v7763, %v8073
        %v8138 = vmul.f32 %v7765, %v8074
        %v8139 = vmul.f32 %v7767, %v8075
        %v8140 = vmul.f32 %v7769, %v8076
        %v8141 = vmul.f32 %v7771, %v8077
        %v8142 = vmul.f32 %v7773, %v8078
        %v8143 = vmul.f32 %v7775, %v8079
        %v8144 = vmul.f32 %v7777, %v8080
        %v8145 = vmul.f32 %v7779, %v8081
        %v8146 = vmul.f32 %v7781, %v8082
        %v8147 = vmul.f32 %v7783, %v8083
        %v8148 = vmul.f32 %v7785, %v8084
        %v8149 = vmul.f32 %v7787, %v8085
        %v8150 = vmul.f32 %v7789, %v8086
        %v8151 = vmul.f32 %v7791, %v8087
        %v8152 = vmul.f32 %v7793, %v8088
        %v8153 = vmul.f32 %v7795, %v8089
        %v8154 = vmul.f32 %v7797, %v8090
        %v8155 = vmul.f32 %v7799, %v8091
        %v8156 = vmul.f32 %v7801, %v8092
        %v8157 = vmul.f32 %v7803, %v8093
        %v8158 = vmul.f32 %v7805, %v8094
        %v8159 = vmul.f32 %v7807, %v8095
        %v8160 = vmul.f32 %v7809, %v8096
        %v8161 = vmul.f32 %v7811, %v8097
        %v8162 = vmul.f32 %v7813, %v8098
        %v8163 = vmul.f32 %v7815, %v8099
        %v8164 = vmul.f32 %v7817, %v8100
        %v8165 = vmul.f32 %v7819, %v8101
        %v8166 = vmul.f32 %v7821, %v8102
        %v8167 = vmul.f32 %v7823, %v8103
        %v8168 = vmul.f32 %v7825, %v8104
        %v8169 = vmul.f32 %v7827, %v8105
        %v8170 = vmul.f32 %v7829, %v8106
        %v8171 = vmul.f32 %v7831, %v8107
        %v8172 = vmul.f32 %v7833, %v8108
        %v8173 = vmul.f32 %v7835, %v8109
        %v8174 = vmul.f32 %v7837, %v8110
        %v8175 = vmul.f32 %v7839, %v8111
        %v8176 = vmul.f32 %v7841, %v8112
        %v8177 = vmul.f32 %v7843, %v8113
        %v8178 = vmul.f32 %v7845, %v8114
        %v8179 = vmul.f32 %v7847, %v8115
        %v8180 = vmul.f32 %v7849, %v8116
        %v8181 = vmul.f32 %v7851, %v8117
        %v8182 = vmul.f32 %v7853, %v8118
        %v8183 = vmul.f32 %v7855, %v8119
        %v8184 = vmul.f32 %v7857, %v8120
        %v8185 = vmul.f32 %v7859, %v8121
        %v8186 = vmul.f32 %v7861, %v8122
        %v8187 = vmul.f32 %v7863, %v8123
        %v8188 = vmul.f32 %v7865, %v8124
        %v8189 = vmul.f32 %v7867, %v8125
        %v8190 = vmul.f32 %v7869, %v8126
        %v8191 = vmul.f32 %v7871, %v8127
        %v8192 = vpack.c.bf16 %v8129, %v8128
        %v8193 = vpack.c.bf16 %v8131, %v8130
        %v8194 = vpack.c.bf16 %v8133, %v8132
        %v8195 = vpack.c.bf16 %v8135, %v8134
        %v8196 = vpack.c.bf16 %v8137, %v8136
        %v8197 = vpack.c.bf16 %v8139, %v8138
        %v8198 = vpack.c.bf16 %v8141, %v8140
        %v8199 = vpack.c.bf16 %v8143, %v8142
        %v8200 = vpack.c.bf16 %v8145, %v8144
        %v8201 = vpack.c.bf16 %v8147, %v8146
        %v8202 = vpack.c.bf16 %v8149, %v8148
        %v8203 = vpack.c.bf16 %v8151, %v8150
        %v8204 = vpack.c.bf16 %v8153, %v8152
        %v8205 = vpack.c.bf16 %v8155, %v8154
        %v8206 = vpack.c.bf16 %v8157, %v8156
        %v8207 = vpack.c.bf16 %v8159, %v8158
        %v8208 = vpack.c.bf16 %v8161, %v8160
        %v8209 = vpack.c.bf16 %v8163, %v8162
        %v8210 = vpack.c.bf16 %v8165, %v8164
        %v8211 = vpack.c.bf16 %v8167, %v8166
        %v8212 = vpack.c.bf16 %v8169, %v8168
        %v8213 = vpack.c.bf16 %v8171, %v8170
        %v8214 = vpack.c.bf16 %v8173, %v8172
        %v8215 = vpack.c.bf16 %v8175, %v8174
        %v8216 = vpack.c.bf16 %v8177, %v8176
        %v8217 = vpack.c.bf16 %v8179, %v8178
        %v8218 = vpack.c.bf16 %v8181, %v8180
        %v8219 = vpack.c.bf16 %v8183, %v8182
        %v8220 = vpack.c.bf16 %v8185, %v8184
        %v8221 = vpack.c.bf16 %v8187, %v8186
        %v8222 = vpack.c.bf16 %v8189, %v8188
        %v8223 = vpack.c.bf16 %v8191, %v8190
        %v8225 = vsel %vm2848, %v8192, 0
        %v8228 = vsel %vm2848, %v8193, 0
        %v8231 = vsel %vm2848, %v8194, 0
        %v8234 = vsel %vm2848, %v8195, 0
        %v8237 = vsel %vm2848, %v8196, 0
        %v8240 = vsel %vm2848, %v8197, 0
        %v8243 = vsel %vm2848, %v8198, 0
        %v8246 = vsel %vm2848, %v8199, 0
        %v8249 = vsel %vm2848, %v8200, 0
        %v8252 = vsel %vm2848, %v8201, 0
        %v8255 = vsel %vm2848, %v8202, 0
        %v8258 = vsel %vm2848, %v8203, 0
        %v8261 = vsel %vm2848, %v8204, 0
        %v8264 = vsel %vm2848, %v8205, 0
        %v8267 = vsel %vm2848, %v8206, 0
        %v8270 = vsel %vm2848, %v8207, 0
        %v8273 = vsel %vm2848, %v8208, 0
        %v8276 = vsel %vm2848, %v8209, 0
        %v8279 = vsel %vm2848, %v8210, 0
        %v8282 = vsel %vm2848, %v8211, 0
        %v8285 = vsel %vm2848, %v8212, 0
        %v8288 = vsel %vm2848, %v8213, 0
        %v8291 = vsel %vm2848, %v8214, 0
        %v8294 = vsel %vm2848, %v8215, 0
        %v8297 = vsel %vm2848, %v8216, 0
        %v8300 = vsel %vm2848, %v8217, 0
        %v8303 = vsel %vm2848, %v8218, 0
        %v8306 = vsel %vm2848, %v8219, 0
        %v8309 = vsel %vm2848, %v8220, 0
        %v8312 = vsel %vm2848, %v8221, 0
        %v8315 = vsel %vm2848, %v8222, 0
        %v8318 = vsel %vm2848, %v8223, 0
        %8320 = vmatprep.subr.bf16.mxu0 0
        %8321 = vmatpush1.bf16.msra.mxu0 0
        %8322 = vmatprep.subr.bf16.mxu0 0
        %8323 = vmatpush1.bf16.msra.mxu0 0
        %8324 = vmatprep.subr.bf16.mxu0 0
        %8325 = vmatpush1.bf16.msra.mxu0 0
        %8326 = vmatprep.subr.bf16.mxu0 0
        %8327 = vmatpush1.bf16.msra.mxu0 0
        %8328 = vmatprep.subr.bf16.mxu0 %v1737
        %8329 = vmatpush1.bf16.msra.mxu0 %v1736
        %8330 = vmatprep.subr.bf16.mxu0 %v1735
        %8331 = vmatpush1.bf16.msra.mxu0 %v1734
        %8332 = vmatprep.subr.bf16.mxu0 %v1733
        %8333 = vmatpush1.bf16.msra.mxu0 %v1732
        %8334 = vmatprep.subr.bf16.mxu0 %v1731
        %8335 = vmatpush1.bf16.msra.mxu0 %v1730
        %8336 = vmatprep.subr.bf16.mxu0 0
        %8337 = vmatpush2.bf16.msra.mxu0 0
        %8338 = vmatprep.subr.bf16.mxu0 0
        %8339 = vmatpush2.bf16.msra.mxu0 0
        %8340 = vmatprep.subr.bf16.mxu0 0
        %8341 = vmatpush2.bf16.msra.mxu0 0
        %8342 = vmatprep.subr.bf16.mxu0 0
        %8343 = vmatpush2.bf16.msra.mxu0 0
        %8344 = vmatprep.subr.bf16.mxu0 0
        %8345 = vmatpush2.bf16.msra.mxu0 0
        %8346 = vmatprep.subr.bf16.mxu0 0
        %8347 = vmatpush2.bf16.msra.mxu0 0
        %8348 = vmatprep.subr.bf16.mxu0 0
        %8349 = vmatpush2.bf16.msra.mxu0 0
        %8350 = vmatprep.subr.bf16.mxu0 0
        %8351 = vmatpush2.bf16.msra.mxu0 0
        %8352 = vmatprep.mubr.bf16.mxu0 0
        %8353 = vmatmul.mubr.bf16.gmra.mxu0 %v8225
        %v8354 = vpop.f32.mrf.mxu0
        %v8355 = vadd.f32 0.0, %v8354
        %v8356 = vpop.f32.mrf.mxu0
        %v8357 = vadd.f32 0.0, %v8356
        %v8358 = vpop.f32.mrf.mxu0
        %v8359 = vadd.f32 0.0, %v8358
        %v8360 = vpop.f32.mrf.mxu0
        %v8361 = vadd.f32 0.0, %v8360
        %8362 = vmatprep.mubr.bf16.mxu0 0
        %8363 = vmatmul.mubr.bf16.gmra.mxu0 %v8228
        %v8364 = vpop.f32.mrf.mxu0
        %v8365 = vadd.f32 0.0, %v8364
        %v8366 = vpop.f32.mrf.mxu0
        %v8367 = vadd.f32 0.0, %v8366
        %v8368 = vpop.f32.mrf.mxu0
        %v8369 = vadd.f32 0.0, %v8368
        %v8370 = vpop.f32.mrf.mxu0
        %v8371 = vadd.f32 0.0, %v8370
        %8372 = vmatprep.mubr.bf16.mxu0 0
        %8373 = vmatmul.mubr.bf16.gmra.mxu0 %v8231
        %v8374 = vpop.f32.mrf.mxu0
        %v8375 = vadd.f32 0.0, %v8374
        %v8376 = vpop.f32.mrf.mxu0
        %v8377 = vadd.f32 0.0, %v8376
        %v8378 = vpop.f32.mrf.mxu0
        %v8379 = vadd.f32 0.0, %v8378
        %v8380 = vpop.f32.mrf.mxu0
        %v8381 = vadd.f32 0.0, %v8380
        %8382 = vmatprep.mubr.bf16.mxu0 0
        %8383 = vmatmul.mubr.bf16.gmra.mxu0 %v8234
        %v8384 = vpop.f32.mrf.mxu0
        %v8385 = vadd.f32 0.0, %v8384
        %v8386 = vpop.f32.mrf.mxu0
        %v8387 = vadd.f32 0.0, %v8386
        %v8388 = vpop.f32.mrf.mxu0
        %v8389 = vadd.f32 0.0, %v8388
        %v8390 = vpop.f32.mrf.mxu0
        %v8391 = vadd.f32 0.0, %v8390
        %8392 = vmatprep.mubr.bf16.mxu0 0
        %8393 = vmatmul.mubr.bf16.gmra.mxu0 %v8237
        %v8394 = vpop.f32.mrf.mxu0
        %v8395 = vadd.f32 0.0, %v8394
        %v8396 = vpop.f32.mrf.mxu0
        %v8397 = vadd.f32 0.0, %v8396
        %v8398 = vpop.f32.mrf.mxu0
        %v8399 = vadd.f32 0.0, %v8398
        %v8400 = vpop.f32.mrf.mxu0
        %v8401 = vadd.f32 0.0, %v8400
        %8402 = vmatprep.mubr.bf16.mxu0 0
        %8403 = vmatmul.mubr.bf16.gmra.mxu0 %v8240
        %v8404 = vpop.f32.mrf.mxu0
        %v8405 = vadd.f32 0.0, %v8404
        %v8406 = vpop.f32.mrf.mxu0
        %v8407 = vadd.f32 0.0, %v8406
        %v8408 = vpop.f32.mrf.mxu0
        %v8409 = vadd.f32 0.0, %v8408
        %v8410 = vpop.f32.mrf.mxu0
        %v8411 = vadd.f32 0.0, %v8410
        %8412 = vmatprep.mubr.bf16.mxu0 0
        %8413 = vmatmul.mubr.bf16.gmra.mxu0 %v8243
        %v8414 = vpop.f32.mrf.mxu0
        %v8415 = vadd.f32 0.0, %v8414
        %v8416 = vpop.f32.mrf.mxu0
        %v8417 = vadd.f32 0.0, %v8416
        %v8418 = vpop.f32.mrf.mxu0
        %v8419 = vadd.f32 0.0, %v8418
        %v8420 = vpop.f32.mrf.mxu0
        %v8421 = vadd.f32 0.0, %v8420
        %8422 = vmatprep.mubr.bf16.mxu0 0
        %8423 = vmatmul.mubr.bf16.gmra.mxu0 %v8246
        %v8424 = vpop.f32.mrf.mxu0
        %v8425 = vadd.f32 0.0, %v8424
        %v8426 = vpop.f32.mrf.mxu0
        %v8427 = vadd.f32 0.0, %v8426
        %v8428 = vpop.f32.mrf.mxu0
        %v8429 = vadd.f32 0.0, %v8428
        %v8430 = vpop.f32.mrf.mxu0
        %v8431 = vadd.f32 0.0, %v8430
        %8432 = vmatprep.mubr.bf16.mxu0 0
        %8433 = vmatmul.mubr.bf16.gmra.mxu0 %v8249
        %v8434 = vpop.f32.mrf.mxu0
        %v8435 = vadd.f32 0.0, %v8434
        %v8436 = vpop.f32.mrf.mxu0
        %v8437 = vadd.f32 0.0, %v8436
        %v8438 = vpop.f32.mrf.mxu0
        %v8439 = vadd.f32 0.0, %v8438
        %v8440 = vpop.f32.mrf.mxu0
        %v8441 = vadd.f32 0.0, %v8440
        %8442 = vmatprep.mubr.bf16.mxu0 0
        %8443 = vmatmul.mubr.bf16.gmra.mxu0 %v8252
        %v8444 = vpop.f32.mrf.mxu0
        %v8445 = vadd.f32 0.0, %v8444
        %v8446 = vpop.f32.mrf.mxu0
        %v8447 = vadd.f32 0.0, %v8446
        %v8448 = vpop.f32.mrf.mxu0
        %v8449 = vadd.f32 0.0, %v8448
        %v8450 = vpop.f32.mrf.mxu0
        %v8451 = vadd.f32 0.0, %v8450
        %8452 = vmatprep.mubr.bf16.mxu0 0
        %8453 = vmatmul.mubr.bf16.gmra.mxu0 %v8255
        %v8454 = vpop.f32.mrf.mxu0
        %v8455 = vadd.f32 0.0, %v8454
        %v8456 = vpop.f32.mrf.mxu0
        %v8457 = vadd.f32 0.0, %v8456
        %v8458 = vpop.f32.mrf.mxu0
        %v8459 = vadd.f32 0.0, %v8458
        %v8460 = vpop.f32.mrf.mxu0
        %v8461 = vadd.f32 0.0, %v8460
        %8462 = vmatprep.mubr.bf16.mxu0 0
        %8463 = vmatmul.mubr.bf16.gmra.mxu0 %v8258
        %v8464 = vpop.f32.mrf.mxu0
        %v8465 = vadd.f32 0.0, %v8464
        %v8466 = vpop.f32.mrf.mxu0
        %v8467 = vadd.f32 0.0, %v8466
        %v8468 = vpop.f32.mrf.mxu0
        %v8469 = vadd.f32 0.0, %v8468
        %v8470 = vpop.f32.mrf.mxu0
        %v8471 = vadd.f32 0.0, %v8470
        %8472 = vmatprep.mubr.bf16.mxu0 0
        %8473 = vmatmul.mubr.bf16.gmra.mxu0 %v8261
        %v8474 = vpop.f32.mrf.mxu0
        %v8475 = vadd.f32 0.0, %v8474
        %v8476 = vpop.f32.mrf.mxu0
        %v8477 = vadd.f32 0.0, %v8476
        %v8478 = vpop.f32.mrf.mxu0
        %v8479 = vadd.f32 0.0, %v8478
        %v8480 = vpop.f32.mrf.mxu0
        %v8481 = vadd.f32 0.0, %v8480
        %8482 = vmatprep.mubr.bf16.mxu0 0
        %8483 = vmatmul.mubr.bf16.gmra.mxu0 %v8264
        %v8484 = vpop.f32.mrf.mxu0
        %v8485 = vadd.f32 0.0, %v8484
        %v8486 = vpop.f32.mrf.mxu0
        %v8487 = vadd.f32 0.0, %v8486
        %v8488 = vpop.f32.mrf.mxu0
        %v8489 = vadd.f32 0.0, %v8488
        %v8490 = vpop.f32.mrf.mxu0
        %v8491 = vadd.f32 0.0, %v8490
        %8492 = vmatprep.mubr.bf16.mxu0 0
        %8493 = vmatmul.mubr.bf16.gmra.mxu0 %v8267
        %v8494 = vpop.f32.mrf.mxu0
        %v8495 = vadd.f32 0.0, %v8494
        %v8496 = vpop.f32.mrf.mxu0
        %v8497 = vadd.f32 0.0, %v8496
        %v8498 = vpop.f32.mrf.mxu0
        %v8499 = vadd.f32 0.0, %v8498
        %v8500 = vpop.f32.mrf.mxu0
        %v8501 = vadd.f32 0.0, %v8500
        %8502 = vmatprep.mubr.bf16.mxu0 0
        %8503 = vmatmul.mubr.bf16.gmra.mxu0 %v8270
        %v8504 = vpop.f32.mrf.mxu0
        %v8505 = vadd.f32 0.0, %v8504
        %v8506 = vpop.f32.mrf.mxu0
        %v8507 = vadd.f32 0.0, %v8506
        %v8508 = vpop.f32.mrf.mxu0
        %v8509 = vadd.f32 0.0, %v8508
        %v8510 = vpop.f32.mrf.mxu0
        %v8511 = vadd.f32 0.0, %v8510
        %8512 = vmatprep.mubr.bf16.mxu0 0
        %8513 = vmatmul.mubr.bf16.gmra.mxu0 %v8273
        %v8514 = vpop.f32.mrf.mxu0
        %v8515 = vadd.f32 0.0, %v8514
        %v8516 = vpop.f32.mrf.mxu0
        %v8517 = vadd.f32 0.0, %v8516
        %v8518 = vpop.f32.mrf.mxu0
        %v8519 = vadd.f32 0.0, %v8518
        %v8520 = vpop.f32.mrf.mxu0
        %v8521 = vadd.f32 0.0, %v8520
        %8522 = vmatprep.mubr.bf16.mxu0 0
        %8523 = vmatmul.mubr.bf16.gmra.mxu0 %v8276
        %v8524 = vpop.f32.mrf.mxu0
        %v8525 = vadd.f32 0.0, %v8524
        %v8526 = vpop.f32.mrf.mxu0
        %v8527 = vadd.f32 0.0, %v8526
        %v8528 = vpop.f32.mrf.mxu0
        %v8529 = vadd.f32 0.0, %v8528
        %v8530 = vpop.f32.mrf.mxu0
        %v8531 = vadd.f32 0.0, %v8530
        %8532 = vmatprep.mubr.bf16.mxu0 0
        %8533 = vmatmul.mubr.bf16.gmra.mxu0 %v8279
        %v8534 = vpop.f32.mrf.mxu0
        %v8535 = vadd.f32 0.0, %v8534
        %v8536 = vpop.f32.mrf.mxu0
        %v8537 = vadd.f32 0.0, %v8536
        %v8538 = vpop.f32.mrf.mxu0
        %v8539 = vadd.f32 0.0, %v8538
        %v8540 = vpop.f32.mrf.mxu0
        %v8541 = vadd.f32 0.0, %v8540
        %8542 = vmatprep.mubr.bf16.mxu0 0
        %8543 = vmatmul.mubr.bf16.gmra.mxu0 %v8282
        %v8544 = vpop.f32.mrf.mxu0
        %v8545 = vadd.f32 0.0, %v8544
        %v8546 = vpop.f32.mrf.mxu0
        %v8547 = vadd.f32 0.0, %v8546
        %v8548 = vpop.f32.mrf.mxu0
        %v8549 = vadd.f32 0.0, %v8548
        %v8550 = vpop.f32.mrf.mxu0
        %v8551 = vadd.f32 0.0, %v8550
        %8552 = vmatprep.mubr.bf16.mxu0 0
        %8553 = vmatmul.mubr.bf16.gmra.mxu0 %v8285
        %v8554 = vpop.f32.mrf.mxu0
        %v8555 = vadd.f32 0.0, %v8554
        %v8556 = vpop.f32.mrf.mxu0
        %v8557 = vadd.f32 0.0, %v8556
        %v8558 = vpop.f32.mrf.mxu0
        %v8559 = vadd.f32 0.0, %v8558
        %v8560 = vpop.f32.mrf.mxu0
        %v8561 = vadd.f32 0.0, %v8560
        %8562 = vmatprep.mubr.bf16.mxu0 0
        %8563 = vmatmul.mubr.bf16.gmra.mxu0 %v8288
        %v8564 = vpop.f32.mrf.mxu0
        %v8565 = vadd.f32 0.0, %v8564
        %v8566 = vpop.f32.mrf.mxu0
        %v8567 = vadd.f32 0.0, %v8566
        %v8568 = vpop.f32.mrf.mxu0
        %v8569 = vadd.f32 0.0, %v8568
        %v8570 = vpop.f32.mrf.mxu0
        %v8571 = vadd.f32 0.0, %v8570
        %8572 = vmatprep.mubr.bf16.mxu0 0
        %8573 = vmatmul.mubr.bf16.gmra.mxu0 %v8291
        %v8574 = vpop.f32.mrf.mxu0
        %v8575 = vadd.f32 0.0, %v8574
        %v8576 = vpop.f32.mrf.mxu0
        %v8577 = vadd.f32 0.0, %v8576
        %v8578 = vpop.f32.mrf.mxu0
        %v8579 = vadd.f32 0.0, %v8578
        %v8580 = vpop.f32.mrf.mxu0
        %v8581 = vadd.f32 0.0, %v8580
        %8582 = vmatprep.mubr.bf16.mxu0 0
        %8583 = vmatmul.mubr.bf16.gmra.mxu0 %v8294
        %v8584 = vpop.f32.mrf.mxu0
        %v8585 = vadd.f32 0.0, %v8584
        %v8586 = vpop.f32.mrf.mxu0
        %v8587 = vadd.f32 0.0, %v8586
        %v8588 = vpop.f32.mrf.mxu0
        %v8589 = vadd.f32 0.0, %v8588
        %v8590 = vpop.f32.mrf.mxu0
        %v8591 = vadd.f32 0.0, %v8590
        %8592 = vmatprep.mubr.bf16.mxu0 0
        %8593 = vmatmul.mubr.bf16.gmra.mxu0 %v8297
        %v8594 = vpop.f32.mrf.mxu0
        %v8595 = vadd.f32 0.0, %v8594
        %v8596 = vpop.f32.mrf.mxu0
        %v8597 = vadd.f32 0.0, %v8596
        %v8598 = vpop.f32.mrf.mxu0
        %v8599 = vadd.f32 0.0, %v8598
        %v8600 = vpop.f32.mrf.mxu0
        %v8601 = vadd.f32 0.0, %v8600
        %8602 = vmatprep.mubr.bf16.mxu0 0
        %8603 = vmatmul.mubr.bf16.gmra.mxu0 %v8300
        %v8604 = vpop.f32.mrf.mxu0
        %v8605 = vadd.f32 0.0, %v8604
        %v8606 = vpop.f32.mrf.mxu0
        %v8607 = vadd.f32 0.0, %v8606
        %v8608 = vpop.f32.mrf.mxu0
        %v8609 = vadd.f32 0.0, %v8608
        %v8610 = vpop.f32.mrf.mxu0
        %v8611 = vadd.f32 0.0, %v8610
        %8612 = vmatprep.mubr.bf16.mxu0 0
        %8613 = vmatmul.mubr.bf16.gmra.mxu0 %v8303
        %v8614 = vpop.f32.mrf.mxu0
        %v8615 = vadd.f32 0.0, %v8614
        %v8616 = vpop.f32.mrf.mxu0
        %v8617 = vadd.f32 0.0, %v8616
        %v8618 = vpop.f32.mrf.mxu0
        %v8619 = vadd.f32 0.0, %v8618
        %v8620 = vpop.f32.mrf.mxu0
        %v8621 = vadd.f32 0.0, %v8620
        %8622 = vmatprep.mubr.bf16.mxu0 0
        %8623 = vmatmul.mubr.bf16.gmra.mxu0 %v8306
        %v8624 = vpop.f32.mrf.mxu0
        %v8625 = vadd.f32 0.0, %v8624
        %v8626 = vpop.f32.mrf.mxu0
        %v8627 = vadd.f32 0.0, %v8626
        %v8628 = vpop.f32.mrf.mxu0
        %v8629 = vadd.f32 0.0, %v8628
        %v8630 = vpop.f32.mrf.mxu0
        %v8631 = vadd.f32 0.0, %v8630
        %8632 = vmatprep.mubr.bf16.mxu0 0
        %8633 = vmatmul.mubr.bf16.gmra.mxu0 %v8309
        %v8634 = vpop.f32.mrf.mxu0
        %v8635 = vadd.f32 0.0, %v8634
        %v8636 = vpop.f32.mrf.mxu0
        %v8637 = vadd.f32 0.0, %v8636
        %v8638 = vpop.f32.mrf.mxu0
        %v8639 = vadd.f32 0.0, %v8638
        %v8640 = vpop.f32.mrf.mxu0
        %v8641 = vadd.f32 0.0, %v8640
        %8642 = vmatprep.mubr.bf16.mxu0 0
        %8643 = vmatmul.mubr.bf16.gmra.mxu0 %v8312
        %v8644 = vpop.f32.mrf.mxu0
        %v8645 = vadd.f32 0.0, %v8644
        %v8646 = vpop.f32.mrf.mxu0
        %v8647 = vadd.f32 0.0, %v8646
        %v8648 = vpop.f32.mrf.mxu0
        %v8649 = vadd.f32 0.0, %v8648
        %v8650 = vpop.f32.mrf.mxu0
        %v8651 = vadd.f32 0.0, %v8650
        %8652 = vmatprep.mubr.bf16.mxu0 0
        %8653 = vmatmul.mubr.bf16.gmra.mxu0 %v8315
        %v8654 = vpop.f32.mrf.mxu0
        %v8655 = vadd.f32 0.0, %v8654
        %v8656 = vpop.f32.mrf.mxu0
        %v8657 = vadd.f32 0.0, %v8656
        %v8658 = vpop.f32.mrf.mxu0
        %v8659 = vadd.f32 0.0, %v8658
        %v8660 = vpop.f32.mrf.mxu0
        %v8661 = vadd.f32 0.0, %v8660
        %8662 = vmatprep.mubr.bf16.mxu0 0
        %8663 = vmatmul.mubr.bf16.gmra.mxu0 %v8318
        %v8664 = vpop.f32.mrf.mxu0
        %v8665 = vadd.f32 0.0, %v8664
        %v8666 = vpop.f32.mrf.mxu0
        %v8667 = vadd.f32 0.0, %v8666
        %v8668 = vpop.f32.mrf.mxu0
        %v8669 = vadd.f32 0.0, %v8668
        %v8670 = vpop.f32.mrf.mxu0
        %v8671 = vadd.f32 0.0, %v8670
        %8672 = vdwg.mxu0
        %v8673 = vpack.c.bf16 %v8359, %v8355
        %v8674 = vpack.c.bf16 %v8361, %v8357
        %v8675 = vpack.c.bf16 %v8369, %v8365
        %v8676 = vpack.c.bf16 %v8371, %v8367
        %v8677 = vpack.c.bf16 %v8379, %v8375
        %v8678 = vpack.c.bf16 %v8381, %v8377
        %v8679 = vpack.c.bf16 %v8389, %v8385
        %v8680 = vpack.c.bf16 %v8391, %v8387
        %v8681 = vpack.c.bf16 %v8399, %v8395
        %v8682 = vpack.c.bf16 %v8401, %v8397
        %v8683 = vpack.c.bf16 %v8409, %v8405
        %v8684 = vpack.c.bf16 %v8411, %v8407
        %v8685 = vpack.c.bf16 %v8419, %v8415
        %v8686 = vpack.c.bf16 %v8421, %v8417
        %v8687 = vpack.c.bf16 %v8429, %v8425
        %v8688 = vpack.c.bf16 %v8431, %v8427
        %v8689 = vpack.c.bf16 %v8439, %v8435
        %v8690 = vpack.c.bf16 %v8441, %v8437
        %v8691 = vpack.c.bf16 %v8449, %v8445
        %v8692 = vpack.c.bf16 %v8451, %v8447
        %v8693 = vpack.c.bf16 %v8459, %v8455
        %v8694 = vpack.c.bf16 %v8461, %v8457
        %v8695 = vpack.c.bf16 %v8469, %v8465
        %v8696 = vpack.c.bf16 %v8471, %v8467
        %v8697 = vpack.c.bf16 %v8479, %v8475
        %v8698 = vpack.c.bf16 %v8481, %v8477
        %v8699 = vpack.c.bf16 %v8489, %v8485
        %v8700 = vpack.c.bf16 %v8491, %v8487
        %v8701 = vpack.c.bf16 %v8499, %v8495
        %v8702 = vpack.c.bf16 %v8501, %v8497
        %v8703 = vpack.c.bf16 %v8509, %v8505
        %v8704 = vpack.c.bf16 %v8511, %v8507
        %v8705 = vpack.c.bf16 %v8519, %v8515
        %v8706 = vpack.c.bf16 %v8521, %v8517
        %v8707 = vpack.c.bf16 %v8529, %v8525
        %v8708 = vpack.c.bf16 %v8531, %v8527
        %v8709 = vpack.c.bf16 %v8539, %v8535
        %v8710 = vpack.c.bf16 %v8541, %v8537
        %v8711 = vpack.c.bf16 %v8549, %v8545
        %v8712 = vpack.c.bf16 %v8551, %v8547
        %v8713 = vpack.c.bf16 %v8559, %v8555
        %v8714 = vpack.c.bf16 %v8561, %v8557
        %v8715 = vpack.c.bf16 %v8569, %v8565
        %v8716 = vpack.c.bf16 %v8571, %v8567
        %v8717 = vpack.c.bf16 %v8579, %v8575
        %v8718 = vpack.c.bf16 %v8581, %v8577
        %v8719 = vpack.c.bf16 %v8589, %v8585
        %v8720 = vpack.c.bf16 %v8591, %v8587
        %v8721 = vpack.c.bf16 %v8599, %v8595
        %v8722 = vpack.c.bf16 %v8601, %v8597
        %v8723 = vpack.c.bf16 %v8609, %v8605
        %v8724 = vpack.c.bf16 %v8611, %v8607
        %v8725 = vpack.c.bf16 %v8619, %v8615
        %v8726 = vpack.c.bf16 %v8621, %v8617
        %v8727 = vpack.c.bf16 %v8629, %v8625
        %v8728 = vpack.c.bf16 %v8631, %v8627
        %v8729 = vpack.c.bf16 %v8639, %v8635
        %v8730 = vpack.c.bf16 %v8641, %v8637
        %v8731 = vpack.c.bf16 %v8649, %v8645
        %v8732 = vpack.c.bf16 %v8651, %v8647
        %v8733 = vpack.c.bf16 %v8659, %v8655
        %v8734 = vpack.c.bf16 %v8661, %v8657
        %v8735 = vpack.c.bf16 %v8669, %v8665
        %v8736 = vpack.c.bf16 %v8671, %v8667
        %v8737 = vmul.bf16 %v8673, %v2303
        %v8738 = vmul.bf16 %v8674, %v2304
        %v8739 = vmul.bf16 %v8675, %v2305
        %v8740 = vmul.bf16 %v8676, %v2306
        %v8741 = vmul.bf16 %v8677, %v2307
        %v8742 = vmul.bf16 %v8678, %v2308
        %v8743 = vmul.bf16 %v8679, %v2309
        %v8744 = vmul.bf16 %v8680, %v2310
        %v8745 = vmul.bf16 %v8681, %v2311
        %v8746 = vmul.bf16 %v8682, %v2312
        %v8747 = vmul.bf16 %v8683, %v2313
        %v8748 = vmul.bf16 %v8684, %v2314
        %v8749 = vmul.bf16 %v8685, %v2315
        %v8750 = vmul.bf16 %v8686, %v2316
        %v8751 = vmul.bf16 %v8687, %v2317
        %v8752 = vmul.bf16 %v8688, %v2318
        %v8753 = vmul.bf16 %v8689, %v2319
        %v8754 = vmul.bf16 %v8690, %v2320
        %v8755 = vmul.bf16 %v8691, %v2321
        %v8756 = vmul.bf16 %v8692, %v2322
        %v8757 = vmul.bf16 %v8693, %v2323
        %v8758 = vmul.bf16 %v8694, %v2324
        %v8759 = vmul.bf16 %v8695, %v2325
        %v8760 = vmul.bf16 %v8696, %v2326
        %v8761 = vmul.bf16 %v8697, %v2327
        %v8762 = vmul.bf16 %v8698, %v2328
        %v8763 = vmul.bf16 %v8699, %v2329
        %v8764 = vmul.bf16 %v8700, %v2330
        %v8765 = vmul.bf16 %v8701, %v2331
        %v8766 = vmul.bf16 %v8702, %v2332
        %v8767 = vmul.bf16 %v8703, %v2333
        %v8768 = vmul.bf16 %v8704, %v2334
        %v8769 = vmul.bf16 %v8705, %v2335
        %v8770 = vmul.bf16 %v8706, %v2336
        %v8771 = vmul.bf16 %v8707, %v2337
        %v8772 = vmul.bf16 %v8708, %v2338
        %v8773 = vmul.bf16 %v8709, %v2339
        %v8774 = vmul.bf16 %v8710, %v2340
        %v8775 = vmul.bf16 %v8711, %v2341
        %v8776 = vmul.bf16 %v8712, %v2342
        %v8777 = vmul.bf16 %v8713, %v2343
        %v8778 = vmul.bf16 %v8714, %v2344
        %v8779 = vmul.bf16 %v8715, %v2345
        %v8780 = vmul.bf16 %v8716, %v2346
        %v8781 = vmul.bf16 %v8717, %v2347
        %v8782 = vmul.bf16 %v8718, %v2348
        %v8783 = vmul.bf16 %v8719, %v2349
        %v8784 = vmul.bf16 %v8720, %v2350
        %v8785 = vmul.bf16 %v8721, %v2351
        %v8786 = vmul.bf16 %v8722, %v2352
        %v8787 = vmul.bf16 %v8723, %v2353
        %v8788 = vmul.bf16 %v8724, %v2354
        %v8789 = vmul.bf16 %v8725, %v2355
        %v8790 = vmul.bf16 %v8726, %v2356
        %v8791 = vmul.bf16 %v8727, %v2357
        %v8792 = vmul.bf16 %v8728, %v2358
        %v8793 = vmul.bf16 %v8729, %v2359
        %v8794 = vmul.bf16 %v8730, %v2360
        %v8795 = vmul.bf16 %v8731, %v2361
        %v8796 = vmul.bf16 %v8732, %v2362
        %v8797 = vmul.bf16 %v8733, %v2363
        %v8798 = vmul.bf16 %v8734, %v2364
        %v8799 = vmul.bf16 %v8735, %v2365
        %v8800 = vmul.bf16 %v8736, %v2366
        %v8801 = vunpack.c.l.bf16 %v8737
        %v8802 = vunpack.c.l.bf16 %v8738
        %v8803 = vunpack.c.h.bf16 %v8737
        %v8804 = vunpack.c.h.bf16 %v8738
        %v8805 = vunpack.c.l.bf16 %v8739
        %v8806 = vunpack.c.l.bf16 %v8740
        %v8807 = vunpack.c.h.bf16 %v8739
        %v8808 = vunpack.c.h.bf16 %v8740
        %v8809 = vunpack.c.l.bf16 %v8741
        %v8810 = vunpack.c.l.bf16 %v8742
        %v8811 = vunpack.c.h.bf16 %v8741
        %v8812 = vunpack.c.h.bf16 %v8742
        %v8813 = vunpack.c.l.bf16 %v8743
        %v8814 = vunpack.c.l.bf16 %v8744
        %v8815 = vunpack.c.h.bf16 %v8743
        %v8816 = vunpack.c.h.bf16 %v8744
        %v8817 = vunpack.c.l.bf16 %v8745
        %v8818 = vunpack.c.l.bf16 %v8746
        %v8819 = vunpack.c.h.bf16 %v8745
        %v8820 = vunpack.c.h.bf16 %v8746
        %v8821 = vunpack.c.l.bf16 %v8747
        %v8822 = vunpack.c.l.bf16 %v8748
        %v8823 = vunpack.c.h.bf16 %v8747
        %v8824 = vunpack.c.h.bf16 %v8748
        %v8825 = vunpack.c.l.bf16 %v8749
        %v8826 = vunpack.c.l.bf16 %v8750
        %v8827 = vunpack.c.h.bf16 %v8749
        %v8828 = vunpack.c.h.bf16 %v8750
        %v8829 = vunpack.c.l.bf16 %v8751
        %v8830 = vunpack.c.l.bf16 %v8752
        %v8831 = vunpack.c.h.bf16 %v8751
        %v8832 = vunpack.c.h.bf16 %v8752
        %v8833 = vunpack.c.l.bf16 %v8753
        %v8834 = vunpack.c.l.bf16 %v8754
        %v8835 = vunpack.c.h.bf16 %v8753
        %v8836 = vunpack.c.h.bf16 %v8754
        %v8837 = vunpack.c.l.bf16 %v8755
        %v8838 = vunpack.c.l.bf16 %v8756
        %v8839 = vunpack.c.h.bf16 %v8755
        %v8840 = vunpack.c.h.bf16 %v8756
        %v8841 = vunpack.c.l.bf16 %v8757
        %v8842 = vunpack.c.l.bf16 %v8758
        %v8843 = vunpack.c.h.bf16 %v8757
        %v8844 = vunpack.c.h.bf16 %v8758
        %v8845 = vunpack.c.l.bf16 %v8759
        %v8846 = vunpack.c.l.bf16 %v8760
        %v8847 = vunpack.c.h.bf16 %v8759
        %v8848 = vunpack.c.h.bf16 %v8760
        %v8849 = vunpack.c.l.bf16 %v8761
        %v8850 = vunpack.c.l.bf16 %v8762
        %v8851 = vunpack.c.h.bf16 %v8761
        %v8852 = vunpack.c.h.bf16 %v8762
        %v8853 = vunpack.c.l.bf16 %v8763
        %v8854 = vunpack.c.l.bf16 %v8764
        %v8855 = vunpack.c.h.bf16 %v8763
        %v8856 = vunpack.c.h.bf16 %v8764
        %v8857 = vunpack.c.l.bf16 %v8765
        %v8858 = vunpack.c.l.bf16 %v8766
        %v8859 = vunpack.c.h.bf16 %v8765
        %v8860 = vunpack.c.h.bf16 %v8766
        %v8861 = vunpack.c.l.bf16 %v8767
        %v8862 = vunpack.c.l.bf16 %v8768
        %v8863 = vunpack.c.h.bf16 %v8767
        %v8864 = vunpack.c.h.bf16 %v8768
        %v8865 = vunpack.c.l.bf16 %v8769
        %v8866 = vunpack.c.l.bf16 %v8770
        %v8867 = vunpack.c.h.bf16 %v8769
        %v8868 = vunpack.c.h.bf16 %v8770
        %v8869 = vunpack.c.l.bf16 %v8771
        %v8870 = vunpack.c.l.bf16 %v8772
        %v8871 = vunpack.c.h.bf16 %v8771
        %v8872 = vunpack.c.h.bf16 %v8772
        %v8873 = vunpack.c.l.bf16 %v8773
        %v8874 = vunpack.c.l.bf16 %v8774
        %v8875 = vunpack.c.h.bf16 %v8773
        %v8876 = vunpack.c.h.bf16 %v8774
        %v8877 = vunpack.c.l.bf16 %v8775
        %v8878 = vunpack.c.l.bf16 %v8776
        %v8879 = vunpack.c.h.bf16 %v8775
        %v8880 = vunpack.c.h.bf16 %v8776
        %v8881 = vunpack.c.l.bf16 %v8777
        %v8882 = vunpack.c.l.bf16 %v8778
        %v8883 = vunpack.c.h.bf16 %v8777
        %v8884 = vunpack.c.h.bf16 %v8778
        %v8885 = vunpack.c.l.bf16 %v8779
        %v8886 = vunpack.c.l.bf16 %v8780
        %v8887 = vunpack.c.h.bf16 %v8779
        %v8888 = vunpack.c.h.bf16 %v8780
        %v8889 = vunpack.c.l.bf16 %v8781
        %v8890 = vunpack.c.l.bf16 %v8782
        %v8891 = vunpack.c.h.bf16 %v8781
        %v8892 = vunpack.c.h.bf16 %v8782
        %v8893 = vunpack.c.l.bf16 %v8783
        %v8894 = vunpack.c.l.bf16 %v8784
        %v8895 = vunpack.c.h.bf16 %v8783
        %v8896 = vunpack.c.h.bf16 %v8784
        %v8897 = vunpack.c.l.bf16 %v8785
        %v8898 = vunpack.c.l.bf16 %v8786
        %v8899 = vunpack.c.h.bf16 %v8785
        %v8900 = vunpack.c.h.bf16 %v8786
        %v8901 = vunpack.c.l.bf16 %v8787
        %v8902 = vunpack.c.l.bf16 %v8788
        %v8903 = vunpack.c.h.bf16 %v8787
        %v8904 = vunpack.c.h.bf16 %v8788
        %v8905 = vunpack.c.l.bf16 %v8789
        %v8906 = vunpack.c.l.bf16 %v8790
        %v8907 = vunpack.c.h.bf16 %v8789
        %v8908 = vunpack.c.h.bf16 %v8790
        %v8909 = vunpack.c.l.bf16 %v8791
        %v8910 = vunpack.c.l.bf16 %v8792
        %v8911 = vunpack.c.h.bf16 %v8791
        %v8912 = vunpack.c.h.bf16 %v8792
        %v8913 = vunpack.c.l.bf16 %v8793
        %v8914 = vunpack.c.l.bf16 %v8794
        %v8915 = vunpack.c.h.bf16 %v8793
        %v8916 = vunpack.c.h.bf16 %v8794
        %v8917 = vunpack.c.l.bf16 %v8795
        %v8918 = vunpack.c.l.bf16 %v8796
        %v8919 = vunpack.c.h.bf16 %v8795
        %v8920 = vunpack.c.h.bf16 %v8796
        %v8921 = vunpack.c.l.bf16 %v8797
        %v8922 = vunpack.c.l.bf16 %v8798
        %v8923 = vunpack.c.h.bf16 %v8797
        %v8924 = vunpack.c.h.bf16 %v8798
        %v8925 = vunpack.c.l.bf16 %v8799
        %v8926 = vunpack.c.l.bf16 %v8800
        %v8927 = vunpack.c.h.bf16 %v8799
        %v8928 = vunpack.c.h.bf16 %v8800
        %v8929 = vadd.f32 %v8801, %v8817
        %v8930 = vadd.f32 %v8929, %v8833
        %v8931 = vadd.f32 %v8930, %v8849
        %v8932 = vadd.f32 %v8931, %v8865
        %v8933 = vadd.f32 %v8932, %v8881
        %v8934 = vadd.f32 %v8933, %v8897
        %v8935 = vadd.f32 %v8934, %v8913
        %v8936 = vadd.f32 %v8802, %v8818
        %v8937 = vadd.f32 %v8936, %v8834
        %v8938 = vadd.f32 %v8937, %v8850
        %v8939 = vadd.f32 %v8938, %v8866
        %v8940 = vadd.f32 %v8939, %v8882
        %v8941 = vadd.f32 %v8940, %v8898
        %v8942 = vadd.f32 %v8941, %v8914
        %v8943 = vadd.f32 %v8803, %v8819
        %v8944 = vadd.f32 %v8943, %v8835
        %v8945 = vadd.f32 %v8944, %v8851
        %v8946 = vadd.f32 %v8945, %v8867
        %v8947 = vadd.f32 %v8946, %v8883
        %v8948 = vadd.f32 %v8947, %v8899
        %v8949 = vadd.f32 %v8948, %v8915
        %v8950 = vadd.f32 %v8804, %v8820
        %v8951 = vadd.f32 %v8950, %v8836
        %v8952 = vadd.f32 %v8951, %v8852
        %v8953 = vadd.f32 %v8952, %v8868
        %v8954 = vadd.f32 %v8953, %v8884
        %v8955 = vadd.f32 %v8954, %v8900
        %v8956 = vadd.f32 %v8955, %v8916
        %v8957 = vadd.f32 %v8805, %v8821
        %v8958 = vadd.f32 %v8957, %v8837
        %v8959 = vadd.f32 %v8958, %v8853
        %v8960 = vadd.f32 %v8959, %v8869
        %v8961 = vadd.f32 %v8960, %v8885
        %v8962 = vadd.f32 %v8961, %v8901
        %v8963 = vadd.f32 %v8962, %v8917
        %v8964 = vadd.f32 %v8806, %v8822
        %v8965 = vadd.f32 %v8964, %v8838
        %v8966 = vadd.f32 %v8965, %v8854
        %v8967 = vadd.f32 %v8966, %v8870
        %v8968 = vadd.f32 %v8967, %v8886
        %v8969 = vadd.f32 %v8968, %v8902
        %v8970 = vadd.f32 %v8969, %v8918
        %v8971 = vadd.f32 %v8807, %v8823
        %v8972 = vadd.f32 %v8971, %v8839
        %v8973 = vadd.f32 %v8972, %v8855
        %v8974 = vadd.f32 %v8973, %v8871
        %v8975 = vadd.f32 %v8974, %v8887
        %v8976 = vadd.f32 %v8975, %v8903
        %v8977 = vadd.f32 %v8976, %v8919
        %v8978 = vadd.f32 %v8808, %v8824
        %v8979 = vadd.f32 %v8978, %v8840
        %v8980 = vadd.f32 %v8979, %v8856
        %v8981 = vadd.f32 %v8980, %v8872
        %v8982 = vadd.f32 %v8981, %v8888
        %v8983 = vadd.f32 %v8982, %v8904
        %v8984 = vadd.f32 %v8983, %v8920
        %v8985 = vadd.f32 %v8809, %v8825
        %v8986 = vadd.f32 %v8985, %v8841
        %v8987 = vadd.f32 %v8986, %v8857
        %v8988 = vadd.f32 %v8987, %v8873
        %v8989 = vadd.f32 %v8988, %v8889
        %v8990 = vadd.f32 %v8989, %v8905
        %v8991 = vadd.f32 %v8990, %v8921
        %v8992 = vadd.f32 %v8810, %v8826
        %v8993 = vadd.f32 %v8992, %v8842
        %v8994 = vadd.f32 %v8993, %v8858
        %v8995 = vadd.f32 %v8994, %v8874
        %v8996 = vadd.f32 %v8995, %v8890
        %v8997 = vadd.f32 %v8996, %v8906
        %v8998 = vadd.f32 %v8997, %v8922
        %v8999 = vadd.f32 %v8811, %v8827
        %v9000 = vadd.f32 %v8999, %v8843
        %v9001 = vadd.f32 %v9000, %v8859
        %v9002 = vadd.f32 %v9001, %v8875
        %v9003 = vadd.f32 %v9002, %v8891
        %v9004 = vadd.f32 %v9003, %v8907
        %v9005 = vadd.f32 %v9004, %v8923
        %v9006 = vadd.f32 %v8812, %v8828
        %v9007 = vadd.f32 %v9006, %v8844
        %v9008 = vadd.f32 %v9007, %v8860
        %v9009 = vadd.f32 %v9008, %v8876
        %v9010 = vadd.f32 %v9009, %v8892
        %v9011 = vadd.f32 %v9010, %v8908
        %v9012 = vadd.f32 %v9011, %v8924
        %v9013 = vadd.f32 %v8813, %v8829
        %v9014 = vadd.f32 %v9013, %v8845
        %v9015 = vadd.f32 %v9014, %v8861
        %v9016 = vadd.f32 %v9015, %v8877
        %v9017 = vadd.f32 %v9016, %v8893
        %v9018 = vadd.f32 %v9017, %v8909
        %v9019 = vadd.f32 %v9018, %v8925
        %v9020 = vadd.f32 %v8814, %v8830
        %v9021 = vadd.f32 %v9020, %v8846
        %v9022 = vadd.f32 %v9021, %v8862
        %v9023 = vadd.f32 %v9022, %v8878
        %v9024 = vadd.f32 %v9023, %v8894
        %v9025 = vadd.f32 %v9024, %v8910
        %v9026 = vadd.f32 %v9025, %v8926
        %v9027 = vadd.f32 %v8815, %v8831
        %v9028 = vadd.f32 %v9027, %v8847
        %v9029 = vadd.f32 %v9028, %v8863
        %v9030 = vadd.f32 %v9029, %v8879
        %v9031 = vadd.f32 %v9030, %v8895
        %v9032 = vadd.f32 %v9031, %v8911
        %v9033 = vadd.f32 %v9032, %v8927
        %v9034 = vadd.f32 %v8816, %v8832
        %v9035 = vadd.f32 %v9034, %v8848
        %v9036 = vadd.f32 %v9035, %v8864
        %v9037 = vadd.f32 %v9036, %v8880
        %v9038 = vadd.f32 %v9037, %v8896
        %v9039 = vadd.f32 %v9038, %v8912
        %v9040 = vadd.f32 %v9039, %v8928
        %v9041 = vpack.c.bf16 %v8949, %v8935
        %v9042 = vpack.c.bf16 %v8956, %v8942
        %v9043 = vpack.c.bf16 %v8977, %v8963
        %v9044 = vpack.c.bf16 %v8984, %v8970
        %v9045 = vpack.c.bf16 %v9005, %v8991
        %v9046 = vpack.c.bf16 %v9012, %v8998
        %v9047 = vpack.c.bf16 %v9033, %v9019
        %v9048 = vpack.c.bf16 %v9040, %v9026
        %9049 = vmatprep.subr.bf16.mxu0 %v4565
        %9050 = vmatpush1.bf16.msra.mxu0 %v4564
        %9051 = vmatprep.subr.bf16.mxu0 %v4563
        %9052 = vmatpush1.bf16.msra.mxu0 %v4562
        %9053 = vmatprep.subr.bf16.mxu0 %v4561
        %9054 = vmatpush1.bf16.msra.mxu0 %v4560
        %9055 = vmatprep.subr.bf16.mxu0 %v4559
        %9056 = vmatpush1.bf16.msra.mxu0 %v4558
        %9057 = vmatprep.subr.bf16.mxu0 %v4557
        %9058 = vmatpush1.bf16.msra.mxu0 %v4556
        %9059 = vmatprep.subr.bf16.mxu0 %v4555
        %9060 = vmatpush1.bf16.msra.mxu0 %v4554
        %9061 = vmatprep.subr.bf16.mxu0 %v4553
        %9062 = vmatpush1.bf16.msra.mxu0 %v4552
        %9063 = vmatprep.subr.bf16.mxu0 %v4551
        %9064 = vmatpush1.bf16.msra.mxu0 %v4550
        %9065 = vmatprep.subr.bf16.mxu0 %v4581
        %9066 = vmatpush2.bf16.msra.mxu0 %v4580
        %9067 = vmatprep.subr.bf16.mxu0 %v4579
        %9068 = vmatpush2.bf16.msra.mxu0 %v4578
        %9069 = vmatprep.subr.bf16.mxu0 %v4577
        %9070 = vmatpush2.bf16.msra.mxu0 %v4576
        %9071 = vmatprep.subr.bf16.mxu0 %v4575
        %9072 = vmatpush2.bf16.msra.mxu0 %v4574
        %9073 = vmatprep.subr.bf16.mxu0 %v4573
        %9074 = vmatpush2.bf16.msra.mxu0 %v4572
        %9075 = vmatprep.subr.bf16.mxu0 %v4571
        %9076 = vmatpush2.bf16.msra.mxu0 %v4570
        %9077 = vmatprep.subr.bf16.mxu0 %v4569
        %9078 = vmatpush2.bf16.msra.mxu0 %v4568
        %9079 = vmatprep.subr.bf16.mxu0 %v4567
        %9080 = vmatpush2.bf16.msra.mxu0 %v4566
        %9081 = vmatprep.mubr.bf16.mxu0 %v9042
        %9082 = vmatmul.mubr.bf16.gmra.mxu0 %v9041
        %v9083 = vpop.f32.mrf.mxu0
        %v9084 = vadd.f32 %v4447, %v9083
        %v9085 = vpop.f32.mrf.mxu0
        %v9086 = vadd.f32 %v4451, %v9085
        %v9087 = vpop.f32.mrf.mxu0
        %v9088 = vadd.f32 %v4447, %v9087
        %v9089 = vpop.f32.mrf.mxu0
        %v9090 = vadd.f32 %v4451, %v9089
        %9091 = vmatprep.mubr.bf16.mxu0 %v9044
        %9092 = vmatmul.mubr.bf16.gmra.mxu0 %v9043
        %v9093 = vpop.f32.mrf.mxu0
        %v9094 = vadd.f32 %v4447, %v9093
        %v9095 = vpop.f32.mrf.mxu0
        %v9096 = vadd.f32 %v4451, %v9095
        %v9097 = vpop.f32.mrf.mxu0
        %v9098 = vadd.f32 %v4447, %v9097
        %v9099 = vpop.f32.mrf.mxu0
        %v9100 = vadd.f32 %v4451, %v9099
        %9101 = vmatprep.mubr.bf16.mxu0 %v9046
        %9102 = vmatmul.mubr.bf16.gmra.mxu0 %v9045
        %v9103 = vpop.f32.mrf.mxu0
        %v9104 = vadd.f32 %v4447, %v9103
        %v9105 = vpop.f32.mrf.mxu0
        %v9106 = vadd.f32 %v4451, %v9105
        %v9107 = vpop.f32.mrf.mxu0
        %v9108 = vadd.f32 %v4447, %v9107
        %v9109 = vpop.f32.mrf.mxu0
        %v9110 = vadd.f32 %v4451, %v9109
        %9111 = vmatprep.mubr.bf16.mxu0 %v9048
        %9112 = vmatmul.mubr.bf16.gmra.mxu0 %v9047
        %v9113 = vpop.f32.mrf.mxu0
        %v9114 = vadd.f32 %v4447, %v9113
        %v9115 = vpop.f32.mrf.mxu0
        %v9116 = vadd.f32 %v4451, %v9115
        %v9117 = vpop.f32.mrf.mxu0
        %v9118 = vadd.f32 %v4447, %v9117
        %v9119 = vpop.f32.mrf.mxu0
        %v9120 = vadd.f32 %v4451, %v9119
        %9121 = vdwg.mxu0
        %v9122 = vpack.c.bf16 %v9088, %v9084
        %v9123 = vpack.c.bf16 %v9090, %v9086
        %v9124 = vpack.c.bf16 %v9098, %v9094
        %v9125 = vpack.c.bf16 %v9100, %v9096
        %v9126 = vpack.c.bf16 %v9108, %v9104
        %v9127 = vpack.c.bf16 %v9110, %v9106
        %v9128 = vpack.c.bf16 %v9118, %v9114
        %v9129 = vpack.c.bf16 %v9120, %v9116
        %v9130 = vmul.bf16 %v9122, %v2303
        %v9131 = vmul.bf16 %v9123, %v2304
        %v9132 = vmul.bf16 %v9124, %v2305
        %v9133 = vmul.bf16 %v9125, %v2306
        %v9134 = vmul.bf16 %v9126, %v2307
        %v9135 = vmul.bf16 %v9127, %v2308
        %v9136 = vmul.bf16 %v9128, %v2309
        %v9137 = vmul.bf16 %v9129, %v2310
        %v9138 = vmul.bf16 %v9122, %v2311
        %v9139 = vmul.bf16 %v9123, %v2312
        %v9140 = vmul.bf16 %v9124, %v2313
        %v9141 = vmul.bf16 %v9125, %v2314
        %v9142 = vmul.bf16 %v9126, %v2315
        %v9143 = vmul.bf16 %v9127, %v2316
        %v9144 = vmul.bf16 %v9128, %v2317
        %v9145 = vmul.bf16 %v9129, %v2318
        %v9146 = vmul.bf16 %v9122, %v2319
        %v9147 = vmul.bf16 %v9123, %v2320
        %v9148 = vmul.bf16 %v9124, %v2321
        %v9149 = vmul.bf16 %v9125, %v2322
        %v9150 = vmul.bf16 %v9126, %v2323
        %v9151 = vmul.bf16 %v9127, %v2324
        %v9152 = vmul.bf16 %v9128, %v2325
        %v9153 = vmul.bf16 %v9129, %v2326
        %v9154 = vmul.bf16 %v9122, %v2327
        %v9155 = vmul.bf16 %v9123, %v2328
        %v9156 = vmul.bf16 %v9124, %v2329
        %v9157 = vmul.bf16 %v9125, %v2330
        %v9158 = vmul.bf16 %v9126, %v2331
        %v9159 = vmul.bf16 %v9127, %v2332
        %v9160 = vmul.bf16 %v9128, %v2333
        %v9161 = vmul.bf16 %v9129, %v2334
        %v9162 = vmul.bf16 %v9122, %v2335
        %v9163 = vmul.bf16 %v9123, %v2336
        %v9164 = vmul.bf16 %v9124, %v2337
        %v9165 = vmul.bf16 %v9125, %v2338
        %v9166 = vmul.bf16 %v9126, %v2339
        %v9167 = vmul.bf16 %v9127, %v2340
        %v9168 = vmul.bf16 %v9128, %v2341
        %v9169 = vmul.bf16 %v9129, %v2342
        %v9170 = vmul.bf16 %v9122, %v2343
        %v9171 = vmul.bf16 %v9123, %v2344
        %v9172 = vmul.bf16 %v9124, %v2345
        %v9173 = vmul.bf16 %v9125, %v2346
        %v9174 = vmul.bf16 %v9126, %v2347
        %v9175 = vmul.bf16 %v9127, %v2348
        %v9176 = vmul.bf16 %v9128, %v2349
        %v9177 = vmul.bf16 %v9129, %v2350
        %v9178 = vmul.bf16 %v9122, %v2351
        %v9179 = vmul.bf16 %v9123, %v2352
        %v9180 = vmul.bf16 %v9124, %v2353
        %v9181 = vmul.bf16 %v9125, %v2354
        %v9182 = vmul.bf16 %v9126, %v2355
        %v9183 = vmul.bf16 %v9127, %v2356
        %v9184 = vmul.bf16 %v9128, %v2357
        %v9185 = vmul.bf16 %v9129, %v2358
        %v9186 = vmul.bf16 %v9122, %v2359
        %v9187 = vmul.bf16 %v9123, %v2360
        %v9188 = vmul.bf16 %v9124, %v2361
        %v9189 = vmul.bf16 %v9125, %v2362
        %v9190 = vmul.bf16 %v9126, %v2363
        %v9191 = vmul.bf16 %v9127, %v2364
        %v9192 = vmul.bf16 %v9128, %v2365
        %v9193 = vmul.bf16 %v9129, %v2366
        %9194 = vmatprep.subr.bf16.mxu0 0
        %9195 = vmatpush1.bf16.xpose.msra.mxu0 0
        %9196 = vmatprep.subr.bf16.mxu0 0
        %9197 = vmatpush1.bf16.xpose.msra.mxu0 0
        %9198 = vmatprep.subr.bf16.mxu0 0
        %9199 = vmatpush1.bf16.xpose.msra.mxu0 0
        %9200 = vmatprep.subr.bf16.mxu0 0
        %9201 = vmatpush1.bf16.xpose.msra.mxu0 0
        %9202 = vmatprep.subr.bf16.mxu0 %v1745
        %9203 = vmatpush1.bf16.xpose.msra.mxu0 %v1744
        %9204 = vmatprep.subr.bf16.mxu0 %v1743
        %9205 = vmatpush1.bf16.xpose.msra.mxu0 %v1742
        %9206 = vmatprep.subr.bf16.mxu0 %v1741
        %9207 = vmatpush1.bf16.xpose.msra.mxu0 %v1740
        %9208 = vmatprep.subr.bf16.mxu0 %v1739
        %9209 = vmatpush1.bf16.xpose.msra.mxu0 %v1738
        %9210 = vmatprep.subr.bf16.mxu0 0
        %9211 = vmatpush2.bf16.xpose.msra.mxu0 0
        %9212 = vmatprep.subr.bf16.mxu0 0
        %9213 = vmatpush2.bf16.xpose.msra.mxu0 0
        %9214 = vmatprep.subr.bf16.mxu0 0
        %9215 = vmatpush2.bf16.xpose.msra.mxu0 0
        %9216 = vmatprep.subr.bf16.mxu0 0
        %9217 = vmatpush2.bf16.xpose.msra.mxu0 0
        %9218 = vmatprep.subr.bf16.mxu0 0
        %9219 = vmatpush2.bf16.xpose.msra.mxu0 0
        %9220 = vmatprep.subr.bf16.mxu0 0
        %9221 = vmatpush2.bf16.xpose.msra.mxu0 0
        %9222 = vmatprep.subr.bf16.mxu0 0
        %9223 = vmatpush2.bf16.xpose.msra.mxu0 0
        %9224 = vmatprep.subr.bf16.mxu0 0
        %9225 = vmatpush2.bf16.xpose.msra.mxu0 0
        %9226 = vmatprep.mubr.bf16.mxu0 %v9131
        %9227 = vmatmul.mubr.bf16.gmra.mxu0 %v9130
        %v9228 = vpop.f32.mrf.mxu0
        %v9229 = vadd.f32 %v4823, %v9228
        %v9230 = vpop.f32.mrf.mxu0
        %v9231 = vpop.f32.mrf.mxu0
        %v9232 = vadd.f32 %v4824, %v9231
        %v9233 = vpop.f32.mrf.mxu0
        %9234 = vmatprep.mubr.bf16.mxu0 %v9133
        %9235 = vmatmul.mubr.bf16.gmra.mxu0 %v9132
        %v9236 = vpop.f32.mrf.mxu0
        %v9237 = vadd.f32 %v4825, %v9236
        %v9238 = vpop.f32.mrf.mxu0
        %v9239 = vpop.f32.mrf.mxu0
        %v9240 = vadd.f32 %v4826, %v9239
        %v9241 = vpop.f32.mrf.mxu0
        %9242 = vmatprep.mubr.bf16.mxu0 %v9135
        %9243 = vmatmul.mubr.bf16.gmra.mxu0 %v9134
        %v9244 = vpop.f32.mrf.mxu0
        %v9245 = vadd.f32 %v4827, %v9244
        %v9246 = vpop.f32.mrf.mxu0
        %v9247 = vpop.f32.mrf.mxu0
        %v9248 = vadd.f32 %v4828, %v9247
        %v9249 = vpop.f32.mrf.mxu0
        %9250 = vmatprep.mubr.bf16.mxu0 %v9137
        %9251 = vmatmul.mubr.bf16.gmra.mxu0 %v9136
        %v9252 = vpop.f32.mrf.mxu0
        %v9253 = vadd.f32 %v4829, %v9252
        %v9254 = vpop.f32.mrf.mxu0
        %v9255 = vpop.f32.mrf.mxu0
        %v9256 = vadd.f32 %v4830, %v9255
        %v9257 = vpop.f32.mrf.mxu0
        %9258 = vmatprep.mubr.bf16.mxu0 %v9139
        %9259 = vmatmul.mubr.bf16.gmra.mxu0 %v9138
        %v9260 = vpop.f32.mrf.mxu0
        %v9261 = vadd.f32 %v4831, %v9260
        %v9262 = vpop.f32.mrf.mxu0
        %v9263 = vpop.f32.mrf.mxu0
        %v9264 = vadd.f32 %v4832, %v9263
        %v9265 = vpop.f32.mrf.mxu0
        %9266 = vmatprep.mubr.bf16.mxu0 %v9141
        %9267 = vmatmul.mubr.bf16.gmra.mxu0 %v9140
        %v9268 = vpop.f32.mrf.mxu0
        %v9269 = vadd.f32 %v4833, %v9268
        %v9270 = vpop.f32.mrf.mxu0
        %v9271 = vpop.f32.mrf.mxu0
        %v9272 = vadd.f32 %v4834, %v9271
        %v9273 = vpop.f32.mrf.mxu0
        %9274 = vmatprep.mubr.bf16.mxu0 %v9143
        %9275 = vmatmul.mubr.bf16.gmra.mxu0 %v9142
        %v9276 = vpop.f32.mrf.mxu0
        %v9277 = vadd.f32 %v4835, %v9276
        %v9278 = vpop.f32.mrf.mxu0
        %v9279 = vpop.f32.mrf.mxu0
        %v9280 = vadd.f32 %v4836, %v9279
        %v9281 = vpop.f32.mrf.mxu0
        %9282 = vmatprep.mubr.bf16.mxu0 %v9145
        %9283 = vmatmul.mubr.bf16.gmra.mxu0 %v9144
        %v9284 = vpop.f32.mrf.mxu0
        %v9285 = vadd.f32 %v4837, %v9284
        %v9286 = vpop.f32.mrf.mxu0
        %v9287 = vpop.f32.mrf.mxu0
        %v9288 = vadd.f32 %v4838, %v9287
        %v9289 = vpop.f32.mrf.mxu0
        %9290 = vmatprep.mubr.bf16.mxu0 %v9147
        %9291 = vmatmul.mubr.bf16.gmra.mxu0 %v9146
        %v9292 = vpop.f32.mrf.mxu0
        %v9293 = vadd.f32 %v4839, %v9292
        %v9294 = vpop.f32.mrf.mxu0
        %v9295 = vpop.f32.mrf.mxu0
        %v9296 = vadd.f32 %v4840, %v9295
        %v9297 = vpop.f32.mrf.mxu0
        %9298 = vmatprep.mubr.bf16.mxu0 %v9149
        %9299 = vmatmul.mubr.bf16.gmra.mxu0 %v9148
        %v9300 = vpop.f32.mrf.mxu0
        %v9301 = vadd.f32 %v4841, %v9300
        %v9302 = vpop.f32.mrf.mxu0
        %v9303 = vpop.f32.mrf.mxu0
        %v9304 = vadd.f32 %v4842, %v9303
        %v9305 = vpop.f32.mrf.mxu0
        %9306 = vmatprep.mubr.bf16.mxu0 %v9151
        %9307 = vmatmul.mubr.bf16.gmra.mxu0 %v9150
        %v9308 = vpop.f32.mrf.mxu0
        %v9309 = vadd.f32 %v4843, %v9308
        %v9310 = vpop.f32.mrf.mxu0
        %v9311 = vpop.f32.mrf.mxu0
        %v9312 = vadd.f32 %v4844, %v9311
        %v9313 = vpop.f32.mrf.mxu0
        %9314 = vmatprep.mubr.bf16.mxu0 %v9153
        %9315 = vmatmul.mubr.bf16.gmra.mxu0 %v9152
        %v9316 = vpop.f32.mrf.mxu0
        %v9317 = vadd.f32 %v4845, %v9316
        %v9318 = vpop.f32.mrf.mxu0
        %v9319 = vpop.f32.mrf.mxu0
        %v9320 = vadd.f32 %v4846, %v9319
        %v9321 = vpop.f32.mrf.mxu0
        %9322 = vmatprep.mubr.bf16.mxu0 %v9155
        %9323 = vmatmul.mubr.bf16.gmra.mxu0 %v9154
        %v9324 = vpop.f32.mrf.mxu0
        %v9325 = vadd.f32 %v4847, %v9324
        %v9326 = vpop.f32.mrf.mxu0
        %v9327 = vpop.f32.mrf.mxu0
        %v9328 = vadd.f32 %v4848, %v9327
        %v9329 = vpop.f32.mrf.mxu0
        %9330 = vmatprep.mubr.bf16.mxu0 %v9157
        %9331 = vmatmul.mubr.bf16.gmra.mxu0 %v9156
        %v9332 = vpop.f32.mrf.mxu0
        %v9333 = vadd.f32 %v4849, %v9332
        %v9334 = vpop.f32.mrf.mxu0
        %v9335 = vpop.f32.mrf.mxu0
        %v9336 = vadd.f32 %v4850, %v9335
        %v9337 = vpop.f32.mrf.mxu0
        %9338 = vmatprep.mubr.bf16.mxu0 %v9159
        %9339 = vmatmul.mubr.bf16.gmra.mxu0 %v9158
        %v9340 = vpop.f32.mrf.mxu0
        %v9341 = vadd.f32 %v4851, %v9340
        %v9342 = vpop.f32.mrf.mxu0
        %v9343 = vpop.f32.mrf.mxu0
        %v9344 = vadd.f32 %v4852, %v9343
        %v9345 = vpop.f32.mrf.mxu0
        %9346 = vmatprep.mubr.bf16.mxu0 %v9161
        %9347 = vmatmul.mubr.bf16.gmra.mxu0 %v9160
        %v9348 = vpop.f32.mrf.mxu0
        %v9349 = vadd.f32 %v4853, %v9348
        %v9350 = vpop.f32.mrf.mxu0
        %v9351 = vpop.f32.mrf.mxu0
        %v9352 = vadd.f32 %v4854, %v9351
        %v9353 = vpop.f32.mrf.mxu0
        %9354 = vmatprep.mubr.bf16.mxu0 %v9163
        %9355 = vmatmul.mubr.bf16.gmra.mxu0 %v9162
        %v9356 = vpop.f32.mrf.mxu0
        %v9357 = vadd.f32 %v4855, %v9356
        %v9358 = vpop.f32.mrf.mxu0
        %v9359 = vpop.f32.mrf.mxu0
        %v9360 = vadd.f32 %v4856, %v9359
        %v9361 = vpop.f32.mrf.mxu0
        %9362 = vmatprep.mubr.bf16.mxu0 %v9165
        %9363 = vmatmul.mubr.bf16.gmra.mxu0 %v9164
        %v9364 = vpop.f32.mrf.mxu0
        %v9365 = vadd.f32 %v4857, %v9364
        %v9366 = vpop.f32.mrf.mxu0
        %v9367 = vpop.f32.mrf.mxu0
        %v9368 = vadd.f32 %v4858, %v9367
        %v9369 = vpop.f32.mrf.mxu0
        %9370 = vmatprep.mubr.bf16.mxu0 %v9167
        %9371 = vmatmul.mubr.bf16.gmra.mxu0 %v9166
        %v9372 = vpop.f32.mrf.mxu0
        %v9373 = vadd.f32 %v4859, %v9372
        %v9374 = vpop.f32.mrf.mxu0
        %v9375 = vpop.f32.mrf.mxu0
        %v9376 = vadd.f32 %v4860, %v9375
        %v9377 = vpop.f32.mrf.mxu0
        %9378 = vmatprep.mubr.bf16.mxu0 %v9169
        %9379 = vmatmul.mubr.bf16.gmra.mxu0 %v9168
        %v9380 = vpop.f32.mrf.mxu0
        %v9381 = vadd.f32 %v4861, %v9380
        %v9382 = vpop.f32.mrf.mxu0
        %v9383 = vpop.f32.mrf.mxu0
        %v9384 = vadd.f32 %v4862, %v9383
        %v9385 = vpop.f32.mrf.mxu0
        %9386 = vmatprep.mubr.bf16.mxu0 %v9171
        %9387 = vmatmul.mubr.bf16.gmra.mxu0 %v9170
        %v9388 = vpop.f32.mrf.mxu0
        %v9389 = vadd.f32 %v4863, %v9388
        %v9390 = vpop.f32.mrf.mxu0
        %v9391 = vpop.f32.mrf.mxu0
        %v9392 = vadd.f32 %v4864, %v9391
        %v9393 = vpop.f32.mrf.mxu0
        %9394 = vmatprep.mubr.bf16.mxu0 %v9173
        %9395 = vmatmul.mubr.bf16.gmra.mxu0 %v9172
        %v9396 = vpop.f32.mrf.mxu0
        %v9397 = vadd.f32 %v4865, %v9396
        %v9398 = vpop.f32.mrf.mxu0
        %v9399 = vpop.f32.mrf.mxu0
        %v9400 = vadd.f32 %v4866, %v9399
        %v9401 = vpop.f32.mrf.mxu0
        %9402 = vmatprep.mubr.bf16.mxu0 %v9175
        %9403 = vmatmul.mubr.bf16.gmra.mxu0 %v9174
        %v9404 = vpop.f32.mrf.mxu0
        %v9405 = vadd.f32 %v4867, %v9404
        %v9406 = vpop.f32.mrf.mxu0
        %v9407 = vpop.f32.mrf.mxu0
        %v9408 = vadd.f32 %v4868, %v9407
        %v9409 = vpop.f32.mrf.mxu0
        %9410 = vmatprep.mubr.bf16.mxu0 %v9177
        %9411 = vmatmul.mubr.bf16.gmra.mxu0 %v9176
        %v9412 = vpop.f32.mrf.mxu0
        %v9413 = vadd.f32 %v4869, %v9412
        %v9414 = vpop.f32.mrf.mxu0
        %v9415 = vpop.f32.mrf.mxu0
        %v9416 = vadd.f32 %v4870, %v9415
        %v9417 = vpop.f32.mrf.mxu0
        %9418 = vmatprep.mubr.bf16.mxu0 %v9179
        %9419 = vmatmul.mubr.bf16.gmra.mxu0 %v9178
        %v9420 = vpop.f32.mrf.mxu0
        %v9421 = vadd.f32 %v4871, %v9420
        %v9422 = vpop.f32.mrf.mxu0
        %v9423 = vpop.f32.mrf.mxu0
        %v9424 = vadd.f32 %v4872, %v9423
        %v9425 = vpop.f32.mrf.mxu0
        %9426 = vmatprep.mubr.bf16.mxu0 %v9181
        %9427 = vmatmul.mubr.bf16.gmra.mxu0 %v9180
        %v9428 = vpop.f32.mrf.mxu0
        %v9429 = vadd.f32 %v4873, %v9428
        %v9430 = vpop.f32.mrf.mxu0
        %v9431 = vpop.f32.mrf.mxu0
        %v9432 = vadd.f32 %v4874, %v9431
        %v9433 = vpop.f32.mrf.mxu0
        %9434 = vmatprep.mubr.bf16.mxu0 %v9183
        %9435 = vmatmul.mubr.bf16.gmra.mxu0 %v9182
        %v9436 = vpop.f32.mrf.mxu0
        %v9437 = vadd.f32 %v4875, %v9436
        %v9438 = vpop.f32.mrf.mxu0
        %v9439 = vpop.f32.mrf.mxu0
        %v9440 = vadd.f32 %v4876, %v9439
        %v9441 = vpop.f32.mrf.mxu0
        %9442 = vmatprep.mubr.bf16.mxu0 %v9185
        %9443 = vmatmul.mubr.bf16.gmra.mxu0 %v9184
        %v9444 = vpop.f32.mrf.mxu0
        %v9445 = vadd.f32 %v4877, %v9444
        %v9446 = vpop.f32.mrf.mxu0
        %v9447 = vpop.f32.mrf.mxu0
        %v9448 = vadd.f32 %v4878, %v9447
        %v9449 = vpop.f32.mrf.mxu0
        %9450 = vmatprep.mubr.bf16.mxu0 %v9187
        %9451 = vmatmul.mubr.bf16.gmra.mxu0 %v9186
        %v9452 = vpop.f32.mrf.mxu0
        %v9453 = vadd.f32 %v4879, %v9452
        %v9454 = vpop.f32.mrf.mxu0
        %v9455 = vpop.f32.mrf.mxu0
        %v9456 = vadd.f32 %v4880, %v9455
        %v9457 = vpop.f32.mrf.mxu0
        %9458 = vmatprep.mubr.bf16.mxu0 %v9189
        %9459 = vmatmul.mubr.bf16.gmra.mxu0 %v9188
        %v9460 = vpop.f32.mrf.mxu0
        %v9461 = vadd.f32 %v4881, %v9460
        %v9462 = vpop.f32.mrf.mxu0
        %v9463 = vpop.f32.mrf.mxu0
        %v9464 = vadd.f32 %v4882, %v9463
        %v9465 = vpop.f32.mrf.mxu0
        %9466 = vmatprep.mubr.bf16.mxu0 %v9191
        %9467 = vmatmul.mubr.bf16.gmra.mxu0 %v9190
        %v9468 = vpop.f32.mrf.mxu0
        %v9469 = vadd.f32 %v4883, %v9468
        %v9470 = vpop.f32.mrf.mxu0
        %v9471 = vpop.f32.mrf.mxu0
        %v9472 = vadd.f32 %v4884, %v9471
        %v9473 = vpop.f32.mrf.mxu0
        %9474 = vmatprep.mubr.bf16.mxu0 %v9193
        %9475 = vmatmul.mubr.bf16.gmra.mxu0 %v9192
        %v9476 = vpop.f32.mrf.mxu0
        %v9477 = vadd.f32 %v4885, %v9476
        %v9478 = vpop.f32.mrf.mxu0
        %v9479 = vpop.f32.mrf.mxu0
        %v9480 = vadd.f32 %v4886, %v9479
        %v9481 = vpop.f32.mrf.mxu0
        %9482 = vdwg.mxu0
        %v9483 = vsel %vm2848, %v9229, -inf
        %9484 = vmax.xlane.f32.xlu0 %v9483
        %v9485 = vpop.xlane.xlu0 %9484
        %v9486 = vsel %vm2848, %v9232, -inf
        %9487 = vmax.xlane.f32.xlu0 %v9486
        %v9488 = vpop.xlane.xlu0 %9487
        %v9489 = vsel %vm2848, %v9237, -inf
        %9490 = vmax.xlane.f32.xlu0 %v9489
        %v9491 = vpop.xlane.xlu0 %9490
        %v9492 = vsel %vm2848, %v9240, -inf
        %9493 = vmax.xlane.f32.xlu0 %v9492
        %v9494 = vpop.xlane.xlu0 %9493
        %v9495 = vsel %vm2848, %v9245, -inf
        %9496 = vmax.xlane.f32.xlu0 %v9495
        %v9497 = vpop.xlane.xlu0 %9496
        %v9498 = vsel %vm2848, %v9248, -inf
        %9499 = vmax.xlane.f32.xlu0 %v9498
        %v9500 = vpop.xlane.xlu0 %9499
        %v9501 = vsel %vm2848, %v9253, -inf
        %9502 = vmax.xlane.f32.xlu0 %v9501
        %v9503 = vpop.xlane.xlu0 %9502
        %v9504 = vsel %vm2848, %v9256, -inf
        %9505 = vmax.xlane.f32.xlu0 %v9504
        %v9506 = vpop.xlane.xlu0 %9505
        %v9507 = vsel %vm2848, %v9261, -inf
        %9508 = vmax.xlane.f32.xlu0 %v9507
        %v9509 = vpop.xlane.xlu0 %9508
        %v9510 = vsel %vm2848, %v9264, -inf
        %9511 = vmax.xlane.f32.xlu0 %v9510
        %v9512 = vpop.xlane.xlu0 %9511
        %v9513 = vsel %vm2848, %v9269, -inf
        %9514 = vmax.xlane.f32.xlu0 %v9513
        %v9515 = vpop.xlane.xlu0 %9514
        %v9516 = vsel %vm2848, %v9272, -inf
        %9517 = vmax.xlane.f32.xlu0 %v9516
        %v9518 = vpop.xlane.xlu0 %9517
        %v9519 = vsel %vm2848, %v9277, -inf
        %9520 = vmax.xlane.f32.xlu0 %v9519
        %v9521 = vpop.xlane.xlu0 %9520
        %v9522 = vsel %vm2848, %v9280, -inf
        %9523 = vmax.xlane.f32.xlu0 %v9522
        %v9524 = vpop.xlane.xlu0 %9523
        %v9525 = vsel %vm2848, %v9285, -inf
        %9526 = vmax.xlane.f32.xlu0 %v9525
        %v9527 = vpop.xlane.xlu0 %9526
        %v9528 = vsel %vm2848, %v9288, -inf
        %9529 = vmax.xlane.f32.xlu0 %v9528
        %v9530 = vpop.xlane.xlu0 %9529
        %v9531 = vsel %vm2848, %v9293, -inf
        %9532 = vmax.xlane.f32.xlu0 %v9531
        %v9533 = vpop.xlane.xlu0 %9532
        %v9534 = vsel %vm2848, %v9296, -inf
        %9535 = vmax.xlane.f32.xlu0 %v9534
        %v9536 = vpop.xlane.xlu0 %9535
        %v9537 = vsel %vm2848, %v9301, -inf
        %9538 = vmax.xlane.f32.xlu0 %v9537
        %v9539 = vpop.xlane.xlu0 %9538
        %v9540 = vsel %vm2848, %v9304, -inf
        %9541 = vmax.xlane.f32.xlu0 %v9540
        %v9542 = vpop.xlane.xlu0 %9541
        %v9543 = vsel %vm2848, %v9309, -inf
        %9544 = vmax.xlane.f32.xlu0 %v9543
        %v9545 = vpop.xlane.xlu0 %9544
        %v9546 = vsel %vm2848, %v9312, -inf
        %9547 = vmax.xlane.f32.xlu0 %v9546
        %v9548 = vpop.xlane.xlu0 %9547
        %v9549 = vsel %vm2848, %v9317, -inf
        %9550 = vmax.xlane.f32.xlu0 %v9549
        %v9551 = vpop.xlane.xlu0 %9550
        %v9552 = vsel %vm2848, %v9320, -inf
        %9553 = vmax.xlane.f32.xlu0 %v9552
        %v9554 = vpop.xlane.xlu0 %9553
        %v9555 = vsel %vm2848, %v9325, -inf
        %9556 = vmax.xlane.f32.xlu0 %v9555
        %v9557 = vpop.xlane.xlu0 %9556
        %v9558 = vsel %vm2848, %v9328, -inf
        %9559 = vmax.xlane.f32.xlu0 %v9558
        %v9560 = vpop.xlane.xlu0 %9559
        %v9561 = vsel %vm2848, %v9333, -inf
        %9562 = vmax.xlane.f32.xlu0 %v9561
        %v9563 = vpop.xlane.xlu0 %9562
        %v9564 = vsel %vm2848, %v9336, -inf
        %9565 = vmax.xlane.f32.xlu0 %v9564
        %v9566 = vpop.xlane.xlu0 %9565
        %v9567 = vsel %vm2848, %v9341, -inf
        %9568 = vmax.xlane.f32.xlu0 %v9567
        %v9569 = vpop.xlane.xlu0 %9568
        %v9570 = vsel %vm2848, %v9344, -inf
        %9571 = vmax.xlane.f32.xlu0 %v9570
        %v9572 = vpop.xlane.xlu0 %9571
        %v9573 = vsel %vm2848, %v9349, -inf
        %9574 = vmax.xlane.f32.xlu0 %v9573
        %v9575 = vpop.xlane.xlu0 %9574
        %v9576 = vsel %vm2848, %v9352, -inf
        %9577 = vmax.xlane.f32.xlu0 %v9576
        %v9578 = vpop.xlane.xlu0 %9577
        %v9579 = vsel %vm2848, %v9357, -inf
        %9580 = vmax.xlane.f32.xlu0 %v9579
        %v9581 = vpop.xlane.xlu0 %9580
        %v9582 = vsel %vm2848, %v9360, -inf
        %9583 = vmax.xlane.f32.xlu0 %v9582
        %v9584 = vpop.xlane.xlu0 %9583
        %v9585 = vsel %vm2848, %v9365, -inf
        %9586 = vmax.xlane.f32.xlu0 %v9585
        %v9587 = vpop.xlane.xlu0 %9586
        %v9588 = vsel %vm2848, %v9368, -inf
        %9589 = vmax.xlane.f32.xlu0 %v9588
        %v9590 = vpop.xlane.xlu0 %9589
        %v9591 = vsel %vm2848, %v9373, -inf
        %9592 = vmax.xlane.f32.xlu0 %v9591
        %v9593 = vpop.xlane.xlu0 %9592
        %v9594 = vsel %vm2848, %v9376, -inf
        %9595 = vmax.xlane.f32.xlu0 %v9594
        %v9596 = vpop.xlane.xlu0 %9595
        %v9597 = vsel %vm2848, %v9381, -inf
        %9598 = vmax.xlane.f32.xlu0 %v9597
        %v9599 = vpop.xlane.xlu0 %9598
        %v9600 = vsel %vm2848, %v9384, -inf
        %9601 = vmax.xlane.f32.xlu0 %v9600
        %v9602 = vpop.xlane.xlu0 %9601
        %v9603 = vsel %vm2848, %v9389, -inf
        %9604 = vmax.xlane.f32.xlu0 %v9603
        %v9605 = vpop.xlane.xlu0 %9604
        %v9606 = vsel %vm2848, %v9392, -inf
        %9607 = vmax.xlane.f32.xlu0 %v9606
        %v9608 = vpop.xlane.xlu0 %9607
        %v9609 = vsel %vm2848, %v9397, -inf
        %9610 = vmax.xlane.f32.xlu0 %v9609
        %v9611 = vpop.xlane.xlu0 %9610
        %v9612 = vsel %vm2848, %v9400, -inf
        %9613 = vmax.xlane.f32.xlu0 %v9612
        %v9614 = vpop.xlane.xlu0 %9613
        %v9615 = vsel %vm2848, %v9405, -inf
        %9616 = vmax.xlane.f32.xlu0 %v9615
        %v9617 = vpop.xlane.xlu0 %9616
        %v9618 = vsel %vm2848, %v9408, -inf
        %9619 = vmax.xlane.f32.xlu0 %v9618
        %v9620 = vpop.xlane.xlu0 %9619
        %v9621 = vsel %vm2848, %v9413, -inf
        %9622 = vmax.xlane.f32.xlu0 %v9621
        %v9623 = vpop.xlane.xlu0 %9622
        %v9624 = vsel %vm2848, %v9416, -inf
        %9625 = vmax.xlane.f32.xlu0 %v9624
        %v9626 = vpop.xlane.xlu0 %9625
        %v9627 = vsel %vm2848, %v9421, -inf
        %9628 = vmax.xlane.f32.xlu0 %v9627
        %v9629 = vpop.xlane.xlu0 %9628
        %v9630 = vsel %vm2848, %v9424, -inf
        %9631 = vmax.xlane.f32.xlu0 %v9630
        %v9632 = vpop.xlane.xlu0 %9631
        %v9633 = vsel %vm2848, %v9429, -inf
        %9634 = vmax.xlane.f32.xlu0 %v9633
        %v9635 = vpop.xlane.xlu0 %9634
        %v9636 = vsel %vm2848, %v9432, -inf
        %9637 = vmax.xlane.f32.xlu0 %v9636
        %v9638 = vpop.xlane.xlu0 %9637
        %v9639 = vsel %vm2848, %v9437, -inf
        %9640 = vmax.xlane.f32.xlu0 %v9639
        %v9641 = vpop.xlane.xlu0 %9640
        %v9642 = vsel %vm2848, %v9440, -inf
        %9643 = vmax.xlane.f32.xlu0 %v9642
        %v9644 = vpop.xlane.xlu0 %9643
        %v9645 = vsel %vm2848, %v9445, -inf
        %9646 = vmax.xlane.f32.xlu0 %v9645
        %v9647 = vpop.xlane.xlu0 %9646
        %v9648 = vsel %vm2848, %v9448, -inf
        %9649 = vmax.xlane.f32.xlu0 %v9648
        %v9650 = vpop.xlane.xlu0 %9649
        %v9651 = vsel %vm2848, %v9453, -inf
        %9652 = vmax.xlane.f32.xlu0 %v9651
        %v9653 = vpop.xlane.xlu0 %9652
        %v9654 = vsel %vm2848, %v9456, -inf
        %9655 = vmax.xlane.f32.xlu0 %v9654
        %v9656 = vpop.xlane.xlu0 %9655
        %v9657 = vsel %vm2848, %v9461, -inf
        %9658 = vmax.xlane.f32.xlu0 %v9657
        %v9659 = vpop.xlane.xlu0 %9658
        %v9660 = vsel %vm2848, %v9464, -inf
        %9661 = vmax.xlane.f32.xlu0 %v9660
        %v9662 = vpop.xlane.xlu0 %9661
        %v9663 = vsel %vm2848, %v9469, -inf
        %9664 = vmax.xlane.f32.xlu0 %v9663
        %v9665 = vpop.xlane.xlu0 %9664
        %v9666 = vsel %vm2848, %v9472, -inf
        %9667 = vmax.xlane.f32.xlu0 %v9666
        %v9668 = vpop.xlane.xlu0 %9667
        %v9669 = vsel %vm2848, %v9477, -inf
        %9670 = vmax.xlane.f32.xlu0 %v9669
        %v9671 = vpop.xlane.xlu0 %9670
        %v9672 = vsel %vm2848, %v9480, -inf
        %9673 = vmax.xlane.f32.xlu0 %v9672
        %v9674 = vpop.xlane.xlu0 %9673
        %v9675 = vsub.f32 %v9229, %v9485
        %v9676 = vsub.f32 %v9232, %v9488
        %v9677 = vsub.f32 %v9237, %v9491
        %v9678 = vsub.f32 %v9240, %v9494
        %v9679 = vsub.f32 %v9245, %v9497
        %v9680 = vsub.f32 %v9248, %v9500
        %v9681 = vsub.f32 %v9253, %v9503
        %v9682 = vsub.f32 %v9256, %v9506
        %v9683 = vsub.f32 %v9261, %v9509
        %v9684 = vsub.f32 %v9264, %v9512
        %v9685 = vsub.f32 %v9269, %v9515
        %v9686 = vsub.f32 %v9272, %v9518
        %v9687 = vsub.f32 %v9277, %v9521
        %v9688 = vsub.f32 %v9280, %v9524
        %v9689 = vsub.f32 %v9285, %v9527
        %v9690 = vsub.f32 %v9288, %v9530
        %v9691 = vsub.f32 %v9293, %v9533
        %v9692 = vsub.f32 %v9296, %v9536
        %v9693 = vsub.f32 %v9301, %v9539
        %v9694 = vsub.f32 %v9304, %v9542
        %v9695 = vsub.f32 %v9309, %v9545
        %v9696 = vsub.f32 %v9312, %v9548
        %v9697 = vsub.f32 %v9317, %v9551
        %v9698 = vsub.f32 %v9320, %v9554
        %v9699 = vsub.f32 %v9325, %v9557
        %v9700 = vsub.f32 %v9328, %v9560
        %v9701 = vsub.f32 %v9333, %v9563
        %v9702 = vsub.f32 %v9336, %v9566
        %v9703 = vsub.f32 %v9341, %v9569
        %v9704 = vsub.f32 %v9344, %v9572
        %v9705 = vsub.f32 %v9349, %v9575
        %v9706 = vsub.f32 %v9352, %v9578
        %v9707 = vsub.f32 %v9357, %v9581
        %v9708 = vsub.f32 %v9360, %v9584
        %v9709 = vsub.f32 %v9365, %v9587
        %v9710 = vsub.f32 %v9368, %v9590
        %v9711 = vsub.f32 %v9373, %v9593
        %v9712 = vsub.f32 %v9376, %v9596
        %v9713 = vsub.f32 %v9381, %v9599
        %v9714 = vsub.f32 %v9384, %v9602
        %v9715 = vsub.f32 %v9389, %v9605
        %v9716 = vsub.f32 %v9392, %v9608
        %v9717 = vsub.f32 %v9397, %v9611
        %v9718 = vsub.f32 %v9400, %v9614
        %v9719 = vsub.f32 %v9405, %v9617
        %v9720 = vsub.f32 %v9408, %v9620
        %v9721 = vsub.f32 %v9413, %v9623
        %v9722 = vsub.f32 %v9416, %v9626
        %v9723 = vsub.f32 %v9421, %v9629
        %v9724 = vsub.f32 %v9424, %v9632
        %v9725 = vsub.f32 %v9429, %v9635
        %v9726 = vsub.f32 %v9432, %v9638
        %v9727 = vsub.f32 %v9437, %v9641
        %v9728 = vsub.f32 %v9440, %v9644
        %v9729 = vsub.f32 %v9445, %v9647
        %v9730 = vsub.f32 %v9448, %v9650
        %v9731 = vsub.f32 %v9453, %v9653
        %v9732 = vsub.f32 %v9456, %v9656
        %v9733 = vsub.f32 %v9461, %v9659
        %v9734 = vsub.f32 %v9464, %v9662
        %v9735 = vsub.f32 %v9469, %v9665
        %v9736 = vsub.f32 %v9472, %v9668
        %v9737 = vsub.f32 %v9477, %v9671
        %v9738 = vsub.f32 %v9480, %v9674
        %v9739 = vmul.f32 %v9675, 1.442695
        %v9740 = vpow.pop %v9739
        %v9741 = vmul.f32 %v9676, 1.442695
        %v9742 = vpow.pop %v9741
        %v9743 = vmul.f32 %v9677, 1.442695
        %v9744 = vpow.pop %v9743
        %v9745 = vmul.f32 %v9678, 1.442695
        %v9746 = vpow.pop %v9745
        %v9747 = vmul.f32 %v9679, 1.442695
        %v9748 = vpow.pop %v9747
        %v9749 = vmul.f32 %v9680, 1.442695
        %v9750 = vpow.pop %v9749
        %v9751 = vmul.f32 %v9681, 1.442695
        %v9752 = vpow.pop %v9751
        %v9753 = vmul.f32 %v9682, 1.442695
        %v9754 = vpow.pop %v9753
        %v9755 = vmul.f32 %v9683, 1.442695
        %v9756 = vpow.pop %v9755
        %v9757 = vmul.f32 %v9684, 1.442695
        %v9758 = vpow.pop %v9757
        %v9759 = vmul.f32 %v9685, 1.442695
        %v9760 = vpow.pop %v9759
        %v9761 = vmul.f32 %v9686, 1.442695
        %v9762 = vpow.pop %v9761
        %v9763 = vmul.f32 %v9687, 1.442695
        %v9764 = vpow.pop %v9763
        %v9765 = vmul.f32 %v9688, 1.442695
        %v9766 = vpow.pop %v9765
        %v9767 = vmul.f32 %v9689, 1.442695
        %v9768 = vpow.pop %v9767
        %v9769 = vmul.f32 %v9690, 1.442695
        %v9770 = vpow.pop %v9769
        %v9771 = vmul.f32 %v9691, 1.442695
        %v9772 = vpow.pop %v9771
        %v9773 = vmul.f32 %v9692, 1.442695
        %v9774 = vpow.pop %v9773
        %v9775 = vmul.f32 %v9693, 1.442695
        %v9776 = vpow.pop %v9775
        %v9777 = vmul.f32 %v9694, 1.442695
        %v9778 = vpow.pop %v9777
        %v9779 = vmul.f32 %v9695, 1.442695
        %v9780 = vpow.pop %v9779
        %v9781 = vmul.f32 %v9696, 1.442695
        %v9782 = vpow.pop %v9781
        %v9783 = vmul.f32 %v9697, 1.442695
        %v9784 = vpow.pop %v9783
        %v9785 = vmul.f32 %v9698, 1.442695
        %v9786 = vpow.pop %v9785
        %v9787 = vmul.f32 %v9699, 1.442695
        %v9788 = vpow.pop %v9787
        %v9789 = vmul.f32 %v9700, 1.442695
        %v9790 = vpow.pop %v9789
        %v9791 = vmul.f32 %v9701, 1.442695
        %v9792 = vpow.pop %v9791
        %v9793 = vmul.f32 %v9702, 1.442695
        %v9794 = vpow.pop %v9793
        %v9795 = vmul.f32 %v9703, 1.442695
        %v9796 = vpow.pop %v9795
        %v9797 = vmul.f32 %v9704, 1.442695
        %v9798 = vpow.pop %v9797
        %v9799 = vmul.f32 %v9705, 1.442695
        %v9800 = vpow.pop %v9799
        %v9801 = vmul.f32 %v9706, 1.442695
        %v9802 = vpow.pop %v9801
        %v9803 = vmul.f32 %v9707, 1.442695
        %v9804 = vpow.pop %v9803
        %v9805 = vmul.f32 %v9708, 1.442695
        %v9806 = vpow.pop %v9805
        %v9807 = vmul.f32 %v9709, 1.442695
        %v9808 = vpow.pop %v9807
        %v9809 = vmul.f32 %v9710, 1.442695
        %v9810 = vpow.pop %v9809
        %v9811 = vmul.f32 %v9711, 1.442695
        %v9812 = vpow.pop %v9811
        %v9813 = vmul.f32 %v9712, 1.442695
        %v9814 = vpow.pop %v9813
        %v9815 = vmul.f32 %v9713, 1.442695
        %v9816 = vpow.pop %v9815
        %v9817 = vmul.f32 %v9714, 1.442695
        %v9818 = vpow.pop %v9817
        %v9819 = vmul.f32 %v9715, 1.442695
        %v9820 = vpow.pop %v9819
        %v9821 = vmul.f32 %v9716, 1.442695
        %v9822 = vpow.pop %v9821
        %v9823 = vmul.f32 %v9717, 1.442695
        %v9824 = vpow.pop %v9823
        %v9825 = vmul.f32 %v9718, 1.442695
        %v9826 = vpow.pop %v9825
        %v9827 = vmul.f32 %v9719, 1.442695
        %v9828 = vpow.pop %v9827
        %v9829 = vmul.f32 %v9720, 1.442695
        %v9830 = vpow.pop %v9829
        %v9831 = vmul.f32 %v9721, 1.442695
        %v9832 = vpow.pop %v9831
        %v9833 = vmul.f32 %v9722, 1.442695
        %v9834 = vpow.pop %v9833
        %v9835 = vmul.f32 %v9723, 1.442695
        %v9836 = vpow.pop %v9835
        %v9837 = vmul.f32 %v9724, 1.442695
        %v9838 = vpow.pop %v9837
        %v9839 = vmul.f32 %v9725, 1.442695
        %v9840 = vpow.pop %v9839
        %v9841 = vmul.f32 %v9726, 1.442695
        %v9842 = vpow.pop %v9841
        %v9843 = vmul.f32 %v9727, 1.442695
        %v9844 = vpow.pop %v9843
        %v9845 = vmul.f32 %v9728, 1.442695
        %v9846 = vpow.pop %v9845
        %v9847 = vmul.f32 %v9729, 1.442695
        %v9848 = vpow.pop %v9847
        %v9849 = vmul.f32 %v9730, 1.442695
        %v9850 = vpow.pop %v9849
        %v9851 = vmul.f32 %v9731, 1.442695
        %v9852 = vpow.pop %v9851
        %v9853 = vmul.f32 %v9732, 1.442695
        %v9854 = vpow.pop %v9853
        %v9855 = vmul.f32 %v9733, 1.442695
        %v9856 = vpow.pop %v9855
        %v9857 = vmul.f32 %v9734, 1.442695
        %v9858 = vpow.pop %v9857
        %v9859 = vmul.f32 %v9735, 1.442695
        %v9860 = vpow.pop %v9859
        %v9861 = vmul.f32 %v9736, 1.442695
        %v9862 = vpow.pop %v9861
        %v9863 = vmul.f32 %v9737, 1.442695
        %v9864 = vpow.pop %v9863
        %v9865 = vmul.f32 %v9738, 1.442695
        %v9866 = vpow.pop %v9865
        %v9867 = vsel %vm2848, %v9740, 0.0
        %9868 = vadd.xlane.f32.xlu0 %v9867
        %v9869 = vpop.xlane.xlu0 %9868
        %v9870 = vsel %vm2848, %v9742, 0.0
        %9871 = vadd.xlane.f32.xlu0 %v9870
        %v9872 = vpop.xlane.xlu0 %9871
        %v9873 = vsel %vm2848, %v9744, 0.0
        %9874 = vadd.xlane.f32.xlu0 %v9873
        %v9875 = vpop.xlane.xlu0 %9874
        %v9876 = vsel %vm2848, %v9746, 0.0
        %9877 = vadd.xlane.f32.xlu0 %v9876
        %v9878 = vpop.xlane.xlu0 %9877
        %v9879 = vsel %vm2848, %v9748, 0.0
        %9880 = vadd.xlane.f32.xlu0 %v9879
        %v9881 = vpop.xlane.xlu0 %9880
        %v9882 = vsel %vm2848, %v9750, 0.0
        %9883 = vadd.xlane.f32.xlu0 %v9882
        %v9884 = vpop.xlane.xlu0 %9883
        %v9885 = vsel %vm2848, %v9752, 0.0
        %9886 = vadd.xlane.f32.xlu0 %v9885
        %v9887 = vpop.xlane.xlu0 %9886
        %v9888 = vsel %vm2848, %v9754, 0.0
        %9889 = vadd.xlane.f32.xlu0 %v9888
        %v9890 = vpop.xlane.xlu0 %9889
        %v9891 = vsel %vm2848, %v9756, 0.0
        %9892 = vadd.xlane.f32.xlu0 %v9891
        %v9893 = vpop.xlane.xlu0 %9892
        %v9894 = vsel %vm2848, %v9758, 0.0
        %9895 = vadd.xlane.f32.xlu0 %v9894
        %v9896 = vpop.xlane.xlu0 %9895
        %v9897 = vsel %vm2848, %v9760, 0.0
        %9898 = vadd.xlane.f32.xlu0 %v9897
        %v9899 = vpop.xlane.xlu0 %9898
        %v9900 = vsel %vm2848, %v9762, 0.0
        %9901 = vadd.xlane.f32.xlu0 %v9900
        %v9902 = vpop.xlane.xlu0 %9901
        %v9903 = vsel %vm2848, %v9764, 0.0
        %9904 = vadd.xlane.f32.xlu0 %v9903
        %v9905 = vpop.xlane.xlu0 %9904
        %v9906 = vsel %vm2848, %v9766, 0.0
        %9907 = vadd.xlane.f32.xlu0 %v9906
        %v9908 = vpop.xlane.xlu0 %9907
        %v9909 = vsel %vm2848, %v9768, 0.0
        %9910 = vadd.xlane.f32.xlu0 %v9909
        %v9911 = vpop.xlane.xlu0 %9910
        %v9912 = vsel %vm2848, %v9770, 0.0
        %9913 = vadd.xlane.f32.xlu0 %v9912
        %v9914 = vpop.xlane.xlu0 %9913
        %v9915 = vsel %vm2848, %v9772, 0.0
        %9916 = vadd.xlane.f32.xlu0 %v9915
        %v9917 = vpop.xlane.xlu0 %9916
        %v9918 = vsel %vm2848, %v9774, 0.0
        %9919 = vadd.xlane.f32.xlu0 %v9918
        %v9920 = vpop.xlane.xlu0 %9919
        %v9921 = vsel %vm2848, %v9776, 0.0
        %9922 = vadd.xlane.f32.xlu0 %v9921
        %v9923 = vpop.xlane.xlu0 %9922
        %v9924 = vsel %vm2848, %v9778, 0.0
        %9925 = vadd.xlane.f32.xlu0 %v9924
        %v9926 = vpop.xlane.xlu0 %9925
        %v9927 = vsel %vm2848, %v9780, 0.0
        %9928 = vadd.xlane.f32.xlu0 %v9927
        %v9929 = vpop.xlane.xlu0 %9928
        %v9930 = vsel %vm2848, %v9782, 0.0
        %9931 = vadd.xlane.f32.xlu0 %v9930
        %v9932 = vpop.xlane.xlu0 %9931
        %v9933 = vsel %vm2848, %v9784, 0.0
        %9934 = vadd.xlane.f32.xlu0 %v9933
        %v9935 = vpop.xlane.xlu0 %9934
        %v9936 = vsel %vm2848, %v9786, 0.0
        %9937 = vadd.xlane.f32.xlu0 %v9936
        %v9938 = vpop.xlane.xlu0 %9937
        %v9939 = vsel %vm2848, %v9788, 0.0
        %9940 = vadd.xlane.f32.xlu0 %v9939
        %v9941 = vpop.xlane.xlu0 %9940
        %v9942 = vsel %vm2848, %v9790, 0.0
        %9943 = vadd.xlane.f32.xlu0 %v9942
        %v9944 = vpop.xlane.xlu0 %9943
        %v9945 = vsel %vm2848, %v9792, 0.0
        %9946 = vadd.xlane.f32.xlu0 %v9945
        %v9947 = vpop.xlane.xlu0 %9946
        %v9948 = vsel %vm2848, %v9794, 0.0
        %9949 = vadd.xlane.f32.xlu0 %v9948
        %v9950 = vpop.xlane.xlu0 %9949
        %v9951 = vsel %vm2848, %v9796, 0.0
        %9952 = vadd.xlane.f32.xlu0 %v9951
        %v9953 = vpop.xlane.xlu0 %9952
        %v9954 = vsel %vm2848, %v9798, 0.0
        %9955 = vadd.xlane.f32.xlu0 %v9954
        %v9956 = vpop.xlane.xlu0 %9955
        %v9957 = vsel %vm2848, %v9800, 0.0
        %9958 = vadd.xlane.f32.xlu0 %v9957
        %v9959 = vpop.xlane.xlu0 %9958
        %v9960 = vsel %vm2848, %v9802, 0.0
        %9961 = vadd.xlane.f32.xlu0 %v9960
        %v9962 = vpop.xlane.xlu0 %9961
        %v9963 = vsel %vm2848, %v9804, 0.0
        %9964 = vadd.xlane.f32.xlu0 %v9963
        %v9965 = vpop.xlane.xlu0 %9964
        %v9966 = vsel %vm2848, %v9806, 0.0
        %9967 = vadd.xlane.f32.xlu0 %v9966
        %v9968 = vpop.xlane.xlu0 %9967
        %v9969 = vsel %vm2848, %v9808, 0.0
        %9970 = vadd.xlane.f32.xlu0 %v9969
        %v9971 = vpop.xlane.xlu0 %9970
        %v9972 = vsel %vm2848, %v9810, 0.0
        %9973 = vadd.xlane.f32.xlu0 %v9972
        %v9974 = vpop.xlane.xlu0 %9973
        %v9975 = vsel %vm2848, %v9812, 0.0
        %9976 = vadd.xlane.f32.xlu0 %v9975
        %v9977 = vpop.xlane.xlu0 %9976
        %v9978 = vsel %vm2848, %v9814, 0.0
        %9979 = vadd.xlane.f32.xlu0 %v9978
        %v9980 = vpop.xlane.xlu0 %9979
        %v9981 = vsel %vm2848, %v9816, 0.0
        %9982 = vadd.xlane.f32.xlu0 %v9981
        %v9983 = vpop.xlane.xlu0 %9982
        %v9984 = vsel %vm2848, %v9818, 0.0
        %9985 = vadd.xlane.f32.xlu0 %v9984
        %v9986 = vpop.xlane.xlu0 %9985
        %v9987 = vsel %vm2848, %v9820, 0.0
        %9988 = vadd.xlane.f32.xlu0 %v9987
        %v9989 = vpop.xlane.xlu0 %9988
        %v9990 = vsel %vm2848, %v9822, 0.0
        %9991 = vadd.xlane.f32.xlu0 %v9990
        %v9992 = vpop.xlane.xlu0 %9991
        %v9993 = vsel %vm2848, %v9824, 0.0
        %9994 = vadd.xlane.f32.xlu0 %v9993
        %v9995 = vpop.xlane.xlu0 %9994
        %v9996 = vsel %vm2848, %v9826, 0.0
        %9997 = vadd.xlane.f32.xlu0 %v9996
        %v9998 = vpop.xlane.xlu0 %9997
        %v9999 = vsel %vm2848, %v9828, 0.0
        %10000 = vadd.xlane.f32.xlu0 %v9999
        %v10001 = vpop.xlane.xlu0 %10000
        %v10002 = vsel %vm2848, %v9830, 0.0
        %10003 = vadd.xlane.f32.xlu0 %v10002
        %v10004 = vpop.xlane.xlu0 %10003
        %v10005 = vsel %vm2848, %v9832, 0.0
        %10006 = vadd.xlane.f32.xlu0 %v10005
        %v10007 = vpop.xlane.xlu0 %10006
        %v10008 = vsel %vm2848, %v9834, 0.0
        %10009 = vadd.xlane.f32.xlu0 %v10008
        %v10010 = vpop.xlane.xlu0 %10009
        %v10011 = vsel %vm2848, %v9836, 0.0
        %10012 = vadd.xlane.f32.xlu0 %v10011
        %v10013 = vpop.xlane.xlu0 %10012
        %v10014 = vsel %vm2848, %v9838, 0.0
        %10015 = vadd.xlane.f32.xlu0 %v10014
        %v10016 = vpop.xlane.xlu0 %10015
        %v10017 = vsel %vm2848, %v9840, 0.0
        %10018 = vadd.xlane.f32.xlu0 %v10017
        %v10019 = vpop.xlane.xlu0 %10018
        %v10020 = vsel %vm2848, %v9842, 0.0
        %10021 = vadd.xlane.f32.xlu0 %v10020
        %v10022 = vpop.xlane.xlu0 %10021
        %v10023 = vsel %vm2848, %v9844, 0.0
        %10024 = vadd.xlane.f32.xlu0 %v10023
        %v10025 = vpop.xlane.xlu0 %10024
        %v10026 = vsel %vm2848, %v9846, 0.0
        %10027 = vadd.xlane.f32.xlu0 %v10026
        %v10028 = vpop.xlane.xlu0 %10027
        %v10029 = vsel %vm2848, %v9848, 0.0
        %10030 = vadd.xlane.f32.xlu0 %v10029
        %v10031 = vpop.xlane.xlu0 %10030
        %v10032 = vsel %vm2848, %v9850, 0.0
        %10033 = vadd.xlane.f32.xlu0 %v10032
        %v10034 = vpop.xlane.xlu0 %10033
        %v10035 = vsel %vm2848, %v9852, 0.0
        %10036 = vadd.xlane.f32.xlu0 %v10035
        %v10037 = vpop.xlane.xlu0 %10036
        %v10038 = vsel %vm2848, %v9854, 0.0
        %10039 = vadd.xlane.f32.xlu0 %v10038
        %v10040 = vpop.xlane.xlu0 %10039
        %v10041 = vsel %vm2848, %v9856, 0.0
        %10042 = vadd.xlane.f32.xlu0 %v10041
        %v10043 = vpop.xlane.xlu0 %10042
        %v10044 = vsel %vm2848, %v9858, 0.0
        %10045 = vadd.xlane.f32.xlu0 %v10044
        %v10046 = vpop.xlane.xlu0 %10045
        %v10047 = vsel %vm2848, %v9860, 0.0
        %10048 = vadd.xlane.f32.xlu0 %v10047
        %v10049 = vpop.xlane.xlu0 %10048
        %v10050 = vsel %vm2848, %v9862, 0.0
        %10051 = vadd.xlane.f32.xlu0 %v10050
        %v10052 = vpop.xlane.xlu0 %10051
        %v10053 = vsel %vm2848, %v9864, 0.0
        %10054 = vadd.xlane.f32.xlu0 %v10053
        %v10055 = vpop.xlane.xlu0 %10054
        %v10056 = vsel %vm2848, %v9866, 0.0
        %10057 = vadd.xlane.f32.xlu0 %v10056
        %v10058 = vpop.xlane.xlu0 %10057
        %v10059 = vrcp.pop %v9869
        %v10060 = vrcp.pop %v9872
        %v10061 = vrcp.pop %v9875
        %v10062 = vrcp.pop %v9878
        %v10063 = vrcp.pop %v9881
        %v10064 = vrcp.pop %v9884
        %v10065 = vrcp.pop %v9887
        %v10066 = vrcp.pop %v9890
        %v10067 = vrcp.pop %v9893
        %v10068 = vrcp.pop %v9896
        %v10069 = vrcp.pop %v9899
        %v10070 = vrcp.pop %v9902
        %v10071 = vrcp.pop %v9905
        %v10072 = vrcp.pop %v9908
        %v10073 = vrcp.pop %v9911
        %v10074 = vrcp.pop %v9914
        %v10075 = vrcp.pop %v9917
        %v10076 = vrcp.pop %v9920
        %v10077 = vrcp.pop %v9923
        %v10078 = vrcp.pop %v9926
        %v10079 = vrcp.pop %v9929
        %v10080 = vrcp.pop %v9932
        %v10081 = vrcp.pop %v9935
        %v10082 = vrcp.pop %v9938
        %v10083 = vrcp.pop %v9941
        %v10084 = vrcp.pop %v9944
        %v10085 = vrcp.pop %v9947
        %v10086 = vrcp.pop %v9950
        %v10087 = vrcp.pop %v9953
        %v10088 = vrcp.pop %v9956
        %v10089 = vrcp.pop %v9959
        %v10090 = vrcp.pop %v9962
        %v10091 = vrcp.pop %v9965
        %v10092 = vrcp.pop %v9968
        %v10093 = vrcp.pop %v9971
        %v10094 = vrcp.pop %v9974
        %v10095 = vrcp.pop %v9977
        %v10096 = vrcp.pop %v9980
        %v10097 = vrcp.pop %v9983
        %v10098 = vrcp.pop %v9986
        %v10099 = vrcp.pop %v9989
        %v10100 = vrcp.pop %v9992
        %v10101 = vrcp.pop %v9995
        %v10102 = vrcp.pop %v9998
        %v10103 = vrcp.pop %v10001
        %v10104 = vrcp.pop %v10004
        %v10105 = vrcp.pop %v10007
        %v10106 = vrcp.pop %v10010
        %v10107 = vrcp.pop %v10013
        %v10108 = vrcp.pop %v10016
        %v10109 = vrcp.pop %v10019
        %v10110 = vrcp.pop %v10022
        %v10111 = vrcp.pop %v10025
        %v10112 = vrcp.pop %v10028
        %v10113 = vrcp.pop %v10031
        %v10114 = vrcp.pop %v10034
        %v10115 = vrcp.pop %v10037
        %v10116 = vrcp.pop %v10040
        %v10117 = vrcp.pop %v10043
        %v10118 = vrcp.pop %v10046
        %v10119 = vrcp.pop %v10049
        %v10120 = vrcp.pop %v10052
        %v10121 = vrcp.pop %v10055
        %v10122 = vrcp.pop %v10058
        %v10123 = vmul.f32 %v9740, %v10059
        %v10124 = vmul.f32 %v9742, %v10060
        %v10125 = vmul.f32 %v9744, %v10061
        %v10126 = vmul.f32 %v9746, %v10062
        %v10127 = vmul.f32 %v9748, %v10063
        %v10128 = vmul.f32 %v9750, %v10064
        %v10129 = vmul.f32 %v9752, %v10065
        %v10130 = vmul.f32 %v9754, %v10066
        %v10131 = vmul.f32 %v9756, %v10067
        %v10132 = vmul.f32 %v9758, %v10068
        %v10133 = vmul.f32 %v9760, %v10069
        %v10134 = vmul.f32 %v9762, %v10070
        %v10135 = vmul.f32 %v9764, %v10071
        %v10136 = vmul.f32 %v9766, %v10072
        %v10137 = vmul.f32 %v9768, %v10073
        %v10138 = vmul.f32 %v9770, %v10074
        %v10139 = vmul.f32 %v9772, %v10075
        %v10140 = vmul.f32 %v9774, %v10076
        %v10141 = vmul.f32 %v9776, %v10077
        %v10142 = vmul.f32 %v9778, %v10078
        %v10143 = vmul.f32 %v9780, %v10079
        %v10144 = vmul.f32 %v9782, %v10080
        %v10145 = vmul.f32 %v9784, %v10081
        %v10146 = vmul.f32 %v9786, %v10082
        %v10147 = vmul.f32 %v9788, %v10083
        %v10148 = vmul.f32 %v9790, %v10084
        %v10149 = vmul.f32 %v9792, %v10085
        %v10150 = vmul.f32 %v9794, %v10086
        %v10151 = vmul.f32 %v9796, %v10087
        %v10152 = vmul.f32 %v9798, %v10088
        %v10153 = vmul.f32 %v9800, %v10089
        %v10154 = vmul.f32 %v9802, %v10090
        %v10155 = vmul.f32 %v9804, %v10091
        %v10156 = vmul.f32 %v9806, %v10092
        %v10157 = vmul.f32 %v9808, %v10093
        %v10158 = vmul.f32 %v9810, %v10094
        %v10159 = vmul.f32 %v9812, %v10095
        %v10160 = vmul.f32 %v9814, %v10096
        %v10161 = vmul.f32 %v9816, %v10097
        %v10162 = vmul.f32 %v9818, %v10098
        %v10163 = vmul.f32 %v9820, %v10099
        %v10164 = vmul.f32 %v9822, %v10100
        %v10165 = vmul.f32 %v9824, %v10101
        %v10166 = vmul.f32 %v9826, %v10102
        %v10167 = vmul.f32 %v9828, %v10103
        %v10168 = vmul.f32 %v9830, %v10104
        %v10169 = vmul.f32 %v9832, %v10105
        %v10170 = vmul.f32 %v9834, %v10106
        %v10171 = vmul.f32 %v9836, %v10107
        %v10172 = vmul.f32 %v9838, %v10108
        %v10173 = vmul.f32 %v9840, %v10109
        %v10174 = vmul.f32 %v9842, %v10110
        %v10175 = vmul.f32 %v9844, %v10111
        %v10176 = vmul.f32 %v9846, %v10112
        %v10177 = vmul.f32 %v9848, %v10113
        %v10178 = vmul.f32 %v9850, %v10114
        %v10179 = vmul.f32 %v9852, %v10115
        %v10180 = vmul.f32 %v9854, %v10116
        %v10181 = vmul.f32 %v9856, %v10117
        %v10182 = vmul.f32 %v9858, %v10118
        %v10183 = vmul.f32 %v9860, %v10119
        %v10184 = vmul.f32 %v9862, %v10120
        %v10185 = vmul.f32 %v9864, %v10121
        %v10186 = vmul.f32 %v9866, %v10122
        %v10187 = vpack.c.bf16 %v10124, %v10123
        %v10188 = vpack.c.bf16 %v10126, %v10125
        %v10189 = vpack.c.bf16 %v10128, %v10127
        %v10190 = vpack.c.bf16 %v10130, %v10129
        %v10191 = vpack.c.bf16 %v10132, %v10131
        %v10192 = vpack.c.bf16 %v10134, %v10133
        %v10193 = vpack.c.bf16 %v10136, %v10135
        %v10194 = vpack.c.bf16 %v10138, %v10137
        %v10195 = vpack.c.bf16 %v10140, %v10139
        %v10196 = vpack.c.bf16 %v10142, %v10141
        %v10197 = vpack.c.bf16 %v10144, %v10143
        %v10198 = vpack.c.bf16 %v10146, %v10145
        %v10199 = vpack.c.bf16 %v10148, %v10147
        %v10200 = vpack.c.bf16 %v10150, %v10149
        %v10201 = vpack.c.bf16 %v10152, %v10151
        %v10202 = vpack.c.bf16 %v10154, %v10153
        %v10203 = vpack.c.bf16 %v10156, %v10155
        %v10204 = vpack.c.bf16 %v10158, %v10157
        %v10205 = vpack.c.bf16 %v10160, %v10159
        %v10206 = vpack.c.bf16 %v10162, %v10161
        %v10207 = vpack.c.bf16 %v10164, %v10163
        %v10208 = vpack.c.bf16 %v10166, %v10165
        %v10209 = vpack.c.bf16 %v10168, %v10167
        %v10210 = vpack.c.bf16 %v10170, %v10169
        %v10211 = vpack.c.bf16 %v10172, %v10171
        %v10212 = vpack.c.bf16 %v10174, %v10173
        %v10213 = vpack.c.bf16 %v10176, %v10175
        %v10214 = vpack.c.bf16 %v10178, %v10177
        %v10215 = vpack.c.bf16 %v10180, %v10179
        %v10216 = vpack.c.bf16 %v10182, %v10181
        %v10217 = vpack.c.bf16 %v10184, %v10183
        %v10218 = vpack.c.bf16 %v10186, %v10185
        %v10220 = vsel %vm2848, %v10187, 0
        %v10223 = vsel %vm2848, %v10188, 0
        %v10226 = vsel %vm2848, %v10189, 0
        %v10229 = vsel %vm2848, %v10190, 0
        %v10232 = vsel %vm2848, %v10191, 0
        %v10235 = vsel %vm2848, %v10192, 0
        %v10238 = vsel %vm2848, %v10193, 0
        %v10241 = vsel %vm2848, %v10194, 0
        %v10244 = vsel %vm2848, %v10195, 0
        %v10247 = vsel %vm2848, %v10196, 0
        %v10250 = vsel %vm2848, %v10197, 0
        %v10253 = vsel %vm2848, %v10198, 0
        %v10256 = vsel %vm2848, %v10199, 0
        %v10259 = vsel %vm2848, %v10200, 0
        %v10262 = vsel %vm2848, %v10201, 0
        %v10265 = vsel %vm2848, %v10202, 0
        %v10268 = vsel %vm2848, %v10203, 0
        %v10271 = vsel %vm2848, %v10204, 0
        %v10274 = vsel %vm2848, %v10205, 0
        %v10277 = vsel %vm2848, %v10206, 0
        %v10280 = vsel %vm2848, %v10207, 0
        %v10283 = vsel %vm2848, %v10208, 0
        %v10286 = vsel %vm2848, %v10209, 0
        %v10289 = vsel %vm2848, %v10210, 0
        %v10292 = vsel %vm2848, %v10211, 0
        %v10295 = vsel %vm2848, %v10212, 0
        %v10298 = vsel %vm2848, %v10213, 0
        %v10301 = vsel %vm2848, %v10214, 0
        %v10304 = vsel %vm2848, %v10215, 0
        %v10307 = vsel %vm2848, %v10216, 0
        %v10310 = vsel %vm2848, %v10217, 0
        %v10313 = vsel %vm2848, %v10218, 0
        %10315 = vmatprep.subr.bf16.mxu0 0
        %10316 = vmatpush1.bf16.msra.mxu0 0
        %10317 = vmatprep.subr.bf16.mxu0 0
        %10318 = vmatpush1.bf16.msra.mxu0 0
        %10319 = vmatprep.subr.bf16.mxu0 0
        %10320 = vmatpush1.bf16.msra.mxu0 0
        %10321 = vmatprep.subr.bf16.mxu0 0
        %10322 = vmatpush1.bf16.msra.mxu0 0
        %10323 = vmatprep.subr.bf16.mxu0 %v1753
        %10324 = vmatpush1.bf16.msra.mxu0 %v1752
        %10325 = vmatprep.subr.bf16.mxu0 %v1751
        %10326 = vmatpush1.bf16.msra.mxu0 %v1750
        %10327 = vmatprep.subr.bf16.mxu0 %v1749
        %10328 = vmatpush1.bf16.msra.mxu0 %v1748
        %10329 = vmatprep.subr.bf16.mxu0 %v1747
        %10330 = vmatpush1.bf16.msra.mxu0 %v1746
        %10331 = vmatprep.subr.bf16.mxu0 0
        %10332 = vmatpush2.bf16.msra.mxu0 0
        %10333 = vmatprep.subr.bf16.mxu0 0
        %10334 = vmatpush2.bf16.msra.mxu0 0
        %10335 = vmatprep.subr.bf16.mxu0 0
        %10336 = vmatpush2.bf16.msra.mxu0 0
        %10337 = vmatprep.subr.bf16.mxu0 0
        %10338 = vmatpush2.bf16.msra.mxu0 0
        %10339 = vmatprep.subr.bf16.mxu0 0
        %10340 = vmatpush2.bf16.msra.mxu0 0
        %10341 = vmatprep.subr.bf16.mxu0 0
        %10342 = vmatpush2.bf16.msra.mxu0 0
        %10343 = vmatprep.subr.bf16.mxu0 0
        %10344 = vmatpush2.bf16.msra.mxu0 0
        %10345 = vmatprep.subr.bf16.mxu0 0
        %10346 = vmatpush2.bf16.msra.mxu0 0
        %10347 = vmatprep.mubr.bf16.mxu0 0
        %10348 = vmatmul.mubr.bf16.gmra.mxu0 %v10220
        %v10349 = vpop.f32.mrf.mxu0
        %v10350 = vadd.f32 0.0, %v10349
        %v10351 = vpop.f32.mrf.mxu0
        %v10352 = vadd.f32 0.0, %v10351
        %v10353 = vpop.f32.mrf.mxu0
        %v10354 = vadd.f32 0.0, %v10353
        %v10355 = vpop.f32.mrf.mxu0
        %v10356 = vadd.f32 0.0, %v10355
        %10357 = vmatprep.mubr.bf16.mxu0 0
        %10358 = vmatmul.mubr.bf16.gmra.mxu0 %v10223
        %v10359 = vpop.f32.mrf.mxu0
        %v10360 = vadd.f32 0.0, %v10359
        %v10361 = vpop.f32.mrf.mxu0
        %v10362 = vadd.f32 0.0, %v10361
        %v10363 = vpop.f32.mrf.mxu0
        %v10364 = vadd.f32 0.0, %v10363
        %v10365 = vpop.f32.mrf.mxu0
        %v10366 = vadd.f32 0.0, %v10365
        %10367 = vmatprep.mubr.bf16.mxu0 0
        %10368 = vmatmul.mubr.bf16.gmra.mxu0 %v10226
        %v10369 = vpop.f32.mrf.mxu0
        %v10370 = vadd.f32 0.0, %v10369
        %v10371 = vpop.f32.mrf.mxu0
        %v10372 = vadd.f32 0.0, %v10371
        %v10373 = vpop.f32.mrf.mxu0
        %v10374 = vadd.f32 0.0, %v10373
        %v10375 = vpop.f32.mrf.mxu0
        %v10376 = vadd.f32 0.0, %v10375
        %10377 = vmatprep.mubr.bf16.mxu0 0
        %10378 = vmatmul.mubr.bf16.gmra.mxu0 %v10229
        %v10379 = vpop.f32.mrf.mxu0
        %v10380 = vadd.f32 0.0, %v10379
        %v10381 = vpop.f32.mrf.mxu0
        %v10382 = vadd.f32 0.0, %v10381
        %v10383 = vpop.f32.mrf.mxu0
        %v10384 = vadd.f32 0.0, %v10383
        %v10385 = vpop.f32.mrf.mxu0
        %v10386 = vadd.f32 0.0, %v10385
        %10387 = vmatprep.mubr.bf16.mxu0 0
        %10388 = vmatmul.mubr.bf16.gmra.mxu0 %v10232
        %v10389 = vpop.f32.mrf.mxu0
        %v10390 = vadd.f32 0.0, %v10389
        %v10391 = vpop.f32.mrf.mxu0
        %v10392 = vadd.f32 0.0, %v10391
        %v10393 = vpop.f32.mrf.mxu0
        %v10394 = vadd.f32 0.0, %v10393
        %v10395 = vpop.f32.mrf.mxu0
        %v10396 = vadd.f32 0.0, %v10395
        %10397 = vmatprep.mubr.bf16.mxu0 0
        %10398 = vmatmul.mubr.bf16.gmra.mxu0 %v10235
        %v10399 = vpop.f32.mrf.mxu0
        %v10400 = vadd.f32 0.0, %v10399
        %v10401 = vpop.f32.mrf.mxu0
        %v10402 = vadd.f32 0.0, %v10401
        %v10403 = vpop.f32.mrf.mxu0
        %v10404 = vadd.f32 0.0, %v10403
        %v10405 = vpop.f32.mrf.mxu0
        %v10406 = vadd.f32 0.0, %v10405
        %10407 = vmatprep.mubr.bf16.mxu0 0
        %10408 = vmatmul.mubr.bf16.gmra.mxu0 %v10238
        %v10409 = vpop.f32.mrf.mxu0
        %v10410 = vadd.f32 0.0, %v10409
        %v10411 = vpop.f32.mrf.mxu0
        %v10412 = vadd.f32 0.0, %v10411
        %v10413 = vpop.f32.mrf.mxu0
        %v10414 = vadd.f32 0.0, %v10413
        %v10415 = vpop.f32.mrf.mxu0
        %v10416 = vadd.f32 0.0, %v10415
        %10417 = vmatprep.mubr.bf16.mxu0 0
        %10418 = vmatmul.mubr.bf16.gmra.mxu0 %v10241
        %v10419 = vpop.f32.mrf.mxu0
        %v10420 = vadd.f32 0.0, %v10419
        %v10421 = vpop.f32.mrf.mxu0
        %v10422 = vadd.f32 0.0, %v10421
        %v10423 = vpop.f32.mrf.mxu0
        %v10424 = vadd.f32 0.0, %v10423
        %v10425 = vpop.f32.mrf.mxu0
        %v10426 = vadd.f32 0.0, %v10425
        %10427 = vmatprep.mubr.bf16.mxu0 0
        %10428 = vmatmul.mubr.bf16.gmra.mxu0 %v10244
        %v10429 = vpop.f32.mrf.mxu0
        %v10430 = vadd.f32 0.0, %v10429
        %v10431 = vpop.f32.mrf.mxu0
        %v10432 = vadd.f32 0.0, %v10431
        %v10433 = vpop.f32.mrf.mxu0
        %v10434 = vadd.f32 0.0, %v10433
        %v10435 = vpop.f32.mrf.mxu0
        %v10436 = vadd.f32 0.0, %v10435
        %10437 = vmatprep.mubr.bf16.mxu0 0
        %10438 = vmatmul.mubr.bf16.gmra.mxu0 %v10247
        %v10439 = vpop.f32.mrf.mxu0
        %v10440 = vadd.f32 0.0, %v10439
        %v10441 = vpop.f32.mrf.mxu0
        %v10442 = vadd.f32 0.0, %v10441
        %v10443 = vpop.f32.mrf.mxu0
        %v10444 = vadd.f32 0.0, %v10443
        %v10445 = vpop.f32.mrf.mxu0
        %v10446 = vadd.f32 0.0, %v10445
        %10447 = vmatprep.mubr.bf16.mxu0 0
        %10448 = vmatmul.mubr.bf16.gmra.mxu0 %v10250
        %v10449 = vpop.f32.mrf.mxu0
        %v10450 = vadd.f32 0.0, %v10449
        %v10451 = vpop.f32.mrf.mxu0
        %v10452 = vadd.f32 0.0, %v10451
        %v10453 = vpop.f32.mrf.mxu0
        %v10454 = vadd.f32 0.0, %v10453
        %v10455 = vpop.f32.mrf.mxu0
        %v10456 = vadd.f32 0.0, %v10455
        %10457 = vmatprep.mubr.bf16.mxu0 0
        %10458 = vmatmul.mubr.bf16.gmra.mxu0 %v10253
        %v10459 = vpop.f32.mrf.mxu0
        %v10460 = vadd.f32 0.0, %v10459
        %v10461 = vpop.f32.mrf.mxu0
        %v10462 = vadd.f32 0.0, %v10461
        %v10463 = vpop.f32.mrf.mxu0
        %v10464 = vadd.f32 0.0, %v10463
        %v10465 = vpop.f32.mrf.mxu0
        %v10466 = vadd.f32 0.0, %v10465
        %10467 = vmatprep.mubr.bf16.mxu0 0
        %10468 = vmatmul.mubr.bf16.gmra.mxu0 %v10256
        %v10469 = vpop.f32.mrf.mxu0
        %v10470 = vadd.f32 0.0, %v10469
        %v10471 = vpop.f32.mrf.mxu0
        %v10472 = vadd.f32 0.0, %v10471
        %v10473 = vpop.f32.mrf.mxu0
        %v10474 = vadd.f32 0.0, %v10473
        %v10475 = vpop.f32.mrf.mxu0
        %v10476 = vadd.f32 0.0, %v10475
        %10477 = vmatprep.mubr.bf16.mxu0 0
        %10478 = vmatmul.mubr.bf16.gmra.mxu0 %v10259
        %v10479 = vpop.f32.mrf.mxu0
        %v10480 = vadd.f32 0.0, %v10479
        %v10481 = vpop.f32.mrf.mxu0
        %v10482 = vadd.f32 0.0, %v10481
        %v10483 = vpop.f32.mrf.mxu0
        %v10484 = vadd.f32 0.0, %v10483
        %v10485 = vpop.f32.mrf.mxu0
        %v10486 = vadd.f32 0.0, %v10485
        %10487 = vmatprep.mubr.bf16.mxu0 0
        %10488 = vmatmul.mubr.bf16.gmra.mxu0 %v10262
        %v10489 = vpop.f32.mrf.mxu0
        %v10490 = vadd.f32 0.0, %v10489
        %v10491 = vpop.f32.mrf.mxu0
        %v10492 = vadd.f32 0.0, %v10491
        %v10493 = vpop.f32.mrf.mxu0
        %v10494 = vadd.f32 0.0, %v10493
        %v10495 = vpop.f32.mrf.mxu0
        %v10496 = vadd.f32 0.0, %v10495
        %10497 = vmatprep.mubr.bf16.mxu0 0
        %10498 = vmatmul.mubr.bf16.gmra.mxu0 %v10265
        %v10499 = vpop.f32.mrf.mxu0
        %v10500 = vadd.f32 0.0, %v10499
        %v10501 = vpop.f32.mrf.mxu0
        %v10502 = vadd.f32 0.0, %v10501
        %v10503 = vpop.f32.mrf.mxu0
        %v10504 = vadd.f32 0.0, %v10503
        %v10505 = vpop.f32.mrf.mxu0
        %v10506 = vadd.f32 0.0, %v10505
        %10507 = vmatprep.mubr.bf16.mxu0 0
        %10508 = vmatmul.mubr.bf16.gmra.mxu0 %v10268
        %v10509 = vpop.f32.mrf.mxu0
        %v10510 = vadd.f32 0.0, %v10509
        %v10511 = vpop.f32.mrf.mxu0
        %v10512 = vadd.f32 0.0, %v10511
        %v10513 = vpop.f32.mrf.mxu0
        %v10514 = vadd.f32 0.0, %v10513
        %v10515 = vpop.f32.mrf.mxu0
        %v10516 = vadd.f32 0.0, %v10515
        %10517 = vmatprep.mubr.bf16.mxu0 0
        %10518 = vmatmul.mubr.bf16.gmra.mxu0 %v10271
        %v10519 = vpop.f32.mrf.mxu0
        %v10520 = vadd.f32 0.0, %v10519
        %v10521 = vpop.f32.mrf.mxu0
        %v10522 = vadd.f32 0.0, %v10521
        %v10523 = vpop.f32.mrf.mxu0
        %v10524 = vadd.f32 0.0, %v10523
        %v10525 = vpop.f32.mrf.mxu0
        %v10526 = vadd.f32 0.0, %v10525
        %10527 = vmatprep.mubr.bf16.mxu0 0
        %10528 = vmatmul.mubr.bf16.gmra.mxu0 %v10274
        %v10529 = vpop.f32.mrf.mxu0
        %v10530 = vadd.f32 0.0, %v10529
        %v10531 = vpop.f32.mrf.mxu0
        %v10532 = vadd.f32 0.0, %v10531
        %v10533 = vpop.f32.mrf.mxu0
        %v10534 = vadd.f32 0.0, %v10533
        %v10535 = vpop.f32.mrf.mxu0
        %v10536 = vadd.f32 0.0, %v10535
        %10537 = vmatprep.mubr.bf16.mxu0 0
        %10538 = vmatmul.mubr.bf16.gmra.mxu0 %v10277
        %v10539 = vpop.f32.mrf.mxu0
        %v10540 = vadd.f32 0.0, %v10539
        %v10541 = vpop.f32.mrf.mxu0
        %v10542 = vadd.f32 0.0, %v10541
        %v10543 = vpop.f32.mrf.mxu0
        %v10544 = vadd.f32 0.0, %v10543
        %v10545 = vpop.f32.mrf.mxu0
        %v10546 = vadd.f32 0.0, %v10545
        %10547 = vmatprep.mubr.bf16.mxu0 0
        %10548 = vmatmul.mubr.bf16.gmra.mxu0 %v10280
        %v10549 = vpop.f32.mrf.mxu0
        %v10550 = vadd.f32 0.0, %v10549
        %v10551 = vpop.f32.mrf.mxu0
        %v10552 = vadd.f32 0.0, %v10551
        %v10553 = vpop.f32.mrf.mxu0
        %v10554 = vadd.f32 0.0, %v10553
        %v10555 = vpop.f32.mrf.mxu0
        %v10556 = vadd.f32 0.0, %v10555
        %10557 = vmatprep.mubr.bf16.mxu0 0
        %10558 = vmatmul.mubr.bf16.gmra.mxu0 %v10283
        %v10559 = vpop.f32.mrf.mxu0
        %v10560 = vadd.f32 0.0, %v10559
        %v10561 = vpop.f32.mrf.mxu0
        %v10562 = vadd.f32 0.0, %v10561
        %v10563 = vpop.f32.mrf.mxu0
        %v10564 = vadd.f32 0.0, %v10563
        %v10565 = vpop.f32.mrf.mxu0
        %v10566 = vadd.f32 0.0, %v10565
        %10567 = vmatprep.mubr.bf16.mxu0 0
        %10568 = vmatmul.mubr.bf16.gmra.mxu0 %v10286
        %v10569 = vpop.f32.mrf.mxu0
        %v10570 = vadd.f32 0.0, %v10569
        %v10571 = vpop.f32.mrf.mxu0
        %v10572 = vadd.f32 0.0, %v10571
        %v10573 = vpop.f32.mrf.mxu0
        %v10574 = vadd.f32 0.0, %v10573
        %v10575 = vpop.f32.mrf.mxu0
        %v10576 = vadd.f32 0.0, %v10575
        %10577 = vmatprep.mubr.bf16.mxu0 0
        %10578 = vmatmul.mubr.bf16.gmra.mxu0 %v10289
        %v10579 = vpop.f32.mrf.mxu0
        %v10580 = vadd.f32 0.0, %v10579
        %v10581 = vpop.f32.mrf.mxu0
        %v10582 = vadd.f32 0.0, %v10581
        %v10583 = vpop.f32.mrf.mxu0
        %v10584 = vadd.f32 0.0, %v10583
        %v10585 = vpop.f32.mrf.mxu0
        %v10586 = vadd.f32 0.0, %v10585
        %10587 = vmatprep.mubr.bf16.mxu0 0
        %10588 = vmatmul.mubr.bf16.gmra.mxu0 %v10292
        %v10589 = vpop.f32.mrf.mxu0
        %v10590 = vadd.f32 0.0, %v10589
        %v10591 = vpop.f32.mrf.mxu0
        %v10592 = vadd.f32 0.0, %v10591
        %v10593 = vpop.f32.mrf.mxu0
        %v10594 = vadd.f32 0.0, %v10593
        %v10595 = vpop.f32.mrf.mxu0
        %v10596 = vadd.f32 0.0, %v10595
        %10597 = vmatprep.mubr.bf16.mxu0 0
        %10598 = vmatmul.mubr.bf16.gmra.mxu0 %v10295
        %v10599 = vpop.f32.mrf.mxu0
        %v10600 = vadd.f32 0.0, %v10599
        %v10601 = vpop.f32.mrf.mxu0
        %v10602 = vadd.f32 0.0, %v10601
        %v10603 = vpop.f32.mrf.mxu0
        %v10604 = vadd.f32 0.0, %v10603
        %v10605 = vpop.f32.mrf.mxu0
        %v10606 = vadd.f32 0.0, %v10605
        %10607 = vmatprep.mubr.bf16.mxu0 0
        %10608 = vmatmul.mubr.bf16.gmra.mxu0 %v10298
        %v10609 = vpop.f32.mrf.mxu0
        %v10610 = vadd.f32 0.0, %v10609
        %v10611 = vpop.f32.mrf.mxu0
        %v10612 = vadd.f32 0.0, %v10611
        %v10613 = vpop.f32.mrf.mxu0
        %v10614 = vadd.f32 0.0, %v10613
        %v10615 = vpop.f32.mrf.mxu0
        %v10616 = vadd.f32 0.0, %v10615
        %10617 = vmatprep.mubr.bf16.mxu0 0
        %10618 = vmatmul.mubr.bf16.gmra.mxu0 %v10301
        %v10619 = vpop.f32.mrf.mxu0
        %v10620 = vadd.f32 0.0, %v10619
        %v10621 = vpop.f32.mrf.mxu0
        %v10622 = vadd.f32 0.0, %v10621
        %v10623 = vpop.f32.mrf.mxu0
        %v10624 = vadd.f32 0.0, %v10623
        %v10625 = vpop.f32.mrf.mxu0
        %v10626 = vadd.f32 0.0, %v10625
        %10627 = vmatprep.mubr.bf16.mxu0 0
        %10628 = vmatmul.mubr.bf16.gmra.mxu0 %v10304
        %v10629 = vpop.f32.mrf.mxu0
        %v10630 = vadd.f32 0.0, %v10629
        %v10631 = vpop.f32.mrf.mxu0
        %v10632 = vadd.f32 0.0, %v10631
        %v10633 = vpop.f32.mrf.mxu0
        %v10634 = vadd.f32 0.0, %v10633
        %v10635 = vpop.f32.mrf.mxu0
        %v10636 = vadd.f32 0.0, %v10635
        %10637 = vmatprep.mubr.bf16.mxu0 0
        %10638 = vmatmul.mubr.bf16.gmra.mxu0 %v10307
        %v10639 = vpop.f32.mrf.mxu0
        %v10640 = vadd.f32 0.0, %v10639
        %v10641 = vpop.f32.mrf.mxu0
        %v10642 = vadd.f32 0.0, %v10641
        %v10643 = vpop.f32.mrf.mxu0
        %v10644 = vadd.f32 0.0, %v10643
        %v10645 = vpop.f32.mrf.mxu0
        %v10646 = vadd.f32 0.0, %v10645
        %10647 = vmatprep.mubr.bf16.mxu0 0
        %10648 = vmatmul.mubr.bf16.gmra.mxu0 %v10310
        %v10649 = vpop.f32.mrf.mxu0
        %v10650 = vadd.f32 0.0, %v10649
        %v10651 = vpop.f32.mrf.mxu0
        %v10652 = vadd.f32 0.0, %v10651
        %v10653 = vpop.f32.mrf.mxu0
        %v10654 = vadd.f32 0.0, %v10653
        %v10655 = vpop.f32.mrf.mxu0
        %v10656 = vadd.f32 0.0, %v10655
        %10657 = vmatprep.mubr.bf16.mxu0 0
        %10658 = vmatmul.mubr.bf16.gmra.mxu0 %v10313
        %v10659 = vpop.f32.mrf.mxu0
        %v10660 = vadd.f32 0.0, %v10659
        %v10661 = vpop.f32.mrf.mxu0
        %v10662 = vadd.f32 0.0, %v10661
        %v10663 = vpop.f32.mrf.mxu0
        %v10664 = vadd.f32 0.0, %v10663
        %v10665 = vpop.f32.mrf.mxu0
        %v10666 = vadd.f32 0.0, %v10665
        %10667 = vdwg.mxu0
        %v10668 = vpack.c.bf16 %v10354, %v10350
        %v10669 = vpack.c.bf16 %v10356, %v10352
        %v10670 = vpack.c.bf16 %v10364, %v10360
        %v10671 = vpack.c.bf16 %v10366, %v10362
        %v10672 = vpack.c.bf16 %v10374, %v10370
        %v10673 = vpack.c.bf16 %v10376, %v10372
        %v10674 = vpack.c.bf16 %v10384, %v10380
        %v10675 = vpack.c.bf16 %v10386, %v10382
        %v10676 = vpack.c.bf16 %v10394, %v10390
        %v10677 = vpack.c.bf16 %v10396, %v10392
        %v10678 = vpack.c.bf16 %v10404, %v10400
        %v10679 = vpack.c.bf16 %v10406, %v10402
        %v10680 = vpack.c.bf16 %v10414, %v10410
        %v10681 = vpack.c.bf16 %v10416, %v10412
        %v10682 = vpack.c.bf16 %v10424, %v10420
        %v10683 = vpack.c.bf16 %v10426, %v10422
        %v10684 = vpack.c.bf16 %v10434, %v10430
        %v10685 = vpack.c.bf16 %v10436, %v10432
        %v10686 = vpack.c.bf16 %v10444, %v10440
        %v10687 = vpack.c.bf16 %v10446, %v10442
        %v10688 = vpack.c.bf16 %v10454, %v10450
        %v10689 = vpack.c.bf16 %v10456, %v10452
        %v10690 = vpack.c.bf16 %v10464, %v10460
        %v10691 = vpack.c.bf16 %v10466, %v10462
        %v10692 = vpack.c.bf16 %v10474, %v10470
        %v10693 = vpack.c.bf16 %v10476, %v10472
        %v10694 = vpack.c.bf16 %v10484, %v10480
        %v10695 = vpack.c.bf16 %v10486, %v10482
        %v10696 = vpack.c.bf16 %v10494, %v10490
        %v10697 = vpack.c.bf16 %v10496, %v10492
        %v10698 = vpack.c.bf16 %v10504, %v10500
        %v10699 = vpack.c.bf16 %v10506, %v10502
        %v10700 = vpack.c.bf16 %v10514, %v10510
        %v10701 = vpack.c.bf16 %v10516, %v10512
        %v10702 = vpack.c.bf16 %v10524, %v10520
        %v10703 = vpack.c.bf16 %v10526, %v10522
        %v10704 = vpack.c.bf16 %v10534, %v10530
        %v10705 = vpack.c.bf16 %v10536, %v10532
        %v10706 = vpack.c.bf16 %v10544, %v10540
        %v10707 = vpack.c.bf16 %v10546, %v10542
        %v10708 = vpack.c.bf16 %v10554, %v10550
        %v10709 = vpack.c.bf16 %v10556, %v10552
        %v10710 = vpack.c.bf16 %v10564, %v10560
        %v10711 = vpack.c.bf16 %v10566, %v10562
        %v10712 = vpack.c.bf16 %v10574, %v10570
        %v10713 = vpack.c.bf16 %v10576, %v10572
        %v10714 = vpack.c.bf16 %v10584, %v10580
        %v10715 = vpack.c.bf16 %v10586, %v10582
        %v10716 = vpack.c.bf16 %v10594, %v10590
        %v10717 = vpack.c.bf16 %v10596, %v10592
        %v10718 = vpack.c.bf16 %v10604, %v10600
        %v10719 = vpack.c.bf16 %v10606, %v10602
        %v10720 = vpack.c.bf16 %v10614, %v10610
        %v10721 = vpack.c.bf16 %v10616, %v10612
        %v10722 = vpack.c.bf16 %v10624, %v10620
        %v10723 = vpack.c.bf16 %v10626, %v10622
        %v10724 = vpack.c.bf16 %v10634, %v10630
        %v10725 = vpack.c.bf16 %v10636, %v10632
        %v10726 = vpack.c.bf16 %v10644, %v10640
        %v10727 = vpack.c.bf16 %v10646, %v10642
        %v10728 = vpack.c.bf16 %v10654, %v10650
        %v10729 = vpack.c.bf16 %v10656, %v10652
        %v10730 = vpack.c.bf16 %v10664, %v10660
        %v10731 = vpack.c.bf16 %v10666, %v10662
        %v10732 = vmul.bf16 %v10668, %v2303
        %v10733 = vmul.bf16 %v10669, %v2304
        %v10734 = vmul.bf16 %v10670, %v2305
        %v10735 = vmul.bf16 %v10671, %v2306
        %v10736 = vmul.bf16 %v10672, %v2307
        %v10737 = vmul.bf16 %v10673, %v2308
        %v10738 = vmul.bf16 %v10674, %v2309
        %v10739 = vmul.bf16 %v10675, %v2310
        %v10740 = vmul.bf16 %v10676, %v2311
        %v10741 = vmul.bf16 %v10677, %v2312
        %v10742 = vmul.bf16 %v10678, %v2313
        %v10743 = vmul.bf16 %v10679, %v2314
        %v10744 = vmul.bf16 %v10680, %v2315
        %v10745 = vmul.bf16 %v10681, %v2316
        %v10746 = vmul.bf16 %v10682, %v2317
        %v10747 = vmul.bf16 %v10683, %v2318
        %v10748 = vmul.bf16 %v10684, %v2319
        %v10749 = vmul.bf16 %v10685, %v2320
        %v10750 = vmul.bf16 %v10686, %v2321
        %v10751 = vmul.bf16 %v10687, %v2322
        %v10752 = vmul.bf16 %v10688, %v2323
        %v10753 = vmul.bf16 %v10689, %v2324
        %v10754 = vmul.bf16 %v10690, %v2325
        %v10755 = vmul.bf16 %v10691, %v2326
        %v10756 = vmul.bf16 %v10692, %v2327
        %v10757 = vmul.bf16 %v10693, %v2328
        %v10758 = vmul.bf16 %v10694, %v2329
        %v10759 = vmul.bf16 %v10695, %v2330
        %v10760 = vmul.bf16 %v10696, %v2331
        %v10761 = vmul.bf16 %v10697, %v2332
        %v10762 = vmul.bf16 %v10698, %v2333
        %v10763 = vmul.bf16 %v10699, %v2334
        %v10764 = vmul.bf16 %v10700, %v2335
        %v10765 = vmul.bf16 %v10701, %v2336
        %v10766 = vmul.bf16 %v10702, %v2337
        %v10767 = vmul.bf16 %v10703, %v2338
        %v10768 = vmul.bf16 %v10704, %v2339
        %v10769 = vmul.bf16 %v10705, %v2340
        %v10770 = vmul.bf16 %v10706, %v2341
        %v10771 = vmul.bf16 %v10707, %v2342
        %v10772 = vmul.bf16 %v10708, %v2343
        %v10773 = vmul.bf16 %v10709, %v2344
        %v10774 = vmul.bf16 %v10710, %v2345
        %v10775 = vmul.bf16 %v10711, %v2346
        %v10776 = vmul.bf16 %v10712, %v2347
        %v10777 = vmul.bf16 %v10713, %v2348
        %v10778 = vmul.bf16 %v10714, %v2349
        %v10779 = vmul.bf16 %v10715, %v2350
        %v10780 = vmul.bf16 %v10716, %v2351
        %v10781 = vmul.bf16 %v10717, %v2352
        %v10782 = vmul.bf16 %v10718, %v2353
        %v10783 = vmul.bf16 %v10719, %v2354
        %v10784 = vmul.bf16 %v10720, %v2355
        %v10785 = vmul.bf16 %v10721, %v2356
        %v10786 = vmul.bf16 %v10722, %v2357
        %v10787 = vmul.bf16 %v10723, %v2358
        %v10788 = vmul.bf16 %v10724, %v2359
        %v10789 = vmul.bf16 %v10725, %v2360
        %v10790 = vmul.bf16 %v10726, %v2361
        %v10791 = vmul.bf16 %v10727, %v2362
        %v10792 = vmul.bf16 %v10728, %v2363
        %v10793 = vmul.bf16 %v10729, %v2364
        %v10794 = vmul.bf16 %v10730, %v2365
        %v10795 = vmul.bf16 %v10731, %v2366
        %v10796 = vunpack.c.l.bf16 %v10732
        %v10797 = vunpack.c.l.bf16 %v10733
        %v10798 = vunpack.c.h.bf16 %v10732
        %v10799 = vunpack.c.h.bf16 %v10733
        %v10800 = vunpack.c.l.bf16 %v10734
        %v10801 = vunpack.c.l.bf16 %v10735
        %v10802 = vunpack.c.h.bf16 %v10734
        %v10803 = vunpack.c.h.bf16 %v10735
        %v10804 = vunpack.c.l.bf16 %v10736
        %v10805 = vunpack.c.l.bf16 %v10737
        %v10806 = vunpack.c.h.bf16 %v10736
        %v10807 = vunpack.c.h.bf16 %v10737
        %v10808 = vunpack.c.l.bf16 %v10738
        %v10809 = vunpack.c.l.bf16 %v10739
        %v10810 = vunpack.c.h.bf16 %v10738
        %v10811 = vunpack.c.h.bf16 %v10739
        %v10812 = vunpack.c.l.bf16 %v10740
        %v10813 = vunpack.c.l.bf16 %v10741
        %v10814 = vunpack.c.h.bf16 %v10740
        %v10815 = vunpack.c.h.bf16 %v10741
        %v10816 = vunpack.c.l.bf16 %v10742
        %v10817 = vunpack.c.l.bf16 %v10743
        %v10818 = vunpack.c.h.bf16 %v10742
        %v10819 = vunpack.c.h.bf16 %v10743
        %v10820 = vunpack.c.l.bf16 %v10744
        %v10821 = vunpack.c.l.bf16 %v10745
        %v10822 = vunpack.c.h.bf16 %v10744
        %v10823 = vunpack.c.h.bf16 %v10745
        %v10824 = vunpack.c.l.bf16 %v10746
        %v10825 = vunpack.c.l.bf16 %v10747
        %v10826 = vunpack.c.h.bf16 %v10746
        %v10827 = vunpack.c.h.bf16 %v10747
        %v10828 = vunpack.c.l.bf16 %v10748
        %v10829 = vunpack.c.l.bf16 %v10749
        %v10830 = vunpack.c.h.bf16 %v10748
        %v10831 = vunpack.c.h.bf16 %v10749
        %v10832 = vunpack.c.l.bf16 %v10750
        %v10833 = vunpack.c.l.bf16 %v10751
        %v10834 = vunpack.c.h.bf16 %v10750
        %v10835 = vunpack.c.h.bf16 %v10751
        %v10836 = vunpack.c.l.bf16 %v10752
        %v10837 = vunpack.c.l.bf16 %v10753
        %v10838 = vunpack.c.h.bf16 %v10752
        %v10839 = vunpack.c.h.bf16 %v10753
        %v10840 = vunpack.c.l.bf16 %v10754
        %v10841 = vunpack.c.l.bf16 %v10755
        %v10842 = vunpack.c.h.bf16 %v10754
        %v10843 = vunpack.c.h.bf16 %v10755
        %v10844 = vunpack.c.l.bf16 %v10756
        %v10845 = vunpack.c.l.bf16 %v10757
        %v10846 = vunpack.c.h.bf16 %v10756
        %v10847 = vunpack.c.h.bf16 %v10757
        %v10848 = vunpack.c.l.bf16 %v10758
        %v10849 = vunpack.c.l.bf16 %v10759
        %v10850 = vunpack.c.h.bf16 %v10758
        %v10851 = vunpack.c.h.bf16 %v10759
        %v10852 = vunpack.c.l.bf16 %v10760
        %v10853 = vunpack.c.l.bf16 %v10761
        %v10854 = vunpack.c.h.bf16 %v10760
        %v10855 = vunpack.c.h.bf16 %v10761
        %v10856 = vunpack.c.l.bf16 %v10762
        %v10857 = vunpack.c.l.bf16 %v10763
        %v10858 = vunpack.c.h.bf16 %v10762
        %v10859 = vunpack.c.h.bf16 %v10763
        %v10860 = vunpack.c.l.bf16 %v10764
        %v10861 = vunpack.c.l.bf16 %v10765
        %v10862 = vunpack.c.h.bf16 %v10764
        %v10863 = vunpack.c.h.bf16 %v10765
        %v10864 = vunpack.c.l.bf16 %v10766
        %v10865 = vunpack.c.l.bf16 %v10767
        %v10866 = vunpack.c.h.bf16 %v10766
        %v10867 = vunpack.c.h.bf16 %v10767
        %v10868 = vunpack.c.l.bf16 %v10768
        %v10869 = vunpack.c.l.bf16 %v10769
        %v10870 = vunpack.c.h.bf16 %v10768
        %v10871 = vunpack.c.h.bf16 %v10769
        %v10872 = vunpack.c.l.bf16 %v10770
        %v10873 = vunpack.c.l.bf16 %v10771
        %v10874 = vunpack.c.h.bf16 %v10770
        %v10875 = vunpack.c.h.bf16 %v10771
        %v10876 = vunpack.c.l.bf16 %v10772
        %v10877 = vunpack.c.l.bf16 %v10773
        %v10878 = vunpack.c.h.bf16 %v10772
        %v10879 = vunpack.c.h.bf16 %v10773
        %v10880 = vunpack.c.l.bf16 %v10774
        %v10881 = vunpack.c.l.bf16 %v10775
        %v10882 = vunpack.c.h.bf16 %v10774
        %v10883 = vunpack.c.h.bf16 %v10775
        %v10884 = vunpack.c.l.bf16 %v10776
        %v10885 = vunpack.c.l.bf16 %v10777
        %v10886 = vunpack.c.h.bf16 %v10776
        %v10887 = vunpack.c.h.bf16 %v10777
        %v10888 = vunpack.c.l.bf16 %v10778
        %v10889 = vunpack.c.l.bf16 %v10779
        %v10890 = vunpack.c.h.bf16 %v10778
        %v10891 = vunpack.c.h.bf16 %v10779
        %v10892 = vunpack.c.l.bf16 %v10780
        %v10893 = vunpack.c.l.bf16 %v10781
        %v10894 = vunpack.c.h.bf16 %v10780
        %v10895 = vunpack.c.h.bf16 %v10781
        %v10896 = vunpack.c.l.bf16 %v10782
        %v10897 = vunpack.c.l.bf16 %v10783
        %v10898 = vunpack.c.h.bf16 %v10782
        %v10899 = vunpack.c.h.bf16 %v10783
        %v10900 = vunpack.c.l.bf16 %v10784
        %v10901 = vunpack.c.l.bf16 %v10785
        %v10902 = vunpack.c.h.bf16 %v10784
        %v10903 = vunpack.c.h.bf16 %v10785
        %v10904 = vunpack.c.l.bf16 %v10786
        %v10905 = vunpack.c.l.bf16 %v10787
        %v10906 = vunpack.c.h.bf16 %v10786
        %v10907 = vunpack.c.h.bf16 %v10787
        %v10908 = vunpack.c.l.bf16 %v10788
        %v10909 = vunpack.c.l.bf16 %v10789
        %v10910 = vunpack.c.h.bf16 %v10788
        %v10911 = vunpack.c.h.bf16 %v10789
        %v10912 = vunpack.c.l.bf16 %v10790
        %v10913 = vunpack.c.l.bf16 %v10791
        %v10914 = vunpack.c.h.bf16 %v10790
        %v10915 = vunpack.c.h.bf16 %v10791
        %v10916 = vunpack.c.l.bf16 %v10792
        %v10917 = vunpack.c.l.bf16 %v10793
        %v10918 = vunpack.c.h.bf16 %v10792
        %v10919 = vunpack.c.h.bf16 %v10793
        %v10920 = vunpack.c.l.bf16 %v10794
        %v10921 = vunpack.c.l.bf16 %v10795
        %v10922 = vunpack.c.h.bf16 %v10794
        %v10923 = vunpack.c.h.bf16 %v10795
        %v10924 = vadd.f32 %v10796, %v10812
        %v10925 = vadd.f32 %v10924, %v10828
        %v10926 = vadd.f32 %v10925, %v10844
        %v10927 = vadd.f32 %v10926, %v10860
        %v10928 = vadd.f32 %v10927, %v10876
        %v10929 = vadd.f32 %v10928, %v10892
        %v10930 = vadd.f32 %v10929, %v10908
        %v10931 = vadd.f32 %v10797, %v10813
        %v10932 = vadd.f32 %v10931, %v10829
        %v10933 = vadd.f32 %v10932, %v10845
        %v10934 = vadd.f32 %v10933, %v10861
        %v10935 = vadd.f32 %v10934, %v10877
        %v10936 = vadd.f32 %v10935, %v10893
        %v10937 = vadd.f32 %v10936, %v10909
        %v10938 = vadd.f32 %v10798, %v10814
        %v10939 = vadd.f32 %v10938, %v10830
        %v10940 = vadd.f32 %v10939, %v10846
        %v10941 = vadd.f32 %v10940, %v10862
        %v10942 = vadd.f32 %v10941, %v10878
        %v10943 = vadd.f32 %v10942, %v10894
        %v10944 = vadd.f32 %v10943, %v10910
        %v10945 = vadd.f32 %v10799, %v10815
        %v10946 = vadd.f32 %v10945, %v10831
        %v10947 = vadd.f32 %v10946, %v10847
        %v10948 = vadd.f32 %v10947, %v10863
        %v10949 = vadd.f32 %v10948, %v10879
        %v10950 = vadd.f32 %v10949, %v10895
        %v10951 = vadd.f32 %v10950, %v10911
        %v10952 = vadd.f32 %v10800, %v10816
        %v10953 = vadd.f32 %v10952, %v10832
        %v10954 = vadd.f32 %v10953, %v10848
        %v10955 = vadd.f32 %v10954, %v10864
        %v10956 = vadd.f32 %v10955, %v10880
        %v10957 = vadd.f32 %v10956, %v10896
        %v10958 = vadd.f32 %v10957, %v10912
        %v10959 = vadd.f32 %v10801, %v10817
        %v10960 = vadd.f32 %v10959, %v10833
        %v10961 = vadd.f32 %v10960, %v10849
        %v10962 = vadd.f32 %v10961, %v10865
        %v10963 = vadd.f32 %v10962, %v10881
        %v10964 = vadd.f32 %v10963, %v10897
        %v10965 = vadd.f32 %v10964, %v10913
        %v10966 = vadd.f32 %v10802, %v10818
        %v10967 = vadd.f32 %v10966, %v10834
        %v10968 = vadd.f32 %v10967, %v10850
        %v10969 = vadd.f32 %v10968, %v10866
        %v10970 = vadd.f32 %v10969, %v10882
        %v10971 = vadd.f32 %v10970, %v10898
        %v10972 = vadd.f32 %v10971, %v10914
        %v10973 = vadd.f32 %v10803, %v10819
        %v10974 = vadd.f32 %v10973, %v10835
        %v10975 = vadd.f32 %v10974, %v10851
        %v10976 = vadd.f32 %v10975, %v10867
        %v10977 = vadd.f32 %v10976, %v10883
        %v10978 = vadd.f32 %v10977, %v10899
        %v10979 = vadd.f32 %v10978, %v10915
        %v10980 = vadd.f32 %v10804, %v10820
        %v10981 = vadd.f32 %v10980, %v10836
        %v10982 = vadd.f32 %v10981, %v10852
        %v10983 = vadd.f32 %v10982, %v10868
        %v10984 = vadd.f32 %v10983, %v10884
        %v10985 = vadd.f32 %v10984, %v10900
        %v10986 = vadd.f32 %v10985, %v10916
        %v10987 = vadd.f32 %v10805, %v10821
        %v10988 = vadd.f32 %v10987, %v10837
        %v10989 = vadd.f32 %v10988, %v10853
        %v10990 = vadd.f32 %v10989, %v10869
        %v10991 = vadd.f32 %v10990, %v10885
        %v10992 = vadd.f32 %v10991, %v10901
        %v10993 = vadd.f32 %v10992, %v10917
        %v10994 = vadd.f32 %v10806, %v10822
        %v10995 = vadd.f32 %v10994, %v10838
        %v10996 = vadd.f32 %v10995, %v10854
        %v10997 = vadd.f32 %v10996, %v10870
        %v10998 = vadd.f32 %v10997, %v10886
        %v10999 = vadd.f32 %v10998, %v10902
        %v11000 = vadd.f32 %v10999, %v10918
        %v11001 = vadd.f32 %v10807, %v10823
        %v11002 = vadd.f32 %v11001, %v10839
        %v11003 = vadd.f32 %v11002, %v10855
        %v11004 = vadd.f32 %v11003, %v10871
        %v11005 = vadd.f32 %v11004, %v10887
        %v11006 = vadd.f32 %v11005, %v10903
        %v11007 = vadd.f32 %v11006, %v10919
        %v11008 = vadd.f32 %v10808, %v10824
        %v11009 = vadd.f32 %v11008, %v10840
        %v11010 = vadd.f32 %v11009, %v10856
        %v11011 = vadd.f32 %v11010, %v10872
        %v11012 = vadd.f32 %v11011, %v10888
        %v11013 = vadd.f32 %v11012, %v10904
        %v11014 = vadd.f32 %v11013, %v10920
        %v11015 = vadd.f32 %v10809, %v10825
        %v11016 = vadd.f32 %v11015, %v10841
        %v11017 = vadd.f32 %v11016, %v10857
        %v11018 = vadd.f32 %v11017, %v10873
        %v11019 = vadd.f32 %v11018, %v10889
        %v11020 = vadd.f32 %v11019, %v10905
        %v11021 = vadd.f32 %v11020, %v10921
        %v11022 = vadd.f32 %v10810, %v10826
        %v11023 = vadd.f32 %v11022, %v10842
        %v11024 = vadd.f32 %v11023, %v10858
        %v11025 = vadd.f32 %v11024, %v10874
        %v11026 = vadd.f32 %v11025, %v10890
        %v11027 = vadd.f32 %v11026, %v10906
        %v11028 = vadd.f32 %v11027, %v10922
        %v11029 = vadd.f32 %v10811, %v10827
        %v11030 = vadd.f32 %v11029, %v10843
        %v11031 = vadd.f32 %v11030, %v10859
        %v11032 = vadd.f32 %v11031, %v10875
        %v11033 = vadd.f32 %v11032, %v10891
        %v11034 = vadd.f32 %v11033, %v10907
        %v11035 = vadd.f32 %v11034, %v10923
        %v11036 = vpack.c.bf16 %v10944, %v10930
        %v11037 = vpack.c.bf16 %v10951, %v10937
        %v11038 = vpack.c.bf16 %v10972, %v10958
        %v11039 = vpack.c.bf16 %v10979, %v10965
        %v11040 = vpack.c.bf16 %v11000, %v10986
        %v11041 = vpack.c.bf16 %v11007, %v10993
        %v11042 = vpack.c.bf16 %v11028, %v11014
        %v11043 = vpack.c.bf16 %v11035, %v11021
        %11044 = vmatprep.subr.bf16.mxu0 %v6892
        %11045 = vmatpush1.bf16.msra.mxu0 %v6891
        %11046 = vmatprep.subr.bf16.mxu0 %v6890
        %11047 = vmatpush1.bf16.msra.mxu0 %v6889
        %11048 = vmatprep.subr.bf16.mxu0 %v6888
        %11049 = vmatpush1.bf16.msra.mxu0 %v6887
        %11050 = vmatprep.subr.bf16.mxu0 %v6886
        %11051 = vmatpush1.bf16.msra.mxu0 %v6885
        %11052 = vmatprep.subr.bf16.mxu0 %v6884
        %11053 = vmatpush1.bf16.msra.mxu0 %v6883
        %11054 = vmatprep.subr.bf16.mxu0 %v6882
        %11055 = vmatpush1.bf16.msra.mxu0 %v6881
        %11056 = vmatprep.subr.bf16.mxu0 %v6880
        %11057 = vmatpush1.bf16.msra.mxu0 %v6879
        %11058 = vmatprep.subr.bf16.mxu0 %v6878
        %11059 = vmatpush1.bf16.msra.mxu0 %v6877
        %11060 = vmatprep.subr.bf16.mxu0 %v6908
        %11061 = vmatpush2.bf16.msra.mxu0 %v6907
        %11062 = vmatprep.subr.bf16.mxu0 %v6906
        %11063 = vmatpush2.bf16.msra.mxu0 %v6905
        %11064 = vmatprep.subr.bf16.mxu0 %v6904
        %11065 = vmatpush2.bf16.msra.mxu0 %v6903
        %11066 = vmatprep.subr.bf16.mxu0 %v6902
        %11067 = vmatpush2.bf16.msra.mxu0 %v6901
        %11068 = vmatprep.subr.bf16.mxu0 %v6900
        %11069 = vmatpush2.bf16.msra.mxu0 %v6899
        %11070 = vmatprep.subr.bf16.mxu0 %v6898
        %11071 = vmatpush2.bf16.msra.mxu0 %v6897
        %11072 = vmatprep.subr.bf16.mxu0 %v6896
        %11073 = vmatpush2.bf16.msra.mxu0 %v6895
        %11074 = vmatprep.subr.bf16.mxu0 %v6894
        %11075 = vmatpush2.bf16.msra.mxu0 %v6893
        %11076 = vmatprep.mubr.bf16.mxu0 %v11037
        %11077 = vmatmul.mubr.bf16.gmra.mxu0 %v11036
        %v11078 = vpop.f32.mrf.mxu0
        %v11079 = vadd.f32 %v6774, %v11078
        %v11080 = vpop.f32.mrf.mxu0
        %v11081 = vadd.f32 %v6778, %v11080
        %v11082 = vpop.f32.mrf.mxu0
        %v11083 = vadd.f32 %v6774, %v11082
        %v11084 = vpop.f32.mrf.mxu0
        %v11085 = vadd.f32 %v6778, %v11084
        %11086 = vmatprep.mubr.bf16.mxu0 %v11039
        %11087 = vmatmul.mubr.bf16.gmra.mxu0 %v11038
        %v11088 = vpop.f32.mrf.mxu0
        %v11089 = vadd.f32 %v6774, %v11088
        %v11090 = vpop.f32.mrf.mxu0
        %v11091 = vadd.f32 %v6778, %v11090
        %v11092 = vpop.f32.mrf.mxu0
        %v11093 = vadd.f32 %v6774, %v11092
        %v11094 = vpop.f32.mrf.mxu0
        %v11095 = vadd.f32 %v6778, %v11094
        %11096 = vmatprep.mubr.bf16.mxu0 %v11041
        %11097 = vmatmul.mubr.bf16.gmra.mxu0 %v11040
        %v11098 = vpop.f32.mrf.mxu0
        %v11099 = vadd.f32 %v6774, %v11098
        %v11100 = vpop.f32.mrf.mxu0
        %v11101 = vadd.f32 %v6778, %v11100
        %v11102 = vpop.f32.mrf.mxu0
        %v11103 = vadd.f32 %v6774, %v11102
        %v11104 = vpop.f32.mrf.mxu0
        %v11105 = vadd.f32 %v6778, %v11104
        %11106 = vmatprep.mubr.bf16.mxu0 %v11043
        %11107 = vmatmul.mubr.bf16.gmra.mxu0 %v11042
        %v11108 = vpop.f32.mrf.mxu0
        %v11109 = vadd.f32 %v6774, %v11108
        %v11110 = vpop.f32.mrf.mxu0
        %v11111 = vadd.f32 %v6778, %v11110
        %v11112 = vpop.f32.mrf.mxu0
        %v11113 = vadd.f32 %v6774, %v11112
        %v11114 = vpop.f32.mrf.mxu0
        %v11115 = vadd.f32 %v6778, %v11114
        %11116 = vdwg.mxu0
        %v11117 = vadd.f32 %v11079, %v7030
        %v11118 = vadd.f32 %v11081, %v7031
        %v11119 = vadd.f32 %v11083, %v7032
        %v11120 = vadd.f32 %v11085, %v7033
        %v11121 = vadd.f32 %v11089, %v7034
        %v11122 = vadd.f32 %v11091, %v7035
        %v11123 = vadd.f32 %v11093, %v7036
        %v11124 = vadd.f32 %v11095, %v7037
        %v11125 = vadd.f32 %v11099, %v7038
        %v11126 = vadd.f32 %v11101, %v7039
        %v11127 = vadd.f32 %v11103, %v7040
        %v11128 = vadd.f32 %v11105, %v7041
        %v11129 = vadd.f32 %v11109, %v7042
        %v11130 = vadd.f32 %v11111, %v7043
        %v11131 = vadd.f32 %v11113, %v7044
        %v11132 = vadd.f32 %v11115, %v7045
        %v11133 = vmax.f32 %v11117, 0.0
        %v11134 = vmax.f32 %v11118, 0.0
        %v11135 = vmax.f32 %v11119, 0.0
        %v11136 = vmax.f32 %v11120, 0.0
        %v11137 = vmax.f32 %v11121, 0.0
        %v11138 = vmax.f32 %v11122, 0.0
        %v11139 = vmax.f32 %v11123, 0.0
        %v11140 = vmax.f32 %v11124, 0.0
        %v11141 = vmax.f32 %v11125, 0.0
        %v11142 = vmax.f32 %v11126, 0.0
        %v11143 = vmax.f32 %v11127, 0.0
        %v11144 = vmax.f32 %v11128, 0.0
        %v11145 = vmax.f32 %v11129, 0.0
        %v11146 = vmax.f32 %v11130, 0.0
        %v11147 = vmax.f32 %v11131, 0.0
        %v11148 = vmax.f32 %v11132, 0.0
        %11149 = vst [vmem:[%s502] sm:$0xff] %v11133
        %11150 = vst [vmem:[%s502 + $0x8] sm:$0xff] %v11134
        %11151 = vst [vmem:[%s502 + $0x10] sm:$0xff] %v11135
        %11152 = vst [vmem:[%s502 + $0x18] sm:$0xff] %v11136
        %11153 = vst [vmem:[%s502 + $0x20] sm:$0xff] %v11137
        %11154 = vst [vmem:[%s502 + $0x28] sm:$0xff] %v11138
        %11155 = vst [vmem:[%s502 + $0x30] sm:$0xff] %v11139
        %11156 = vst [vmem:[%s502 + $0x38] sm:$0xff] %v11140
        %11157 = vst [vmem:[%s502 + $0x40] sm:$0xff] %v11141
        %11158 = vst [vmem:[%s502 + $0x48] sm:$0xff] %v11142
        %11159 = vst [vmem:[%s502 + $0x50] sm:$0xff] %v11143
        %11160 = vst [vmem:[%s502 + $0x58] sm:$0xff] %v11144
        %11161 = vst [vmem:[%s502 + $0x60] sm:$0xff] %v11145
        %11162 = vst [vmem:[%s502 + $0x68] sm:$0xff] %v11146
        %11163 = vst [vmem:[%s502 + $0x70] sm:$0xff] %v11147
        %11164 = vst [vmem:[%s502 + $0x78] sm:$0xff] %v11148
        %s11165 = sand.u32 %s362, 1
        %s11166 = scalar_lea.sflag [#allocation3], %s11165
        %s11167 = sand.u32 %s362, 1
        %s11168 = smul.addr %s11167, 128
        %s11169 = scalar_lea.vmem [#allocation2], %s11168
        // Predicated region
        $region81: #{attention_block.1} parent=79 // pred_check
          %p11170 = pneg %p372
        $region82: #{attention_block.1} parent=79 // pred_check_branch
          %11172 = sbr.rel (%p11170) target = $region84
        $region83: #{attention_block.1} parent=79 // pred_region
          %s11174 = ssub.s32 2048, 2048
          %11175 = vsyncadd %s11166, %s11174
          %s11176 = smul.addr %s29, 16
          %s11177 = smul.addr %s11176, 128
          %s11178 = scalar_lea.hbm %s15, %s11177
          %s11179 = sshll.u32 %s11169, 4
          %s11180 = int_to_ptr.vmem [resolvable:$true] %s11179
          %11185 = dma.vmem_to_hbm [thread:$0]  %s11180, 2048, %s11178, %s11166, 256, 256, 16
        $region84: #{attention_block.1} parent=79 // pred_fallthru
          _
      $region80: #{attention_block.1} parent=5 // pred_fallthru
        _
      %p11186 = scmp.le.s32.totalorder 2, %s24
      // Predicated region
      $region85: #{attention_block.1} parent=5 // pred_check
        %p11187 = pneg %p11186
      $region86: #{attention_block.1} parent=5 // pred_check_branch
        %11189 = sbr.rel (%p11187) target = $region88
      $region87: #{attention_block.1} parent=5 // pred_region
        %s11190 = ssub.s32 %s24, 2
        // Predicated region
        $region89: #{attention_block.1} parent=87 // pred_check
          %p11191 = pneg %p378
        $region90: #{attention_block.1} parent=87 // pred_check_branch
          %11193 = sbr.rel (%p11191) target = $region92
        $region91: #{attention_block.1} parent=87 // pred_region
          %s11194 = sand.u32 %s363, 1
          %s11195 = scalar_lea.sflag [#allocation3], %s11194
          %s11196 = sand.u32 %s363, 1
          %s11197 = smul.addr %s11196, 128
          %s11198 = scalar_lea.vmem [#allocation2], %s11197
          %11199 = dma.done %s11195, 2048
        $region92: #{attention_block.1} parent=87 // pred_fallthru
          _
      $region88: #{attention_block.1} parent=5 // pred_fallthru
        _
    $region6: #{attention_block.1} parent=1 // loop_footer
      %s28 = sadd.s32 1, %s24
    $region7: #{attention_block.1} parent=1 // loop_footer_branch
      %23 = sbr.rel target = $region3
    $region8: #{attention_block.1} parent=1 // loop_exit
      _
    %11200 = vsyncpa [#allocation3], 1
    %s11201 = scalar_lea.sflag [#allocation3], 1
    %11202 = vsyncpa %s11201, 1

</llo_original>
